<compile_context>
chip_gen: v5e
topology: v5e:2x2
jax: 0.10.0
libtpu: 0.0.40
codegen_flags: <defaults>
</compile_context>

<pallas_src>
import math

import jax
import jax.numpy as jnp
from jax.experimental import pallas as pl
from jax.experimental.pallas import tpu as pltpu


def _round_up(n, m):
    return ((n + m - 1) // m) * m


def cmix_kernel(x_ref, prev_ref, mask_ref, maak_ref, maar_ref,
                wk_ref, wv_ref, wr_ref, o_ref,
                xk_sc, r_sc, acc_sc):
    """Grid = (m_tiles, k_tiles); k (d_inner) is the innermost reduction axis."""
    k_step = pl.program_id(1)

    # ---- first K step of this M tile: token mixing + receptance gate --------
    @pl.when(k_step == 0)
    def _():
        x = x_ref[...].astype(jnp.float32)                      # (TM, Cin) f32
        # time_shift: row t <- row t-1 within each sequence, row 0 <- 0.
        shifted = pltpu.roll(x, shift=1, axis=0)                 # intra-tile shift (XLU)
        row = jax.lax.broadcasted_iota(jnp.int32, (x.shape[0], 1), 0)
        prev = prev_ref[0].astype(jnp.float32)                   # (1, Cin) carry row
        shifted = jnp.where(row == 0, prev, shifted)             # cross-tile carry
        shifted = shifted * mask_ref[...]                        # zero sequence starts

        xx = shifted - x
        xk = x + xx * maak_ref[...]
        xr = x + xx * maar_ref[...]

        xk_sc[...] = xk.astype(jnp.bfloat16)                     # reused every k step
        r = jnp.dot(xr.astype(jnp.bfloat16), wr_ref[...],
                    preferred_element_type=jnp.float32)
        r_sc[...] = jax.nn.sigmoid(r)                            # gate (EUP), f32
        acc_sc[...] = jnp.zeros_like(acc_sc)

    # ---- streamed d_inner reduction: kv += relu(xk @ Wk_k)^2 @ Wv_k ---------
    k_act = jnp.dot(xk_sc[...], wk_ref[...], preferred_element_type=jnp.float32)
    k_act = jnp.maximum(k_act, 0.0)
    k_act = k_act * k_act                                        # ReLU^2 in f32
    acc_sc[...] += jnp.dot(k_act.astype(jnp.bfloat16), wv_ref[...],
                           preferred_element_type=jnp.float32)

    # ---- last K step: apply gate and write the lane-dense output tile -------
    @pl.when(k_step == pl.num_programs(1) - 1)
    def _():
        o_ref[...] = (r_sc[...] * acc_sc[...]).astype(o_ref.dtype)


def rwkv_cmix_x060(x, time_maa_k, time_maa_r, w_key, w_value, w_receptance,
                   *, tm=512, tk=512):
    """
    x            : (B, T, d_in)     float32
    time_maa_k/r : (1, d_in)        float32
    w_key        : (d_in, d_inner)  (nn.Linear weight, transposed)
    w_value      : (d_inner, d_out)
    w_receptance : (d_in, d_out)
    returns      : (B, T, d_out)    in x.dtype
    """
    B, T, d_in = x.shape
    d_inner = w_key.shape[1]
    d_out = w_value.shape[1]
    out_dtype = x.dtype

    # ---- tile sizes / padded dims (lane = 128, sublane-safe for bf16) -------
    M = B * T
    tm = _round_up(max(16, min(tm, _round_up(M, 16))), 16)
    tk = _round_up(min(tk, _round_up(d_inner, 128)), 128)
    M_pad = _round_up(M, tm)
    d_in_p = _round_up(d_in, 128)
    d_out_p = _round_up(d_out, 128)
    d_inner_p = _round_up(d_inner, tk)
    num_m = M_pad // tm
    num_k = d_inner_p // tk

    def _pad2(a, rows, cols):
        pr, pc = rows - a.shape[0], cols - a.shape[1]
        return jnp.pad(a, ((0, pr), (0, pc))) if (pr or pc) else a

    # ---- host-side packing: flatten (B,T)->M, pad, cast MXU inputs to bf16 --
    x_flat = _pad2(x.reshape(M, d_in), M_pad, d_in_p).astype(jnp.bfloat16)
    maak_p = _pad2(jnp.reshape(time_maa_k, (1, d_in)), 1, d_in_p).astype(jnp.float32)
    maar_p = _pad2(jnp.reshape(time_maa_r, (1, d_in)), 1, d_in_p).astype(jnp.float32)
    wk_p = _pad2(w_key, d_in_p, d_inner_p).astype(jnp.bfloat16)
    wv_p = _pad2(w_value, d_inner_p, d_out_p).astype(jnp.bfloat16)
    wr_p = _pad2(w_receptance, d_in_p, d_out_p).astype(jnp.bfloat16)

    # Carry row for the time_shift at each M-tile boundary (tiny side input).
    row_start = jnp.arange(num_m) * tm
    prev_rows = x_flat[jnp.maximum(row_start - 1, 0)].reshape(num_m, 1, d_in_p)
    # 0.0 at global rows that start a new sequence (t == 0), else 1.0.
    shift_mask = (jnp.arange(M_pad) % T != 0).astype(jnp.float32).reshape(M_pad, 1)

    out_p = pl.pallas_call(
        cmix_kernel,
        out_shape=jax.ShapeDtypeStruct((M_pad, d_out_p), out_dtype),
        grid_spec=pltpu.PrefetchScalarGridSpec(
            num_scalar_prefetch=0,
            grid=(num_m, num_k),
            in_specs=[
                pl.BlockSpec((tm, d_in_p), lambda m, k: (m, 0)),        # x tile
                pl.BlockSpec((1, 1, d_in_p), lambda m, k: (m, 0, 0)),   # carry row
                pl.BlockSpec((tm, 1), lambda m, k: (m, 0)),             # shift mask
                pl.BlockSpec((1, d_in_p), lambda m, k: (0, 0)),         # time_maa_k
                pl.BlockSpec((1, d_in_p), lambda m, k: (0, 0)),         # time_maa_r
                pl.BlockSpec((d_in_p, tk), lambda m, k: (0, k)),        # W_key cols
                pl.BlockSpec((tk, d_out_p), lambda m, k: (k, 0)),       # W_value rows
                pl.BlockSpec((d_in_p, d_out_p), lambda m, k: (0, 0)),   # W_receptance
            ],
            out_specs=pl.BlockSpec((tm, d_out_p), lambda m, k: (m, 0)),
            scratch_shapes=[
                pltpu.VMEM((tm, d_in_p), jnp.bfloat16),   # xk (MXU LHS, reused over k)
                pltpu.VMEM((tm, d_out_p), jnp.float32),   # sigmoid(r) gate
                pltpu.VMEM((tm, d_out_p), jnp.float32),   # kv accumulator
            ]),
        compiler_params=pltpu.CompilerParams(
            dimension_semantics=("parallel", "arbitrary"),
            vmem_limit_bytes=48 * 1024 * 1024),
    )(x_flat, prev_rows, shift_mask, maak_p, maar_p, wk_p, wv_p, wr_p)

    return out_p[:M, :d_out].reshape(B, T, d_out)


def reference(x, time_maa_k, time_maa_r, w_key, w_value, w_receptance):
    """Pure-JAX f32 reference mirroring the PyTorch forward."""
    shifted = jnp.concatenate([jnp.zeros_like(x[:, :1]), x[:, :-1]], axis=1)
    xx = shifted - x
    xk = x + xx * time_maa_k[None]
    xr = x + xx * time_maa_r[None]
    k = jnp.maximum(xk @ w_key, 0.0) ** 2
    kv = k @ w_value
    return jax.nn.sigmoid(xr @ w_receptance) * kv


if __name__ == "__main__":
    # Small but lane-friendly config: d_model=256, ffn_mult=4, layer_id=0,
    # n_layer=2, B=2, T=192.  With tm=256 this exercises: an M tile starting
    # mid-sequence (carry row), an in-tile sequence boundary (mask), M padding
    # (384 -> 512), and a 2-step d_inner reduction (1024 / tk=512).
    B, T = 2, 192
    d_in = 256
    ffn_mult = 4
    d_inner = d_in * ffn_mult   # 1024
    d_out = d_in                # 256
    layer_id, n_layer = 0, 2

    ratio_1_to_almost0 = 1.0 - layer_id / n_layer
    ddd = jnp.arange(d_in, dtype=jnp.float32) / d_in
    time_maa_k = (1.0 - jnp.power(ddd, ratio_1_to_almost0)).reshape(1, d_in)
    time_maa_r = (1.0 - jnp.power(ddd, ratio_1_to_almost0)).reshape(1, d_in)

    key = jax.random.PRNGKey(0)
    kx, kk, kv_, kr = jax.random.split(key, 4)
    x = jax.random.normal(kx, (B, T, d_in), dtype=jnp.float32)
    b_in = 1.0 / math.sqrt(d_in)
    b_inner = 1.0 / math.sqrt(d_inner)
    w_key = jax.random.uniform(kk, (d_in, d_inner), jnp.float32, -b_in, b_in)
    w_value = jax.random.uniform(kv_, (d_inner, d_out), jnp.float32, -b_inner, b_inner)
    w_receptance = jax.random.uniform(kr, (d_in, d_out), jnp.float32, -b_in, b_in)

    out = rwkv_cmix_x060(x, time_maa_k, time_maa_r, w_key, w_value, w_receptance,
                         tm=256, tk=512)
    out = jax.block_until_ready(out)

    ref = reference(x, time_maa_k, time_maa_r, w_key, w_value, w_receptance)
    assert out.shape == (B, T, d_out)
    max_err = jnp.max(jnp.abs(out - ref))
    # bf16 MXU inputs with f32 accumulation -> loose-ish tolerance vs f32 ref.
    assert jnp.allclose(out, ref, atol=3e-2, rtol=3e-2), f"max err {max_err}"

    print("KERNEL_OK")
</pallas_src>

<mosaic_0001>
module attributes {stable_mosaic.version = 11 : i64} {
  func.func @cmix_kernel(%arg0: i32, %arg1: i32, %arg2: memref<256x256xbf16, #tpu.memory_space<vmem>>, %arg3: memref<1x1x256xbf16, #tpu.memory_space<vmem>>, %arg4: memref<256x1xf32, #tpu.memory_space<vmem>>, %arg5: memref<1x256xf32, #tpu.memory_space<vmem>>, %arg6: memref<1x256xf32, #tpu.memory_space<vmem>>, %arg7: memref<256x512xbf16, #tpu.memory_space<vmem>>, %arg8: memref<512x256xbf16, #tpu.memory_space<vmem>>, %arg9: memref<256x256xbf16, #tpu.memory_space<vmem>>, %arg10: memref<256x256xf32, #tpu.memory_space<vmem>>, %arg11: memref<256x256xbf16, #tpu.memory_space<vmem>>, %arg12: memref<256x256xf32, #tpu.memory_space<vmem>>, %arg13: memref<256x256xf32, #tpu.memory_space<vmem>>) attributes {dimension_semantics = [#tpu.dimension_semantics<parallel>, #tpu.dimension_semantics<arbitrary>], iteration_bounds = array<i64: 2, 2>, scalar_prefetch = 0 : i64, scratch_operands = 3 : i64, tpu.core_type = #tpu.core_type<tc>, window_params = [{transform_indices = @transform_0, window_bounds = array<i64: 256, 256>}, {transform_indices = @transform_1, window_bounds = array<i64: 1, 1, 256>}, {transform_indices = @transform_2, window_bounds = array<i64: 256, 1>}, {pipeline_mode = #tpu.pipeline_mode<synchronous>, transform_indices = @transform_3, window_bounds = array<i64: 1, 256>}, {pipeline_mode = #tpu.pipeline_mode<synchronous>, transform_indices = @transform_4, window_bounds = array<i64: 1, 256>}, {transform_indices = @transform_5, window_bounds = array<i64: 256, 512>}, {transform_indices = @transform_6, window_bounds = array<i64: 512, 256>}, {pipeline_mode = #tpu.pipeline_mode<synchronous>, transform_indices = @transform_7, window_bounds = array<i64: 256, 256>}, {transform_indices = @transform_8, window_bounds = array<i64: 256, 256>}]} {
    %c0_i32 = arith.constant 0 : i32
    %0 = arith.cmpi eq, %arg1, %c0_i32 : i32
    %1 = arith.extui %0 : i1 to i32
    %c0_i32_0 = arith.constant 0 : i32
    %2 = arith.cmpi ne, %1, %c0_i32_0 : i32
    scf.if %2 {
      %c0_13 = arith.constant 0 : index
      %c0_14 = arith.constant 0 : index
      %18 = vector.load %arg2[%c0_13, %c0_14] : memref<256x256xbf16, #tpu.memory_space<vmem>>, vector<256x256xbf16>
      %19 = arith.extf %18 : vector<256x256xbf16> to vector<256x256xf32>
      %c1_i32_15 = arith.constant 1 : i32
      %20 = tpu.dynamic_rotate %19 by %c1_i32_15 dim 0 : vector<256x256xf32>, i32 -> vector<256x256xf32>
      %21 = tpu.iota {dimensions = array<i32: 0>} : vector<256x1xi32>
      %c0_16 = arith.constant 0 : index
      %c0_17 = arith.constant 0 : index
      %c0_18 = arith.constant 0 : index
      %22 = vector.load %arg3[%c0_16, %c0_17, %c0_18] : memref<1x1x256xbf16, #tpu.memory_space<vmem>>, vector<1x1x256xbf16>
      %23 = vector.shape_cast %22 : vector<1x1x256xbf16> to vector<1x256xbf16>
      %24 = arith.extf %23 : vector<1x256xbf16> to vector<1x256xf32>
      %c0_i32_19 = arith.constant 0 : i32
      %25 = vector.broadcast %c0_i32_19 : i32 to vector<256x1xi32>
      %26 = arith.cmpi eq, %21, %25 : vector<256x1xi32>
      %27 = vector.shape_cast %26 : vector<256x1xi1> to vector<256x1xi1>
      %28 = vector.broadcast %27 : vector<256x1xi1> to vector<256x256xi1>
      %29 = vector.shape_cast %24 : vector<1x256xf32> to vector<1x256xf32>
      %30 = vector.broadcast %29 : vector<1x256xf32> to vector<256x256xf32>
      %31 = arith.select %28, %30, %20 : vector<256x256xi1>, vector<256x256xf32>
      %c0_20 = arith.constant 0 : index
      %c0_21 = arith.constant 0 : index
      %32 = vector.load %arg4[%c0_20, %c0_21] : memref<256x1xf32, #tpu.memory_space<vmem>>, vector<256x1xf32>
      %33 = vector.broadcast %32 : vector<256x1xf32> to vector<256x256xf32>
      %34 = arith.mulf %31, %33 : vector<256x256xf32>
      %35 = arith.subf %34, %19 : vector<256x256xf32>
      %c0_22 = arith.constant 0 : index
      %c0_23 = arith.constant 0 : index
      %36 = vector.load %arg5[%c0_22, %c0_23] : memref<1x256xf32, #tpu.memory_space<vmem>>, vector<1x256xf32>
      %37 = vector.broadcast %36 : vector<1x256xf32> to vector<256x256xf32>
      %38 = arith.mulf %35, %37 : vector<256x256xf32>
      %39 = arith.addf %19, %38 : vector<256x256xf32>
      %c0_24 = arith.constant 0 : index
      %c0_25 = arith.constant 0 : index
      %40 = vector.load %arg6[%c0_24, %c0_25] : memref<1x256xf32, #tpu.memory_space<vmem>>, vector<1x256xf32>
      %41 = vector.broadcast %40 : vector<1x256xf32> to vector<256x256xf32>
      %42 = arith.mulf %35, %41 : vector<256x256xf32>
      %43 = arith.addf %19, %42 : vector<256x256xf32>
      %44 = arith.truncf %39 : vector<256x256xf32> to vector<256x256xbf16>
      %c0_26 = arith.constant 0 : index
      %c0_27 = arith.constant 0 : index
      %45 = vector.load %arg11[%c0_26, %c0_27] : memref<256x256xbf16, #tpu.memory_space<vmem>>, vector<256x256xbf16>
      tpu.vector_store %arg11[%c0_26, %c0_27], %44 {strides = array<i32>} : memref<256x256xbf16, #tpu.memory_space<vmem>>, vector<256x256xbf16>,
      %46 = arith.truncf %43 : vector<256x256xf32> to vector<256x256xbf16>
      %c0_28 = arith.constant 0 : index
      %c0_29 = arith.constant 0 : index
      %47 = vector.load %arg9[%c0_28, %c0_29] : memref<256x256xbf16, #tpu.memory_space<vmem>>, vector<256x256xbf16>
      %cst_30 = arith.constant dense<0.000000e+00> : vector<256x256xf32>
      %48 = tpu.matmul %46, %47, %cst_30 {dimension_numbers = #tpu.dot_dimension_numbers<[1], [0], [0], [1], [0, 0, 1, 1], [], []>} : vector<256x256xbf16>, vector<256x256xbf16>, vector<256x256xf32> -> vector<256x256xf32>
      %49 = arith.negf %48 : vector<256x256xf32>
      %50 = math.exp %49 : vector<256x256xf32>
      %cst_31 = arith.constant 1.000000e+00 : f32
      %51 = vector.broadcast %cst_31 : f32 to vector<256x256xf32>
      %52 = arith.addf %51, %50 : vector<256x256xf32>
      %53 = arith.divf %51, %52 : vector<256x256xf32>
      %c0_32 = arith.constant 0 : index
      %c0_33 = arith.constant 0 : index
      %54 = vector.load %arg12[%c0_32, %c0_33] : memref<256x256xf32, #tpu.memory_space<vmem>>, vector<256x256xf32>
      tpu.vector_store %arg12[%c0_32, %c0_33], %53 {strides = array<i32>} : memref<256x256xf32, #tpu.memory_space<vmem>>, vector<256x256xf32>,
      %cst_34 = arith.constant 0.000000e+00 : f32
      %55 = vector.broadcast %cst_34 : f32 to vector<256x256xf32>
      %c0_35 = arith.constant 0 : index
      %c0_36 = arith.constant 0 : index
      %56 = vector.load %arg13[%c0_35, %c0_36] : memref<256x256xf32, #tpu.memory_space<vmem>>, vector<256x256xf32>
      tpu.vector_store %arg13[%c0_35, %c0_36], %55 {strides = array<i32>} : memref<256x256xf32, #tpu.memory_space<vmem>>, vector<256x256xf32>,
    } else {
    }
    %c0 = arith.constant 0 : index
    %c0_1 = arith.constant 0 : index
    %3 = vector.load %arg11[%c0, %c0_1] : memref<256x256xbf16, #tpu.memory_space<vmem>>, vector<256x256xbf16>
    %c0_2 = arith.constant 0 : index
    %c0_3 = arith.constant 0 : index
    %4 = vector.load %arg7[%c0_2, %c0_3] : memref<256x512xbf16, #tpu.memory_space<vmem>>, vector<256x512xbf16>
    %cst = arith.constant dense<0.000000e+00> : vector<256x512xf32>
    %5 = tpu.matmul %3, %4, %cst {dimension_numbers = #tpu.dot_dimension_numbers<[1], [0], [0], [1], [0, 0, 1, 1], [], []>} : vector<256x256xbf16>, vector<256x512xbf16>, vector<256x512xf32> -> vector<256x512xf32>
    %cst_4 = arith.constant 0.000000e+00 : f32
    %6 = vector.broadcast %cst_4 : f32 to vector<256x512xf32>
    %7 = arith.maximumf %5, %6 : vector<256x512xf32>
    %8 = arith.mulf %7, %7 : vector<256x512xf32>
    %c0_5 = arith.constant 0 : index
    %c0_6 = arith.constant 0 : index
    %9 = vector.load %arg13[%c0_5, %c0_6] : memref<256x256xf32, #tpu.memory_space<vmem>>, vector<256x256xf32>
    %10 = arith.truncf %8 : vector<256x512xf32> to vector<256x512xbf16>
    %c0_7 = arith.constant 0 : index
    %c0_8 = arith.constant 0 : index
    %11 = vector.load %arg8[%c0_7, %c0_8] : memref<512x256xbf16, #tpu.memory_space<vmem>>, vector<512x256xbf16>
    %cst_9 = arith.constant dense<0.000000e+00> : vector<256x256xf32>
    %12 = tpu.matmul %10, %11, %cst_9 {dimension_numbers = #tpu.dot_dimension_numbers<[1], [0], [0], [1], [0, 0, 1, 1], [], []>} : vector<256x512xbf16>, vector<512x256xbf16>, vector<256x256xf32> -> vector<256x256xf32>
    %13 = arith.addf %9, %12 : vector<256x256xf32>
    %c0_10 = arith.constant 0 : index
    %c0_11 = arith.constant 0 : index
    %14 = vector.load %arg13[%c0_10, %c0_11] : memref<256x256xf32, #tpu.memory_space<vmem>>, vector<256x256xf32>
    tpu.vector_store %arg13[%c0_10, %c0_11], %13 {strides = array<i32>} : memref<256x256xf32, #tpu.memory_space<vmem>>, vector<256x256xf32>,
    %c1_i32 = arith.constant 1 : i32
    %15 = arith.cmpi eq, %arg1, %c1_i32 : i32
    %16 = arith.extui %15 : i1 to i32
    %c0_i32_12 = arith.constant 0 : i32
    %17 = arith.cmpi ne, %16, %c0_i32_12 : i32
    scf.if %17 {
      %c0_13 = arith.constant 0 : index
      %c0_14 = arith.constant 0 : index
      %18 = vector.load %arg12[%c0_13, %c0_14] : memref<256x256xf32, #tpu.memory_space<vmem>>, vector<256x256xf32>
      %c0_15 = arith.constant 0 : index
      %c0_16 = arith.constant 0 : index
      %19 = vector.load %arg13[%c0_15, %c0_16] : memref<256x256xf32, #tpu.memory_space<vmem>>, vector<256x256xf32>
      %20 = arith.mulf %18, %19 : vector<256x256xf32>
      %c0_17 = arith.constant 0 : index
      %c0_18 = arith.constant 0 : index
      %21 = vector.load %arg10[%c0_17, %c0_18] : memref<256x256xf32, #tpu.memory_space<vmem>>, vector<256x256xf32>
      tpu.vector_store %arg10[%c0_17, %c0_18], %20 {strides = array<i32>} : memref<256x256xf32, #tpu.memory_space<vmem>>, vector<256x256xf32>,
    } else {
    }
    return
  }
  func.func @transform_0(%arg0: i32, %arg1: i32) -> (i32, i32) {
    %c0_i32 = arith.constant 0 : i32
    %c0_i32_0 = arith.constant 0 : i32
    return %arg0, %c0_i32 : i32, i32
  }
  func.func @transform_1(%arg0: i32, %arg1: i32) -> (i32, i32, i32) {
    %c0_i32 = arith.constant 0 : i32
    %c0_i32_0 = arith.constant 0 : i32
    %c0_i32_1 = arith.constant 0 : i32
    return %arg0, %c0_i32, %c0_i32_0 : i32, i32, i32
  }
  func.func @transform_2(%arg0: i32, %arg1: i32) -> (i32, i32) {
    %c0_i32 = arith.constant 0 : i32
    %c0_i32_0 = arith.constant 0 : i32
    return %arg0, %c0_i32 : i32, i32
  }
  func.func @transform_3(%arg0: i32, %arg1: i32) -> (i32, i32) {
    %c0_i32 = arith.constant 0 : i32
    %c0_i32_0 = arith.constant 0 : i32
    %c0_i32_1 = arith.constant 0 : i32
    return %c0_i32, %c0_i32_0 : i32, i32
  }
  func.func @transform_4(%arg0: i32, %arg1: i32) -> (i32, i32) {
    %c0_i32 = arith.constant 0 : i32
    %c0_i32_0 = arith.constant 0 : i32
    %c0_i32_1 = arith.constant 0 : i32
    return %c0_i32, %c0_i32_0 : i32, i32
  }
  func.func @transform_5(%arg0: i32, %arg1: i32) -> (i32, i32) {
    %c0_i32 = arith.constant 0 : i32
    %c0_i32_0 = arith.constant 0 : i32
    return %c0_i32, %arg1 : i32, i32
  }
  func.func @transform_6(%arg0: i32, %arg1: i32) -> (i32, i32) {
    %c0_i32 = arith.constant 0 : i32
    %c0_i32_0 = arith.constant 0 : i32
    return %arg1, %c0_i32 : i32, i32
  }
  func.func @transform_7(%arg0: i32, %arg1: i32) -> (i32, i32) {
    %c0_i32 = arith.constant 0 : i32
    %c0_i32_0 = arith.constant 0 : i32
    %c0_i32_1 = arith.constant 0 : i32
    return %c0_i32, %c0_i32_0 : i32, i32
  }
  func.func @transform_8(%arg0: i32, %arg1: i32) -> (i32, i32) {
    %c0_i32 = arith.constant 0 : i32
    %c0_i32_0 = arith.constant 0 : i32
    return %arg0, %c0_i32 : i32, i32
  }
}

</mosaic_0001>

<llo_original>
// kernel: tpu_custom_call.1
$region0: #{tpu_custom_call.1}
  #allocation0 [shape = 'u32[]', space=smem, size = 0x4, offset = 0x4, fixed_abs, tag = 'smem constant byte address 0x4 - core index']
  #allocation1 [shape = 'u32[72,128]{1,0:T(1,128)}', space=vmem, size = 0x9000, scoped, tag = 'internal scratch']
  #allocation2 [shape = 'bf16[256,256]{1,0:T(8,128)(2,1)}', space=vmem, size = 0x20000, scoped, tag = 'scratch operand']
  #allocation3 [shape = 'f32[256,256]{1,0:T(8,128)}', space=vmem, size = 0x40000, scoped, tag = 'scratch operand']
  #allocation4 [shape = 'f32[256,256]{1,0:T(8,128)}', space=vmem, size = 0x40000, scoped, tag = 'scratch operand']
  %s0 = inlined_call_operand.vmem [shape: bf16[512,256], index: 0, kind: input, shape index: {}]
  %s1 = inlined_call_operand.vmem [shape: bf16[2,1,256], index: 1, kind: input, shape index: {}]
  %s2 = inlined_call_operand.vmem [shape: f32[512,1], index: 2, kind: input, shape index: {}]
  %s3 = inlined_call_operand.vmem [shape: f32[1,256], index: 3, kind: input, shape index: {}]
  %s4 = inlined_call_operand.vmem [shape: f32[1,256], index: 4, kind: input, shape index: {}]
  %s5 = inlined_call_operand.hbm [shape: bf16[256,1024], index: 5, kind: input, shape index: {}]
  %s6 = inlined_call_operand.hbm [shape: bf16[1024,256], index: 6, kind: input, shape index: {}]
  %s7 = inlined_call_operand.hbm [shape: bf16[256,256], index: 7, kind: input, shape index: {}]
  %s8 = inlined_call_operand.hbm [shape: f32[512,256], index: 8, kind: output, shape index: {}]
  %s9 = sld [smem:[#allocation0]]
  $region85: #{tpu_custom_call.1} parent=0
    _
  %s11 = ssub.s32 1, %s9
  %s12 = scalar_select 0, %s11, %s9
  $region1: #{tpu_custom_call.1} parent=0
    #allocation5 [shape = 'u8[524288]{0}', space=vmem, size = 0x80000, scoped, tag = 'input window, operand 5']
    #allocation6 [shape = 's32[2]{0}', space=sflag, size = 0x8, scoped, tag = 'scoped memory for tpu_custom_call.1']
    #allocation7 [shape = 's32[2]{0}', space=sflag, size = 0x8, scoped, tag = 'scoped memory for tpu_custom_call.1']
    #allocation8 [shape = 'u8[524288]{0}', space=vmem, size = 0x80000, scoped, tag = 'input window, operand 6']
    #allocation9 [shape = 's32[2]{0}', space=sflag, size = 0x8, scoped, tag = 'scoped memory for tpu_custom_call.1']
    #allocation10 [shape = 'u8[131072]{0}', space=vmem, size = 0x20000, scoped, tag = 'input window, operand 7, single buffered']
    #allocation11 [shape = 'u8[524288]{0}', space=vmem, size = 0x80000, scoped, tag = 'output window, operand 0']
    %13 = vsyncpa [#allocation6], 0
    %s14 = scalar_lea.sflag [#allocation6], 1
    %15 = vsyncpa %s14, 0
    %16 = vsyncpa [#allocation9], 0
    %s17 = scalar_lea.sflag [#allocation9], 1
    %18 = vsyncpa %s17, 0
    %19 = vsyncpa [#allocation7], 0
    %s20 = scalar_lea.sflag [#allocation7], 1
    %21 = vsyncpa %s20, 0
    loop: start=0, step=1, limit=6
    $region2: #{tpu_custom_call.1} parent=1 // loop_pre_header
      _
    $region3: #{tpu_custom_call.1} parent=1 // loop_header
      %s23 = sphi 0, %s27
      %p24 = scmp.ge.s32.totalorder %s23, 6
      %s30 = sphi 0, %s42
      %s31 = sphi 0, %s38
      %s32 = sphi 0, %s30
      %s33 = sphi 0, %s31
      %s34 = sphi 0, %s32
      %s35 = sphi 0, %s33
      %s45 = sphi 0, %s47
      %s48 = sphi 0, %s45
      %s49 = sphi 0, %s48
      %s65 = sphi 0, %s49
      %s71 = sphi 0, %s73
      %s74 = sphi 0, %s71
      %s75 = sphi 0, %s74
      %s91 = sphi 0, %s75
      %s97 = sphi 0, %s99
      %s100 = sphi 0, %s97
      %s101 = sphi 0, %s100
      %s117 = sphi 0, %s101
      %s121 = sphi 0, %s121
      %s123 = sphi 0, %s121
      %s124 = sphi 0, %s123
      %s138 = sphi 0, %s124
      %s142 = sphi 0, %s142
      %s144 = sphi 0, %s142
      %s145 = sphi 0, %s144
      %s159 = sphi 0, %s145
      %s165 = sphi 0, %s167
      %s168 = sphi 0, %s165
      %s169 = sphi 0, %s168
      %s185 = sphi 0, %s169
      %s191 = sphi 0, %s193
      %s194 = sphi 0, %s191
      %s195 = sphi 0, %s194
      %s211 = sphi 0, %s195
      %s215 = sphi 0, %s215
      %s217 = sphi 0, %s215
      %s218 = sphi 0, %s217
      %s232 = sphi 0, %s218
      %s238 = sphi 0, %s240
      %s241 = sphi 0, %s238
      %s242 = sphi 0, %s241
      %s258 = sphi 0, %s242
    $region4: #{tpu_custom_call.1} parent=1 // loop_header_branch
      %26 = sbr.rel (%p24) target = $region8
    $region5: #{tpu_custom_call.1} parent=1 // loop_body
      %s28 = ssub.s32 %s23, 1
      %s29 = ssub.s32 %s23, 2
      %s36 = sadd.s32 1, %s31
      %p37 = scmp.ge.s32.totalorder %s36, 2
      %s38 = scalar_select %p37, 0, %s36
      %s39 = sadd.s32 1, %s30
      %s40 = scalar_select %p37, %s39, %s30
      %p41 = scmp.ge.s32.totalorder %s40, 2
      %s42 = scalar_select %p41, 0, %s40
      %s43 = ssub.s32 %s30, %s42
      %p44 = scmp.eq.s32.totalorder %s43, 0
      %s46 = sadd.s32 %s45, 1
      %s47 = scalar_select %p44, %s45, %s46
      %p50 = pneg %p44
      %p51 = scmp.eq.s32.totalorder %s23, 3
      %p52 = por %p50, %p51
      %p53 = scmp.ne.s32.totalorder %s45, %s48
      %p54 = scmp.eq.s32.totalorder %s23, 0
      %p55 = por %p53, %p54
      %p56 = scmp.ne.s32.totalorder %s45, %s48
      %p57 = scmp.eq.s32.totalorder %s28, 3
      %p58 = por %p56, %p57
      %p59 = scmp.ne.s32.totalorder %s48, %s49
      %p60 = scmp.eq.s32.totalorder %s28, 0
      %p61 = por %p59, %p60
      %p62 = scmp.ne.s32.totalorder %s48, %s49
      %p63 = scmp.eq.s32.totalorder %s29, 3
      %p64 = por %p62, %p63
      %p66 = scmp.ne.s32.totalorder %s49, %s65
      %p67 = scmp.eq.s32.totalorder %s29, 0
      %p68 = por %p66, %p67
      %s69 = ssub.s32 %s30, %s42
      %p70 = scmp.eq.s32.totalorder %s69, 0
      %s72 = sadd.s32 %s71, 1
      %s73 = scalar_select %p70, %s71, %s72
      %p76 = pneg %p70
      %p77 = scmp.eq.s32.totalorder %s23, 3
      %p78 = por %p76, %p77
      %p79 = scmp.ne.s32.totalorder %s71, %s74
      %p80 = scmp.eq.s32.totalorder %s23, 0
      %p81 = por %p79, %p80
      %p82 = scmp.ne.s32.totalorder %s71, %s74
      %p83 = scmp.eq.s32.totalorder %s28, 3
      %p84 = por %p82, %p83
      %p85 = scmp.ne.s32.totalorder %s74, %s75
      %p86 = scmp.eq.s32.totalorder %s28, 0
      %p87 = por %p85, %p86
      %p88 = scmp.ne.s32.totalorder %s74, %s75
      %p89 = scmp.eq.s32.totalorder %s29, 3
      %p90 = por %p88, %p89
      %p92 = scmp.ne.s32.totalorder %s75, %s91
      %p93 = scmp.eq.s32.totalorder %s29, 0
      %p94 = por %p92, %p93
      %s95 = ssub.s32 %s30, %s42
      %p96 = scmp.eq.s32.totalorder %s95, 0
      %s98 = sadd.s32 %s97, 1
      %s99 = scalar_select %p96, %s97, %s98
      %p102 = pneg %p96
      %p103 = scmp.eq.s32.totalorder %s23, 3
      %p104 = por %p102, %p103
      %p105 = scmp.ne.s32.totalorder %s97, %s100
      %p106 = scmp.eq.s32.totalorder %s23, 0
      %p107 = por %p105, %p106
      %p108 = scmp.ne.s32.totalorder %s97, %s100
      %p109 = scmp.eq.s32.totalorder %s28, 3
      %p110 = por %p108, %p109
      %p111 = scmp.ne.s32.totalorder %s100, %s101
      %p112 = scmp.eq.s32.totalorder %s28, 0
      %p113 = por %p111, %p112
      %p114 = scmp.ne.s32.totalorder %s100, %s101
      %p115 = scmp.eq.s32.totalorder %s29, 3
      %p116 = por %p114, %p115
      %p118 = scmp.ne.s32.totalorder %s101, %s117
      %p119 = scmp.eq.s32.totalorder %s29, 0
      %p120 = por %p118, %p119
      %s122 = sadd.s32 %s121, 1
      %p125 = scmp.eq.s32.totalorder %s23, 3
      %p126 = scmp.ne.s32.totalorder %s121, %s123
      %p127 = scmp.eq.s32.totalorder %s23, 0
      %p128 = por %p126, %p127
      %p129 = scmp.ne.s32.totalorder %s121, %s123
      %p130 = scmp.eq.s32.totalorder %s28, 3
      %p131 = por %p129, %p130
      %p132 = scmp.ne.s32.totalorder %s123, %s124
      %p133 = scmp.eq.s32.totalorder %s28, 0
      %p134 = por %p132, %p133
      %p135 = scmp.ne.s32.totalorder %s123, %s124
      %p136 = scmp.eq.s32.totalorder %s29, 3
      %p137 = por %p135, %p136
      %p139 = scmp.ne.s32.totalorder %s124, %s138
      %p140 = scmp.eq.s32.totalorder %s29, 0
      %p141 = por %p139, %p140
      %s143 = sadd.s32 %s142, 1
      %p146 = scmp.eq.s32.totalorder %s23, 3
      %p147 = scmp.ne.s32.totalorder %s142, %s144
      %p148 = scmp.eq.s32.totalorder %s23, 0
      %p149 = por %p147, %p148
      %p150 = scmp.ne.s32.totalorder %s142, %s144
      %p151 = scmp.eq.s32.totalorder %s28, 3
      %p152 = por %p150, %p151
      %p153 = scmp.ne.s32.totalorder %s144, %s145
      %p154 = scmp.eq.s32.totalorder %s28, 0
      %p155 = por %p153, %p154
      %p156 = scmp.ne.s32.totalorder %s144, %s145
      %p157 = scmp.eq.s32.totalorder %s29, 3
      %p158 = por %p156, %p157
      %p160 = scmp.ne.s32.totalorder %s145, %s159
      %p161 = scmp.eq.s32.totalorder %s29, 0
      %p162 = por %p160, %p161
      %s163 = ssub.s32 %s31, %s38
      %p164 = scmp.eq.s32.totalorder %s163, 0
      %s166 = sadd.s32 %s165, 1
      %s167 = scalar_select %p164, %s165, %s166
      %p170 = pneg %p164
      %p171 = scmp.eq.s32.totalorder %s23, 3
      %p172 = por %p170, %p171
      %p173 = scmp.ne.s32.totalorder %s165, %s168
      %p174 = scmp.eq.s32.totalorder %s23, 0
      %p175 = por %p173, %p174
      %p176 = scmp.ne.s32.totalorder %s165, %s168
      %p177 = scmp.eq.s32.totalorder %s28, 3
      %p178 = por %p176, %p177
      %p179 = scmp.ne.s32.totalorder %s168, %s169
      %p180 = scmp.eq.s32.totalorder %s28, 0
      %p181 = por %p179, %p180
      %p182 = scmp.ne.s32.totalorder %s168, %s169
      %p183 = scmp.eq.s32.totalorder %s29, 3
      %p184 = por %p182, %p183
      %p186 = scmp.ne.s32.totalorder %s169, %s185
      %p187 = scmp.eq.s32.totalorder %s29, 0
      %p188 = por %p186, %p187
      %s189 = ssub.s32 %s31, %s38
      %p190 = scmp.eq.s32.totalorder %s189, 0
      %s192 = sadd.s32 %s191, 1
      %s193 = scalar_select %p190, %s191, %s192
      %p196 = pneg %p190
      %p197 = scmp.eq.s32.totalorder %s23, 3
      %p198 = por %p196, %p197
      %p199 = scmp.ne.s32.totalorder %s191, %s194
      %p200 = scmp.eq.s32.totalorder %s23, 0
      %p201 = por %p199, %p200
      %p202 = scmp.ne.s32.totalorder %s191, %s194
      %p203 = scmp.eq.s32.totalorder %s28, 3
      %p204 = por %p202, %p203
      %p205 = scmp.ne.s32.totalorder %s194, %s195
      %p206 = scmp.eq.s32.totalorder %s28, 0
      %p207 = por %p205, %p206
      %p208 = scmp.ne.s32.totalorder %s194, %s195
      %p209 = scmp.eq.s32.totalorder %s29, 3
      %p210 = por %p208, %p209
      %p212 = scmp.ne.s32.totalorder %s195, %s211
      %p213 = scmp.eq.s32.totalorder %s29, 0
      %p214 = por %p212, %p213
      %s216 = sadd.s32 %s215, 1
      %p219 = scmp.eq.s32.totalorder %s23, 3
      %p220 = scmp.ne.s32.totalorder %s215, %s217
      %p221 = scmp.eq.s32.totalorder %s23, 0
      %p222 = por %p220, %p221
      %p223 = scmp.ne.s32.totalorder %s215, %s217
      %p224 = scmp.eq.s32.totalorder %s28, 3
      %p225 = por %p223, %p224
      %p226 = scmp.ne.s32.totalorder %s217, %s218
      %p227 = scmp.eq.s32.totalorder %s28, 0
      %p228 = por %p226, %p227
      %p229 = scmp.ne.s32.totalorder %s217, %s218
      %p230 = scmp.eq.s32.totalorder %s29, 3
      %p231 = por %p229, %p230
      %p233 = scmp.ne.s32.totalorder %s218, %s232
      %p234 = scmp.eq.s32.totalorder %s29, 0
      %p235 = por %p233, %p234
      %s236 = ssub.s32 %s30, %s42
      %p237 = scmp.eq.s32.totalorder %s236, 0
      %s239 = sadd.s32 %s238, 1
      %s240 = scalar_select %p237, %s238, %s239
      %p243 = pneg %p237
      %p244 = scmp.eq.s32.totalorder %s23, 3
      %p245 = por %p243, %p244
      %p246 = scmp.ne.s32.totalorder %s238, %s241
      %p247 = scmp.eq.s32.totalorder %s23, 0
      %p248 = por %p246, %p247
      %p249 = scmp.ne.s32.totalorder %s238, %s241
      %p250 = scmp.eq.s32.totalorder %s28, 3
      %p251 = por %p249, %p250
      %p252 = scmp.ne.s32.totalorder %s241, %s242
      %p253 = scmp.eq.s32.totalorder %s28, 0
      %p254 = por %p252, %p253
      %p255 = scmp.ne.s32.totalorder %s241, %s242
      %p256 = scmp.eq.s32.totalorder %s29, 3
      %p257 = por %p255, %p256
      %p259 = scmp.ne.s32.totalorder %s242, %s258
      %p260 = scmp.eq.s32.totalorder %s29, 0
      %p261 = por %p259, %p260
      %p262 = scmp.le.s32.totalorder 1, %s23
      %p263 = scmp.lt.s32.totalorder %s23, 5
      %p264 = pnand %p262, %p263
      %p265 = pneg %p264
      // Predicated region
      $region9: #{tpu_custom_call.1} parent=5 // pred_check
        _
      $region10: #{tpu_custom_call.1} parent=5 // pred_check_branch
        %267 = sbr.rel (%p264) target = $region12
      $region11: #{tpu_custom_call.1} parent=5 // pred_region
        %s268 = ssub.s32 %s23, 1
        // Predicated region
        $region13: #{tpu_custom_call.1} parent=11 // pred_check
          %p269 = pneg %p134
        $region14: #{tpu_custom_call.1} parent=11 // pred_check_branch
          %271 = sbr.rel (%p269) target = $region16
        $region15: #{tpu_custom_call.1} parent=11 // pred_region
          _
        $region16: #{tpu_custom_call.1} parent=11 // pred_fallthru
          _
        // Predicated region
        $region17: #{tpu_custom_call.1} parent=11 // pred_check
          %p272 = pneg %p155
        $region18: #{tpu_custom_call.1} parent=11 // pred_check_branch
          %274 = sbr.rel (%p272) target = $region20
        $region19: #{tpu_custom_call.1} parent=11 // pred_region
          _
        $region20: #{tpu_custom_call.1} parent=11 // pred_fallthru
          _
        // Predicated region
        $region21: #{tpu_custom_call.1} parent=11 // pred_check
          %p275 = pneg %p228
        $region22: #{tpu_custom_call.1} parent=11 // pred_check_branch
          %277 = sbr.rel (%p275) target = $region24
        $region23: #{tpu_custom_call.1} parent=11 // pred_region
          %279 = vsyncadd [#allocation9], 0
          %s280 = sshll.u32 %s7, 4
          %s281 = int_to_ptr.hbm [resolvable:$true] %s280
          %s282 = sshll.u32 [#allocation10], 4
          %s283 = int_to_ptr.vmem [resolvable:$true] %s282
          %288 = dma.hbm_to_vmem [thread:$0]  %s281, 4096, %s283, [#allocation9], 128, 128, 8
        $region24: #{tpu_custom_call.1} parent=11 // pred_fallthru
          _
      $region12: #{tpu_custom_call.1} parent=5 // pred_fallthru
        _
      %p289 = scmp.lt.s32.totalorder %s23, 4
      // Predicated region
      $region25: #{tpu_custom_call.1} parent=5 // pred_check
        %p290 = pneg %p289
      $region26: #{tpu_custom_call.1} parent=5 // pred_check_branch
        %292 = sbr.rel (%p290) target = $region28
      $region27: #{tpu_custom_call.1} parent=5 // pred_region
        // Predicated region
        $region29: #{tpu_custom_call.1} parent=27 // pred_check
          %p293 = pneg %p55
        $region30: #{tpu_custom_call.1} parent=27 // pred_check_branch
          %295 = sbr.rel (%p293) target = $region32
        $region31: #{tpu_custom_call.1} parent=27 // pred_region
          %s296 = smul.u32 32, %s30
          %p297 = scmp.lt.s32.totalorder %s296, 63
          %s298 = scalar_select %p297, %s296, 63
          %s299 = smul.addr %s298, 2
          %s300 = smul.addr %s299, 4
          %s301 = scalar_lea.vmem %s0, %s300
          %s302 = smul.u32 32, %s30
        $region32: #{tpu_custom_call.1} parent=27 // pred_fallthru
          _
        // Predicated region
        $region33: #{tpu_custom_call.1} parent=27 // pred_check
          %p303 = pneg %p81
        $region34: #{tpu_custom_call.1} parent=27 // pred_check_branch
          %305 = sbr.rel (%p303) target = $region36
        $region35: #{tpu_custom_call.1} parent=27 // pred_region
          %p306 = scmp.lt.s32.totalorder %s30, 1
          %s307 = scalar_select %p306, %s30, 1
          %s308 = smul.addr %s307, 2
          %s309 = scalar_lea.vmem %s1, %s308
        $region36: #{tpu_custom_call.1} parent=27 // pred_fallthru
          _
        // Predicated region
        $region37: #{tpu_custom_call.1} parent=27 // pred_check
          %p310 = pneg %p107
        $region38: #{tpu_custom_call.1} parent=27 // pred_check_branch
          %312 = sbr.rel (%p310) target = $region40
        $region39: #{tpu_custom_call.1} parent=27 // pred_region
          %s313 = smul.u32 32, %s30
          %p314 = scmp.lt.s32.totalorder %s313, 63
          %s315 = scalar_select %p314, %s313, 63
          %s316 = smul.addr %s315, 8
          %s317 = scalar_lea.vmem %s2, %s316
          %s318 = smul.u32 32, %s30
        $region40: #{tpu_custom_call.1} parent=27 // pred_fallthru
          _
        // Predicated region
        $region41: #{tpu_custom_call.1} parent=27 // pred_check
          %p319 = pneg %p175
        $region42: #{tpu_custom_call.1} parent=27 // pred_check_branch
          %321 = sbr.rel (%p319) target = $region44
        $region43: #{tpu_custom_call.1} parent=27 // pred_region
          %s322 = sand.u32 %s165, 1
          %s323 = scalar_lea.sflag [#allocation6], %s322
          %s324 = sand.u32 %s165, 1
          %s325 = smul.addr %s324, 512
          %s326 = scalar_lea.vmem [#allocation5], %s325
          %s327 = smul.u32 4, %s31
          %329 = vsyncadd %s323, 0
          %s330 = smul.addr %s327, 4
          %s331 = scalar_lea.hbm %s5, %s330
          %s332 = sshll.u32 %s331, 4
          %s333 = int_to_ptr.hbm [resolvable:$true] %s332
          %s334 = sshll.u32 %s326, 4
          %s335 = int_to_ptr.vmem [resolvable:$true] %s334
          %340 = dma.hbm_to_vmem [thread:$0]  %s333, 8192, %s335, %s323, 512, 256, 16
        $region44: #{tpu_custom_call.1} parent=27 // pred_fallthru
          _
        // Predicated region
        $region45: #{tpu_custom_call.1} parent=27 // pred_check
          %p341 = pneg %p201
        $region46: #{tpu_custom_call.1} parent=27 // pred_check_branch
          %343 = sbr.rel (%p341) target = $region48
        $region47: #{tpu_custom_call.1} parent=27 // pred_region
          %s344 = sand.u32 %s23, 1
          %s345 = scalar_lea.sflag [#allocation9], %s344
          %s346 = sand.u32 %s191, 1
          %s347 = smul.addr %s346, 512
          %s348 = scalar_lea.vmem [#allocation8], %s347
          %s349 = smul.u32 64, %s31
          %351 = vsyncadd %s345, 0
          %s352 = smul.addr %s349, 2
          %s353 = smul.addr %s352, 4
          %s354 = scalar_lea.hbm %s6, %s353
          %s355 = sshll.u32 %s354, 4
          %s356 = int_to_ptr.hbm [resolvable:$true] %s355
          %s357 = sshll.u32 %s348, 4
          %s358 = int_to_ptr.vmem [resolvable:$true] %s357
          %363 = dma.hbm_to_vmem [thread:$0]  %s356, 8192, %s358, %s345, 128, 128, 8
        $region48: #{tpu_custom_call.1} parent=27 // pred_fallthru
          _
      $region28: #{tpu_custom_call.1} parent=5 // pred_fallthru
        _
      %p364 = scmp.le.s32.totalorder 1, %s23
      %p365 = scmp.lt.s32.totalorder %s23, 5
      %p366 = pnand %p364, %p365
      %p367 = pneg %p366
      // Predicated region
      $region49: #{tpu_custom_call.1} parent=5 // pred_check
        _
      $region50: #{tpu_custom_call.1} parent=5 // pred_check_branch
        %369 = sbr.rel (%p366) target = $region52
      $region51: #{tpu_custom_call.1} parent=5 // pred_region
        %s370 = ssub.s32 %s23, 1
        %s371 = sand.u32 %s168, 1
        %s372 = scalar_lea.sflag [#allocation6], %s371
        %s373 = sand.u32 %s168, 1
        %s374 = smul.addr %s373, 512
        %s375 = scalar_lea.vmem [#allocation5], %s374
        // Predicated region
        $region53: #{tpu_custom_call.1} parent=51 // pred_check
          %p376 = pneg %p181
        $region54: #{tpu_custom_call.1} parent=51 // pred_check_branch
          %378 = sbr.rel (%p376) target = $region56
        $region55: #{tpu_custom_call.1} parent=51 // pred_region
          %380 = dma.done %s372, 8192
        $region56: #{tpu_custom_call.1} parent=51 // pred_fallthru
          _
        %s381 = sand.u32 %s28, 1
        %s382 = scalar_lea.sflag [#allocation9], %s381
        %s383 = sand.u32 %s194, 1
        %s384 = smul.addr %s383, 512
        %s385 = scalar_lea.vmem [#allocation8], %s384
        // Predicated region
        $region57: #{tpu_custom_call.1} parent=51 // pred_check
          %p386 = pneg %p207
        $region58: #{tpu_custom_call.1} parent=51 // pred_check_branch
          %388 = sbr.rel (%p386) target = $region60
        $region59: #{tpu_custom_call.1} parent=51 // pred_region
          %390 = dma.done %s382, 8192
        $region60: #{tpu_custom_call.1} parent=51 // pred_fallthru
          _
        // Predicated region
        $region61: #{tpu_custom_call.1} parent=51 // pred_check
          %p391 = pneg %p228
        $region62: #{tpu_custom_call.1} parent=51 // pred_check_branch
          %393 = sbr.rel (%p391) target = $region64
        $region63: #{tpu_custom_call.1} parent=51 // pred_region
          %395 = dma.done [#allocation9], 4096
        $region64: #{tpu_custom_call.1} parent=51 // pred_fallthru
          _
        %s396 = smul.u32 32, %s32
        %p397 = scmp.lt.s32.totalorder %s396, 63
        %s398 = scalar_select %p397, %s396, 63
        %s399 = smul.addr %s398, 2
        %s400 = smul.addr %s399, 4
        %s401 = scalar_lea.vmem %s0, %s400
        %p402 = pneg %p61
        %p403 = pneg %p58
        %p404 = scmp.lt.s32.totalorder %s32, 1
        %s405 = scalar_select %p404, %s32, 1
        %s406 = smul.addr %s405, 2
        %s407 = scalar_lea.vmem %s1, %s406
        %p408 = pneg %p87
        %p409 = pneg %p84
        %s410 = smul.u32 32, %s32
        %p411 = scmp.lt.s32.totalorder %s410, 63
        %s412 = scalar_select %p411, %s410, 63
        %s413 = smul.addr %s412, 8
        %s414 = scalar_lea.vmem %s2, %s413
        %p415 = pneg %p113
        %p416 = pneg %p110
        %p417 = pneg %p134
        %p418 = pneg %p131
        %p419 = pneg %p155
        %p420 = pneg %p152
        %s421 = sand.u32 %s168, 1
        %s422 = scalar_lea.sflag [#allocation6], %s421
        %s423 = sand.u32 %s168, 1
        %s424 = smul.addr %s423, 512
        %s425 = scalar_lea.vmem [#allocation5], %s424
        %p426 = pneg %p181
        %p427 = pneg %p178
        %s428 = sand.u32 %s28, 1
        %s429 = scalar_lea.sflag [#allocation9], %s428
        %s430 = sand.u32 %s194, 1
        %s431 = smul.addr %s430, 512
        %s432 = scalar_lea.vmem [#allocation8], %s431
        %p433 = pneg %p207
        %p434 = pneg %p204
        %p435 = pneg %p228
        %p436 = pneg %p225
        %p437 = pneg %p254
        %p438 = pneg %p251
        %s439 = sand.u32 %s241, 1
        %s440 = scalar_lea.sflag [#allocation7], %s439
        %s441 = sand.u32 %s241, 1
        %s442 = smul.addr %s441, 512
        %s443 = scalar_lea.vmem [#allocation11], %s442
        %s444 = smul.u32 32, %s32
        %p445 = scmp.lt.s32.totalorder %s444, 63
        %s446 = scalar_select %p445, %s444, 63
        %s447 = smul.addr %s446, 2
        %s448 = smul.addr %s447, 4
        %s449 = scalar_lea.vmem %s0, %s448
        %s450 = smul.u32 32, %s32
        %p451 = scmp.lt.s32.totalorder %s32, 1
        %s452 = scalar_select %p451, %s32, 1
        %s453 = smul.addr %s452, 2
        %s454 = scalar_lea.vmem %s1, %s453
        %s455 = smul.u32 32, %s32
        %p456 = scmp.lt.s32.totalorder %s455, 63
        %s457 = scalar_select %p456, %s455, 63
        %s458 = smul.addr %s457, 8
        %s459 = scalar_lea.vmem %s2, %s458
        %s460 = smul.u32 32, %s32
        %s461 = smul.u32 4, %s33
        %s462 = smul.u32 64, %s33
        %s463 = smul.u32 32, %s32
        %p464 = scmp.eq.s32.totalorder %s33, 0
        // Predicated region
        $region65: #{tpu_custom_call.1} parent=51 // pred_check
          %p465 = pneg %p464
        $region66: #{tpu_custom_call.1} parent=51 // pred_check_branch
          %467 = sbr.rel (%p465) target = $region68
        $region67: #{tpu_custom_call.1} parent=51 // pred_region
          %v468 = vld [vmem:[%s449] sm:$0xff]
          %v469 = vld [vmem:[%s449 + $0x8] sm:$0xff]
          %v470 = vld [vmem:[%s449 + $0x10] sm:$0xff]
          %v471 = vld [vmem:[%s449 + $0x18] sm:$0xff]
          %v472 = vld [vmem:[%s449 + $0x20] sm:$0xff]
          %v473 = vld [vmem:[%s449 + $0x28] sm:$0xff]
          %v474 = vld [vmem:[%s449 + $0x30] sm:$0xff]
          %v475 = vld [vmem:[%s449 + $0x38] sm:$0xff]
          %v476 = vld [vmem:[%s449 + $0x40] sm:$0xff]
          %v477 = vld [vmem:[%s449 + $0x48] sm:$0xff]
          %v478 = vld [vmem:[%s449 + $0x50] sm:$0xff]
          %v479 = vld [vmem:[%s449 + $0x58] sm:$0xff]
          %v480 = vld [vmem:[%s449 + $0x60] sm:$0xff]
          %v481 = vld [vmem:[%s449 + $0x68] sm:$0xff]
          %v482 = vld [vmem:[%s449 + $0x70] sm:$0xff]
          %v483 = vld [vmem:[%s449 + $0x78] sm:$0xff]
          %v484 = vld [vmem:[%s449 + $0x80] sm:$0xff]
          %v485 = vld [vmem:[%s449 + $0x88] sm:$0xff]
          %v486 = vld [vmem:[%s449 + $0x90] sm:$0xff]
          %v487 = vld [vmem:[%s449 + $0x98] sm:$0xff]
          %v488 = vld [vmem:[%s449 + $0xa0] sm:$0xff]
          %v489 = vld [vmem:[%s449 + $0xa8] sm:$0xff]
          %v490 = vld [vmem:[%s449 + $0xb0] sm:$0xff]
          %v491 = vld [vmem:[%s449 + $0xb8] sm:$0xff]
          %v492 = vld [vmem:[%s449 + $0xc0] sm:$0xff]
          %v493 = vld [vmem:[%s449 + $0xc8] sm:$0xff]
          %v494 = vld [vmem:[%s449 + $0xd0] sm:$0xff]
          %v495 = vld [vmem:[%s449 + $0xd8] sm:$0xff]
          %v496 = vld [vmem:[%s449 + $0xe0] sm:$0xff]
          %v497 = vld [vmem:[%s449 + $0xe8] sm:$0xff]
          %v498 = vld [vmem:[%s449 + $0xf0] sm:$0xff]
          %v499 = vld [vmem:[%s449 + $0xf8] sm:$0xff]
          %v500 = vunpack.c.l.bf16 %v468
          %v501 = vunpack.c.h.bf16 %v468
          %v502 = vunpack.c.l.bf16 %v469
          %v503 = vunpack.c.h.bf16 %v469
          %v504 = vunpack.c.l.bf16 %v470
          %v505 = vunpack.c.h.bf16 %v470
          %v506 = vunpack.c.l.bf16 %v471
          %v507 = vunpack.c.h.bf16 %v471
          %v508 = vunpack.c.l.bf16 %v472
          %v509 = vunpack.c.h.bf16 %v472
          %v510 = vunpack.c.l.bf16 %v473
          %v511 = vunpack.c.h.bf16 %v473
          %v512 = vunpack.c.l.bf16 %v474
          %v513 = vunpack.c.h.bf16 %v474
          %v514 = vunpack.c.l.bf16 %v475
          %v515 = vunpack.c.h.bf16 %v475
          %v516 = vunpack.c.l.bf16 %v476
          %v517 = vunpack.c.h.bf16 %v476
          %v518 = vunpack.c.l.bf16 %v477
          %v519 = vunpack.c.h.bf16 %v477
          %v520 = vunpack.c.l.bf16 %v478
          %v521 = vunpack.c.h.bf16 %v478
          %v522 = vunpack.c.l.bf16 %v479
          %v523 = vunpack.c.h.bf16 %v479
          %v524 = vunpack.c.l.bf16 %v480
          %v525 = vunpack.c.h.bf16 %v480
          %v526 = vunpack.c.l.bf16 %v481
          %v527 = vunpack.c.h.bf16 %v481
          %v528 = vunpack.c.l.bf16 %v482
          %v529 = vunpack.c.h.bf16 %v482
          %v530 = vunpack.c.l.bf16 %v483
          %v531 = vunpack.c.h.bf16 %v483
          %v532 = vunpack.c.l.bf16 %v484
          %v533 = vunpack.c.h.bf16 %v484
          %v534 = vunpack.c.l.bf16 %v485
          %v535 = vunpack.c.h.bf16 %v485
          %v536 = vunpack.c.l.bf16 %v486
          %v537 = vunpack.c.h.bf16 %v486
          %v538 = vunpack.c.l.bf16 %v487
          %v539 = vunpack.c.h.bf16 %v487
          %v540 = vunpack.c.l.bf16 %v488
          %v541 = vunpack.c.h.bf16 %v488
          %v542 = vunpack.c.l.bf16 %v489
          %v543 = vunpack.c.h.bf16 %v489
          %v544 = vunpack.c.l.bf16 %v490
          %v545 = vunpack.c.h.bf16 %v490
          %v546 = vunpack.c.l.bf16 %v491
          %v547 = vunpack.c.h.bf16 %v491
          %v548 = vunpack.c.l.bf16 %v492
          %v549 = vunpack.c.h.bf16 %v492
          %v550 = vunpack.c.l.bf16 %v493
          %v551 = vunpack.c.h.bf16 %v493
          %v552 = vunpack.c.l.bf16 %v494
          %v553 = vunpack.c.h.bf16 %v494
          %v554 = vunpack.c.l.bf16 %v495
          %v555 = vunpack.c.h.bf16 %v495
          %v556 = vunpack.c.l.bf16 %v496
          %v557 = vunpack.c.h.bf16 %v496
          %v558 = vunpack.c.l.bf16 %v497
          %v559 = vunpack.c.h.bf16 %v497
          %v560 = vunpack.c.l.bf16 %v498
          %v561 = vunpack.c.h.bf16 %v498
          %v562 = vunpack.c.l.bf16 %v499
          %v563 = vunpack.c.h.bf16 %v499
          %v564 = vrot.slane %v500, 7
          %v565 = vrot.slane %v501, 7
          %v566 = vrot.slane %v502, 7
          %v567 = vrot.slane %v503, 7
          %v568 = vrot.slane %v504, 7
          %v569 = vrot.slane %v505, 7
          %v570 = vrot.slane %v506, 7
          %v571 = vrot.slane %v507, 7
          %v572 = vrot.slane %v508, 7
          %v573 = vrot.slane %v509, 7
          %v574 = vrot.slane %v510, 7
          %v575 = vrot.slane %v511, 7
          %v576 = vrot.slane %v512, 7
          %v577 = vrot.slane %v513, 7
          %v578 = vrot.slane %v514, 7
          %v579 = vrot.slane %v515, 7
          %v580 = vrot.slane %v516, 7
          %v581 = vrot.slane %v517, 7
          %v582 = vrot.slane %v518, 7
          %v583 = vrot.slane %v519, 7
          %v584 = vrot.slane %v520, 7
          %v585 = vrot.slane %v521, 7
          %v586 = vrot.slane %v522, 7
          %v587 = vrot.slane %v523, 7
          %v588 = vrot.slane %v524, 7
          %v589 = vrot.slane %v525, 7
          %v590 = vrot.slane %v526, 7
          %v591 = vrot.slane %v527, 7
          %v592 = vrot.slane %v528, 7
          %v593 = vrot.slane %v529, 7
          %v594 = vrot.slane %v530, 7
          %v595 = vrot.slane %v531, 7
          %v596 = vrot.slane %v532, 7
          %v597 = vrot.slane %v533, 7
          %v598 = vrot.slane %v534, 7
          %v599 = vrot.slane %v535, 7
          %v600 = vrot.slane %v536, 7
          %v601 = vrot.slane %v537, 7
          %v602 = vrot.slane %v538, 7
          %v603 = vrot.slane %v539, 7
          %v604 = vrot.slane %v540, 7
          %v605 = vrot.slane %v541, 7
          %v606 = vrot.slane %v542, 7
          %v607 = vrot.slane %v543, 7
          %v608 = vrot.slane %v544, 7
          %v609 = vrot.slane %v545, 7
          %v610 = vrot.slane %v546, 7
          %v611 = vrot.slane %v547, 7
          %v612 = vrot.slane %v548, 7
          %v613 = vrot.slane %v549, 7
          %v614 = vrot.slane %v550, 7
          %v615 = vrot.slane %v551, 7
          %v616 = vrot.slane %v552, 7
          %v617 = vrot.slane %v553, 7
          %v618 = vrot.slane %v554, 7
          %v619 = vrot.slane %v555, 7
          %v620 = vrot.slane %v556, 7
          %v621 = vrot.slane %v557, 7
          %v622 = vrot.slane %v558, 7
          %v623 = vrot.slane %v559, 7
          %v624 = vrot.slane %v560, 7
          %v625 = vrot.slane %v561, 7
          %v626 = vrot.slane %v562, 7
          %v627 = vrot.slane %v563, 7
          %v628 = vlaneseq
          %v629 = vshrl.u32 %v628, 7
          %vm630 = vcmp.lt.s32.totalorder %v629, 1
          %v631 = vsel %vm630, %v624, %v626
          %v632 = vsel %vm630, %v625, %v627
          %v633 = vsel %vm630, %v622, %v624
          %v634 = vsel %vm630, %v623, %v625
          %v635 = vsel %vm630, %v620, %v622
          %v636 = vsel %vm630, %v621, %v623
          %v637 = vsel %vm630, %v618, %v620
          %v638 = vsel %vm630, %v619, %v621
          %v639 = vsel %vm630, %v616, %v618
          %v640 = vsel %vm630, %v617, %v619
          %v641 = vsel %vm630, %v614, %v616
          %v642 = vsel %vm630, %v615, %v617
          %v643 = vsel %vm630, %v612, %v614
          %v644 = vsel %vm630, %v613, %v615
          %v645 = vsel %vm630, %v610, %v612
          %v646 = vsel %vm630, %v611, %v613
          %v647 = vsel %vm630, %v608, %v610
          %v648 = vsel %vm630, %v609, %v611
          %v649 = vsel %vm630, %v606, %v608
          %v650 = vsel %vm630, %v607, %v609
          %v651 = vsel %vm630, %v604, %v606
          %v652 = vsel %vm630, %v605, %v607
          %v653 = vsel %vm630, %v602, %v604
          %v654 = vsel %vm630, %v603, %v605
          %v655 = vsel %vm630, %v600, %v602
          %v656 = vsel %vm630, %v601, %v603
          %v657 = vsel %vm630, %v598, %v600
          %v658 = vsel %vm630, %v599, %v601
          %v659 = vsel %vm630, %v596, %v598
          %v660 = vsel %vm630, %v597, %v599
          %v661 = vsel %vm630, %v594, %v596
          %v662 = vsel %vm630, %v595, %v597
          %v663 = vsel %vm630, %v592, %v594
          %v664 = vsel %vm630, %v593, %v595
          %v665 = vsel %vm630, %v590, %v592
          %v666 = vsel %vm630, %v591, %v593
          %v667 = vsel %vm630, %v588, %v590
          %v668 = vsel %vm630, %v589, %v591
          %v669 = vsel %vm630, %v586, %v588
          %v670 = vsel %vm630, %v587, %v589
          %v671 = vsel %vm630, %v584, %v586
          %v672 = vsel %vm630, %v585, %v587
          %v673 = vsel %vm630, %v582, %v584
          %v674 = vsel %vm630, %v583, %v585
          %v675 = vsel %vm630, %v580, %v582
          %v676 = vsel %vm630, %v581, %v583
          %v677 = vsel %vm630, %v578, %v580
          %v678 = vsel %vm630, %v579, %v581
          %v679 = vsel %vm630, %v576, %v578
          %v680 = vsel %vm630, %v577, %v579
          %v681 = vsel %vm630, %v574, %v576
          %v682 = vsel %vm630, %v575, %v577
          %v683 = vsel %vm630, %v572, %v574
          %v684 = vsel %vm630, %v573, %v575
          %v685 = vsel %vm630, %v570, %v572
          %v686 = vsel %vm630, %v571, %v573
          %v687 = vsel %vm630, %v568, %v570
          %v688 = vsel %vm630, %v569, %v571
          %v689 = vsel %vm630, %v566, %v568
          %v690 = vsel %vm630, %v567, %v569
          %v691 = vsel %vm630, %v564, %v566
          %v692 = vsel %vm630, %v565, %v567
          %v693 = vsel %vm630, %v626, %v564
          %v694 = vsel %vm630, %v627, %v565
          %v695 = vadd.s32 %v629, 8
          %v696 = vadd.s32 %v629, 16
          %v697 = vadd.s32 %v629, 24
          %v698 = vadd.s32 %v629, 32
          %v699 = vadd.s32 %v629, 40
          %v700 = vadd.s32 %v629, 48
          %v701 = vadd.s32 %v629, 56
          %v702 = vadd.s32 %v629, 64
          %v703 = vadd.s32 %v629, 72
          %v704 = vadd.s32 %v629, 80
          %v705 = vadd.s32 %v629, 88
          %v706 = vadd.s32 %v629, 96
          %v707 = vadd.s32 %v629, 104
          %v708 = vadd.s32 %v629, 112
          %v709 = vadd.s32 %v629, 120
          %v710 = vadd.s32 %v629, 128
          %v711 = vadd.s32 %v629, 136
          %v712 = vadd.s32 %v629, 144
          %v713 = vadd.s32 %v629, 152
          %v714 = vadd.s32 %v629, 160
          %v715 = vadd.s32 %v629, 168
          %v716 = vadd.s32 %v629, 176
          %v717 = vadd.s32 %v629, 184
          %v718 = vadd.s32 %v629, 192
          %v719 = vadd.s32 %v629, 200
          %v720 = vadd.s32 %v629, 208
          %v721 = vadd.s32 %v629, 216
          %v722 = vadd.s32 %v629, 224
          %v723 = vadd.s32 %v629, 232
          %v724 = vadd.s32 %v629, 240
          %v725 = vadd.s32 %v629, 248
          %v726 = vld [vmem:[%s454] sm:$0x3]
          %v727 = vunpack.c.l.bf16 %v726
          %vm728 = vcmp.eq.s32.totalorder %v629, 0
          %vm729 = vcmp.eq.s32.totalorder %v695, 0
          %vm730 = vcmp.eq.s32.totalorder %v696, 0
          %vm731 = vcmp.eq.s32.totalorder %v697, 0
          %vm732 = vcmp.eq.s32.totalorder %v698, 0
          %vm733 = vcmp.eq.s32.totalorder %v699, 0
          %vm734 = vcmp.eq.s32.totalorder %v700, 0
          %vm735 = vcmp.eq.s32.totalorder %v701, 0
          %vm736 = vcmp.eq.s32.totalorder %v702, 0
          %vm737 = vcmp.eq.s32.totalorder %v703, 0
          %vm738 = vcmp.eq.s32.totalorder %v704, 0
          %vm739 = vcmp.eq.s32.totalorder %v705, 0
          %vm740 = vcmp.eq.s32.totalorder %v706, 0
          %vm741 = vcmp.eq.s32.totalorder %v707, 0
          %vm742 = vcmp.eq.s32.totalorder %v708, 0
          %vm743 = vcmp.eq.s32.totalorder %v709, 0
          %vm744 = vcmp.eq.s32.totalorder %v710, 0
          %vm745 = vcmp.eq.s32.totalorder %v711, 0
          %vm746 = vcmp.eq.s32.totalorder %v712, 0
          %vm747 = vcmp.eq.s32.totalorder %v713, 0
          %vm748 = vcmp.eq.s32.totalorder %v714, 0
          %vm749 = vcmp.eq.s32.totalorder %v715, 0
          %vm750 = vcmp.eq.s32.totalorder %v716, 0
          %vm751 = vcmp.eq.s32.totalorder %v717, 0
          %vm752 = vcmp.eq.s32.totalorder %v718, 0
          %vm753 = vcmp.eq.s32.totalorder %v719, 0
          %vm754 = vcmp.eq.s32.totalorder %v720, 0
          %vm755 = vcmp.eq.s32.totalorder %v721, 0
          %vm756 = vcmp.eq.s32.totalorder %v722, 0
          %vm757 = vcmp.eq.s32.totalorder %v723, 0
          %vm758 = vcmp.eq.s32.totalorder %v724, 0
          %vm759 = vcmp.eq.s32.totalorder %v725, 0
          %v760 = vsel %vm728, 1, 0
          %v761 = vsel %vm729, 1, 0
          %v762 = vsel %vm730, 1, 0
          %v763 = vsel %vm731, 1, 0
          %v764 = vsel %vm732, 1, 0
          %v765 = vsel %vm733, 1, 0
          %v766 = vsel %vm734, 1, 0
          %v767 = vsel %vm735, 1, 0
          %v768 = vsel %vm736, 1, 0
          %v769 = vsel %vm737, 1, 0
          %v770 = vsel %vm738, 1, 0
          %v771 = vsel %vm739, 1, 0
          %v772 = vsel %vm740, 1, 0
          %v773 = vsel %vm741, 1, 0
          %v774 = vsel %vm742, 1, 0
          %v775 = vsel %vm743, 1, 0
          %v776 = vsel %vm744, 1, 0
          %v777 = vsel %vm745, 1, 0
          %v778 = vsel %vm746, 1, 0
          %v779 = vsel %vm747, 1, 0
          %v780 = vsel %vm748, 1, 0
          %v781 = vsel %vm749, 1, 0
          %v782 = vsel %vm750, 1, 0
          %v783 = vsel %vm751, 1, 0
          %v784 = vsel %vm752, 1, 0
          %v785 = vsel %vm753, 1, 0
          %v786 = vsel %vm754, 1, 0
          %v787 = vsel %vm755, 1, 0
          %v788 = vsel %vm756, 1, 0
          %v789 = vsel %vm757, 1, 0
          %v790 = vsel %vm758, 1, 0
          %v791 = vsel %vm759, 1, 0
          %vm792 = vcmp.eq.s32.totalorder %v760, 1
          %vm793 = vcmp.eq.s32.totalorder %v761, 1
          %vm794 = vcmp.eq.s32.totalorder %v762, 1
          %vm795 = vcmp.eq.s32.totalorder %v763, 1
          %vm796 = vcmp.eq.s32.totalorder %v764, 1
          %vm797 = vcmp.eq.s32.totalorder %v765, 1
          %vm798 = vcmp.eq.s32.totalorder %v766, 1
          %vm799 = vcmp.eq.s32.totalorder %v767, 1
          %vm800 = vcmp.eq.s32.totalorder %v768, 1
          %vm801 = vcmp.eq.s32.totalorder %v769, 1
          %vm802 = vcmp.eq.s32.totalorder %v770, 1
          %vm803 = vcmp.eq.s32.totalorder %v771, 1
          %vm804 = vcmp.eq.s32.totalorder %v772, 1
          %vm805 = vcmp.eq.s32.totalorder %v773, 1
          %vm806 = vcmp.eq.s32.totalorder %v774, 1
          %vm807 = vcmp.eq.s32.totalorder %v775, 1
          %vm808 = vcmp.eq.s32.totalorder %v776, 1
          %vm809 = vcmp.eq.s32.totalorder %v777, 1
          %vm810 = vcmp.eq.s32.totalorder %v778, 1
          %vm811 = vcmp.eq.s32.totalorder %v779, 1
          %vm812 = vcmp.eq.s32.totalorder %v780, 1
          %vm813 = vcmp.eq.s32.totalorder %v781, 1
          %vm814 = vcmp.eq.s32.totalorder %v782, 1
          %vm815 = vcmp.eq.s32.totalorder %v783, 1
          %vm816 = vcmp.eq.s32.totalorder %v784, 1
          %vm817 = vcmp.eq.s32.totalorder %v785, 1
          %vm818 = vcmp.eq.s32.totalorder %v786, 1
          %vm819 = vcmp.eq.s32.totalorder %v787, 1
          %vm820 = vcmp.eq.s32.totalorder %v788, 1
          %vm821 = vcmp.eq.s32.totalorder %v789, 1
          %vm822 = vcmp.eq.s32.totalorder %v790, 1
          %vm823 = vcmp.eq.s32.totalorder %v791, 1
          %v825 = vperm.slane %v727, 0
          %v826 = vperm.slane %v727, 2
          %v829 = vperm.slane %v825, 0
          %v830 = vperm.slane %v826, 0
          %v831 = vsel %vm792, %v829, %v693
          %v832 = vsel %vm792, %v830, %v694
          %v833 = vsel %vm793, %v829, %v691
          %v834 = vsel %vm793, %v830, %v692
          %v835 = vsel %vm794, %v829, %v689
          %v836 = vsel %vm794, %v830, %v690
          %v837 = vsel %vm795, %v829, %v687
          %v838 = vsel %vm795, %v830, %v688
          %v839 = vsel %vm796, %v829, %v685
          %v840 = vsel %vm796, %v830, %v686
          %v841 = vsel %vm797, %v829, %v683
          %v842 = vsel %vm797, %v830, %v684
          %v843 = vsel %vm798, %v829, %v681
          %v844 = vsel %vm798, %v830, %v682
          %v845 = vsel %vm799, %v829, %v679
          %v846 = vsel %vm799, %v830, %v680
          %v847 = vsel %vm800, %v829, %v677
          %v848 = vsel %vm800, %v830, %v678
          %v849 = vsel %vm801, %v829, %v675
          %v850 = vsel %vm801, %v830, %v676
          %v851 = vsel %vm802, %v829, %v673
          %v852 = vsel %vm802, %v830, %v674
          %v853 = vsel %vm803, %v829, %v671
          %v854 = vsel %vm803, %v830, %v672
          %v855 = vsel %vm804, %v829, %v669
          %v856 = vsel %vm804, %v830, %v670
          %v857 = vsel %vm805, %v829, %v667
          %v858 = vsel %vm805, %v830, %v668
          %v859 = vsel %vm806, %v829, %v665
          %v860 = vsel %vm806, %v830, %v666
          %v861 = vsel %vm807, %v829, %v663
          %v862 = vsel %vm807, %v830, %v664
          %v863 = vsel %vm808, %v829, %v661
          %v864 = vsel %vm808, %v830, %v662
          %v865 = vsel %vm809, %v829, %v659
          %v866 = vsel %vm809, %v830, %v660
          %v867 = vsel %vm810, %v829, %v657
          %v868 = vsel %vm810, %v830, %v658
          %v869 = vsel %vm811, %v829, %v655
          %v870 = vsel %vm811, %v830, %v656
          %v871 = vsel %vm812, %v829, %v653
          %v872 = vsel %vm812, %v830, %v654
          %v873 = vsel %vm813, %v829, %v651
          %v874 = vsel %vm813, %v830, %v652
          %v875 = vsel %vm814, %v829, %v649
          %v876 = vsel %vm814, %v830, %v650
          %v877 = vsel %vm815, %v829, %v647
          %v878 = vsel %vm815, %v830, %v648
          %v879 = vsel %vm816, %v829, %v645
          %v880 = vsel %vm816, %v830, %v646
          %v881 = vsel %vm817, %v829, %v643
          %v882 = vsel %vm817, %v830, %v644
          %v883 = vsel %vm818, %v829, %v641
          %v884 = vsel %vm818, %v830, %v642
          %v885 = vsel %vm819, %v829, %v639
          %v886 = vsel %vm819, %v830, %v640
          %v887 = vsel %vm820, %v829, %v637
          %v888 = vsel %vm820, %v830, %v638
          %v889 = vsel %vm821, %v829, %v635
          %v890 = vsel %vm821, %v830, %v636
          %v891 = vsel %vm822, %v829, %v633
          %v892 = vsel %vm822, %v830, %v634
          %v893 = vsel %vm823, %v829, %v631
          %v894 = vsel %vm823, %v830, %v632
          %v895 = vld [vmem:[%s459] sm:$0xff]
          %v896 = vld [vmem:[%s459 + $0x8] sm:$0xff]
          %v897 = vld [vmem:[%s459 + $0x10] sm:$0xff]
          %v898 = vld [vmem:[%s459 + $0x18] sm:$0xff]
          %v899 = vld [vmem:[%s459 + $0x20] sm:$0xff]
          %v900 = vld [vmem:[%s459 + $0x28] sm:$0xff]
          %v901 = vld [vmem:[%s459 + $0x30] sm:$0xff]
          %v902 = vld [vmem:[%s459 + $0x38] sm:$0xff]
          %v903 = vld [vmem:[%s459 + $0x40] sm:$0xff]
          %v904 = vld [vmem:[%s459 + $0x48] sm:$0xff]
          %v905 = vld [vmem:[%s459 + $0x50] sm:$0xff]
          %v906 = vld [vmem:[%s459 + $0x58] sm:$0xff]
          %v907 = vld [vmem:[%s459 + $0x60] sm:$0xff]
          %v908 = vld [vmem:[%s459 + $0x68] sm:$0xff]
          %v909 = vld [vmem:[%s459 + $0x70] sm:$0xff]
          %v910 = vld [vmem:[%s459 + $0x78] sm:$0xff]
          %v911 = vld [vmem:[%s459 + $0x80] sm:$0xff]
          %v912 = vld [vmem:[%s459 + $0x88] sm:$0xff]
          %v913 = vld [vmem:[%s459 + $0x90] sm:$0xff]
          %v914 = vld [vmem:[%s459 + $0x98] sm:$0xff]
          %v915 = vld [vmem:[%s459 + $0xa0] sm:$0xff]
          %v916 = vld [vmem:[%s459 + $0xa8] sm:$0xff]
          %v917 = vld [vmem:[%s459 + $0xb0] sm:$0xff]
          %v918 = vld [vmem:[%s459 + $0xb8] sm:$0xff]
          %v919 = vld [vmem:[%s459 + $0xc0] sm:$0xff]
          %v920 = vld [vmem:[%s459 + $0xc8] sm:$0xff]
          %v921 = vld [vmem:[%s459 + $0xd0] sm:$0xff]
          %v922 = vld [vmem:[%s459 + $0xd8] sm:$0xff]
          %v923 = vld [vmem:[%s459 + $0xe0] sm:$0xff]
          %v924 = vld [vmem:[%s459 + $0xe8] sm:$0xff]
          %v925 = vld [vmem:[%s459 + $0xf0] sm:$0xff]
          %v926 = vld [vmem:[%s459 + $0xf8] sm:$0xff]
          %928 = vset.pattern.permute.xlu0 0
          %929 = vperm.xlu0 %928, %v895
          %v930 = vpop.permute.xlu0 %929
          %933 = vset.pattern.permute.xlu0 0
          %934 = vperm.xlu0 %933, %v896
          %v935 = vpop.permute.xlu0 %934
          %938 = vset.pattern.permute.xlu0 0
          %939 = vperm.xlu0 %938, %v897
          %v940 = vpop.permute.xlu0 %939
          %943 = vset.pattern.permute.xlu0 0
          %944 = vperm.xlu0 %943, %v898
          %v945 = vpop.permute.xlu0 %944
          %948 = vset.pattern.permute.xlu0 0
          %949 = vperm.xlu0 %948, %v899
          %v950 = vpop.permute.xlu0 %949
          %953 = vset.pattern.permute.xlu0 0
          %954 = vperm.xlu0 %953, %v900
          %v955 = vpop.permute.xlu0 %954
          %958 = vset.pattern.permute.xlu0 0
          %959 = vperm.xlu0 %958, %v901
          %v960 = vpop.permute.xlu0 %959
          %963 = vset.pattern.permute.xlu0 0
          %964 = vperm.xlu0 %963, %v902
          %v965 = vpop.permute.xlu0 %964
          %968 = vset.pattern.permute.xlu0 0
          %969 = vperm.xlu0 %968, %v903
          %v970 = vpop.permute.xlu0 %969
          %973 = vset.pattern.permute.xlu0 0
          %974 = vperm.xlu0 %973, %v904
          %v975 = vpop.permute.xlu0 %974
          %978 = vset.pattern.permute.xlu0 0
          %979 = vperm.xlu0 %978, %v905
          %v980 = vpop.permute.xlu0 %979
          %983 = vset.pattern.permute.xlu0 0
          %984 = vperm.xlu0 %983, %v906
          %v985 = vpop.permute.xlu0 %984
          %988 = vset.pattern.permute.xlu0 0
          %989 = vperm.xlu0 %988, %v907
          %v990 = vpop.permute.xlu0 %989
          %993 = vset.pattern.permute.xlu0 0
          %994 = vperm.xlu0 %993, %v908
          %v995 = vpop.permute.xlu0 %994
          %998 = vset.pattern.permute.xlu0 0
          %999 = vperm.xlu0 %998, %v909
          %v1000 = vpop.permute.xlu0 %999
          %1003 = vset.pattern.permute.xlu0 0
          %1004 = vperm.xlu0 %1003, %v910
          %v1005 = vpop.permute.xlu0 %1004
          %1008 = vset.pattern.permute.xlu0 0
          %1009 = vperm.xlu0 %1008, %v911
          %v1010 = vpop.permute.xlu0 %1009
          %1013 = vset.pattern.permute.xlu0 0
          %1014 = vperm.xlu0 %1013, %v912
          %v1015 = vpop.permute.xlu0 %1014
          %1018 = vset.pattern.permute.xlu0 0
          %1019 = vperm.xlu0 %1018, %v913
          %v1020 = vpop.permute.xlu0 %1019
          %1023 = vset.pattern.permute.xlu0 0
          %1024 = vperm.xlu0 %1023, %v914
          %v1025 = vpop.permute.xlu0 %1024
          %1028 = vset.pattern.permute.xlu0 0
          %1029 = vperm.xlu0 %1028, %v915
          %v1030 = vpop.permute.xlu0 %1029
          %1033 = vset.pattern.permute.xlu0 0
          %1034 = vperm.xlu0 %1033, %v916
          %v1035 = vpop.permute.xlu0 %1034
          %1038 = vset.pattern.permute.xlu0 0
          %1039 = vperm.xlu0 %1038, %v917
          %v1040 = vpop.permute.xlu0 %1039
          %1043 = vset.pattern.permute.xlu0 0
          %1044 = vperm.xlu0 %1043, %v918
          %v1045 = vpop.permute.xlu0 %1044
          %1048 = vset.pattern.permute.xlu0 0
          %1049 = vperm.xlu0 %1048, %v919
          %v1050 = vpop.permute.xlu0 %1049
          %1053 = vset.pattern.permute.xlu0 0
          %1054 = vperm.xlu0 %1053, %v920
          %v1055 = vpop.permute.xlu0 %1054
          %1058 = vset.pattern.permute.xlu0 0
          %1059 = vperm.xlu0 %1058, %v921
          %v1060 = vpop.permute.xlu0 %1059
          %1063 = vset.pattern.permute.xlu0 0
          %1064 = vperm.xlu0 %1063, %v922
          %v1065 = vpop.permute.xlu0 %1064
          %1068 = vset.pattern.permute.xlu0 0
          %1069 = vperm.xlu0 %1068, %v923
          %v1070 = vpop.permute.xlu0 %1069
          %1073 = vset.pattern.permute.xlu0 0
          %1074 = vperm.xlu0 %1073, %v924
          %v1075 = vpop.permute.xlu0 %1074
          %1078 = vset.pattern.permute.xlu0 0
          %1079 = vperm.xlu0 %1078, %v925
          %v1080 = vpop.permute.xlu0 %1079
          %1083 = vset.pattern.permute.xlu0 0
          %1084 = vperm.xlu0 %1083, %v926
          %v1085 = vpop.permute.xlu0 %1084
          %v1087 = vmul.f32 %v831, %v930
          %v1088 = vmul.f32 %v832, %v930
          %v1089 = vmul.f32 %v833, %v935
          %v1090 = vmul.f32 %v834, %v935
          %v1091 = vmul.f32 %v835, %v940
          %v1092 = vmul.f32 %v836, %v940
          %v1093 = vmul.f32 %v837, %v945
          %v1094 = vmul.f32 %v838, %v945
          %v1095 = vmul.f32 %v839, %v950
          %v1096 = vmul.f32 %v840, %v950
          %v1097 = vmul.f32 %v841, %v955
          %v1098 = vmul.f32 %v842, %v955
          %v1099 = vmul.f32 %v843, %v960
          %v1100 = vmul.f32 %v844, %v960
          %v1101 = vmul.f32 %v845, %v965
          %v1102 = vmul.f32 %v846, %v965
          %v1103 = vmul.f32 %v847, %v970
          %v1104 = vmul.f32 %v848, %v970
          %v1105 = vmul.f32 %v849, %v975
          %v1106 = vmul.f32 %v850, %v975
          %v1107 = vmul.f32 %v851, %v980
          %v1108 = vmul.f32 %v852, %v980
          %v1109 = vmul.f32 %v853, %v985
          %v1110 = vmul.f32 %v854, %v985
          %v1111 = vmul.f32 %v855, %v990
          %v1112 = vmul.f32 %v856, %v990
          %v1113 = vmul.f32 %v857, %v995
          %v1114 = vmul.f32 %v858, %v995
          %v1115 = vmul.f32 %v859, %v1000
          %v1116 = vmul.f32 %v860, %v1000
          %v1117 = vmul.f32 %v861, %v1005
          %v1118 = vmul.f32 %v862, %v1005
          %v1119 = vmul.f32 %v863, %v1010
          %v1120 = vmul.f32 %v864, %v1010
          %v1121 = vmul.f32 %v865, %v1015
          %v1122 = vmul.f32 %v866, %v1015
          %v1123 = vmul.f32 %v867, %v1020
          %v1124 = vmul.f32 %v868, %v1020
          %v1125 = vmul.f32 %v869, %v1025
          %v1126 = vmul.f32 %v870, %v1025
          %v1127 = vmul.f32 %v871, %v1030
          %v1128 = vmul.f32 %v872, %v1030
          %v1129 = vmul.f32 %v873, %v1035
          %v1130 = vmul.f32 %v874, %v1035
          %v1131 = vmul.f32 %v875, %v1040
          %v1132 = vmul.f32 %v876, %v1040
          %v1133 = vmul.f32 %v877, %v1045
          %v1134 = vmul.f32 %v878, %v1045
          %v1135 = vmul.f32 %v879, %v1050
          %v1136 = vmul.f32 %v880, %v1050
          %v1137 = vmul.f32 %v881, %v1055
          %v1138 = vmul.f32 %v882, %v1055
          %v1139 = vmul.f32 %v883, %v1060
          %v1140 = vmul.f32 %v884, %v1060
          %v1141 = vmul.f32 %v885, %v1065
          %v1142 = vmul.f32 %v886, %v1065
          %v1143 = vmul.f32 %v887, %v1070
          %v1144 = vmul.f32 %v888, %v1070
          %v1145 = vmul.f32 %v889, %v1075
          %v1146 = vmul.f32 %v890, %v1075
          %v1147 = vmul.f32 %v891, %v1080
          %v1148 = vmul.f32 %v892, %v1080
          %v1149 = vmul.f32 %v893, %v1085
          %v1150 = vmul.f32 %v894, %v1085
          %v1151 = vsub.f32 %v1087, %v500
          %v1152 = vsub.f32 %v1088, %v501
          %v1153 = vsub.f32 %v1089, %v502
          %v1154 = vsub.f32 %v1090, %v503
          %v1155 = vsub.f32 %v1091, %v504
          %v1156 = vsub.f32 %v1092, %v505
          %v1157 = vsub.f32 %v1093, %v506
          %v1158 = vsub.f32 %v1094, %v507
          %v1159 = vsub.f32 %v1095, %v508
          %v1160 = vsub.f32 %v1096, %v509
          %v1161 = vsub.f32 %v1097, %v510
          %v1162 = vsub.f32 %v1098, %v511
          %v1163 = vsub.f32 %v1099, %v512
          %v1164 = vsub.f32 %v1100, %v513
          %v1165 = vsub.f32 %v1101, %v514
          %v1166 = vsub.f32 %v1102, %v515
          %v1167 = vsub.f32 %v1103, %v516
          %v1168 = vsub.f32 %v1104, %v517
          %v1169 = vsub.f32 %v1105, %v518
          %v1170 = vsub.f32 %v1106, %v519
          %v1171 = vsub.f32 %v1107, %v520
          %v1172 = vsub.f32 %v1108, %v521
          %v1173 = vsub.f32 %v1109, %v522
          %v1174 = vsub.f32 %v1110, %v523
          %v1175 = vsub.f32 %v1111, %v524
          %v1176 = vsub.f32 %v1112, %v525
          %v1177 = vsub.f32 %v1113, %v526
          %v1178 = vsub.f32 %v1114, %v527
          %v1179 = vsub.f32 %v1115, %v528
          %v1180 = vsub.f32 %v1116, %v529
          %v1181 = vsub.f32 %v1117, %v530
          %v1182 = vsub.f32 %v1118, %v531
          %v1183 = vsub.f32 %v1119, %v532
          %v1184 = vsub.f32 %v1120, %v533
          %v1185 = vsub.f32 %v1121, %v534
          %v1186 = vsub.f32 %v1122, %v535
          %v1187 = vsub.f32 %v1123, %v536
          %v1188 = vsub.f32 %v1124, %v537
          %v1189 = vsub.f32 %v1125, %v538
          %v1190 = vsub.f32 %v1126, %v539
          %v1191 = vsub.f32 %v1127, %v540
          %v1192 = vsub.f32 %v1128, %v541
          %v1193 = vsub.f32 %v1129, %v542
          %v1194 = vsub.f32 %v1130, %v543
          %v1195 = vsub.f32 %v1131, %v544
          %v1196 = vsub.f32 %v1132, %v545
          %v1197 = vsub.f32 %v1133, %v546
          %v1198 = vsub.f32 %v1134, %v547
          %v1199 = vsub.f32 %v1135, %v548
          %v1200 = vsub.f32 %v1136, %v549
          %v1201 = vsub.f32 %v1137, %v550
          %v1202 = vsub.f32 %v1138, %v551
          %v1203 = vsub.f32 %v1139, %v552
          %v1204 = vsub.f32 %v1140, %v553
          %v1205 = vsub.f32 %v1141, %v554
          %v1206 = vsub.f32 %v1142, %v555
          %v1207 = vsub.f32 %v1143, %v556
          %v1208 = vsub.f32 %v1144, %v557
          %v1209 = vsub.f32 %v1145, %v558
          %v1210 = vsub.f32 %v1146, %v559
          %v1211 = vsub.f32 %v1147, %v560
          %v1212 = vsub.f32 %v1148, %v561
          %v1213 = vsub.f32 %v1149, %v562
          %v1214 = vsub.f32 %v1150, %v563
          %v1215 = vld [vmem:[%s3] sm:$0x3]
          %v1217 = vperm.slane %v1215, 0
          %v1218 = vperm.slane %v1215, 1
          %v1221 = vmul.f32 %v1151, %v1217
          %v1222 = vmul.f32 %v1152, %v1218
          %v1223 = vmul.f32 %v1153, %v1217
          %v1224 = vmul.f32 %v1154, %v1218
          %v1225 = vmul.f32 %v1155, %v1217
          %v1226 = vmul.f32 %v1156, %v1218
          %v1227 = vmul.f32 %v1157, %v1217
          %v1228 = vmul.f32 %v1158, %v1218
          %v1229 = vmul.f32 %v1159, %v1217
          %v1230 = vmul.f32 %v1160, %v1218
          %v1231 = vmul.f32 %v1161, %v1217
          %v1232 = vmul.f32 %v1162, %v1218
          %v1233 = vmul.f32 %v1163, %v1217
          %v1234 = vmul.f32 %v1164, %v1218
          %v1235 = vmul.f32 %v1165, %v1217
          %v1236 = vmul.f32 %v1166, %v1218
          %v1237 = vmul.f32 %v1167, %v1217
          %v1238 = vmul.f32 %v1168, %v1218
          %v1239 = vmul.f32 %v1169, %v1217
          %v1240 = vmul.f32 %v1170, %v1218
          %v1241 = vmul.f32 %v1171, %v1217
          %v1242 = vmul.f32 %v1172, %v1218
          %v1243 = vmul.f32 %v1173, %v1217
          %v1244 = vmul.f32 %v1174, %v1218
          %v1245 = vmul.f32 %v1175, %v1217
          %v1246 = vmul.f32 %v1176, %v1218
          %v1247 = vmul.f32 %v1177, %v1217
          %v1248 = vmul.f32 %v1178, %v1218
          %v1249 = vmul.f32 %v1179, %v1217
          %v1250 = vmul.f32 %v1180, %v1218
          %v1251 = vmul.f32 %v1181, %v1217
          %v1252 = vmul.f32 %v1182, %v1218
          %v1253 = vmul.f32 %v1183, %v1217
          %v1254 = vmul.f32 %v1184, %v1218
          %v1255 = vmul.f32 %v1185, %v1217
          %v1256 = vmul.f32 %v1186, %v1218
          %v1257 = vmul.f32 %v1187, %v1217
          %v1258 = vmul.f32 %v1188, %v1218
          %v1259 = vmul.f32 %v1189, %v1217
          %v1260 = vmul.f32 %v1190, %v1218
          %v1261 = vmul.f32 %v1191, %v1217
          %v1262 = vmul.f32 %v1192, %v1218
          %v1263 = vmul.f32 %v1193, %v1217
          %v1264 = vmul.f32 %v1194, %v1218
          %v1265 = vmul.f32 %v1195, %v1217
          %v1266 = vmul.f32 %v1196, %v1218
          %v1267 = vmul.f32 %v1197, %v1217
          %v1268 = vmul.f32 %v1198, %v1218
          %v1269 = vmul.f32 %v1199, %v1217
          %v1270 = vmul.f32 %v1200, %v1218
          %v1271 = vmul.f32 %v1201, %v1217
          %v1272 = vmul.f32 %v1202, %v1218
          %v1273 = vmul.f32 %v1203, %v1217
          %v1274 = vmul.f32 %v1204, %v1218
          %v1275 = vmul.f32 %v1205, %v1217
          %v1276 = vmul.f32 %v1206, %v1218
          %v1277 = vmul.f32 %v1207, %v1217
          %v1278 = vmul.f32 %v1208, %v1218
          %v1279 = vmul.f32 %v1209, %v1217
          %v1280 = vmul.f32 %v1210, %v1218
          %v1281 = vmul.f32 %v1211, %v1217
          %v1282 = vmul.f32 %v1212, %v1218
          %v1283 = vmul.f32 %v1213, %v1217
          %v1284 = vmul.f32 %v1214, %v1218
          %v1285 = vadd.f32 %v500, %v1221
          %v1286 = vadd.f32 %v501, %v1222
          %v1287 = vadd.f32 %v502, %v1223
          %v1288 = vadd.f32 %v503, %v1224
          %v1289 = vadd.f32 %v504, %v1225
          %v1290 = vadd.f32 %v505, %v1226
          %v1291 = vadd.f32 %v506, %v1227
          %v1292 = vadd.f32 %v507, %v1228
          %v1293 = vadd.f32 %v508, %v1229
          %v1294 = vadd.f32 %v509, %v1230
          %v1295 = vadd.f32 %v510, %v1231
          %v1296 = vadd.f32 %v511, %v1232
          %v1297 = vadd.f32 %v512, %v1233
          %v1298 = vadd.f32 %v513, %v1234
          %v1299 = vadd.f32 %v514, %v1235
          %v1300 = vadd.f32 %v515, %v1236
          %v1301 = vadd.f32 %v516, %v1237
          %v1302 = vadd.f32 %v517, %v1238
          %v1303 = vadd.f32 %v518, %v1239
          %v1304 = vadd.f32 %v519, %v1240
          %v1305 = vadd.f32 %v520, %v1241
          %v1306 = vadd.f32 %v521, %v1242
          %v1307 = vadd.f32 %v522, %v1243
          %v1308 = vadd.f32 %v523, %v1244
          %v1309 = vadd.f32 %v524, %v1245
          %v1310 = vadd.f32 %v525, %v1246
          %v1311 = vadd.f32 %v526, %v1247
          %v1312 = vadd.f32 %v527, %v1248
          %v1313 = vadd.f32 %v528, %v1249
          %v1314 = vadd.f32 %v529, %v1250
          %v1315 = vadd.f32 %v530, %v1251
          %v1316 = vadd.f32 %v531, %v1252
          %v1317 = vadd.f32 %v532, %v1253
          %v1318 = vadd.f32 %v533, %v1254
          %v1319 = vadd.f32 %v534, %v1255
          %v1320 = vadd.f32 %v535, %v1256
          %v1321 = vadd.f32 %v536, %v1257
          %v1322 = vadd.f32 %v537, %v1258
          %v1323 = vadd.f32 %v538, %v1259
          %v1324 = vadd.f32 %v539, %v1260
          %v1325 = vadd.f32 %v540, %v1261
          %v1326 = vadd.f32 %v541, %v1262
          %v1327 = vadd.f32 %v542, %v1263
          %v1328 = vadd.f32 %v543, %v1264
          %v1329 = vadd.f32 %v544, %v1265
          %v1330 = vadd.f32 %v545, %v1266
          %v1331 = vadd.f32 %v546, %v1267
          %v1332 = vadd.f32 %v547, %v1268
          %v1333 = vadd.f32 %v548, %v1269
          %v1334 = vadd.f32 %v549, %v1270
          %v1335 = vadd.f32 %v550, %v1271
          %v1336 = vadd.f32 %v551, %v1272
          %v1337 = vadd.f32 %v552, %v1273
          %v1338 = vadd.f32 %v553, %v1274
          %v1339 = vadd.f32 %v554, %v1275
          %v1340 = vadd.f32 %v555, %v1276
          %v1341 = vadd.f32 %v556, %v1277
          %v1342 = vadd.f32 %v557, %v1278
          %v1343 = vadd.f32 %v558, %v1279
          %v1344 = vadd.f32 %v559, %v1280
          %v1345 = vadd.f32 %v560, %v1281
          %v1346 = vadd.f32 %v561, %v1282
          %v1347 = vadd.f32 %v562, %v1283
          %v1348 = vadd.f32 %v563, %v1284
          %v1349 = vld [vmem:[%s4] sm:$0x3]
          %v1351 = vperm.slane %v1349, 0
          %v1352 = vperm.slane %v1349, 1
          %v1355 = vmul.f32 %v1151, %v1351
          %v1356 = vmul.f32 %v1152, %v1352
          %v1357 = vmul.f32 %v1153, %v1351
          %v1358 = vmul.f32 %v1154, %v1352
          %v1359 = vmul.f32 %v1155, %v1351
          %v1360 = vmul.f32 %v1156, %v1352
          %v1361 = vmul.f32 %v1157, %v1351
          %v1362 = vmul.f32 %v1158, %v1352
          %v1363 = vmul.f32 %v1159, %v1351
          %v1364 = vmul.f32 %v1160, %v1352
          %v1365 = vmul.f32 %v1161, %v1351
          %v1366 = vmul.f32 %v1162, %v1352
          %v1367 = vmul.f32 %v1163, %v1351
          %v1368 = vmul.f32 %v1164, %v1352
          %v1369 = vmul.f32 %v1165, %v1351
          %v1370 = vmul.f32 %v1166, %v1352
          %v1371 = vmul.f32 %v1167, %v1351
          %v1372 = vmul.f32 %v1168, %v1352
          %v1373 = vmul.f32 %v1169, %v1351
          %v1374 = vmul.f32 %v1170, %v1352
          %v1375 = vmul.f32 %v1171, %v1351
          %v1376 = vmul.f32 %v1172, %v1352
          %v1377 = vmul.f32 %v1173, %v1351
          %v1378 = vmul.f32 %v1174, %v1352
          %v1379 = vmul.f32 %v1175, %v1351
          %v1380 = vmul.f32 %v1176, %v1352
          %v1381 = vmul.f32 %v1177, %v1351
          %v1382 = vmul.f32 %v1178, %v1352
          %v1383 = vmul.f32 %v1179, %v1351
          %v1384 = vmul.f32 %v1180, %v1352
          %v1385 = vmul.f32 %v1181, %v1351
          %v1386 = vmul.f32 %v1182, %v1352
          %v1387 = vmul.f32 %v1183, %v1351
          %v1388 = vmul.f32 %v1184, %v1352
          %v1389 = vmul.f32 %v1185, %v1351
          %v1390 = vmul.f32 %v1186, %v1352
          %v1391 = vmul.f32 %v1187, %v1351
          %v1392 = vmul.f32 %v1188, %v1352
          %v1393 = vmul.f32 %v1189, %v1351
          %v1394 = vmul.f32 %v1190, %v1352
          %v1395 = vmul.f32 %v1191, %v1351
          %v1396 = vmul.f32 %v1192, %v1352
          %v1397 = vmul.f32 %v1193, %v1351
          %v1398 = vmul.f32 %v1194, %v1352
          %v1399 = vmul.f32 %v1195, %v1351
          %v1400 = vmul.f32 %v1196, %v1352
          %v1401 = vmul.f32 %v1197, %v1351
          %v1402 = vmul.f32 %v1198, %v1352
          %v1403 = vmul.f32 %v1199, %v1351
          %v1404 = vmul.f32 %v1200, %v1352
          %v1405 = vmul.f32 %v1201, %v1351
          %v1406 = vmul.f32 %v1202, %v1352
          %v1407 = vmul.f32 %v1203, %v1351
          %v1408 = vmul.f32 %v1204, %v1352
          %v1409 = vmul.f32 %v1205, %v1351
          %v1410 = vmul.f32 %v1206, %v1352
          %v1411 = vmul.f32 %v1207, %v1351
          %v1412 = vmul.f32 %v1208, %v1352
          %v1413 = vmul.f32 %v1209, %v1351
          %v1414 = vmul.f32 %v1210, %v1352
          %v1415 = vmul.f32 %v1211, %v1351
          %v1416 = vmul.f32 %v1212, %v1352
          %v1417 = vmul.f32 %v1213, %v1351
          %v1418 = vmul.f32 %v1214, %v1352
          %v1419 = vadd.f32 %v500, %v1355
          %v1420 = vadd.f32 %v501, %v1356
          %v1421 = vadd.f32 %v502, %v1357
          %v1422 = vadd.f32 %v503, %v1358
          %v1423 = vadd.f32 %v504, %v1359
          %v1424 = vadd.f32 %v505, %v1360
          %v1425 = vadd.f32 %v506, %v1361
          %v1426 = vadd.f32 %v507, %v1362
          %v1427 = vadd.f32 %v508, %v1363
          %v1428 = vadd.f32 %v509, %v1364
          %v1429 = vadd.f32 %v510, %v1365
          %v1430 = vadd.f32 %v511, %v1366
          %v1431 = vadd.f32 %v512, %v1367
          %v1432 = vadd.f32 %v513, %v1368
          %v1433 = vadd.f32 %v514, %v1369
          %v1434 = vadd.f32 %v515, %v1370
          %v1435 = vadd.f32 %v516, %v1371
          %v1436 = vadd.f32 %v517, %v1372
          %v1437 = vadd.f32 %v518, %v1373
          %v1438 = vadd.f32 %v519, %v1374
          %v1439 = vadd.f32 %v520, %v1375
          %v1440 = vadd.f32 %v521, %v1376
          %v1441 = vadd.f32 %v522, %v1377
          %v1442 = vadd.f32 %v523, %v1378
          %v1443 = vadd.f32 %v524, %v1379
          %v1444 = vadd.f32 %v525, %v1380
          %v1445 = vadd.f32 %v526, %v1381
          %v1446 = vadd.f32 %v527, %v1382
          %v1447 = vadd.f32 %v528, %v1383
          %v1448 = vadd.f32 %v529, %v1384
          %v1449 = vadd.f32 %v530, %v1385
          %v1450 = vadd.f32 %v531, %v1386
          %v1451 = vadd.f32 %v532, %v1387
          %v1452 = vadd.f32 %v533, %v1388
          %v1453 = vadd.f32 %v534, %v1389
          %v1454 = vadd.f32 %v535, %v1390
          %v1455 = vadd.f32 %v536, %v1391
          %v1456 = vadd.f32 %v537, %v1392
          %v1457 = vadd.f32 %v538, %v1393
          %v1458 = vadd.f32 %v539, %v1394
          %v1459 = vadd.f32 %v540, %v1395
          %v1460 = vadd.f32 %v541, %v1396
          %v1461 = vadd.f32 %v542, %v1397
          %v1462 = vadd.f32 %v543, %v1398
          %v1463 = vadd.f32 %v544, %v1399
          %v1464 = vadd.f32 %v545, %v1400
          %v1465 = vadd.f32 %v546, %v1401
          %v1466 = vadd.f32 %v547, %v1402
          %v1467 = vadd.f32 %v548, %v1403
          %v1468 = vadd.f32 %v549, %v1404
          %v1469 = vadd.f32 %v550, %v1405
          %v1470 = vadd.f32 %v551, %v1406
          %v1471 = vadd.f32 %v552, %v1407
          %v1472 = vadd.f32 %v553, %v1408
          %v1473 = vadd.f32 %v554, %v1409
          %v1474 = vadd.f32 %v555, %v1410
          %v1475 = vadd.f32 %v556, %v1411
          %v1476 = vadd.f32 %v557, %v1412
          %v1477 = vadd.f32 %v558, %v1413
          %v1478 = vadd.f32 %v559, %v1414
          %v1479 = vadd.f32 %v560, %v1415
          %v1480 = vadd.f32 %v561, %v1416
          %v1481 = vadd.f32 %v562, %v1417
          %v1482 = vadd.f32 %v563, %v1418
          %v1483 = vpack.c.bf16 %v1286, %v1285
          %v1484 = vpack.c.bf16 %v1288, %v1287
          %v1485 = vpack.c.bf16 %v1290, %v1289
          %v1486 = vpack.c.bf16 %v1292, %v1291
          %v1487 = vpack.c.bf16 %v1294, %v1293
          %v1488 = vpack.c.bf16 %v1296, %v1295
          %v1489 = vpack.c.bf16 %v1298, %v1297
          %v1490 = vpack.c.bf16 %v1300, %v1299
          %v1491 = vpack.c.bf16 %v1302, %v1301
          %v1492 = vpack.c.bf16 %v1304, %v1303
          %v1493 = vpack.c.bf16 %v1306, %v1305
          %v1494 = vpack.c.bf16 %v1308, %v1307
          %v1495 = vpack.c.bf16 %v1310, %v1309
          %v1496 = vpack.c.bf16 %v1312, %v1311
          %v1497 = vpack.c.bf16 %v1314, %v1313
          %v1498 = vpack.c.bf16 %v1316, %v1315
          %v1499 = vpack.c.bf16 %v1318, %v1317
          %v1500 = vpack.c.bf16 %v1320, %v1319
          %v1501 = vpack.c.bf16 %v1322, %v1321
          %v1502 = vpack.c.bf16 %v1324, %v1323
          %v1503 = vpack.c.bf16 %v1326, %v1325
          %v1504 = vpack.c.bf16 %v1328, %v1327
          %v1505 = vpack.c.bf16 %v1330, %v1329
          %v1506 = vpack.c.bf16 %v1332, %v1331
          %v1507 = vpack.c.bf16 %v1334, %v1333
          %v1508 = vpack.c.bf16 %v1336, %v1335
          %v1509 = vpack.c.bf16 %v1338, %v1337
          %v1510 = vpack.c.bf16 %v1340, %v1339
          %v1511 = vpack.c.bf16 %v1342, %v1341
          %v1512 = vpack.c.bf16 %v1344, %v1343
          %v1513 = vpack.c.bf16 %v1346, %v1345
          %v1514 = vpack.c.bf16 %v1348, %v1347
          %1515 = vst [vmem:[#allocation2] sm:$0xff] %v1483
          %1516 = vst [vmem:[#allocation2 + $0x8] sm:$0xff] %v1484
          %1517 = vst [vmem:[#allocation2 + $0x10] sm:$0xff] %v1485
          %1518 = vst [vmem:[#allocation2 + $0x18] sm:$0xff] %v1486
          %1519 = vst [vmem:[#allocation2 + $0x20] sm:$0xff] %v1487
          %1520 = vst [vmem:[#allocation2 + $0x28] sm:$0xff] %v1488
          %1521 = vst [vmem:[#allocation2 + $0x30] sm:$0xff] %v1489
          %1522 = vst [vmem:[#allocation2 + $0x38] sm:$0xff] %v1490
          %1523 = vst [vmem:[#allocation2 + $0x40] sm:$0xff] %v1491
          %1524 = vst [vmem:[#allocation2 + $0x48] sm:$0xff] %v1492
          %1525 = vst [vmem:[#allocation2 + $0x50] sm:$0xff] %v1493
          %1526 = vst [vmem:[#allocation2 + $0x58] sm:$0xff] %v1494
          %1527 = vst [vmem:[#allocation2 + $0x60] sm:$0xff] %v1495
          %1528 = vst [vmem:[#allocation2 + $0x68] sm:$0xff] %v1496
          %1529 = vst [vmem:[#allocation2 + $0x70] sm:$0xff] %v1497
          %1530 = vst [vmem:[#allocation2 + $0x78] sm:$0xff] %v1498
          %1531 = vst [vmem:[#allocation2 + $0x80] sm:$0xff] %v1499
          %1532 = vst [vmem:[#allocation2 + $0x88] sm:$0xff] %v1500
          %1533 = vst [vmem:[#allocation2 + $0x90] sm:$0xff] %v1501
          %1534 = vst [vmem:[#allocation2 + $0x98] sm:$0xff] %v1502
          %1535 = vst [vmem:[#allocation2 + $0xa0] sm:$0xff] %v1503
          %1536 = vst [vmem:[#allocation2 + $0xa8] sm:$0xff] %v1504
          %1537 = vst [vmem:[#allocation2 + $0xb0] sm:$0xff] %v1505
          %1538 = vst [vmem:[#allocation2 + $0xb8] sm:$0xff] %v1506
          %1539 = vst [vmem:[#allocation2 + $0xc0] sm:$0xff] %v1507
          %1540 = vst [vmem:[#allocation2 + $0xc8] sm:$0xff] %v1508
          %1541 = vst [vmem:[#allocation2 + $0xd0] sm:$0xff] %v1509
          %1542 = vst [vmem:[#allocation2 + $0xd8] sm:$0xff] %v1510
          %1543 = vst [vmem:[#allocation2 + $0xe0] sm:$0xff] %v1511
          %1544 = vst [vmem:[#allocation2 + $0xe8] sm:$0xff] %v1512
          %1545 = vst [vmem:[#allocation2 + $0xf0] sm:$0xff] %v1513
          %1546 = vst [vmem:[#allocation2 + $0xf8] sm:$0xff] %v1514
          %v1547 = vpack.c.bf16 %v1421, %v1419
          %v1548 = vpack.c.bf16 %v1422, %v1420
          %v1549 = vpack.c.bf16 %v1425, %v1423
          %v1550 = vpack.c.bf16 %v1426, %v1424
          %v1551 = vpack.c.bf16 %v1429, %v1427
          %v1552 = vpack.c.bf16 %v1430, %v1428
          %v1553 = vpack.c.bf16 %v1433, %v1431
          %v1554 = vpack.c.bf16 %v1434, %v1432
          %v1555 = vpack.c.bf16 %v1437, %v1435
          %v1556 = vpack.c.bf16 %v1438, %v1436
          %v1557 = vpack.c.bf16 %v1441, %v1439
          %v1558 = vpack.c.bf16 %v1442, %v1440
          %v1559 = vpack.c.bf16 %v1445, %v1443
          %v1560 = vpack.c.bf16 %v1446, %v1444
          %v1561 = vpack.c.bf16 %v1449, %v1447
          %v1562 = vpack.c.bf16 %v1450, %v1448
          %v1563 = vpack.c.bf16 %v1453, %v1451
          %v1564 = vpack.c.bf16 %v1454, %v1452
          %v1565 = vpack.c.bf16 %v1457, %v1455
          %v1566 = vpack.c.bf16 %v1458, %v1456
          %v1567 = vpack.c.bf16 %v1461, %v1459
          %v1568 = vpack.c.bf16 %v1462, %v1460
          %v1569 = vpack.c.bf16 %v1465, %v1463
          %v1570 = vpack.c.bf16 %v1466, %v1464
          %v1571 = vpack.c.bf16 %v1469, %v1467
          %v1572 = vpack.c.bf16 %v1470, %v1468
          %v1573 = vpack.c.bf16 %v1473, %v1471
          %v1574 = vpack.c.bf16 %v1474, %v1472
          %v1575 = vpack.c.bf16 %v1477, %v1475
          %v1576 = vpack.c.bf16 %v1478, %v1476
          %v1577 = vpack.c.bf16 %v1481, %v1479
          %v1578 = vpack.c.bf16 %v1482, %v1480
          %v1579 = vld [vmem:[#allocation10] sm:$0xff]
          %v1580 = vld [vmem:[#allocation10 + $0x8] sm:$0xff]
          %v1581 = vld [vmem:[#allocation10 + $0x10] sm:$0xff]
          %v1582 = vld [vmem:[#allocation10 + $0x18] sm:$0xff]
          %v1583 = vld [vmem:[#allocation10 + $0x20] sm:$0xff]
          %v1584 = vld [vmem:[#allocation10 + $0x28] sm:$0xff]
          %v1585 = vld [vmem:[#allocation10 + $0x30] sm:$0xff]
          %v1586 = vld [vmem:[#allocation10 + $0x38] sm:$0xff]
          %v1587 = vld [vmem:[#allocation10 + $0x40] sm:$0xff]
          %v1588 = vld [vmem:[#allocation10 + $0x48] sm:$0xff]
          %v1589 = vld [vmem:[#allocation10 + $0x50] sm:$0xff]
          %v1590 = vld [vmem:[#allocation10 + $0x58] sm:$0xff]
          %v1591 = vld [vmem:[#allocation10 + $0x60] sm:$0xff]
          %v1592 = vld [vmem:[#allocation10 + $0x68] sm:$0xff]
          %v1593 = vld [vmem:[#allocation10 + $0x70] sm:$0xff]
          %v1594 = vld [vmem:[#allocation10 + $0x78] sm:$0xff]
          %v1595 = vld [vmem:[#allocation10 + $0x80] sm:$0xff]
          %v1596 = vld [vmem:[#allocation10 + $0x88] sm:$0xff]
          %v1597 = vld [vmem:[#allocation10 + $0x90] sm:$0xff]
          %v1598 = vld [vmem:[#allocation10 + $0x98] sm:$0xff]
          %v1599 = vld [vmem:[#allocation10 + $0xa0] sm:$0xff]
          %v1600 = vld [vmem:[#allocation10 + $0xa8] sm:$0xff]
          %v1601 = vld [vmem:[#allocation10 + $0xb0] sm:$0xff]
          %v1602 = vld [vmem:[#allocation10 + $0xb8] sm:$0xff]
          %v1603 = vld [vmem:[#allocation10 + $0xc0] sm:$0xff]
          %v1604 = vld [vmem:[#allocation10 + $0xc8] sm:$0xff]
          %v1605 = vld [vmem:[#allocation10 + $0xd0] sm:$0xff]
          %v1606 = vld [vmem:[#allocation10 + $0xd8] sm:$0xff]
          %v1607 = vld [vmem:[#allocation10 + $0xe0] sm:$0xff]
          %v1608 = vld [vmem:[#allocation10 + $0xe8] sm:$0xff]
          %v1609 = vld [vmem:[#allocation10 + $0xf0] sm:$0xff]
          %v1610 = vld [vmem:[#allocation10 + $0xf8] sm:$0xff]
          %v1643 = vunpack.c.l.b16 %v1579
          %v1644 = vunpack.c.h.b16 %v1579
          %v1645 = vunpack.c.l.b16 %v1580
          %v1646 = vunpack.c.h.b16 %v1580
          %v1647 = vunpack.c.l.b16 %v1581
          %v1648 = vunpack.c.h.b16 %v1581
          %v1649 = vunpack.c.l.b16 %v1582
          %v1650 = vunpack.c.h.b16 %v1582
          %v1651 = vunpack.c.l.b16 %v1583
          %v1652 = vunpack.c.h.b16 %v1583
          %v1653 = vunpack.c.l.b16 %v1584
          %v1654 = vunpack.c.h.b16 %v1584
          %v1655 = vunpack.c.l.b16 %v1585
          %v1656 = vunpack.c.h.b16 %v1585
          %v1657 = vunpack.c.l.b16 %v1586
          %v1658 = vunpack.c.h.b16 %v1586
          %v1659 = vunpack.c.l.b16 %v1587
          %v1660 = vunpack.c.h.b16 %v1587
          %v1661 = vunpack.c.l.b16 %v1588
          %v1662 = vunpack.c.h.b16 %v1588
          %v1663 = vunpack.c.l.b16 %v1589
          %v1664 = vunpack.c.h.b16 %v1589
          %v1665 = vunpack.c.l.b16 %v1590
          %v1666 = vunpack.c.h.b16 %v1590
          %v1667 = vunpack.c.l.b16 %v1591
          %v1668 = vunpack.c.h.b16 %v1591
          %v1669 = vunpack.c.l.b16 %v1592
          %v1670 = vunpack.c.h.b16 %v1592
          %v1671 = vunpack.c.l.b16 %v1593
          %v1672 = vunpack.c.h.b16 %v1593
          %v1673 = vunpack.c.l.b16 %v1594
          %v1674 = vunpack.c.h.b16 %v1594
          %v1675 = vunpack.c.l.b16 %v1595
          %v1676 = vunpack.c.h.b16 %v1595
          %v1677 = vunpack.c.l.b16 %v1596
          %v1678 = vunpack.c.h.b16 %v1596
          %v1679 = vunpack.c.l.b16 %v1597
          %v1680 = vunpack.c.h.b16 %v1597
          %v1681 = vunpack.c.l.b16 %v1598
          %v1682 = vunpack.c.h.b16 %v1598
          %v1683 = vunpack.c.l.b16 %v1599
          %v1684 = vunpack.c.h.b16 %v1599
          %v1685 = vunpack.c.l.b16 %v1600
          %v1686 = vunpack.c.h.b16 %v1600
          %v1687 = vunpack.c.l.b16 %v1601
          %v1688 = vunpack.c.h.b16 %v1601
          %v1689 = vunpack.c.l.b16 %v1602
          %v1690 = vunpack.c.h.b16 %v1602
          %v1691 = vunpack.c.l.b16 %v1603
          %v1692 = vunpack.c.h.b16 %v1603
          %v1693 = vunpack.c.l.b16 %v1604
          %v1694 = vunpack.c.h.b16 %v1604
          %v1695 = vunpack.c.l.b16 %v1605
          %v1696 = vunpack.c.h.b16 %v1605
          %v1697 = vunpack.c.l.b16 %v1606
          %v1698 = vunpack.c.h.b16 %v1606
          %v1699 = vunpack.c.l.b16 %v1607
          %v1700 = vunpack.c.h.b16 %v1607
          %v1701 = vunpack.c.l.b16 %v1608
          %v1702 = vunpack.c.h.b16 %v1608
          %v1703 = vunpack.c.l.b16 %v1609
          %v1704 = vunpack.c.h.b16 %v1609
          %v1705 = vunpack.c.l.b16 %v1610
          %v1706 = vunpack.c.h.b16 %v1610
          %v1707 = vpack.c.b16 %v1645, %v1643
          %v1708 = vpack.c.b16 %v1646, %v1644
          %v1709 = vpack.c.b16 %v1649, %v1647
          %v1710 = vpack.c.b16 %v1650, %v1648
          %v1711 = vpack.c.b16 %v1653, %v1651
          %v1712 = vpack.c.b16 %v1654, %v1652
          %v1713 = vpack.c.b16 %v1657, %v1655
          %v1714 = vpack.c.b16 %v1658, %v1656
          %v1715 = vpack.c.b16 %v1661, %v1659
          %v1716 = vpack.c.b16 %v1662, %v1660
          %v1717 = vpack.c.b16 %v1665, %v1663
          %v1718 = vpack.c.b16 %v1666, %v1664
          %v1719 = vpack.c.b16 %v1669, %v1667
          %v1720 = vpack.c.b16 %v1670, %v1668
          %v1721 = vpack.c.b16 %v1673, %v1671
          %v1722 = vpack.c.b16 %v1674, %v1672
          %v1723 = vpack.c.b16 %v1677, %v1675
          %v1724 = vpack.c.b16 %v1678, %v1676
          %v1725 = vpack.c.b16 %v1681, %v1679
          %v1726 = vpack.c.b16 %v1682, %v1680
          %v1727 = vpack.c.b16 %v1685, %v1683
          %v1728 = vpack.c.b16 %v1686, %v1684
          %v1729 = vpack.c.b16 %v1689, %v1687
          %v1730 = vpack.c.b16 %v1690, %v1688
          %v1731 = vpack.c.b16 %v1693, %v1691
          %v1732 = vpack.c.b16 %v1694, %v1692
          %v1733 = vpack.c.b16 %v1697, %v1695
          %v1734 = vpack.c.b16 %v1698, %v1696
          %v1735 = vpack.c.b16 %v1701, %v1699
          %v1736 = vpack.c.b16 %v1702, %v1700
          %v1737 = vpack.c.b16 %v1705, %v1703
          %v1738 = vpack.c.b16 %v1706, %v1704
          %1771 = vmatpush.bf16.msra.mxu0 %v1721
          %1772 = vmatpush.bf16.msra.mxu0 %v1719
          %1773 = vmatpush.bf16.msra.mxu0 %v1717
          %1774 = vmatpush.bf16.msra.mxu0 %v1715
          %1775 = vmatpush.bf16.msra.mxu0 %v1713
          %1776 = vmatpush.bf16.msra.mxu0 %v1711
          %1777 = vmatpush.bf16.msra.mxu0 %v1709
          %1778 = vmatpush.bf16.msra.mxu0 %v1707
          %1779 = vmatmul.bf16.gmra.mxu0 %v1547
          %v1780 = vpop.f32.mrf.mxu0
          %v1781 = vadd.f32 0.0, %v1780
          %v1782 = vpop.f32.mrf.mxu0
          %v1783 = vadd.f32 0.0, %v1782
          %1784 = vmatmul.bf16.gmra.mxu0 %v1549
          %v1785 = vpop.f32.mrf.mxu0
          %v1786 = vadd.f32 0.0, %v1785
          %v1787 = vpop.f32.mrf.mxu0
          %v1788 = vadd.f32 0.0, %v1787
          %1789 = vmatmul.bf16.gmra.mxu0 %v1551
          %v1790 = vpop.f32.mrf.mxu0
          %v1791 = vadd.f32 0.0, %v1790
          %v1792 = vpop.f32.mrf.mxu0
          %v1793 = vadd.f32 0.0, %v1792
          %1794 = vmatmul.bf16.gmra.mxu0 %v1553
          %v1795 = vpop.f32.mrf.mxu0
          %v1796 = vadd.f32 0.0, %v1795
          %v1797 = vpop.f32.mrf.mxu0
          %v1798 = vadd.f32 0.0, %v1797
          %1799 = vmatmul.bf16.gmra.mxu0 %v1555
          %v1800 = vpop.f32.mrf.mxu0
          %v1801 = vadd.f32 0.0, %v1800
          %v1802 = vpop.f32.mrf.mxu0
          %v1803 = vadd.f32 0.0, %v1802
          %1804 = vmatmul.bf16.gmra.mxu0 %v1557
          %v1805 = vpop.f32.mrf.mxu0
          %v1806 = vadd.f32 0.0, %v1805
          %v1807 = vpop.f32.mrf.mxu0
          %v1808 = vadd.f32 0.0, %v1807
          %1809 = vmatmul.bf16.gmra.mxu0 %v1559
          %v1810 = vpop.f32.mrf.mxu0
          %v1811 = vadd.f32 0.0, %v1810
          %v1812 = vpop.f32.mrf.mxu0
          %v1813 = vadd.f32 0.0, %v1812
          %1814 = vmatmul.bf16.gmra.mxu0 %v1561
          %v1815 = vpop.f32.mrf.mxu0
          %v1816 = vadd.f32 0.0, %v1815
          %v1817 = vpop.f32.mrf.mxu0
          %v1818 = vadd.f32 0.0, %v1817
          %1819 = vmatmul.bf16.gmra.mxu0 %v1563
          %v1820 = vpop.f32.mrf.mxu0
          %v1821 = vadd.f32 0.0, %v1820
          %v1822 = vpop.f32.mrf.mxu0
          %v1823 = vadd.f32 0.0, %v1822
          %1824 = vmatmul.bf16.gmra.mxu0 %v1565
          %v1825 = vpop.f32.mrf.mxu0
          %v1826 = vadd.f32 0.0, %v1825
          %v1827 = vpop.f32.mrf.mxu0
          %v1828 = vadd.f32 0.0, %v1827
          %1829 = vmatmul.bf16.gmra.mxu0 %v1567
          %v1830 = vpop.f32.mrf.mxu0
          %v1831 = vadd.f32 0.0, %v1830
          %v1832 = vpop.f32.mrf.mxu0
          %v1833 = vadd.f32 0.0, %v1832
          %1834 = vmatmul.bf16.gmra.mxu0 %v1569
          %v1835 = vpop.f32.mrf.mxu0
          %v1836 = vadd.f32 0.0, %v1835
          %v1837 = vpop.f32.mrf.mxu0
          %v1838 = vadd.f32 0.0, %v1837
          %1839 = vmatmul.bf16.gmra.mxu0 %v1571
          %v1840 = vpop.f32.mrf.mxu0
          %v1841 = vadd.f32 0.0, %v1840
          %v1842 = vpop.f32.mrf.mxu0
          %v1843 = vadd.f32 0.0, %v1842
          %1844 = vmatmul.bf16.gmra.mxu0 %v1573
          %v1845 = vpop.f32.mrf.mxu0
          %v1846 = vadd.f32 0.0, %v1845
          %v1847 = vpop.f32.mrf.mxu0
          %v1848 = vadd.f32 0.0, %v1847
          %1849 = vmatmul.bf16.gmra.mxu0 %v1575
          %v1850 = vpop.f32.mrf.mxu0
          %v1851 = vadd.f32 0.0, %v1850
          %v1852 = vpop.f32.mrf.mxu0
          %v1853 = vadd.f32 0.0, %v1852
          %1854 = vmatmul.bf16.gmra.mxu0 %v1577
          %v1855 = vpop.f32.mrf.mxu0
          %v1856 = vadd.f32 0.0, %v1855
          %v1857 = vpop.f32.mrf.mxu0
          %v1858 = vadd.f32 0.0, %v1857
          %1859 = vdwg.mxu0
          %1860 = vmatpush.bf16.msra.mxu0 %v1737
          %1861 = vmatpush.bf16.msra.mxu0 %v1735
          %1862 = vmatpush.bf16.msra.mxu0 %v1733
          %1863 = vmatpush.bf16.msra.mxu0 %v1731
          %1864 = vmatpush.bf16.msra.mxu0 %v1729
          %1865 = vmatpush.bf16.msra.mxu0 %v1727
          %1866 = vmatpush.bf16.msra.mxu0 %v1725
          %1867 = vmatpush.bf16.msra.mxu0 %v1723
          %1868 = vmatmul.bf16.gmra.mxu0 %v1548
          %v1869 = vpop.f32.mrf.mxu0
          %v1870 = vadd.f32 %v1781, %v1869
          %v1871 = vpop.f32.mrf.mxu0
          %v1872 = vadd.f32 %v1783, %v1871
          %1873 = vmatmul.bf16.gmra.mxu0 %v1550
          %v1874 = vpop.f32.mrf.mxu0
          %v1875 = vadd.f32 %v1786, %v1874
          %v1876 = vpop.f32.mrf.mxu0
          %v1877 = vadd.f32 %v1788, %v1876
          %1878 = vmatmul.bf16.gmra.mxu0 %v1552
          %v1879 = vpop.f32.mrf.mxu0
          %v1880 = vadd.f32 %v1791, %v1879
          %v1881 = vpop.f32.mrf.mxu0
          %v1882 = vadd.f32 %v1793, %v1881
          %1883 = vmatmul.bf16.gmra.mxu0 %v1554
          %v1884 = vpop.f32.mrf.mxu0
          %v1885 = vadd.f32 %v1796, %v1884
          %v1886 = vpop.f32.mrf.mxu0
          %v1887 = vadd.f32 %v1798, %v1886
          %1888 = vmatmul.bf16.gmra.mxu0 %v1556
          %v1889 = vpop.f32.mrf.mxu0
          %v1890 = vadd.f32 %v1801, %v1889
          %v1891 = vpop.f32.mrf.mxu0
          %v1892 = vadd.f32 %v1803, %v1891
          %1893 = vmatmul.bf16.gmra.mxu0 %v1558
          %v1894 = vpop.f32.mrf.mxu0
          %v1895 = vadd.f32 %v1806, %v1894
          %v1896 = vpop.f32.mrf.mxu0
          %v1897 = vadd.f32 %v1808, %v1896
          %1898 = vmatmul.bf16.gmra.mxu0 %v1560
          %v1899 = vpop.f32.mrf.mxu0
          %v1900 = vadd.f32 %v1811, %v1899
          %v1901 = vpop.f32.mrf.mxu0
          %v1902 = vadd.f32 %v1813, %v1901
          %1903 = vmatmul.bf16.gmra.mxu0 %v1562
          %v1904 = vpop.f32.mrf.mxu0
          %v1905 = vadd.f32 %v1816, %v1904
          %v1906 = vpop.f32.mrf.mxu0
          %v1907 = vadd.f32 %v1818, %v1906
          %1908 = vmatmul.bf16.gmra.mxu0 %v1564
          %v1909 = vpop.f32.mrf.mxu0
          %v1910 = vadd.f32 %v1821, %v1909
          %v1911 = vpop.f32.mrf.mxu0
          %v1912 = vadd.f32 %v1823, %v1911
          %1913 = vmatmul.bf16.gmra.mxu0 %v1566
          %v1914 = vpop.f32.mrf.mxu0
          %v1915 = vadd.f32 %v1826, %v1914
          %v1916 = vpop.f32.mrf.mxu0
          %v1917 = vadd.f32 %v1828, %v1916
          %1918 = vmatmul.bf16.gmra.mxu0 %v1568
          %v1919 = vpop.f32.mrf.mxu0
          %v1920 = vadd.f32 %v1831, %v1919
          %v1921 = vpop.f32.mrf.mxu0
          %v1922 = vadd.f32 %v1833, %v1921
          %1923 = vmatmul.bf16.gmra.mxu0 %v1570
          %v1924 = vpop.f32.mrf.mxu0
          %v1925 = vadd.f32 %v1836, %v1924
          %v1926 = vpop.f32.mrf.mxu0
          %v1927 = vadd.f32 %v1838, %v1926
          %1928 = vmatmul.bf16.gmra.mxu0 %v1572
          %v1929 = vpop.f32.mrf.mxu0
          %v1930 = vadd.f32 %v1841, %v1929
          %v1931 = vpop.f32.mrf.mxu0
          %v1932 = vadd.f32 %v1843, %v1931
          %1933 = vmatmul.bf16.gmra.mxu0 %v1574
          %v1934 = vpop.f32.mrf.mxu0
          %v1935 = vadd.f32 %v1846, %v1934
          %v1936 = vpop.f32.mrf.mxu0
          %v1937 = vadd.f32 %v1848, %v1936
          %1938 = vmatmul.bf16.gmra.mxu0 %v1576
          %v1939 = vpop.f32.mrf.mxu0
          %v1940 = vadd.f32 %v1851, %v1939
          %v1941 = vpop.f32.mrf.mxu0
          %v1942 = vadd.f32 %v1853, %v1941
          %1943 = vmatmul.bf16.gmra.mxu0 %v1578
          %v1944 = vpop.f32.mrf.mxu0
          %v1945 = vadd.f32 %v1856, %v1944
          %v1946 = vpop.f32.mrf.mxu0
          %v1947 = vadd.f32 %v1858, %v1946
          %1948 = vdwg.mxu0
          %1949 = vmatpush.bf16.msra.mxu0 %v1722
          %1950 = vmatpush.bf16.msra.mxu0 %v1720
          %1951 = vmatpush.bf16.msra.mxu0 %v1718
          %1952 = vmatpush.bf16.msra.mxu0 %v1716
          %1953 = vmatpush.bf16.msra.mxu0 %v1714
          %1954 = vmatpush.bf16.msra.mxu0 %v1712
          %1955 = vmatpush.bf16.msra.mxu0 %v1710
          %1956 = vmatpush.bf16.msra.mxu0 %v1708
          %1957 = vmatmul.bf16.gmra.mxu0 %v1547
          %v1958 = vpop.f32.mrf.mxu0
          %v1959 = vadd.f32 0.0, %v1958
          %v1960 = vpop.f32.mrf.mxu0
          %v1961 = vadd.f32 0.0, %v1960
          %1962 = vmatmul.bf16.gmra.mxu0 %v1549
          %v1963 = vpop.f32.mrf.mxu0
          %v1964 = vadd.f32 0.0, %v1963
          %v1965 = vpop.f32.mrf.mxu0
          %v1966 = vadd.f32 0.0, %v1965
          %1967 = vmatmul.bf16.gmra.mxu0 %v1551
          %v1968 = vpop.f32.mrf.mxu0
          %v1969 = vadd.f32 0.0, %v1968
          %v1970 = vpop.f32.mrf.mxu0
          %v1971 = vadd.f32 0.0, %v1970
          %1972 = vmatmul.bf16.gmra.mxu0 %v1553
          %v1973 = vpop.f32.mrf.mxu0
          %v1974 = vadd.f32 0.0, %v1973
          %v1975 = vpop.f32.mrf.mxu0
          %v1976 = vadd.f32 0.0, %v1975
          %1977 = vmatmul.bf16.gmra.mxu0 %v1555
          %v1978 = vpop.f32.mrf.mxu0
          %v1979 = vadd.f32 0.0, %v1978
          %v1980 = vpop.f32.mrf.mxu0
          %v1981 = vadd.f32 0.0, %v1980
          %1982 = vmatmul.bf16.gmra.mxu0 %v1557
          %v1983 = vpop.f32.mrf.mxu0
          %v1984 = vadd.f32 0.0, %v1983
          %v1985 = vpop.f32.mrf.mxu0
          %v1986 = vadd.f32 0.0, %v1985
          %1987 = vmatmul.bf16.gmra.mxu0 %v1559
          %v1988 = vpop.f32.mrf.mxu0
          %v1989 = vadd.f32 0.0, %v1988
          %v1990 = vpop.f32.mrf.mxu0
          %v1991 = vadd.f32 0.0, %v1990
          %1992 = vmatmul.bf16.gmra.mxu0 %v1561
          %v1993 = vpop.f32.mrf.mxu0
          %v1994 = vadd.f32 0.0, %v1993
          %v1995 = vpop.f32.mrf.mxu0
          %v1996 = vadd.f32 0.0, %v1995
          %1997 = vmatmul.bf16.gmra.mxu0 %v1563
          %v1998 = vpop.f32.mrf.mxu0
          %v1999 = vadd.f32 0.0, %v1998
          %v2000 = vpop.f32.mrf.mxu0
          %v2001 = vadd.f32 0.0, %v2000
          %2002 = vmatmul.bf16.gmra.mxu0 %v1565
          %v2003 = vpop.f32.mrf.mxu0
          %v2004 = vadd.f32 0.0, %v2003
          %v2005 = vpop.f32.mrf.mxu0
          %v2006 = vadd.f32 0.0, %v2005
          %2007 = vmatmul.bf16.gmra.mxu0 %v1567
          %v2008 = vpop.f32.mrf.mxu0
          %v2009 = vadd.f32 0.0, %v2008
          %v2010 = vpop.f32.mrf.mxu0
          %v2011 = vadd.f32 0.0, %v2010
          %2012 = vmatmul.bf16.gmra.mxu0 %v1569
          %v2013 = vpop.f32.mrf.mxu0
          %v2014 = vadd.f32 0.0, %v2013
          %v2015 = vpop.f32.mrf.mxu0
          %v2016 = vadd.f32 0.0, %v2015
          %2017 = vmatmul.bf16.gmra.mxu0 %v1571
          %v2018 = vpop.f32.mrf.mxu0
          %v2019 = vadd.f32 0.0, %v2018
          %v2020 = vpop.f32.mrf.mxu0
          %v2021 = vadd.f32 0.0, %v2020
          %2022 = vmatmul.bf16.gmra.mxu0 %v1573
          %v2023 = vpop.f32.mrf.mxu0
          %v2024 = vadd.f32 0.0, %v2023
          %v2025 = vpop.f32.mrf.mxu0
          %v2026 = vadd.f32 0.0, %v2025
          %2027 = vmatmul.bf16.gmra.mxu0 %v1575
          %v2028 = vpop.f32.mrf.mxu0
          %v2029 = vadd.f32 0.0, %v2028
          %v2030 = vpop.f32.mrf.mxu0
          %v2031 = vadd.f32 0.0, %v2030
          %2032 = vmatmul.bf16.gmra.mxu0 %v1577
          %v2033 = vpop.f32.mrf.mxu0
          %v2034 = vadd.f32 0.0, %v2033
          %v2035 = vpop.f32.mrf.mxu0
          %v2036 = vadd.f32 0.0, %v2035
          %2037 = vdwg.mxu0
          %2038 = vmatpush.bf16.msra.mxu0 %v1738
          %2039 = vmatpush.bf16.msra.mxu0 %v1736
          %2040 = vmatpush.bf16.msra.mxu0 %v1734
          %2041 = vmatpush.bf16.msra.mxu0 %v1732
          %2042 = vmatpush.bf16.msra.mxu0 %v1730
          %2043 = vmatpush.bf16.msra.mxu0 %v1728
          %2044 = vmatpush.bf16.msra.mxu0 %v1726
          %2045 = vmatpush.bf16.msra.mxu0 %v1724
          %2046 = vmatmul.bf16.gmra.mxu0 %v1548
          %v2047 = vpop.f32.mrf.mxu0
          %v2048 = vadd.f32 %v1959, %v2047
          %v2049 = vpop.f32.mrf.mxu0
          %v2050 = vadd.f32 %v1961, %v2049
          %2051 = vmatmul.bf16.gmra.mxu0 %v1550
          %v2052 = vpop.f32.mrf.mxu0
          %v2053 = vadd.f32 %v1964, %v2052
          %v2054 = vpop.f32.mrf.mxu0
          %v2055 = vadd.f32 %v1966, %v2054
          %2056 = vmatmul.bf16.gmra.mxu0 %v1552
          %v2057 = vpop.f32.mrf.mxu0
          %v2058 = vadd.f32 %v1969, %v2057
          %v2059 = vpop.f32.mrf.mxu0
          %v2060 = vadd.f32 %v1971, %v2059
          %2061 = vmatmul.bf16.gmra.mxu0 %v1554
          %v2062 = vpop.f32.mrf.mxu0
          %v2063 = vadd.f32 %v1974, %v2062
          %v2064 = vpop.f32.mrf.mxu0
          %v2065 = vadd.f32 %v1976, %v2064
          %2066 = vmatmul.bf16.gmra.mxu0 %v1556
          %v2067 = vpop.f32.mrf.mxu0
          %v2068 = vadd.f32 %v1979, %v2067
          %v2069 = vpop.f32.mrf.mxu0
          %v2070 = vadd.f32 %v1981, %v2069
          %2071 = vmatmul.bf16.gmra.mxu0 %v1558
          %v2072 = vpop.f32.mrf.mxu0
          %v2073 = vadd.f32 %v1984, %v2072
          %v2074 = vpop.f32.mrf.mxu0
          %v2075 = vadd.f32 %v1986, %v2074
          %2076 = vmatmul.bf16.gmra.mxu0 %v1560
          %v2077 = vpop.f32.mrf.mxu0
          %v2078 = vadd.f32 %v1989, %v2077
          %v2079 = vpop.f32.mrf.mxu0
          %v2080 = vadd.f32 %v1991, %v2079
          %2081 = vmatmul.bf16.gmra.mxu0 %v1562
          %v2082 = vpop.f32.mrf.mxu0
          %v2083 = vadd.f32 %v1994, %v2082
          %v2084 = vpop.f32.mrf.mxu0
          %v2085 = vadd.f32 %v1996, %v2084
          %2086 = vmatmul.bf16.gmra.mxu0 %v1564
          %v2087 = vpop.f32.mrf.mxu0
          %v2088 = vadd.f32 %v1999, %v2087
          %v2089 = vpop.f32.mrf.mxu0
          %v2090 = vadd.f32 %v2001, %v2089
          %2091 = vmatmul.bf16.gmra.mxu0 %v1566
          %v2092 = vpop.f32.mrf.mxu0
          %v2093 = vadd.f32 %v2004, %v2092
          %v2094 = vpop.f32.mrf.mxu0
          %v2095 = vadd.f32 %v2006, %v2094
          %2096 = vmatmul.bf16.gmra.mxu0 %v1568
          %v2097 = vpop.f32.mrf.mxu0
          %v2098 = vadd.f32 %v2009, %v2097
          %v2099 = vpop.f32.mrf.mxu0
          %v2100 = vadd.f32 %v2011, %v2099
          %2101 = vmatmul.bf16.gmra.mxu0 %v1570
          %v2102 = vpop.f32.mrf.mxu0
          %v2103 = vadd.f32 %v2014, %v2102
          %v2104 = vpop.f32.mrf.mxu0
          %v2105 = vadd.f32 %v2016, %v2104
          %2106 = vmatmul.bf16.gmra.mxu0 %v1572
          %v2107 = vpop.f32.mrf.mxu0
          %v2108 = vadd.f32 %v2019, %v2107
          %v2109 = vpop.f32.mrf.mxu0
          %v2110 = vadd.f32 %v2021, %v2109
          %2111 = vmatmul.bf16.gmra.mxu0 %v1574
          %v2112 = vpop.f32.mrf.mxu0
          %v2113 = vadd.f32 %v2024, %v2112
          %v2114 = vpop.f32.mrf.mxu0
          %v2115 = vadd.f32 %v2026, %v2114
          %2116 = vmatmul.bf16.gmra.mxu0 %v1576
          %v2117 = vpop.f32.mrf.mxu0
          %v2118 = vadd.f32 %v2029, %v2117
          %v2119 = vpop.f32.mrf.mxu0
          %v2120 = vadd.f32 %v2031, %v2119
          %2121 = vmatmul.bf16.gmra.mxu0 %v1578
          %v2122 = vpop.f32.mrf.mxu0
          %v2123 = vadd.f32 %v2034, %v2122
          %v2124 = vpop.f32.mrf.mxu0
          %v2125 = vadd.f32 %v2036, %v2124
          %2126 = vdwg.mxu0
          %v2127 = vxor.u32 %v1870, 2147483648
          %v2128 = vxor.u32 %v2048, 2147483648
          %v2129 = vxor.u32 %v1872, 2147483648
          %v2130 = vxor.u32 %v2050, 2147483648
          %v2131 = vxor.u32 %v1875, 2147483648
          %v2132 = vxor.u32 %v2053, 2147483648
          %v2133 = vxor.u32 %v1877, 2147483648
          %v2134 = vxor.u32 %v2055, 2147483648
          %v2135 = vxor.u32 %v1880, 2147483648
          %v2136 = vxor.u32 %v2058, 2147483648
          %v2137 = vxor.u32 %v1882, 2147483648
          %v2138 = vxor.u32 %v2060, 2147483648
          %v2139 = vxor.u32 %v1885, 2147483648
          %v2140 = vxor.u32 %v2063, 2147483648
          %v2141 = vxor.u32 %v1887, 2147483648
          %v2142 = vxor.u32 %v2065, 2147483648
          %v2143 = vxor.u32 %v1890, 2147483648
          %v2144 = vxor.u32 %v2068, 2147483648
          %v2145 = vxor.u32 %v1892, 2147483648
          %v2146 = vxor.u32 %v2070, 2147483648
          %v2147 = vxor.u32 %v1895, 2147483648
          %v2148 = vxor.u32 %v2073, 2147483648
          %v2149 = vxor.u32 %v1897, 2147483648
          %v2150 = vxor.u32 %v2075, 2147483648
          %v2151 = vxor.u32 %v1900, 2147483648
          %v2152 = vxor.u32 %v2078, 2147483648
          %v2153 = vxor.u32 %v1902, 2147483648
          %v2154 = vxor.u32 %v2080, 2147483648
          %v2155 = vxor.u32 %v1905, 2147483648
          %v2156 = vxor.u32 %v2083, 2147483648
          %v2157 = vxor.u32 %v1907, 2147483648
          %v2158 = vxor.u32 %v2085, 2147483648
          %v2159 = vxor.u32 %v1910, 2147483648
          %v2160 = vxor.u32 %v2088, 2147483648
          %v2161 = vxor.u32 %v1912, 2147483648
          %v2162 = vxor.u32 %v2090, 2147483648
          %v2163 = vxor.u32 %v1915, 2147483648
          %v2164 = vxor.u32 %v2093, 2147483648
          %v2165 = vxor.u32 %v1917, 2147483648
          %v2166 = vxor.u32 %v2095, 2147483648
          %v2167 = vxor.u32 %v1920, 2147483648
          %v2168 = vxor.u32 %v2098, 2147483648
          %v2169 = vxor.u32 %v1922, 2147483648
          %v2170 = vxor.u32 %v2100, 2147483648
          %v2171 = vxor.u32 %v1925, 2147483648
          %v2172 = vxor.u32 %v2103, 2147483648
          %v2173 = vxor.u32 %v1927, 2147483648
          %v2174 = vxor.u32 %v2105, 2147483648
          %v2175 = vxor.u32 %v1930, 2147483648
          %v2176 = vxor.u32 %v2108, 2147483648
          %v2177 = vxor.u32 %v1932, 2147483648
          %v2178 = vxor.u32 %v2110, 2147483648
          %v2179 = vxor.u32 %v1935, 2147483648
          %v2180 = vxor.u32 %v2113, 2147483648
          %v2181 = vxor.u32 %v1937, 2147483648
          %v2182 = vxor.u32 %v2115, 2147483648
          %v2183 = vxor.u32 %v1940, 2147483648
          %v2184 = vxor.u32 %v2118, 2147483648
          %v2185 = vxor.u32 %v1942, 2147483648
          %v2186 = vxor.u32 %v2120, 2147483648
          %v2187 = vxor.u32 %v1945, 2147483648
          %v2188 = vxor.u32 %v2123, 2147483648
          %v2189 = vxor.u32 %v1947, 2147483648
          %v2190 = vxor.u32 %v2125, 2147483648
          %v2191 = vmul.f32 %v2127, 1.442695
          %v2192 = vpow.pop %v2191
          %v2193 = vmul.f32 %v2128, 1.442695
          %v2194 = vpow.pop %v2193
          %v2195 = vmul.f32 %v2129, 1.442695
          %v2196 = vpow.pop %v2195
          %v2197 = vmul.f32 %v2130, 1.442695
          %v2198 = vpow.pop %v2197
          %v2199 = vmul.f32 %v2131, 1.442695
          %v2200 = vpow.pop %v2199
          %v2201 = vmul.f32 %v2132, 1.442695
          %v2202 = vpow.pop %v2201
          %v2203 = vmul.f32 %v2133, 1.442695
          %v2204 = vpow.pop %v2203
          %v2205 = vmul.f32 %v2134, 1.442695
          %v2206 = vpow.pop %v2205
          %v2207 = vmul.f32 %v2135, 1.442695
          %v2208 = vpow.pop %v2207
          %v2209 = vmul.f32 %v2136, 1.442695
          %v2210 = vpow.pop %v2209
          %v2211 = vmul.f32 %v2137, 1.442695
          %v2212 = vpow.pop %v2211
          %v2213 = vmul.f32 %v2138, 1.442695
          %v2214 = vpow.pop %v2213
          %v2215 = vmul.f32 %v2139, 1.442695
          %v2216 = vpow.pop %v2215
          %v2217 = vmul.f32 %v2140, 1.442695
          %v2218 = vpow.pop %v2217
          %v2219 = vmul.f32 %v2141, 1.442695
          %v2220 = vpow.pop %v2219
          %v2221 = vmul.f32 %v2142, 1.442695
          %v2222 = vpow.pop %v2221
          %v2223 = vmul.f32 %v2143, 1.442695
          %v2224 = vpow.pop %v2223
          %v2225 = vmul.f32 %v2144, 1.442695
          %v2226 = vpow.pop %v2225
          %v2227 = vmul.f32 %v2145, 1.442695
          %v2228 = vpow.pop %v2227
          %v2229 = vmul.f32 %v2146, 1.442695
          %v2230 = vpow.pop %v2229
          %v2231 = vmul.f32 %v2147, 1.442695
          %v2232 = vpow.pop %v2231
          %v2233 = vmul.f32 %v2148, 1.442695
          %v2234 = vpow.pop %v2233
          %v2235 = vmul.f32 %v2149, 1.442695
          %v2236 = vpow.pop %v2235
          %v2237 = vmul.f32 %v2150, 1.442695
          %v2238 = vpow.pop %v2237
          %v2239 = vmul.f32 %v2151, 1.442695
          %v2240 = vpow.pop %v2239
          %v2241 = vmul.f32 %v2152, 1.442695
          %v2242 = vpow.pop %v2241
          %v2243 = vmul.f32 %v2153, 1.442695
          %v2244 = vpow.pop %v2243
          %v2245 = vmul.f32 %v2154, 1.442695
          %v2246 = vpow.pop %v2245
          %v2247 = vmul.f32 %v2155, 1.442695
          %v2248 = vpow.pop %v2247
          %v2249 = vmul.f32 %v2156, 1.442695
          %v2250 = vpow.pop %v2249
          %v2251 = vmul.f32 %v2157, 1.442695
          %v2252 = vpow.pop %v2251
          %v2253 = vmul.f32 %v2158, 1.442695
          %v2254 = vpow.pop %v2253
          %v2255 = vmul.f32 %v2159, 1.442695
          %v2256 = vpow.pop %v2255
          %v2257 = vmul.f32 %v2160, 1.442695
          %v2258 = vpow.pop %v2257
          %v2259 = vmul.f32 %v2161, 1.442695
          %v2260 = vpow.pop %v2259
          %v2261 = vmul.f32 %v2162, 1.442695
          %v2262 = vpow.pop %v2261
          %v2263 = vmul.f32 %v2163, 1.442695
          %v2264 = vpow.pop %v2263
          %v2265 = vmul.f32 %v2164, 1.442695
          %v2266 = vpow.pop %v2265
          %v2267 = vmul.f32 %v2165, 1.442695
          %v2268 = vpow.pop %v2267
          %v2269 = vmul.f32 %v2166, 1.442695
          %v2270 = vpow.pop %v2269
          %v2271 = vmul.f32 %v2167, 1.442695
          %v2272 = vpow.pop %v2271
          %v2273 = vmul.f32 %v2168, 1.442695
          %v2274 = vpow.pop %v2273
          %v2275 = vmul.f32 %v2169, 1.442695
          %v2276 = vpow.pop %v2275
          %v2277 = vmul.f32 %v2170, 1.442695
          %v2278 = vpow.pop %v2277
          %v2279 = vmul.f32 %v2171, 1.442695
          %v2280 = vpow.pop %v2279
          %v2281 = vmul.f32 %v2172, 1.442695
          %v2282 = vpow.pop %v2281
          %v2283 = vmul.f32 %v2173, 1.442695
          %v2284 = vpow.pop %v2283
          %v2285 = vmul.f32 %v2174, 1.442695
          %v2286 = vpow.pop %v2285
          %v2287 = vmul.f32 %v2175, 1.442695
          %v2288 = vpow.pop %v2287
          %v2289 = vmul.f32 %v2176, 1.442695
          %v2290 = vpow.pop %v2289
          %v2291 = vmul.f32 %v2177, 1.442695
          %v2292 = vpow.pop %v2291
          %v2293 = vmul.f32 %v2178, 1.442695
          %v2294 = vpow.pop %v2293
          %v2295 = vmul.f32 %v2179, 1.442695
          %v2296 = vpow.pop %v2295
          %v2297 = vmul.f32 %v2180, 1.442695
          %v2298 = vpow.pop %v2297
          %v2299 = vmul.f32 %v2181, 1.442695
          %v2300 = vpow.pop %v2299
          %v2301 = vmul.f32 %v2182, 1.442695
          %v2302 = vpow.pop %v2301
          %v2303 = vmul.f32 %v2183, 1.442695
          %v2304 = vpow.pop %v2303
          %v2305 = vmul.f32 %v2184, 1.442695
          %v2306 = vpow.pop %v2305
          %v2307 = vmul.f32 %v2185, 1.442695
          %v2308 = vpow.pop %v2307
          %v2309 = vmul.f32 %v2186, 1.442695
          %v2310 = vpow.pop %v2309
          %v2311 = vmul.f32 %v2187, 1.442695
          %v2312 = vpow.pop %v2311
          %v2313 = vmul.f32 %v2188, 1.442695
          %v2314 = vpow.pop %v2313
          %v2315 = vmul.f32 %v2189, 1.442695
          %v2316 = vpow.pop %v2315
          %v2317 = vmul.f32 %v2190, 1.442695
          %v2318 = vpow.pop %v2317
          %v2319 = vadd.f32 %v2192, 1.0
          %v2320 = vadd.f32 %v2194, 1.0
          %v2321 = vadd.f32 %v2196, 1.0
          %v2322 = vadd.f32 %v2198, 1.0
          %v2323 = vadd.f32 %v2200, 1.0
          %v2324 = vadd.f32 %v2202, 1.0
          %v2325 = vadd.f32 %v2204, 1.0
          %v2326 = vadd.f32 %v2206, 1.0
          %v2327 = vadd.f32 %v2208, 1.0
          %v2328 = vadd.f32 %v2210, 1.0
          %v2329 = vadd.f32 %v2212, 1.0
          %v2330 = vadd.f32 %v2214, 1.0
          %v2331 = vadd.f32 %v2216, 1.0
          %v2332 = vadd.f32 %v2218, 1.0
          %v2333 = vadd.f32 %v2220, 1.0
          %v2334 = vadd.f32 %v2222, 1.0
          %v2335 = vadd.f32 %v2224, 1.0
          %v2336 = vadd.f32 %v2226, 1.0
          %v2337 = vadd.f32 %v2228, 1.0
          %v2338 = vadd.f32 %v2230, 1.0
          %v2339 = vadd.f32 %v2232, 1.0
          %v2340 = vadd.f32 %v2234, 1.0
          %v2341 = vadd.f32 %v2236, 1.0
          %v2342 = vadd.f32 %v2238, 1.0
          %v2343 = vadd.f32 %v2240, 1.0
          %v2344 = vadd.f32 %v2242, 1.0
          %v2345 = vadd.f32 %v2244, 1.0
          %v2346 = vadd.f32 %v2246, 1.0
          %v2347 = vadd.f32 %v2248, 1.0
          %v2348 = vadd.f32 %v2250, 1.0
          %v2349 = vadd.f32 %v2252, 1.0
          %v2350 = vadd.f32 %v2254, 1.0
          %v2351 = vadd.f32 %v2256, 1.0
          %v2352 = vadd.f32 %v2258, 1.0
          %v2353 = vadd.f32 %v2260, 1.0
          %v2354 = vadd.f32 %v2262, 1.0
          %v2355 = vadd.f32 %v2264, 1.0
          %v2356 = vadd.f32 %v2266, 1.0
          %v2357 = vadd.f32 %v2268, 1.0
          %v2358 = vadd.f32 %v2270, 1.0
          %v2359 = vadd.f32 %v2272, 1.0
          %v2360 = vadd.f32 %v2274, 1.0
          %v2361 = vadd.f32 %v2276, 1.0
          %v2362 = vadd.f32 %v2278, 1.0
          %v2363 = vadd.f32 %v2280, 1.0
          %v2364 = vadd.f32 %v2282, 1.0
          %v2365 = vadd.f32 %v2284, 1.0
          %v2366 = vadd.f32 %v2286, 1.0
          %v2367 = vadd.f32 %v2288, 1.0
          %v2368 = vadd.f32 %v2290, 1.0
          %v2369 = vadd.f32 %v2292, 1.0
          %v2370 = vadd.f32 %v2294, 1.0
          %v2371 = vadd.f32 %v2296, 1.0
          %v2372 = vadd.f32 %v2298, 1.0
          %v2373 = vadd.f32 %v2300, 1.0
          %v2374 = vadd.f32 %v2302, 1.0
          %v2375 = vadd.f32 %v2304, 1.0
          %v2376 = vadd.f32 %v2306, 1.0
          %v2377 = vadd.f32 %v2308, 1.0
          %v2378 = vadd.f32 %v2310, 1.0
          %v2379 = vadd.f32 %v2312, 1.0
          %v2380 = vadd.f32 %v2314, 1.0
          %v2381 = vadd.f32 %v2316, 1.0
          %v2382 = vadd.f32 %v2318, 1.0
          %v2383 = vrcp.pop %v2319
          %v2384 = vmul.f32 %v2319, %v2383
          %v2385 = vsub.f32 1.0, %v2384
          %v2386 = vmul.f32 %v2383, %v2385
          %v2387 = vadd.f32 %v2383, %v2386
          %vm2388 = vweird.f32 %v2319
          %vm2389 = vweird.f32 %v2383
          %vm2390 = vmor %vm2388, %vm2389
          %v2391 = vsel %vm2390, %v2383, %v2387
          %v2392 = vand.u32 2147483647, %v2319
          %vm2393 = vcmp.eq.f32.partialorder %v2392, 8.507059e+37
          %v2394 = vand.u32 %v2319, 2147483648
          %v2395 = vor.u32 1.1754944e-38, %v2394
          %v2396 = vsel %vm2393, %v2395, %v2391
          %v2397 = vmul.f32 1.0, %v2396
          %v2398 = vrcp.pop %v2320
          %v2399 = vmul.f32 %v2320, %v2398
          %v2400 = vsub.f32 1.0, %v2399
          %v2401 = vmul.f32 %v2398, %v2400
          %v2402 = vadd.f32 %v2398, %v2401
          %vm2403 = vweird.f32 %v2320
          %vm2404 = vweird.f32 %v2398
          %vm2405 = vmor %vm2403, %vm2404
          %v2406 = vsel %vm2405, %v2398, %v2402
          %v2407 = vand.u32 2147483647, %v2320
          %vm2408 = vcmp.eq.f32.partialorder %v2407, 8.507059e+37
          %v2409 = vand.u32 %v2320, 2147483648
          %v2410 = vor.u32 1.1754944e-38, %v2409
          %v2411 = vsel %vm2408, %v2410, %v2406
          %v2412 = vmul.f32 1.0, %v2411
          %v2413 = vrcp.pop %v2321
          %v2414 = vmul.f32 %v2321, %v2413
          %v2415 = vsub.f32 1.0, %v2414
          %v2416 = vmul.f32 %v2413, %v2415
          %v2417 = vadd.f32 %v2413, %v2416
          %vm2418 = vweird.f32 %v2321
          %vm2419 = vweird.f32 %v2413
          %vm2420 = vmor %vm2418, %vm2419
          %v2421 = vsel %vm2420, %v2413, %v2417
          %v2422 = vand.u32 2147483647, %v2321
          %vm2423 = vcmp.eq.f32.partialorder %v2422, 8.507059e+37
          %v2424 = vand.u32 %v2321, 2147483648
          %v2425 = vor.u32 1.1754944e-38, %v2424
          %v2426 = vsel %vm2423, %v2425, %v2421
          %v2427 = vmul.f32 1.0, %v2426
          %v2428 = vrcp.pop %v2322
          %v2429 = vmul.f32 %v2322, %v2428
          %v2430 = vsub.f32 1.0, %v2429
          %v2431 = vmul.f32 %v2428, %v2430
          %v2432 = vadd.f32 %v2428, %v2431
          %vm2433 = vweird.f32 %v2322
          %vm2434 = vweird.f32 %v2428
          %vm2435 = vmor %vm2433, %vm2434
          %v2436 = vsel %vm2435, %v2428, %v2432
          %v2437 = vand.u32 2147483647, %v2322
          %vm2438 = vcmp.eq.f32.partialorder %v2437, 8.507059e+37
          %v2439 = vand.u32 %v2322, 2147483648
          %v2440 = vor.u32 1.1754944e-38, %v2439
          %v2441 = vsel %vm2438, %v2440, %v2436
          %v2442 = vmul.f32 1.0, %v2441
          %v2443 = vrcp.pop %v2323
          %v2444 = vmul.f32 %v2323, %v2443
          %v2445 = vsub.f32 1.0, %v2444
          %v2446 = vmul.f32 %v2443, %v2445
          %v2447 = vadd.f32 %v2443, %v2446
          %vm2448 = vweird.f32 %v2323
          %vm2449 = vweird.f32 %v2443
          %vm2450 = vmor %vm2448, %vm2449
          %v2451 = vsel %vm2450, %v2443, %v2447
          %v2452 = vand.u32 2147483647, %v2323
          %vm2453 = vcmp.eq.f32.partialorder %v2452, 8.507059e+37
          %v2454 = vand.u32 %v2323, 2147483648
          %v2455 = vor.u32 1.1754944e-38, %v2454
          %v2456 = vsel %vm2453, %v2455, %v2451
          %v2457 = vmul.f32 1.0, %v2456
          %v2458 = vrcp.pop %v2324
          %v2459 = vmul.f32 %v2324, %v2458
          %v2460 = vsub.f32 1.0, %v2459
          %v2461 = vmul.f32 %v2458, %v2460
          %v2462 = vadd.f32 %v2458, %v2461
          %vm2463 = vweird.f32 %v2324
          %vm2464 = vweird.f32 %v2458
          %vm2465 = vmor %vm2463, %vm2464
          %v2466 = vsel %vm2465, %v2458, %v2462
          %v2467 = vand.u32 2147483647, %v2324
          %vm2468 = vcmp.eq.f32.partialorder %v2467, 8.507059e+37
          %v2469 = vand.u32 %v2324, 2147483648
          %v2470 = vor.u32 1.1754944e-38, %v2469
          %v2471 = vsel %vm2468, %v2470, %v2466
          %v2472 = vmul.f32 1.0, %v2471
          %v2473 = vrcp.pop %v2325
          %v2474 = vmul.f32 %v2325, %v2473
          %v2475 = vsub.f32 1.0, %v2474
          %v2476 = vmul.f32 %v2473, %v2475
          %v2477 = vadd.f32 %v2473, %v2476
          %vm2478 = vweird.f32 %v2325
          %vm2479 = vweird.f32 %v2473
          %vm2480 = vmor %vm2478, %vm2479
          %v2481 = vsel %vm2480, %v2473, %v2477
          %v2482 = vand.u32 2147483647, %v2325
          %vm2483 = vcmp.eq.f32.partialorder %v2482, 8.507059e+37
          %v2484 = vand.u32 %v2325, 2147483648
          %v2485 = vor.u32 1.1754944e-38, %v2484
          %v2486 = vsel %vm2483, %v2485, %v2481
          %v2487 = vmul.f32 1.0, %v2486
          %v2488 = vrcp.pop %v2326
          %v2489 = vmul.f32 %v2326, %v2488
          %v2490 = vsub.f32 1.0, %v2489
          %v2491 = vmul.f32 %v2488, %v2490
          %v2492 = vadd.f32 %v2488, %v2491
          %vm2493 = vweird.f32 %v2326
          %vm2494 = vweird.f32 %v2488
          %vm2495 = vmor %vm2493, %vm2494
          %v2496 = vsel %vm2495, %v2488, %v2492
          %v2497 = vand.u32 2147483647, %v2326
          %vm2498 = vcmp.eq.f32.partialorder %v2497, 8.507059e+37
          %v2499 = vand.u32 %v2326, 2147483648
          %v2500 = vor.u32 1.1754944e-38, %v2499
          %v2501 = vsel %vm2498, %v2500, %v2496
          %v2502 = vmul.f32 1.0, %v2501
          %v2503 = vrcp.pop %v2327
          %v2504 = vmul.f32 %v2327, %v2503
          %v2505 = vsub.f32 1.0, %v2504
          %v2506 = vmul.f32 %v2503, %v2505
          %v2507 = vadd.f32 %v2503, %v2506
          %vm2508 = vweird.f32 %v2327
          %vm2509 = vweird.f32 %v2503
          %vm2510 = vmor %vm2508, %vm2509
          %v2511 = vsel %vm2510, %v2503, %v2507
          %v2512 = vand.u32 2147483647, %v2327
          %vm2513 = vcmp.eq.f32.partialorder %v2512, 8.507059e+37
          %v2514 = vand.u32 %v2327, 2147483648
          %v2515 = vor.u32 1.1754944e-38, %v2514
          %v2516 = vsel %vm2513, %v2515, %v2511
          %v2517 = vmul.f32 1.0, %v2516
          %v2518 = vrcp.pop %v2328
          %v2519 = vmul.f32 %v2328, %v2518
          %v2520 = vsub.f32 1.0, %v2519
          %v2521 = vmul.f32 %v2518, %v2520
          %v2522 = vadd.f32 %v2518, %v2521
          %vm2523 = vweird.f32 %v2328
          %vm2524 = vweird.f32 %v2518
          %vm2525 = vmor %vm2523, %vm2524
          %v2526 = vsel %vm2525, %v2518, %v2522
          %v2527 = vand.u32 2147483647, %v2328
          %vm2528 = vcmp.eq.f32.partialorder %v2527, 8.507059e+37
          %v2529 = vand.u32 %v2328, 2147483648
          %v2530 = vor.u32 1.1754944e-38, %v2529
          %v2531 = vsel %vm2528, %v2530, %v2526
          %v2532 = vmul.f32 1.0, %v2531
          %v2533 = vrcp.pop %v2329
          %v2534 = vmul.f32 %v2329, %v2533
          %v2535 = vsub.f32 1.0, %v2534
          %v2536 = vmul.f32 %v2533, %v2535
          %v2537 = vadd.f32 %v2533, %v2536
          %vm2538 = vweird.f32 %v2329
          %vm2539 = vweird.f32 %v2533
          %vm2540 = vmor %vm2538, %vm2539
          %v2541 = vsel %vm2540, %v2533, %v2537
          %v2542 = vand.u32 2147483647, %v2329
          %vm2543 = vcmp.eq.f32.partialorder %v2542, 8.507059e+37
          %v2544 = vand.u32 %v2329, 2147483648
          %v2545 = vor.u32 1.1754944e-38, %v2544
          %v2546 = vsel %vm2543, %v2545, %v2541
          %v2547 = vmul.f32 1.0, %v2546
          %v2548 = vrcp.pop %v2330
          %v2549 = vmul.f32 %v2330, %v2548
          %v2550 = vsub.f32 1.0, %v2549
          %v2551 = vmul.f32 %v2548, %v2550
          %v2552 = vadd.f32 %v2548, %v2551
          %vm2553 = vweird.f32 %v2330
          %vm2554 = vweird.f32 %v2548
          %vm2555 = vmor %vm2553, %vm2554
          %v2556 = vsel %vm2555, %v2548, %v2552
          %v2557 = vand.u32 2147483647, %v2330
          %vm2558 = vcmp.eq.f32.partialorder %v2557, 8.507059e+37
          %v2559 = vand.u32 %v2330, 2147483648
          %v2560 = vor.u32 1.1754944e-38, %v2559
          %v2561 = vsel %vm2558, %v2560, %v2556
          %v2562 = vmul.f32 1.0, %v2561
          %v2563 = vrcp.pop %v2331
          %v2564 = vmul.f32 %v2331, %v2563
          %v2565 = vsub.f32 1.0, %v2564
          %v2566 = vmul.f32 %v2563, %v2565
          %v2567 = vadd.f32 %v2563, %v2566
          %vm2568 = vweird.f32 %v2331
          %vm2569 = vweird.f32 %v2563
          %vm2570 = vmor %vm2568, %vm2569
          %v2571 = vsel %vm2570, %v2563, %v2567
          %v2572 = vand.u32 2147483647, %v2331
          %vm2573 = vcmp.eq.f32.partialorder %v2572, 8.507059e+37
          %v2574 = vand.u32 %v2331, 2147483648
          %v2575 = vor.u32 1.1754944e-38, %v2574
          %v2576 = vsel %vm2573, %v2575, %v2571
          %v2577 = vmul.f32 1.0, %v2576
          %v2578 = vrcp.pop %v2332
          %v2579 = vmul.f32 %v2332, %v2578
          %v2580 = vsub.f32 1.0, %v2579
          %v2581 = vmul.f32 %v2578, %v2580
          %v2582 = vadd.f32 %v2578, %v2581
          %vm2583 = vweird.f32 %v2332
          %vm2584 = vweird.f32 %v2578
          %vm2585 = vmor %vm2583, %vm2584
          %v2586 = vsel %vm2585, %v2578, %v2582
          %v2587 = vand.u32 2147483647, %v2332
          %vm2588 = vcmp.eq.f32.partialorder %v2587, 8.507059e+37
          %v2589 = vand.u32 %v2332, 2147483648
          %v2590 = vor.u32 1.1754944e-38, %v2589
          %v2591 = vsel %vm2588, %v2590, %v2586
          %v2592 = vmul.f32 1.0, %v2591
          %v2593 = vrcp.pop %v2333
          %v2594 = vmul.f32 %v2333, %v2593
          %v2595 = vsub.f32 1.0, %v2594
          %v2596 = vmul.f32 %v2593, %v2595
          %v2597 = vadd.f32 %v2593, %v2596
          %vm2598 = vweird.f32 %v2333
          %vm2599 = vweird.f32 %v2593
          %vm2600 = vmor %vm2598, %vm2599
          %v2601 = vsel %vm2600, %v2593, %v2597
          %v2602 = vand.u32 2147483647, %v2333
          %vm2603 = vcmp.eq.f32.partialorder %v2602, 8.507059e+37
          %v2604 = vand.u32 %v2333, 2147483648
          %v2605 = vor.u32 1.1754944e-38, %v2604
          %v2606 = vsel %vm2603, %v2605, %v2601
          %v2607 = vmul.f32 1.0, %v2606
          %v2608 = vrcp.pop %v2334
          %v2609 = vmul.f32 %v2334, %v2608
          %v2610 = vsub.f32 1.0, %v2609
          %v2611 = vmul.f32 %v2608, %v2610
          %v2612 = vadd.f32 %v2608, %v2611
          %vm2613 = vweird.f32 %v2334
          %vm2614 = vweird.f32 %v2608
          %vm2615 = vmor %vm2613, %vm2614
          %v2616 = vsel %vm2615, %v2608, %v2612
          %v2617 = vand.u32 2147483647, %v2334
          %vm2618 = vcmp.eq.f32.partialorder %v2617, 8.507059e+37
          %v2619 = vand.u32 %v2334, 2147483648
          %v2620 = vor.u32 1.1754944e-38, %v2619
          %v2621 = vsel %vm2618, %v2620, %v2616
          %v2622 = vmul.f32 1.0, %v2621
          %v2623 = vrcp.pop %v2335
          %v2624 = vmul.f32 %v2335, %v2623
          %v2625 = vsub.f32 1.0, %v2624
          %v2626 = vmul.f32 %v2623, %v2625
          %v2627 = vadd.f32 %v2623, %v2626
          %vm2628 = vweird.f32 %v2335
          %vm2629 = vweird.f32 %v2623
          %vm2630 = vmor %vm2628, %vm2629
          %v2631 = vsel %vm2630, %v2623, %v2627
          %v2632 = vand.u32 2147483647, %v2335
          %vm2633 = vcmp.eq.f32.partialorder %v2632, 8.507059e+37
          %v2634 = vand.u32 %v2335, 2147483648
          %v2635 = vor.u32 1.1754944e-38, %v2634
          %v2636 = vsel %vm2633, %v2635, %v2631
          %v2637 = vmul.f32 1.0, %v2636
          %v2638 = vrcp.pop %v2336
          %v2639 = vmul.f32 %v2336, %v2638
          %v2640 = vsub.f32 1.0, %v2639
          %v2641 = vmul.f32 %v2638, %v2640
          %v2642 = vadd.f32 %v2638, %v2641
          %vm2643 = vweird.f32 %v2336
          %vm2644 = vweird.f32 %v2638
          %vm2645 = vmor %vm2643, %vm2644
          %v2646 = vsel %vm2645, %v2638, %v2642
          %v2647 = vand.u32 2147483647, %v2336
          %vm2648 = vcmp.eq.f32.partialorder %v2647, 8.507059e+37
          %v2649 = vand.u32 %v2336, 2147483648
          %v2650 = vor.u32 1.1754944e-38, %v2649
          %v2651 = vsel %vm2648, %v2650, %v2646
          %v2652 = vmul.f32 1.0, %v2651
          %v2653 = vrcp.pop %v2337
          %v2654 = vmul.f32 %v2337, %v2653
          %v2655 = vsub.f32 1.0, %v2654
          %v2656 = vmul.f32 %v2653, %v2655
          %v2657 = vadd.f32 %v2653, %v2656
          %vm2658 = vweird.f32 %v2337
          %vm2659 = vweird.f32 %v2653
          %vm2660 = vmor %vm2658, %vm2659
          %v2661 = vsel %vm2660, %v2653, %v2657
          %v2662 = vand.u32 2147483647, %v2337
          %vm2663 = vcmp.eq.f32.partialorder %v2662, 8.507059e+37
          %v2664 = vand.u32 %v2337, 2147483648
          %v2665 = vor.u32 1.1754944e-38, %v2664
          %v2666 = vsel %vm2663, %v2665, %v2661
          %v2667 = vmul.f32 1.0, %v2666
          %v2668 = vrcp.pop %v2338
          %v2669 = vmul.f32 %v2338, %v2668
          %v2670 = vsub.f32 1.0, %v2669
          %v2671 = vmul.f32 %v2668, %v2670
          %v2672 = vadd.f32 %v2668, %v2671
          %vm2673 = vweird.f32 %v2338
          %vm2674 = vweird.f32 %v2668
          %vm2675 = vmor %vm2673, %vm2674
          %v2676 = vsel %vm2675, %v2668, %v2672
          %v2677 = vand.u32 2147483647, %v2338
          %vm2678 = vcmp.eq.f32.partialorder %v2677, 8.507059e+37
          %v2679 = vand.u32 %v2338, 2147483648
          %v2680 = vor.u32 1.1754944e-38, %v2679
          %v2681 = vsel %vm2678, %v2680, %v2676
          %v2682 = vmul.f32 1.0, %v2681
          %v2683 = vrcp.pop %v2339
          %v2684 = vmul.f32 %v2339, %v2683
          %v2685 = vsub.f32 1.0, %v2684
          %v2686 = vmul.f32 %v2683, %v2685
          %v2687 = vadd.f32 %v2683, %v2686
          %vm2688 = vweird.f32 %v2339
          %vm2689 = vweird.f32 %v2683
          %vm2690 = vmor %vm2688, %vm2689
          %v2691 = vsel %vm2690, %v2683, %v2687
          %v2692 = vand.u32 2147483647, %v2339
          %vm2693 = vcmp.eq.f32.partialorder %v2692, 8.507059e+37
          %v2694 = vand.u32 %v2339, 2147483648
          %v2695 = vor.u32 1.1754944e-38, %v2694
          %v2696 = vsel %vm2693, %v2695, %v2691
          %v2697 = vmul.f32 1.0, %v2696
          %v2698 = vrcp.pop %v2340
          %v2699 = vmul.f32 %v2340, %v2698
          %v2700 = vsub.f32 1.0, %v2699
          %v2701 = vmul.f32 %v2698, %v2700
          %v2702 = vadd.f32 %v2698, %v2701
          %vm2703 = vweird.f32 %v2340
          %vm2704 = vweird.f32 %v2698
          %vm2705 = vmor %vm2703, %vm2704
          %v2706 = vsel %vm2705, %v2698, %v2702
          %v2707 = vand.u32 2147483647, %v2340
          %vm2708 = vcmp.eq.f32.partialorder %v2707, 8.507059e+37
          %v2709 = vand.u32 %v2340, 2147483648
          %v2710 = vor.u32 1.1754944e-38, %v2709
          %v2711 = vsel %vm2708, %v2710, %v2706
          %v2712 = vmul.f32 1.0, %v2711
          %v2713 = vrcp.pop %v2341
          %v2714 = vmul.f32 %v2341, %v2713
          %v2715 = vsub.f32 1.0, %v2714
          %v2716 = vmul.f32 %v2713, %v2715
          %v2717 = vadd.f32 %v2713, %v2716
          %vm2718 = vweird.f32 %v2341
          %vm2719 = vweird.f32 %v2713
          %vm2720 = vmor %vm2718, %vm2719
          %v2721 = vsel %vm2720, %v2713, %v2717
          %v2722 = vand.u32 2147483647, %v2341
          %vm2723 = vcmp.eq.f32.partialorder %v2722, 8.507059e+37
          %v2724 = vand.u32 %v2341, 2147483648
          %v2725 = vor.u32 1.1754944e-38, %v2724
          %v2726 = vsel %vm2723, %v2725, %v2721
          %v2727 = vmul.f32 1.0, %v2726
          %v2728 = vrcp.pop %v2342
          %v2729 = vmul.f32 %v2342, %v2728
          %v2730 = vsub.f32 1.0, %v2729
          %v2731 = vmul.f32 %v2728, %v2730
          %v2732 = vadd.f32 %v2728, %v2731
          %vm2733 = vweird.f32 %v2342
          %vm2734 = vweird.f32 %v2728
          %vm2735 = vmor %vm2733, %vm2734
          %v2736 = vsel %vm2735, %v2728, %v2732
          %v2737 = vand.u32 2147483647, %v2342
          %vm2738 = vcmp.eq.f32.partialorder %v2737, 8.507059e+37
          %v2739 = vand.u32 %v2342, 2147483648
          %v2740 = vor.u32 1.1754944e-38, %v2739
          %v2741 = vsel %vm2738, %v2740, %v2736
          %v2742 = vmul.f32 1.0, %v2741
          %v2743 = vrcp.pop %v2343
          %v2744 = vmul.f32 %v2343, %v2743
          %v2745 = vsub.f32 1.0, %v2744
          %v2746 = vmul.f32 %v2743, %v2745
          %v2747 = vadd.f32 %v2743, %v2746
          %vm2748 = vweird.f32 %v2343
          %vm2749 = vweird.f32 %v2743
          %vm2750 = vmor %vm2748, %vm2749
          %v2751 = vsel %vm2750, %v2743, %v2747
          %v2752 = vand.u32 2147483647, %v2343
          %vm2753 = vcmp.eq.f32.partialorder %v2752, 8.507059e+37
          %v2754 = vand.u32 %v2343, 2147483648
          %v2755 = vor.u32 1.1754944e-38, %v2754
          %v2756 = vsel %vm2753, %v2755, %v2751
          %v2757 = vmul.f32 1.0, %v2756
          %v2758 = vrcp.pop %v2344
          %v2759 = vmul.f32 %v2344, %v2758
          %v2760 = vsub.f32 1.0, %v2759
          %v2761 = vmul.f32 %v2758, %v2760
          %v2762 = vadd.f32 %v2758, %v2761
          %vm2763 = vweird.f32 %v2344
          %vm2764 = vweird.f32 %v2758
          %vm2765 = vmor %vm2763, %vm2764
          %v2766 = vsel %vm2765, %v2758, %v2762
          %v2767 = vand.u32 2147483647, %v2344
          %vm2768 = vcmp.eq.f32.partialorder %v2767, 8.507059e+37
          %v2769 = vand.u32 %v2344, 2147483648
          %v2770 = vor.u32 1.1754944e-38, %v2769
          %v2771 = vsel %vm2768, %v2770, %v2766
          %v2772 = vmul.f32 1.0, %v2771
          %v2773 = vrcp.pop %v2345
          %v2774 = vmul.f32 %v2345, %v2773
          %v2775 = vsub.f32 1.0, %v2774
          %v2776 = vmul.f32 %v2773, %v2775
          %v2777 = vadd.f32 %v2773, %v2776
          %vm2778 = vweird.f32 %v2345
          %vm2779 = vweird.f32 %v2773
          %vm2780 = vmor %vm2778, %vm2779
          %v2781 = vsel %vm2780, %v2773, %v2777
          %v2782 = vand.u32 2147483647, %v2345
          %vm2783 = vcmp.eq.f32.partialorder %v2782, 8.507059e+37
          %v2784 = vand.u32 %v2345, 2147483648
          %v2785 = vor.u32 1.1754944e-38, %v2784
          %v2786 = vsel %vm2783, %v2785, %v2781
          %v2787 = vmul.f32 1.0, %v2786
          %v2788 = vrcp.pop %v2346
          %v2789 = vmul.f32 %v2346, %v2788
          %v2790 = vsub.f32 1.0, %v2789
          %v2791 = vmul.f32 %v2788, %v2790
          %v2792 = vadd.f32 %v2788, %v2791
          %vm2793 = vweird.f32 %v2346
          %vm2794 = vweird.f32 %v2788
          %vm2795 = vmor %vm2793, %vm2794
          %v2796 = vsel %vm2795, %v2788, %v2792
          %v2797 = vand.u32 2147483647, %v2346
          %vm2798 = vcmp.eq.f32.partialorder %v2797, 8.507059e+37
          %v2799 = vand.u32 %v2346, 2147483648
          %v2800 = vor.u32 1.1754944e-38, %v2799
          %v2801 = vsel %vm2798, %v2800, %v2796
          %v2802 = vmul.f32 1.0, %v2801
          %v2803 = vrcp.pop %v2347
          %v2804 = vmul.f32 %v2347, %v2803
          %v2805 = vsub.f32 1.0, %v2804
          %v2806 = vmul.f32 %v2803, %v2805
          %v2807 = vadd.f32 %v2803, %v2806
          %vm2808 = vweird.f32 %v2347
          %vm2809 = vweird.f32 %v2803
          %vm2810 = vmor %vm2808, %vm2809
          %v2811 = vsel %vm2810, %v2803, %v2807
          %v2812 = vand.u32 2147483647, %v2347
          %vm2813 = vcmp.eq.f32.partialorder %v2812, 8.507059e+37
          %v2814 = vand.u32 %v2347, 2147483648
          %v2815 = vor.u32 1.1754944e-38, %v2814
          %v2816 = vsel %vm2813, %v2815, %v2811
          %v2817 = vmul.f32 1.0, %v2816
          %v2818 = vrcp.pop %v2348
          %v2819 = vmul.f32 %v2348, %v2818
          %v2820 = vsub.f32 1.0, %v2819
          %v2821 = vmul.f32 %v2818, %v2820
          %v2822 = vadd.f32 %v2818, %v2821
          %vm2823 = vweird.f32 %v2348
          %vm2824 = vweird.f32 %v2818
          %vm2825 = vmor %vm2823, %vm2824
          %v2826 = vsel %vm2825, %v2818, %v2822
          %v2827 = vand.u32 2147483647, %v2348
          %vm2828 = vcmp.eq.f32.partialorder %v2827, 8.507059e+37
          %v2829 = vand.u32 %v2348, 2147483648
          %v2830 = vor.u32 1.1754944e-38, %v2829
          %v2831 = vsel %vm2828, %v2830, %v2826
          %v2832 = vmul.f32 1.0, %v2831
          %v2833 = vrcp.pop %v2349
          %v2834 = vmul.f32 %v2349, %v2833
          %v2835 = vsub.f32 1.0, %v2834
          %v2836 = vmul.f32 %v2833, %v2835
          %v2837 = vadd.f32 %v2833, %v2836
          %vm2838 = vweird.f32 %v2349
          %vm2839 = vweird.f32 %v2833
          %vm2840 = vmor %vm2838, %vm2839
          %v2841 = vsel %vm2840, %v2833, %v2837
          %v2842 = vand.u32 2147483647, %v2349
          %vm2843 = vcmp.eq.f32.partialorder %v2842, 8.507059e+37
          %v2844 = vand.u32 %v2349, 2147483648
          %v2845 = vor.u32 1.1754944e-38, %v2844
          %v2846 = vsel %vm2843, %v2845, %v2841
          %v2847 = vmul.f32 1.0, %v2846
          %v2848 = vrcp.pop %v2350
          %v2849 = vmul.f32 %v2350, %v2848
          %v2850 = vsub.f32 1.0, %v2849
          %v2851 = vmul.f32 %v2848, %v2850
          %v2852 = vadd.f32 %v2848, %v2851
          %vm2853 = vweird.f32 %v2350
          %vm2854 = vweird.f32 %v2848
          %vm2855 = vmor %vm2853, %vm2854
          %v2856 = vsel %vm2855, %v2848, %v2852
          %v2857 = vand.u32 2147483647, %v2350
          %vm2858 = vcmp.eq.f32.partialorder %v2857, 8.507059e+37
          %v2859 = vand.u32 %v2350, 2147483648
          %v2860 = vor.u32 1.1754944e-38, %v2859
          %v2861 = vsel %vm2858, %v2860, %v2856
          %v2862 = vmul.f32 1.0, %v2861
          %v2863 = vrcp.pop %v2351
          %v2864 = vmul.f32 %v2351, %v2863
          %v2865 = vsub.f32 1.0, %v2864
          %v2866 = vmul.f32 %v2863, %v2865
          %v2867 = vadd.f32 %v2863, %v2866
          %vm2868 = vweird.f32 %v2351
          %vm2869 = vweird.f32 %v2863
          %vm2870 = vmor %vm2868, %vm2869
          %v2871 = vsel %vm2870, %v2863, %v2867
          %v2872 = vand.u32 2147483647, %v2351
          %vm2873 = vcmp.eq.f32.partialorder %v2872, 8.507059e+37
          %v2874 = vand.u32 %v2351, 2147483648
          %v2875 = vor.u32 1.1754944e-38, %v2874
          %v2876 = vsel %vm2873, %v2875, %v2871
          %v2877 = vmul.f32 1.0, %v2876
          %v2878 = vrcp.pop %v2352
          %v2879 = vmul.f32 %v2352, %v2878
          %v2880 = vsub.f32 1.0, %v2879
          %v2881 = vmul.f32 %v2878, %v2880
          %v2882 = vadd.f32 %v2878, %v2881
          %vm2883 = vweird.f32 %v2352
          %vm2884 = vweird.f32 %v2878
          %vm2885 = vmor %vm2883, %vm2884
          %v2886 = vsel %vm2885, %v2878, %v2882
          %v2887 = vand.u32 2147483647, %v2352
          %vm2888 = vcmp.eq.f32.partialorder %v2887, 8.507059e+37
          %v2889 = vand.u32 %v2352, 2147483648
          %v2890 = vor.u32 1.1754944e-38, %v2889
          %v2891 = vsel %vm2888, %v2890, %v2886
          %v2892 = vmul.f32 1.0, %v2891
          %v2893 = vrcp.pop %v2353
          %v2894 = vmul.f32 %v2353, %v2893
          %v2895 = vsub.f32 1.0, %v2894
          %v2896 = vmul.f32 %v2893, %v2895
          %v2897 = vadd.f32 %v2893, %v2896
          %vm2898 = vweird.f32 %v2353
          %vm2899 = vweird.f32 %v2893
          %vm2900 = vmor %vm2898, %vm2899
          %v2901 = vsel %vm2900, %v2893, %v2897
          %v2902 = vand.u32 2147483647, %v2353
          %vm2903 = vcmp.eq.f32.partialorder %v2902, 8.507059e+37
          %v2904 = vand.u32 %v2353, 2147483648
          %v2905 = vor.u32 1.1754944e-38, %v2904
          %v2906 = vsel %vm2903, %v2905, %v2901
          %v2907 = vmul.f32 1.0, %v2906
          %v2908 = vrcp.pop %v2354
          %v2909 = vmul.f32 %v2354, %v2908
          %v2910 = vsub.f32 1.0, %v2909
          %v2911 = vmul.f32 %v2908, %v2910
          %v2912 = vadd.f32 %v2908, %v2911
          %vm2913 = vweird.f32 %v2354
          %vm2914 = vweird.f32 %v2908
          %vm2915 = vmor %vm2913, %vm2914
          %v2916 = vsel %vm2915, %v2908, %v2912
          %v2917 = vand.u32 2147483647, %v2354
          %vm2918 = vcmp.eq.f32.partialorder %v2917, 8.507059e+37
          %v2919 = vand.u32 %v2354, 2147483648
          %v2920 = vor.u32 1.1754944e-38, %v2919
          %v2921 = vsel %vm2918, %v2920, %v2916
          %v2922 = vmul.f32 1.0, %v2921
          %v2923 = vrcp.pop %v2355
          %v2924 = vmul.f32 %v2355, %v2923
          %v2925 = vsub.f32 1.0, %v2924
          %v2926 = vmul.f32 %v2923, %v2925
          %v2927 = vadd.f32 %v2923, %v2926
          %vm2928 = vweird.f32 %v2355
          %vm2929 = vweird.f32 %v2923
          %vm2930 = vmor %vm2928, %vm2929
          %v2931 = vsel %vm2930, %v2923, %v2927
          %v2932 = vand.u32 2147483647, %v2355
          %vm2933 = vcmp.eq.f32.partialorder %v2932, 8.507059e+37
          %v2934 = vand.u32 %v2355, 2147483648
          %v2935 = vor.u32 1.1754944e-38, %v2934
          %v2936 = vsel %vm2933, %v2935, %v2931
          %v2937 = vmul.f32 1.0, %v2936
          %v2938 = vrcp.pop %v2356
          %v2939 = vmul.f32 %v2356, %v2938
          %v2940 = vsub.f32 1.0, %v2939
          %v2941 = vmul.f32 %v2938, %v2940
          %v2942 = vadd.f32 %v2938, %v2941
          %vm2943 = vweird.f32 %v2356
          %vm2944 = vweird.f32 %v2938
          %vm2945 = vmor %vm2943, %vm2944
          %v2946 = vsel %vm2945, %v2938, %v2942
          %v2947 = vand.u32 2147483647, %v2356
          %vm2948 = vcmp.eq.f32.partialorder %v2947, 8.507059e+37
          %v2949 = vand.u32 %v2356, 2147483648
          %v2950 = vor.u32 1.1754944e-38, %v2949
          %v2951 = vsel %vm2948, %v2950, %v2946
          %v2952 = vmul.f32 1.0, %v2951
          %v2953 = vrcp.pop %v2357
          %v2954 = vmul.f32 %v2357, %v2953
          %v2955 = vsub.f32 1.0, %v2954
          %v2956 = vmul.f32 %v2953, %v2955
          %v2957 = vadd.f32 %v2953, %v2956
          %vm2958 = vweird.f32 %v2357
          %vm2959 = vweird.f32 %v2953
          %vm2960 = vmor %vm2958, %vm2959
          %v2961 = vsel %vm2960, %v2953, %v2957
          %v2962 = vand.u32 2147483647, %v2357
          %vm2963 = vcmp.eq.f32.partialorder %v2962, 8.507059e+37
          %v2964 = vand.u32 %v2357, 2147483648
          %v2965 = vor.u32 1.1754944e-38, %v2964
          %v2966 = vsel %vm2963, %v2965, %v2961
          %v2967 = vmul.f32 1.0, %v2966
          %v2968 = vrcp.pop %v2358
          %v2969 = vmul.f32 %v2358, %v2968
          %v2970 = vsub.f32 1.0, %v2969
          %v2971 = vmul.f32 %v2968, %v2970
          %v2972 = vadd.f32 %v2968, %v2971
          %vm2973 = vweird.f32 %v2358
          %vm2974 = vweird.f32 %v2968
          %vm2975 = vmor %vm2973, %vm2974
          %v2976 = vsel %vm2975, %v2968, %v2972
          %v2977 = vand.u32 2147483647, %v2358
          %vm2978 = vcmp.eq.f32.partialorder %v2977, 8.507059e+37
          %v2979 = vand.u32 %v2358, 2147483648
          %v2980 = vor.u32 1.1754944e-38, %v2979
          %v2981 = vsel %vm2978, %v2980, %v2976
          %v2982 = vmul.f32 1.0, %v2981
          %v2983 = vrcp.pop %v2359
          %v2984 = vmul.f32 %v2359, %v2983
          %v2985 = vsub.f32 1.0, %v2984
          %v2986 = vmul.f32 %v2983, %v2985
          %v2987 = vadd.f32 %v2983, %v2986
          %vm2988 = vweird.f32 %v2359
          %vm2989 = vweird.f32 %v2983
          %vm2990 = vmor %vm2988, %vm2989
          %v2991 = vsel %vm2990, %v2983, %v2987
          %v2992 = vand.u32 2147483647, %v2359
          %vm2993 = vcmp.eq.f32.partialorder %v2992, 8.507059e+37
          %v2994 = vand.u32 %v2359, 2147483648
          %v2995 = vor.u32 1.1754944e-38, %v2994
          %v2996 = vsel %vm2993, %v2995, %v2991
          %v2997 = vmul.f32 1.0, %v2996
          %v2998 = vrcp.pop %v2360
          %v2999 = vmul.f32 %v2360, %v2998
          %v3000 = vsub.f32 1.0, %v2999
          %v3001 = vmul.f32 %v2998, %v3000
          %v3002 = vadd.f32 %v2998, %v3001
          %vm3003 = vweird.f32 %v2360
          %vm3004 = vweird.f32 %v2998
          %vm3005 = vmor %vm3003, %vm3004
          %v3006 = vsel %vm3005, %v2998, %v3002
          %v3007 = vand.u32 2147483647, %v2360
          %vm3008 = vcmp.eq.f32.partialorder %v3007, 8.507059e+37
          %v3009 = vand.u32 %v2360, 2147483648
          %v3010 = vor.u32 1.1754944e-38, %v3009
          %v3011 = vsel %vm3008, %v3010, %v3006
          %v3012 = vmul.f32 1.0, %v3011
          %v3013 = vrcp.pop %v2361
          %v3014 = vmul.f32 %v2361, %v3013
          %v3015 = vsub.f32 1.0, %v3014
          %v3016 = vmul.f32 %v3013, %v3015
          %v3017 = vadd.f32 %v3013, %v3016
          %vm3018 = vweird.f32 %v2361
          %vm3019 = vweird.f32 %v3013
          %vm3020 = vmor %vm3018, %vm3019
          %v3021 = vsel %vm3020, %v3013, %v3017
          %v3022 = vand.u32 2147483647, %v2361
          %vm3023 = vcmp.eq.f32.partialorder %v3022, 8.507059e+37
          %v3024 = vand.u32 %v2361, 2147483648
          %v3025 = vor.u32 1.1754944e-38, %v3024
          %v3026 = vsel %vm3023, %v3025, %v3021
          %v3027 = vmul.f32 1.0, %v3026
          %v3028 = vrcp.pop %v2362
          %v3029 = vmul.f32 %v2362, %v3028
          %v3030 = vsub.f32 1.0, %v3029
          %v3031 = vmul.f32 %v3028, %v3030
          %v3032 = vadd.f32 %v3028, %v3031
          %vm3033 = vweird.f32 %v2362
          %vm3034 = vweird.f32 %v3028
          %vm3035 = vmor %vm3033, %vm3034
          %v3036 = vsel %vm3035, %v3028, %v3032
          %v3037 = vand.u32 2147483647, %v2362
          %vm3038 = vcmp.eq.f32.partialorder %v3037, 8.507059e+37
          %v3039 = vand.u32 %v2362, 2147483648
          %v3040 = vor.u32 1.1754944e-38, %v3039
          %v3041 = vsel %vm3038, %v3040, %v3036
          %v3042 = vmul.f32 1.0, %v3041
          %v3043 = vrcp.pop %v2363
          %v3044 = vmul.f32 %v2363, %v3043
          %v3045 = vsub.f32 1.0, %v3044
          %v3046 = vmul.f32 %v3043, %v3045
          %v3047 = vadd.f32 %v3043, %v3046
          %vm3048 = vweird.f32 %v2363
          %vm3049 = vweird.f32 %v3043
          %vm3050 = vmor %vm3048, %vm3049
          %v3051 = vsel %vm3050, %v3043, %v3047
          %v3052 = vand.u32 2147483647, %v2363
          %vm3053 = vcmp.eq.f32.partialorder %v3052, 8.507059e+37
          %v3054 = vand.u32 %v2363, 2147483648
          %v3055 = vor.u32 1.1754944e-38, %v3054
          %v3056 = vsel %vm3053, %v3055, %v3051
          %v3057 = vmul.f32 1.0, %v3056
          %v3058 = vrcp.pop %v2364
          %v3059 = vmul.f32 %v2364, %v3058
          %v3060 = vsub.f32 1.0, %v3059
          %v3061 = vmul.f32 %v3058, %v3060
          %v3062 = vadd.f32 %v3058, %v3061
          %vm3063 = vweird.f32 %v2364
          %vm3064 = vweird.f32 %v3058
          %vm3065 = vmor %vm3063, %vm3064
          %v3066 = vsel %vm3065, %v3058, %v3062
          %v3067 = vand.u32 2147483647, %v2364
          %vm3068 = vcmp.eq.f32.partialorder %v3067, 8.507059e+37
          %v3069 = vand.u32 %v2364, 2147483648
          %v3070 = vor.u32 1.1754944e-38, %v3069
          %v3071 = vsel %vm3068, %v3070, %v3066
          %v3072 = vmul.f32 1.0, %v3071
          %v3073 = vrcp.pop %v2365
          %v3074 = vmul.f32 %v2365, %v3073
          %v3075 = vsub.f32 1.0, %v3074
          %v3076 = vmul.f32 %v3073, %v3075
          %v3077 = vadd.f32 %v3073, %v3076
          %vm3078 = vweird.f32 %v2365
          %vm3079 = vweird.f32 %v3073
          %vm3080 = vmor %vm3078, %vm3079
          %v3081 = vsel %vm3080, %v3073, %v3077
          %v3082 = vand.u32 2147483647, %v2365
          %vm3083 = vcmp.eq.f32.partialorder %v3082, 8.507059e+37
          %v3084 = vand.u32 %v2365, 2147483648
          %v3085 = vor.u32 1.1754944e-38, %v3084
          %v3086 = vsel %vm3083, %v3085, %v3081
          %v3087 = vmul.f32 1.0, %v3086
          %v3088 = vrcp.pop %v2366
          %v3089 = vmul.f32 %v2366, %v3088
          %v3090 = vsub.f32 1.0, %v3089
          %v3091 = vmul.f32 %v3088, %v3090
          %v3092 = vadd.f32 %v3088, %v3091
          %vm3093 = vweird.f32 %v2366
          %vm3094 = vweird.f32 %v3088
          %vm3095 = vmor %vm3093, %vm3094
          %v3096 = vsel %vm3095, %v3088, %v3092
          %v3097 = vand.u32 2147483647, %v2366
          %vm3098 = vcmp.eq.f32.partialorder %v3097, 8.507059e+37
          %v3099 = vand.u32 %v2366, 2147483648
          %v3100 = vor.u32 1.1754944e-38, %v3099
          %v3101 = vsel %vm3098, %v3100, %v3096
          %v3102 = vmul.f32 1.0, %v3101
          %v3103 = vrcp.pop %v2367
          %v3104 = vmul.f32 %v2367, %v3103
          %v3105 = vsub.f32 1.0, %v3104
          %v3106 = vmul.f32 %v3103, %v3105
          %v3107 = vadd.f32 %v3103, %v3106
          %vm3108 = vweird.f32 %v2367
          %vm3109 = vweird.f32 %v3103
          %vm3110 = vmor %vm3108, %vm3109
          %v3111 = vsel %vm3110, %v3103, %v3107
          %v3112 = vand.u32 2147483647, %v2367
          %vm3113 = vcmp.eq.f32.partialorder %v3112, 8.507059e+37
          %v3114 = vand.u32 %v2367, 2147483648
          %v3115 = vor.u32 1.1754944e-38, %v3114
          %v3116 = vsel %vm3113, %v3115, %v3111
          %v3117 = vmul.f32 1.0, %v3116
          %v3118 = vrcp.pop %v2368
          %v3119 = vmul.f32 %v2368, %v3118
          %v3120 = vsub.f32 1.0, %v3119
          %v3121 = vmul.f32 %v3118, %v3120
          %v3122 = vadd.f32 %v3118, %v3121
          %vm3123 = vweird.f32 %v2368
          %vm3124 = vweird.f32 %v3118
          %vm3125 = vmor %vm3123, %vm3124
          %v3126 = vsel %vm3125, %v3118, %v3122
          %v3127 = vand.u32 2147483647, %v2368
          %vm3128 = vcmp.eq.f32.partialorder %v3127, 8.507059e+37
          %v3129 = vand.u32 %v2368, 2147483648
          %v3130 = vor.u32 1.1754944e-38, %v3129
          %v3131 = vsel %vm3128, %v3130, %v3126
          %v3132 = vmul.f32 1.0, %v3131
          %v3133 = vrcp.pop %v2369
          %v3134 = vmul.f32 %v2369, %v3133
          %v3135 = vsub.f32 1.0, %v3134
          %v3136 = vmul.f32 %v3133, %v3135
          %v3137 = vadd.f32 %v3133, %v3136
          %vm3138 = vweird.f32 %v2369
          %vm3139 = vweird.f32 %v3133
          %vm3140 = vmor %vm3138, %vm3139
          %v3141 = vsel %vm3140, %v3133, %v3137
          %v3142 = vand.u32 2147483647, %v2369
          %vm3143 = vcmp.eq.f32.partialorder %v3142, 8.507059e+37
          %v3144 = vand.u32 %v2369, 2147483648
          %v3145 = vor.u32 1.1754944e-38, %v3144
          %v3146 = vsel %vm3143, %v3145, %v3141
          %v3147 = vmul.f32 1.0, %v3146
          %v3148 = vrcp.pop %v2370
          %v3149 = vmul.f32 %v2370, %v3148
          %v3150 = vsub.f32 1.0, %v3149
          %v3151 = vmul.f32 %v3148, %v3150
          %v3152 = vadd.f32 %v3148, %v3151
          %vm3153 = vweird.f32 %v2370
          %vm3154 = vweird.f32 %v3148
          %vm3155 = vmor %vm3153, %vm3154
          %v3156 = vsel %vm3155, %v3148, %v3152
          %v3157 = vand.u32 2147483647, %v2370
          %vm3158 = vcmp.eq.f32.partialorder %v3157, 8.507059e+37
          %v3159 = vand.u32 %v2370, 2147483648
          %v3160 = vor.u32 1.1754944e-38, %v3159
          %v3161 = vsel %vm3158, %v3160, %v3156
          %v3162 = vmul.f32 1.0, %v3161
          %v3163 = vrcp.pop %v2371
          %v3164 = vmul.f32 %v2371, %v3163
          %v3165 = vsub.f32 1.0, %v3164
          %v3166 = vmul.f32 %v3163, %v3165
          %v3167 = vadd.f32 %v3163, %v3166
          %vm3168 = vweird.f32 %v2371
          %vm3169 = vweird.f32 %v3163
          %vm3170 = vmor %vm3168, %vm3169
          %v3171 = vsel %vm3170, %v3163, %v3167
          %v3172 = vand.u32 2147483647, %v2371
          %vm3173 = vcmp.eq.f32.partialorder %v3172, 8.507059e+37
          %v3174 = vand.u32 %v2371, 2147483648
          %v3175 = vor.u32 1.1754944e-38, %v3174
          %v3176 = vsel %vm3173, %v3175, %v3171
          %v3177 = vmul.f32 1.0, %v3176
          %v3178 = vrcp.pop %v2372
          %v3179 = vmul.f32 %v2372, %v3178
          %v3180 = vsub.f32 1.0, %v3179
          %v3181 = vmul.f32 %v3178, %v3180
          %v3182 = vadd.f32 %v3178, %v3181
          %vm3183 = vweird.f32 %v2372
          %vm3184 = vweird.f32 %v3178
          %vm3185 = vmor %vm3183, %vm3184
          %v3186 = vsel %vm3185, %v3178, %v3182
          %v3187 = vand.u32 2147483647, %v2372
          %vm3188 = vcmp.eq.f32.partialorder %v3187, 8.507059e+37
          %v3189 = vand.u32 %v2372, 2147483648
          %v3190 = vor.u32 1.1754944e-38, %v3189
          %v3191 = vsel %vm3188, %v3190, %v3186
          %v3192 = vmul.f32 1.0, %v3191
          %v3193 = vrcp.pop %v2373
          %v3194 = vmul.f32 %v2373, %v3193
          %v3195 = vsub.f32 1.0, %v3194
          %v3196 = vmul.f32 %v3193, %v3195
          %v3197 = vadd.f32 %v3193, %v3196
          %vm3198 = vweird.f32 %v2373
          %vm3199 = vweird.f32 %v3193
          %vm3200 = vmor %vm3198, %vm3199
          %v3201 = vsel %vm3200, %v3193, %v3197
          %v3202 = vand.u32 2147483647, %v2373
          %vm3203 = vcmp.eq.f32.partialorder %v3202, 8.507059e+37
          %v3204 = vand.u32 %v2373, 2147483648
          %v3205 = vor.u32 1.1754944e-38, %v3204
          %v3206 = vsel %vm3203, %v3205, %v3201
          %v3207 = vmul.f32 1.0, %v3206
          %v3208 = vrcp.pop %v2374
          %v3209 = vmul.f32 %v2374, %v3208
          %v3210 = vsub.f32 1.0, %v3209
          %v3211 = vmul.f32 %v3208, %v3210
          %v3212 = vadd.f32 %v3208, %v3211
          %vm3213 = vweird.f32 %v2374
          %vm3214 = vweird.f32 %v3208
          %vm3215 = vmor %vm3213, %vm3214
          %v3216 = vsel %vm3215, %v3208, %v3212
          %v3217 = vand.u32 2147483647, %v2374
          %vm3218 = vcmp.eq.f32.partialorder %v3217, 8.507059e+37
          %v3219 = vand.u32 %v2374, 2147483648
          %v3220 = vor.u32 1.1754944e-38, %v3219
          %v3221 = vsel %vm3218, %v3220, %v3216
          %v3222 = vmul.f32 1.0, %v3221
          %v3223 = vrcp.pop %v2375
          %v3224 = vmul.f32 %v2375, %v3223
          %v3225 = vsub.f32 1.0, %v3224
          %v3226 = vmul.f32 %v3223, %v3225
          %v3227 = vadd.f32 %v3223, %v3226
          %vm3228 = vweird.f32 %v2375
          %vm3229 = vweird.f32 %v3223
          %vm3230 = vmor %vm3228, %vm3229
          %v3231 = vsel %vm3230, %v3223, %v3227
          %v3232 = vand.u32 2147483647, %v2375
          %vm3233 = vcmp.eq.f32.partialorder %v3232, 8.507059e+37
          %v3234 = vand.u32 %v2375, 2147483648
          %v3235 = vor.u32 1.1754944e-38, %v3234
          %v3236 = vsel %vm3233, %v3235, %v3231
          %v3237 = vmul.f32 1.0, %v3236
          %v3238 = vrcp.pop %v2376
          %v3239 = vmul.f32 %v2376, %v3238
          %v3240 = vsub.f32 1.0, %v3239
          %v3241 = vmul.f32 %v3238, %v3240
          %v3242 = vadd.f32 %v3238, %v3241
          %vm3243 = vweird.f32 %v2376
          %vm3244 = vweird.f32 %v3238
          %vm3245 = vmor %vm3243, %vm3244
          %v3246 = vsel %vm3245, %v3238, %v3242
          %v3247 = vand.u32 2147483647, %v2376
          %vm3248 = vcmp.eq.f32.partialorder %v3247, 8.507059e+37
          %v3249 = vand.u32 %v2376, 2147483648
          %v3250 = vor.u32 1.1754944e-38, %v3249
          %v3251 = vsel %vm3248, %v3250, %v3246
          %v3252 = vmul.f32 1.0, %v3251
          %v3253 = vrcp.pop %v2377
          %v3254 = vmul.f32 %v2377, %v3253
          %v3255 = vsub.f32 1.0, %v3254
          %v3256 = vmul.f32 %v3253, %v3255
          %v3257 = vadd.f32 %v3253, %v3256
          %vm3258 = vweird.f32 %v2377
          %vm3259 = vweird.f32 %v3253
          %vm3260 = vmor %vm3258, %vm3259
          %v3261 = vsel %vm3260, %v3253, %v3257
          %v3262 = vand.u32 2147483647, %v2377
          %vm3263 = vcmp.eq.f32.partialorder %v3262, 8.507059e+37
          %v3264 = vand.u32 %v2377, 2147483648
          %v3265 = vor.u32 1.1754944e-38, %v3264
          %v3266 = vsel %vm3263, %v3265, %v3261
          %v3267 = vmul.f32 1.0, %v3266
          %v3268 = vrcp.pop %v2378
          %v3269 = vmul.f32 %v2378, %v3268
          %v3270 = vsub.f32 1.0, %v3269
          %v3271 = vmul.f32 %v3268, %v3270
          %v3272 = vadd.f32 %v3268, %v3271
          %vm3273 = vweird.f32 %v2378
          %vm3274 = vweird.f32 %v3268
          %vm3275 = vmor %vm3273, %vm3274
          %v3276 = vsel %vm3275, %v3268, %v3272
          %v3277 = vand.u32 2147483647, %v2378
          %vm3278 = vcmp.eq.f32.partialorder %v3277, 8.507059e+37
          %v3279 = vand.u32 %v2378, 2147483648
          %v3280 = vor.u32 1.1754944e-38, %v3279
          %v3281 = vsel %vm3278, %v3280, %v3276
          %v3282 = vmul.f32 1.0, %v3281
          %v3283 = vrcp.pop %v2379
          %v3284 = vmul.f32 %v2379, %v3283
          %v3285 = vsub.f32 1.0, %v3284
          %v3286 = vmul.f32 %v3283, %v3285
          %v3287 = vadd.f32 %v3283, %v3286
          %vm3288 = vweird.f32 %v2379
          %vm3289 = vweird.f32 %v3283
          %vm3290 = vmor %vm3288, %vm3289
          %v3291 = vsel %vm3290, %v3283, %v3287
          %v3292 = vand.u32 2147483647, %v2379
          %vm3293 = vcmp.eq.f32.partialorder %v3292, 8.507059e+37
          %v3294 = vand.u32 %v2379, 2147483648
          %v3295 = vor.u32 1.1754944e-38, %v3294
          %v3296 = vsel %vm3293, %v3295, %v3291
          %v3297 = vmul.f32 1.0, %v3296
          %v3298 = vrcp.pop %v2380
          %v3299 = vmul.f32 %v2380, %v3298
          %v3300 = vsub.f32 1.0, %v3299
          %v3301 = vmul.f32 %v3298, %v3300
          %v3302 = vadd.f32 %v3298, %v3301
          %vm3303 = vweird.f32 %v2380
          %vm3304 = vweird.f32 %v3298
          %vm3305 = vmor %vm3303, %vm3304
          %v3306 = vsel %vm3305, %v3298, %v3302
          %v3307 = vand.u32 2147483647, %v2380
          %vm3308 = vcmp.eq.f32.partialorder %v3307, 8.507059e+37
          %v3309 = vand.u32 %v2380, 2147483648
          %v3310 = vor.u32 1.1754944e-38, %v3309
          %v3311 = vsel %vm3308, %v3310, %v3306
          %v3312 = vmul.f32 1.0, %v3311
          %v3313 = vrcp.pop %v2381
          %v3314 = vmul.f32 %v2381, %v3313
          %v3315 = vsub.f32 1.0, %v3314
          %v3316 = vmul.f32 %v3313, %v3315
          %v3317 = vadd.f32 %v3313, %v3316
          %vm3318 = vweird.f32 %v2381
          %vm3319 = vweird.f32 %v3313
          %vm3320 = vmor %vm3318, %vm3319
          %v3321 = vsel %vm3320, %v3313, %v3317
          %v3322 = vand.u32 2147483647, %v2381
          %vm3323 = vcmp.eq.f32.partialorder %v3322, 8.507059e+37
          %v3324 = vand.u32 %v2381, 2147483648
          %v3325 = vor.u32 1.1754944e-38, %v3324
          %v3326 = vsel %vm3323, %v3325, %v3321
          %v3327 = vmul.f32 1.0, %v3326
          %v3328 = vrcp.pop %v2382
          %v3329 = vmul.f32 %v2382, %v3328
          %v3330 = vsub.f32 1.0, %v3329
          %v3331 = vmul.f32 %v3328, %v3330
          %v3332 = vadd.f32 %v3328, %v3331
          %vm3333 = vweird.f32 %v2382
          %vm3334 = vweird.f32 %v3328
          %vm3335 = vmor %vm3333, %vm3334
          %v3336 = vsel %vm3335, %v3328, %v3332
          %v3337 = vand.u32 2147483647, %v2382
          %vm3338 = vcmp.eq.f32.partialorder %v3337, 8.507059e+37
          %v3339 = vand.u32 %v2382, 2147483648
          %v3340 = vor.u32 1.1754944e-38, %v3339
          %v3341 = vsel %vm3338, %v3340, %v3336
          %v3342 = vmul.f32 1.0, %v3341
          %3343 = vst [vmem:[#allocation3] sm:$0xff] %v2397
          %3344 = vst [vmem:[#allocation3 + $0x8] sm:$0xff] %v2412
          %3345 = vst [vmem:[#allocation3 + $0x10] sm:$0xff] %v2427
          %3346 = vst [vmem:[#allocation3 + $0x18] sm:$0xff] %v2442
          %3347 = vst [vmem:[#allocation3 + $0x20] sm:$0xff] %v2457
          %3348 = vst [vmem:[#allocation3 + $0x28] sm:$0xff] %v2472
          %3349 = vst [vmem:[#allocation3 + $0x30] sm:$0xff] %v2487
          %3350 = vst [vmem:[#allocation3 + $0x38] sm:$0xff] %v2502
          %3351 = vst [vmem:[#allocation3 + $0x40] sm:$0xff] %v2517
          %3352 = vst [vmem:[#allocation3 + $0x48] sm:$0xff] %v2532
          %3353 = vst [vmem:[#allocation3 + $0x50] sm:$0xff] %v2547
          %3354 = vst [vmem:[#allocation3 + $0x58] sm:$0xff] %v2562
          %3355 = vst [vmem:[#allocation3 + $0x60] sm:$0xff] %v2577
          %3356 = vst [vmem:[#allocation3 + $0x68] sm:$0xff] %v2592
          %3357 = vst [vmem:[#allocation3 + $0x70] sm:$0xff] %v2607
          %3358 = vst [vmem:[#allocation3 + $0x78] sm:$0xff] %v2622
          %3359 = vst [vmem:[#allocation3 + $0x80] sm:$0xff] %v2637
          %3360 = vst [vmem:[#allocation3 + $0x88] sm:$0xff] %v2652
          %3361 = vst [vmem:[#allocation3 + $0x90] sm:$0xff] %v2667
          %3362 = vst [vmem:[#allocation3 + $0x98] sm:$0xff] %v2682
          %3363 = vst [vmem:[#allocation3 + $0xa0] sm:$0xff] %v2697
          %3364 = vst [vmem:[#allocation3 + $0xa8] sm:$0xff] %v2712
          %3365 = vst [vmem:[#allocation3 + $0xb0] sm:$0xff] %v2727
          %3366 = vst [vmem:[#allocation3 + $0xb8] sm:$0xff] %v2742
          %3367 = vst [vmem:[#allocation3 + $0xc0] sm:$0xff] %v2757
          %3368 = vst [vmem:[#allocation3 + $0xc8] sm:$0xff] %v2772
          %3369 = vst [vmem:[#allocation3 + $0xd0] sm:$0xff] %v2787
          %3370 = vst [vmem:[#allocation3 + $0xd8] sm:$0xff] %v2802
          %3371 = vst [vmem:[#allocation3 + $0xe0] sm:$0xff] %v2817
          %3372 = vst [vmem:[#allocation3 + $0xe8] sm:$0xff] %v2832
          %3373 = vst [vmem:[#allocation3 + $0xf0] sm:$0xff] %v2847
          %3374 = vst [vmem:[#allocation3 + $0xf8] sm:$0xff] %v2862
          %3375 = vst [vmem:[#allocation3 + $0x100] sm:$0xff] %v2877
          %3376 = vst [vmem:[#allocation3 + $0x108] sm:$0xff] %v2892
          %3377 = vst [vmem:[#allocation3 + $0x110] sm:$0xff] %v2907
          %3378 = vst [vmem:[#allocation3 + $0x118] sm:$0xff] %v2922
          %3379 = vst [vmem:[#allocation3 + $0x120] sm:$0xff] %v2937
          %3380 = vst [vmem:[#allocation3 + $0x128] sm:$0xff] %v2952
          %3381 = vst [vmem:[#allocation3 + $0x130] sm:$0xff] %v2967
          %3382 = vst [vmem:[#allocation3 + $0x138] sm:$0xff] %v2982
          %3383 = vst [vmem:[#allocation3 + $0x140] sm:$0xff] %v2997
          %3384 = vst [vmem:[#allocation3 + $0x148] sm:$0xff] %v3012
          %3385 = vst [vmem:[#allocation3 + $0x150] sm:$0xff] %v3027
          %3386 = vst [vmem:[#allocation3 + $0x158] sm:$0xff] %v3042
          %3387 = vst [vmem:[#allocation3 + $0x160] sm:$0xff] %v3057
          %3388 = vst [vmem:[#allocation3 + $0x168] sm:$0xff] %v3072
          %3389 = vst [vmem:[#allocation3 + $0x170] sm:$0xff] %v3087
          %3390 = vst [vmem:[#allocation3 + $0x178] sm:$0xff] %v3102
          %3391 = vst [vmem:[#allocation3 + $0x180] sm:$0xff] %v3117
          %3392 = vst [vmem:[#allocation3 + $0x188] sm:$0xff] %v3132
          %3393 = vst [vmem:[#allocation3 + $0x190] sm:$0xff] %v3147
          %3394 = vst [vmem:[#allocation3 + $0x198] sm:$0xff] %v3162
          %3395 = vst [vmem:[#allocation3 + $0x1a0] sm:$0xff] %v3177
          %3396 = vst [vmem:[#allocation3 + $0x1a8] sm:$0xff] %v3192
          %3397 = vst [vmem:[#allocation3 + $0x1b0] sm:$0xff] %v3207
          %3398 = vst [vmem:[#allocation3 + $0x1b8] sm:$0xff] %v3222
          %3399 = vst [vmem:[#allocation3 + $0x1c0] sm:$0xff] %v3237
          %3400 = vst [vmem:[#allocation3 + $0x1c8] sm:$0xff] %v3252
          %3401 = vst [vmem:[#allocation3 + $0x1d0] sm:$0xff] %v3267
          %3402 = vst [vmem:[#allocation3 + $0x1d8] sm:$0xff] %v3282
          %3403 = vst [vmem:[#allocation3 + $0x1e0] sm:$0xff] %v3297
          %3404 = vst [vmem:[#allocation3 + $0x1e8] sm:$0xff] %v3312
          %3405 = vst [vmem:[#allocation3 + $0x1f0] sm:$0xff] %v3327
          %3406 = vst [vmem:[#allocation3 + $0x1f8] sm:$0xff] %v3342
          %3407 = vst [vmem:[#allocation4] sm:$0xff] 0.0
          %3408 = vst [vmem:[#allocation4 + $0x8] sm:$0xff] 0.0
          %3409 = vst [vmem:[#allocation4 + $0x10] sm:$0xff] 0.0
          %3410 = vst [vmem:[#allocation4 + $0x18] sm:$0xff] 0.0
          %3411 = vst [vmem:[#allocation4 + $0x20] sm:$0xff] 0.0
          %3412 = vst [vmem:[#allocation4 + $0x28] sm:$0xff] 0.0
          %3413 = vst [vmem:[#allocation4 + $0x30] sm:$0xff] 0.0
          %3414 = vst [vmem:[#allocation4 + $0x38] sm:$0xff] 0.0
          %3415 = vst [vmem:[#allocation4 + $0x40] sm:$0xff] 0.0
          %3416 = vst [vmem:[#allocation4 + $0x48] sm:$0xff] 0.0
          %3417 = vst [vmem:[#allocation4 + $0x50] sm:$0xff] 0.0
          %3418 = vst [vmem:[#allocation4 + $0x58] sm:$0xff] 0.0
          %3419 = vst [vmem:[#allocation4 + $0x60] sm:$0xff] 0.0
          %3420 = vst [vmem:[#allocation4 + $0x68] sm:$0xff] 0.0
          %3421 = vst [vmem:[#allocation4 + $0x70] sm:$0xff] 0.0
          %3422 = vst [vmem:[#allocation4 + $0x78] sm:$0xff] 0.0
          %3423 = vst [vmem:[#allocation4 + $0x80] sm:$0xff] 0.0
          %3424 = vst [vmem:[#allocation4 + $0x88] sm:$0xff] 0.0
          %3425 = vst [vmem:[#allocation4 + $0x90] sm:$0xff] 0.0
          %3426 = vst [vmem:[#allocation4 + $0x98] sm:$0xff] 0.0
          %3427 = vst [vmem:[#allocation4 + $0xa0] sm:$0xff] 0.0
          %3428 = vst [vmem:[#allocation4 + $0xa8] sm:$0xff] 0.0
          %3429 = vst [vmem:[#allocation4 + $0xb0] sm:$0xff] 0.0
          %3430 = vst [vmem:[#allocation4 + $0xb8] sm:$0xff] 0.0
          %3431 = vst [vmem:[#allocation4 + $0xc0] sm:$0xff] 0.0
          %3432 = vst [vmem:[#allocation4 + $0xc8] sm:$0xff] 0.0
          %3433 = vst [vmem:[#allocation4 + $0xd0] sm:$0xff] 0.0
          %3434 = vst [vmem:[#allocation4 + $0xd8] sm:$0xff] 0.0
          %3435 = vst [vmem:[#allocation4 + $0xe0] sm:$0xff] 0.0
          %3436 = vst [vmem:[#allocation4 + $0xe8] sm:$0xff] 0.0
          %3437 = vst [vmem:[#allocation4 + $0xf0] sm:$0xff] 0.0
          %3438 = vst [vmem:[#allocation4 + $0xf8] sm:$0xff] 0.0
          %3439 = vst [vmem:[#allocation4 + $0x100] sm:$0xff] 0.0
          %3440 = vst [vmem:[#allocation4 + $0x108] sm:$0xff] 0.0
          %3441 = vst [vmem:[#allocation4 + $0x110] sm:$0xff] 0.0
          %3442 = vst [vmem:[#allocation4 + $0x118] sm:$0xff] 0.0
          %3443 = vst [vmem:[#allocation4 + $0x120] sm:$0xff] 0.0
          %3444 = vst [vmem:[#allocation4 + $0x128] sm:$0xff] 0.0
          %3445 = vst [vmem:[#allocation4 + $0x130] sm:$0xff] 0.0
          %3446 = vst [vmem:[#allocation4 + $0x138] sm:$0xff] 0.0
          %3447 = vst [vmem:[#allocation4 + $0x140] sm:$0xff] 0.0
          %3448 = vst [vmem:[#allocation4 + $0x148] sm:$0xff] 0.0
          %3449 = vst [vmem:[#allocation4 + $0x150] sm:$0xff] 0.0
          %3450 = vst [vmem:[#allocation4 + $0x158] sm:$0xff] 0.0
          %3451 = vst [vmem:[#allocation4 + $0x160] sm:$0xff] 0.0
          %3452 = vst [vmem:[#allocation4 + $0x168] sm:$0xff] 0.0
          %3453 = vst [vmem:[#allocation4 + $0x170] sm:$0xff] 0.0
          %3454 = vst [vmem:[#allocation4 + $0x178] sm:$0xff] 0.0
          %3455 = vst [vmem:[#allocation4 + $0x180] sm:$0xff] 0.0
          %3456 = vst [vmem:[#allocation4 + $0x188] sm:$0xff] 0.0
          %3457 = vst [vmem:[#allocation4 + $0x190] sm:$0xff] 0.0
          %3458 = vst [vmem:[#allocation4 + $0x198] sm:$0xff] 0.0
          %3459 = vst [vmem:[#allocation4 + $0x1a0] sm:$0xff] 0.0
          %3460 = vst [vmem:[#allocation4 + $0x1a8] sm:$0xff] 0.0
          %3461 = vst [vmem:[#allocation4 + $0x1b0] sm:$0xff] 0.0
          %3462 = vst [vmem:[#allocation4 + $0x1b8] sm:$0xff] 0.0
          %3463 = vst [vmem:[#allocation4 + $0x1c0] sm:$0xff] 0.0
          %3464 = vst [vmem:[#allocation4 + $0x1c8] sm:$0xff] 0.0
          %3465 = vst [vmem:[#allocation4 + $0x1d0] sm:$0xff] 0.0
          %3466 = vst [vmem:[#allocation4 + $0x1d8] sm:$0xff] 0.0
          %3467 = vst [vmem:[#allocation4 + $0x1e0] sm:$0xff] 0.0
          %3468 = vst [vmem:[#allocation4 + $0x1e8] sm:$0xff] 0.0
          %3469 = vst [vmem:[#allocation4 + $0x1f0] sm:$0xff] 0.0
          %3470 = vst [vmem:[#allocation4 + $0x1f8] sm:$0xff] 0.0
        $region68: #{tpu_custom_call.1} parent=51 // pred_fallthru
          _
        %v3471 = vld [vmem:[#allocation2] sm:$0xff]
        %v3472 = vld [vmem:[#allocation2 + $0x8] sm:$0xff]
        %v3473 = vld [vmem:[#allocation2 + $0x10] sm:$0xff]
        %v3474 = vld [vmem:[#allocation2 + $0x18] sm:$0xff]
        %v3475 = vld [vmem:[#allocation2 + $0x20] sm:$0xff]
        %v3476 = vld [vmem:[#allocation2 + $0x28] sm:$0xff]
        %v3477 = vld [vmem:[#allocation2 + $0x30] sm:$0xff]
        %v3478 = vld [vmem:[#allocation2 + $0x38] sm:$0xff]
        %v3479 = vld [vmem:[#allocation2 + $0x40] sm:$0xff]
        %v3480 = vld [vmem:[#allocation2 + $0x48] sm:$0xff]
        %v3481 = vld [vmem:[#allocation2 + $0x50] sm:$0xff]
        %v3482 = vld [vmem:[#allocation2 + $0x58] sm:$0xff]
        %v3483 = vld [vmem:[#allocation2 + $0x60] sm:$0xff]
        %v3484 = vld [vmem:[#allocation2 + $0x68] sm:$0xff]
        %v3485 = vld [vmem:[#allocation2 + $0x70] sm:$0xff]
        %v3486 = vld [vmem:[#allocation2 + $0x78] sm:$0xff]
        %v3487 = vld [vmem:[#allocation2 + $0x80] sm:$0xff]
        %v3488 = vld [vmem:[#allocation2 + $0x88] sm:$0xff]
        %v3489 = vld [vmem:[#allocation2 + $0x90] sm:$0xff]
        %v3490 = vld [vmem:[#allocation2 + $0x98] sm:$0xff]
        %v3491 = vld [vmem:[#allocation2 + $0xa0] sm:$0xff]
        %v3492 = vld [vmem:[#allocation2 + $0xa8] sm:$0xff]
        %v3493 = vld [vmem:[#allocation2 + $0xb0] sm:$0xff]
        %v3494 = vld [vmem:[#allocation2 + $0xb8] sm:$0xff]
        %v3495 = vld [vmem:[#allocation2 + $0xc0] sm:$0xff]
        %v3496 = vld [vmem:[#allocation2 + $0xc8] sm:$0xff]
        %v3497 = vld [vmem:[#allocation2 + $0xd0] sm:$0xff]
        %v3498 = vld [vmem:[#allocation2 + $0xd8] sm:$0xff]
        %v3499 = vld [vmem:[#allocation2 + $0xe0] sm:$0xff]
        %v3500 = vld [vmem:[#allocation2 + $0xe8] sm:$0xff]
        %v3501 = vld [vmem:[#allocation2 + $0xf0] sm:$0xff]
        %v3502 = vld [vmem:[#allocation2 + $0xf8] sm:$0xff]
        %v3503 = vld [vmem:[%s375] sm:$0xff]
        %v3504 = vld [vmem:[%s375 + $0x8] sm:$0xff]
        %v3505 = vld [vmem:[%s375 + $0x10] sm:$0xff]
        %v3506 = vld [vmem:[%s375 + $0x18] sm:$0xff]
        %v3507 = vld [vmem:[%s375 + $0x20] sm:$0xff]
        %v3508 = vld [vmem:[%s375 + $0x28] sm:$0xff]
        %v3509 = vld [vmem:[%s375 + $0x30] sm:$0xff]
        %v3510 = vld [vmem:[%s375 + $0x38] sm:$0xff]
        %v3511 = vld [vmem:[%s375 + $0x40] sm:$0xff]
        %v3512 = vld [vmem:[%s375 + $0x48] sm:$0xff]
        %v3513 = vld [vmem:[%s375 + $0x50] sm:$0xff]
        %v3514 = vld [vmem:[%s375 + $0x58] sm:$0xff]
        %v3515 = vld [vmem:[%s375 + $0x60] sm:$0xff]
        %v3516 = vld [vmem:[%s375 + $0x68] sm:$0xff]
        %v3517 = vld [vmem:[%s375 + $0x70] sm:$0xff]
        %v3518 = vld [vmem:[%s375 + $0x78] sm:$0xff]
        %v3519 = vld [vmem:[%s375 + $0x80] sm:$0xff]
        %v3520 = vld [vmem:[%s375 + $0x88] sm:$0xff]
        %v3521 = vld [vmem:[%s375 + $0x90] sm:$0xff]
        %v3522 = vld [vmem:[%s375 + $0x98] sm:$0xff]
        %v3523 = vld [vmem:[%s375 + $0xa0] sm:$0xff]
        %v3524 = vld [vmem:[%s375 + $0xa8] sm:$0xff]
        %v3525 = vld [vmem:[%s375 + $0xb0] sm:$0xff]
        %v3526 = vld [vmem:[%s375 + $0xb8] sm:$0xff]
        %v3527 = vld [vmem:[%s375 + $0xc0] sm:$0xff]
        %v3528 = vld [vmem:[%s375 + $0xc8] sm:$0xff]
        %v3529 = vld [vmem:[%s375 + $0xd0] sm:$0xff]
        %v3530 = vld [vmem:[%s375 + $0xd8] sm:$0xff]
        %v3531 = vld [vmem:[%s375 + $0xe0] sm:$0xff]
        %v3532 = vld [vmem:[%s375 + $0xe8] sm:$0xff]
        %v3533 = vld [vmem:[%s375 + $0xf0] sm:$0xff]
        %v3534 = vld [vmem:[%s375 + $0xf8] sm:$0xff]
        %v3535 = vld [vmem:[%s375 + $0x100] sm:$0xff]
        %v3536 = vld [vmem:[%s375 + $0x108] sm:$0xff]
        %v3537 = vld [vmem:[%s375 + $0x110] sm:$0xff]
        %v3538 = vld [vmem:[%s375 + $0x118] sm:$0xff]
        %v3539 = vld [vmem:[%s375 + $0x120] sm:$0xff]
        %v3540 = vld [vmem:[%s375 + $0x128] sm:$0xff]
        %v3541 = vld [vmem:[%s375 + $0x130] sm:$0xff]
        %v3542 = vld [vmem:[%s375 + $0x138] sm:$0xff]
        %v3543 = vld [vmem:[%s375 + $0x140] sm:$0xff]
        %v3544 = vld [vmem:[%s375 + $0x148] sm:$0xff]
        %v3545 = vld [vmem:[%s375 + $0x150] sm:$0xff]
        %v3546 = vld [vmem:[%s375 + $0x158] sm:$0xff]
        %v3547 = vld [vmem:[%s375 + $0x160] sm:$0xff]
        %v3548 = vld [vmem:[%s375 + $0x168] sm:$0xff]
        %v3549 = vld [vmem:[%s375 + $0x170] sm:$0xff]
        %v3550 = vld [vmem:[%s375 + $0x178] sm:$0xff]
        %v3551 = vld [vmem:[%s375 + $0x180] sm:$0xff]
        %v3552 = vld [vmem:[%s375 + $0x188] sm:$0xff]
        %v3553 = vld [vmem:[%s375 + $0x190] sm:$0xff]
        %v3554 = vld [vmem:[%s375 + $0x198] sm:$0xff]
        %v3555 = vld [vmem:[%s375 + $0x1a0] sm:$0xff]
        %v3556 = vld [vmem:[%s375 + $0x1a8] sm:$0xff]
        %v3557 = vld [vmem:[%s375 + $0x1b0] sm:$0xff]
        %v3558 = vld [vmem:[%s375 + $0x1b8] sm:$0xff]
        %v3559 = vld [vmem:[%s375 + $0x1c0] sm:$0xff]
        %v3560 = vld [vmem:[%s375 + $0x1c8] sm:$0xff]
        %v3561 = vld [vmem:[%s375 + $0x1d0] sm:$0xff]
        %v3562 = vld [vmem:[%s375 + $0x1d8] sm:$0xff]
        %v3563 = vld [vmem:[%s375 + $0x1e0] sm:$0xff]
        %v3564 = vld [vmem:[%s375 + $0x1e8] sm:$0xff]
        %v3565 = vld [vmem:[%s375 + $0x1f0] sm:$0xff]
        %v3566 = vld [vmem:[%s375 + $0x1f8] sm:$0xff]
        %v3599 = vunpack.c.l.b16 %v3471
        %v3600 = vunpack.c.h.b16 %v3471
        %v3601 = vunpack.c.l.b16 %v3472
        %v3602 = vunpack.c.h.b16 %v3472
        %v3603 = vunpack.c.l.b16 %v3473
        %v3604 = vunpack.c.h.b16 %v3473
        %v3605 = vunpack.c.l.b16 %v3474
        %v3606 = vunpack.c.h.b16 %v3474
        %v3607 = vunpack.c.l.b16 %v3475
        %v3608 = vunpack.c.h.b16 %v3475
        %v3609 = vunpack.c.l.b16 %v3476
        %v3610 = vunpack.c.h.b16 %v3476
        %v3611 = vunpack.c.l.b16 %v3477
        %v3612 = vunpack.c.h.b16 %v3477
        %v3613 = vunpack.c.l.b16 %v3478
        %v3614 = vunpack.c.h.b16 %v3478
        %v3615 = vunpack.c.l.b16 %v3479
        %v3616 = vunpack.c.h.b16 %v3479
        %v3617 = vunpack.c.l.b16 %v3480
        %v3618 = vunpack.c.h.b16 %v3480
        %v3619 = vunpack.c.l.b16 %v3481
        %v3620 = vunpack.c.h.b16 %v3481
        %v3621 = vunpack.c.l.b16 %v3482
        %v3622 = vunpack.c.h.b16 %v3482
        %v3623 = vunpack.c.l.b16 %v3483
        %v3624 = vunpack.c.h.b16 %v3483
        %v3625 = vunpack.c.l.b16 %v3484
        %v3626 = vunpack.c.h.b16 %v3484
        %v3627 = vunpack.c.l.b16 %v3485
        %v3628 = vunpack.c.h.b16 %v3485
        %v3629 = vunpack.c.l.b16 %v3486
        %v3630 = vunpack.c.h.b16 %v3486
        %v3631 = vunpack.c.l.b16 %v3487
        %v3632 = vunpack.c.h.b16 %v3487
        %v3633 = vunpack.c.l.b16 %v3488
        %v3634 = vunpack.c.h.b16 %v3488
        %v3635 = vunpack.c.l.b16 %v3489
        %v3636 = vunpack.c.h.b16 %v3489
        %v3637 = vunpack.c.l.b16 %v3490
        %v3638 = vunpack.c.h.b16 %v3490
        %v3639 = vunpack.c.l.b16 %v3491
        %v3640 = vunpack.c.h.b16 %v3491
        %v3641 = vunpack.c.l.b16 %v3492
        %v3642 = vunpack.c.h.b16 %v3492
        %v3643 = vunpack.c.l.b16 %v3493
        %v3644 = vunpack.c.h.b16 %v3493
        %v3645 = vunpack.c.l.b16 %v3494
        %v3646 = vunpack.c.h.b16 %v3494
        %v3647 = vunpack.c.l.b16 %v3495
        %v3648 = vunpack.c.h.b16 %v3495
        %v3649 = vunpack.c.l.b16 %v3496
        %v3650 = vunpack.c.h.b16 %v3496
        %v3651 = vunpack.c.l.b16 %v3497
        %v3652 = vunpack.c.h.b16 %v3497
        %v3653 = vunpack.c.l.b16 %v3498
        %v3654 = vunpack.c.h.b16 %v3498
        %v3655 = vunpack.c.l.b16 %v3499
        %v3656 = vunpack.c.h.b16 %v3499
        %v3657 = vunpack.c.l.b16 %v3500
        %v3658 = vunpack.c.h.b16 %v3500
        %v3659 = vunpack.c.l.b16 %v3501
        %v3660 = vunpack.c.h.b16 %v3501
        %v3661 = vunpack.c.l.b16 %v3502
        %v3662 = vunpack.c.h.b16 %v3502
        %v3663 = vpack.c.b16 %v3601, %v3599
        %v3664 = vpack.c.b16 %v3602, %v3600
        %v3665 = vpack.c.b16 %v3605, %v3603
        %v3666 = vpack.c.b16 %v3606, %v3604
        %v3667 = vpack.c.b16 %v3609, %v3607
        %v3668 = vpack.c.b16 %v3610, %v3608
        %v3669 = vpack.c.b16 %v3613, %v3611
        %v3670 = vpack.c.b16 %v3614, %v3612
        %v3671 = vpack.c.b16 %v3617, %v3615
        %v3672 = vpack.c.b16 %v3618, %v3616
        %v3673 = vpack.c.b16 %v3621, %v3619
        %v3674 = vpack.c.b16 %v3622, %v3620
        %v3675 = vpack.c.b16 %v3625, %v3623
        %v3676 = vpack.c.b16 %v3626, %v3624
        %v3677 = vpack.c.b16 %v3629, %v3627
        %v3678 = vpack.c.b16 %v3630, %v3628
        %v3679 = vpack.c.b16 %v3633, %v3631
        %v3680 = vpack.c.b16 %v3634, %v3632
        %v3681 = vpack.c.b16 %v3637, %v3635
        %v3682 = vpack.c.b16 %v3638, %v3636
        %v3683 = vpack.c.b16 %v3641, %v3639
        %v3684 = vpack.c.b16 %v3642, %v3640
        %v3685 = vpack.c.b16 %v3645, %v3643
        %v3686 = vpack.c.b16 %v3646, %v3644
        %v3687 = vpack.c.b16 %v3649, %v3647
        %v3688 = vpack.c.b16 %v3650, %v3648
        %v3689 = vpack.c.b16 %v3653, %v3651
        %v3690 = vpack.c.b16 %v3654, %v3652
        %v3691 = vpack.c.b16 %v3657, %v3655
        %v3692 = vpack.c.b16 %v3658, %v3656
        %v3693 = vpack.c.b16 %v3661, %v3659
        %v3694 = vpack.c.b16 %v3662, %v3660
        %v3791 = vunpack.c.l.b16 %v3503
        %v3792 = vunpack.c.h.b16 %v3503
        %v3793 = vunpack.c.l.b16 %v3504
        %v3794 = vunpack.c.h.b16 %v3504
        %v3795 = vunpack.c.l.b16 %v3505
        %v3796 = vunpack.c.h.b16 %v3505
        %v3797 = vunpack.c.l.b16 %v3506
        %v3798 = vunpack.c.h.b16 %v3506
        %v3799 = vunpack.c.l.b16 %v3507
        %v3800 = vunpack.c.h.b16 %v3507
        %v3801 = vunpack.c.l.b16 %v3508
        %v3802 = vunpack.c.h.b16 %v3508
        %v3803 = vunpack.c.l.b16 %v3509
        %v3804 = vunpack.c.h.b16 %v3509
        %v3805 = vunpack.c.l.b16 %v3510
        %v3806 = vunpack.c.h.b16 %v3510
        %v3807 = vunpack.c.l.b16 %v3511
        %v3808 = vunpack.c.h.b16 %v3511
        %v3809 = vunpack.c.l.b16 %v3512
        %v3810 = vunpack.c.h.b16 %v3512
        %v3811 = vunpack.c.l.b16 %v3513
        %v3812 = vunpack.c.h.b16 %v3513
        %v3813 = vunpack.c.l.b16 %v3514
        %v3814 = vunpack.c.h.b16 %v3514
        %v3815 = vunpack.c.l.b16 %v3515
        %v3816 = vunpack.c.h.b16 %v3515
        %v3817 = vunpack.c.l.b16 %v3516
        %v3818 = vunpack.c.h.b16 %v3516
        %v3819 = vunpack.c.l.b16 %v3517
        %v3820 = vunpack.c.h.b16 %v3517
        %v3821 = vunpack.c.l.b16 %v3518
        %v3822 = vunpack.c.h.b16 %v3518
        %v3823 = vunpack.c.l.b16 %v3519
        %v3824 = vunpack.c.h.b16 %v3519
        %v3825 = vunpack.c.l.b16 %v3520
        %v3826 = vunpack.c.h.b16 %v3520
        %v3827 = vunpack.c.l.b16 %v3521
        %v3828 = vunpack.c.h.b16 %v3521
        %v3829 = vunpack.c.l.b16 %v3522
        %v3830 = vunpack.c.h.b16 %v3522
        %v3831 = vunpack.c.l.b16 %v3523
        %v3832 = vunpack.c.h.b16 %v3523
        %v3833 = vunpack.c.l.b16 %v3524
        %v3834 = vunpack.c.h.b16 %v3524
        %v3835 = vunpack.c.l.b16 %v3525
        %v3836 = vunpack.c.h.b16 %v3525
        %v3837 = vunpack.c.l.b16 %v3526
        %v3838 = vunpack.c.h.b16 %v3526
        %v3839 = vunpack.c.l.b16 %v3527
        %v3840 = vunpack.c.h.b16 %v3527
        %v3841 = vunpack.c.l.b16 %v3528
        %v3842 = vunpack.c.h.b16 %v3528
        %v3843 = vunpack.c.l.b16 %v3529
        %v3844 = vunpack.c.h.b16 %v3529
        %v3845 = vunpack.c.l.b16 %v3530
        %v3846 = vunpack.c.h.b16 %v3530
        %v3847 = vunpack.c.l.b16 %v3531
        %v3848 = vunpack.c.h.b16 %v3531
        %v3849 = vunpack.c.l.b16 %v3532
        %v3850 = vunpack.c.h.b16 %v3532
        %v3851 = vunpack.c.l.b16 %v3533
        %v3852 = vunpack.c.h.b16 %v3533
        %v3853 = vunpack.c.l.b16 %v3534
        %v3854 = vunpack.c.h.b16 %v3534
        %v3855 = vunpack.c.l.b16 %v3535
        %v3856 = vunpack.c.h.b16 %v3535
        %v3857 = vunpack.c.l.b16 %v3536
        %v3858 = vunpack.c.h.b16 %v3536
        %v3859 = vunpack.c.l.b16 %v3537
        %v3860 = vunpack.c.h.b16 %v3537
        %v3861 = vunpack.c.l.b16 %v3538
        %v3862 = vunpack.c.h.b16 %v3538
        %v3863 = vunpack.c.l.b16 %v3539
        %v3864 = vunpack.c.h.b16 %v3539
        %v3865 = vunpack.c.l.b16 %v3540
        %v3866 = vunpack.c.h.b16 %v3540
        %v3867 = vunpack.c.l.b16 %v3541
        %v3868 = vunpack.c.h.b16 %v3541
        %v3869 = vunpack.c.l.b16 %v3542
        %v3870 = vunpack.c.h.b16 %v3542
        %v3871 = vunpack.c.l.b16 %v3543
        %v3872 = vunpack.c.h.b16 %v3543
        %v3873 = vunpack.c.l.b16 %v3544
        %v3874 = vunpack.c.h.b16 %v3544
        %v3875 = vunpack.c.l.b16 %v3545
        %v3876 = vunpack.c.h.b16 %v3545
        %v3877 = vunpack.c.l.b16 %v3546
        %v3878 = vunpack.c.h.b16 %v3546
        %v3879 = vunpack.c.l.b16 %v3547
        %v3880 = vunpack.c.h.b16 %v3547
        %v3881 = vunpack.c.l.b16 %v3548
        %v3882 = vunpack.c.h.b16 %v3548
        %v3883 = vunpack.c.l.b16 %v3549
        %v3884 = vunpack.c.h.b16 %v3549
        %v3885 = vunpack.c.l.b16 %v3550
        %v3886 = vunpack.c.h.b16 %v3550
        %v3887 = vunpack.c.l.b16 %v3551
        %v3888 = vunpack.c.h.b16 %v3551
        %v3889 = vunpack.c.l.b16 %v3552
        %v3890 = vunpack.c.h.b16 %v3552
        %v3891 = vunpack.c.l.b16 %v3553
        %v3892 = vunpack.c.h.b16 %v3553
        %v3893 = vunpack.c.l.b16 %v3554
        %v3894 = vunpack.c.h.b16 %v3554
        %v3895 = vunpack.c.l.b16 %v3555
        %v3896 = vunpack.c.h.b16 %v3555
        %v3897 = vunpack.c.l.b16 %v3556
        %v3898 = vunpack.c.h.b16 %v3556
        %v3899 = vunpack.c.l.b16 %v3557
        %v3900 = vunpack.c.h.b16 %v3557
        %v3901 = vunpack.c.l.b16 %v3558
        %v3902 = vunpack.c.h.b16 %v3558
        %v3903 = vunpack.c.l.b16 %v3559
        %v3904 = vunpack.c.h.b16 %v3559
        %v3905 = vunpack.c.l.b16 %v3560
        %v3906 = vunpack.c.h.b16 %v3560
        %v3907 = vunpack.c.l.b16 %v3561
        %v3908 = vunpack.c.h.b16 %v3561
        %v3909 = vunpack.c.l.b16 %v3562
        %v3910 = vunpack.c.h.b16 %v3562
        %v3911 = vunpack.c.l.b16 %v3563
        %v3912 = vunpack.c.h.b16 %v3563
        %v3913 = vunpack.c.l.b16 %v3564
        %v3914 = vunpack.c.h.b16 %v3564
        %v3915 = vunpack.c.l.b16 %v3565
        %v3916 = vunpack.c.h.b16 %v3565
        %v3917 = vunpack.c.l.b16 %v3566
        %v3918 = vunpack.c.h.b16 %v3566
        %v3919 = vpack.c.b16 %v3795, %v3791
        %v3920 = vpack.c.b16 %v3796, %v3792
        %v3921 = vpack.c.b16 %v3797, %v3793
        %v3922 = vpack.c.b16 %v3798, %v3794
        %v3923 = vpack.c.b16 %v3803, %v3799
        %v3924 = vpack.c.b16 %v3804, %v3800
        %v3925 = vpack.c.b16 %v3805, %v3801
        %v3926 = vpack.c.b16 %v3806, %v3802
        %v3927 = vpack.c.b16 %v3811, %v3807
        %v3928 = vpack.c.b16 %v3812, %v3808
        %v3929 = vpack.c.b16 %v3813, %v3809
        %v3930 = vpack.c.b16 %v3814, %v3810
        %v3931 = vpack.c.b16 %v3819, %v3815
        %v3932 = vpack.c.b16 %v3820, %v3816
        %v3933 = vpack.c.b16 %v3821, %v3817
        %v3934 = vpack.c.b16 %v3822, %v3818
        %v3935 = vpack.c.b16 %v3827, %v3823
        %v3936 = vpack.c.b16 %v3828, %v3824
        %v3937 = vpack.c.b16 %v3829, %v3825
        %v3938 = vpack.c.b16 %v3830, %v3826
        %v3939 = vpack.c.b16 %v3835, %v3831
        %v3940 = vpack.c.b16 %v3836, %v3832
        %v3941 = vpack.c.b16 %v3837, %v3833
        %v3942 = vpack.c.b16 %v3838, %v3834
        %v3943 = vpack.c.b16 %v3843, %v3839
        %v3944 = vpack.c.b16 %v3844, %v3840
        %v3945 = vpack.c.b16 %v3845, %v3841
        %v3946 = vpack.c.b16 %v3846, %v3842
        %v3947 = vpack.c.b16 %v3851, %v3847
        %v3948 = vpack.c.b16 %v3852, %v3848
        %v3949 = vpack.c.b16 %v3853, %v3849
        %v3950 = vpack.c.b16 %v3854, %v3850
        %v3951 = vpack.c.b16 %v3859, %v3855
        %v3952 = vpack.c.b16 %v3860, %v3856
        %v3953 = vpack.c.b16 %v3861, %v3857
        %v3954 = vpack.c.b16 %v3862, %v3858
        %v3955 = vpack.c.b16 %v3867, %v3863
        %v3956 = vpack.c.b16 %v3868, %v3864
        %v3957 = vpack.c.b16 %v3869, %v3865
        %v3958 = vpack.c.b16 %v3870, %v3866
        %v3959 = vpack.c.b16 %v3875, %v3871
        %v3960 = vpack.c.b16 %v3876, %v3872
        %v3961 = vpack.c.b16 %v3877, %v3873
        %v3962 = vpack.c.b16 %v3878, %v3874
        %v3963 = vpack.c.b16 %v3883, %v3879
        %v3964 = vpack.c.b16 %v3884, %v3880
        %v3965 = vpack.c.b16 %v3885, %v3881
        %v3966 = vpack.c.b16 %v3886, %v3882
        %v3967 = vpack.c.b16 %v3891, %v3887
        %v3968 = vpack.c.b16 %v3892, %v3888
        %v3969 = vpack.c.b16 %v3893, %v3889
        %v3970 = vpack.c.b16 %v3894, %v3890
        %v3971 = vpack.c.b16 %v3899, %v3895
        %v3972 = vpack.c.b16 %v3900, %v3896
        %v3973 = vpack.c.b16 %v3901, %v3897
        %v3974 = vpack.c.b16 %v3902, %v3898
        %v3975 = vpack.c.b16 %v3907, %v3903
        %v3976 = vpack.c.b16 %v3908, %v3904
        %v3977 = vpack.c.b16 %v3909, %v3905
        %v3978 = vpack.c.b16 %v3910, %v3906
        %v3979 = vpack.c.b16 %v3915, %v3911
        %v3980 = vpack.c.b16 %v3916, %v3912
        %v3981 = vpack.c.b16 %v3917, %v3913
        %v3982 = vpack.c.b16 %v3918, %v3914
        %4047 = vmatpush.bf16.msra.mxu0 %v3947
        %4048 = vmatpush.bf16.msra.mxu0 %v3943
        %4049 = vmatpush.bf16.msra.mxu0 %v3939
        %4050 = vmatpush.bf16.msra.mxu0 %v3935
        %4051 = vmatpush.bf16.msra.mxu0 %v3931
        %4052 = vmatpush.bf16.msra.mxu0 %v3927
        %4053 = vmatpush.bf16.msra.mxu0 %v3923
        %4054 = vmatpush.bf16.msra.mxu0 %v3919
        %4055 = vmatmul.bf16.gmra.mxu0 %v3663
        %v4056 = vpop.f32.mrf.mxu0
        %v4057 = vadd.f32 0.0, %v4056
        %v4058 = vpop.f32.mrf.mxu0
        %v4059 = vadd.f32 0.0, %v4058
        %4060 = vmatmul.bf16.gmra.mxu0 %v3665
        %v4061 = vpop.f32.mrf.mxu0
        %v4062 = vadd.f32 0.0, %v4061
        %v4063 = vpop.f32.mrf.mxu0
        %v4064 = vadd.f32 0.0, %v4063
        %4065 = vmatmul.bf16.gmra.mxu0 %v3667
        %v4066 = vpop.f32.mrf.mxu0
        %v4067 = vadd.f32 0.0, %v4066
        %v4068 = vpop.f32.mrf.mxu0
        %v4069 = vadd.f32 0.0, %v4068
        %4070 = vmatmul.bf16.gmra.mxu0 %v3669
        %v4071 = vpop.f32.mrf.mxu0
        %v4072 = vadd.f32 0.0, %v4071
        %v4073 = vpop.f32.mrf.mxu0
        %v4074 = vadd.f32 0.0, %v4073
        %4075 = vmatmul.bf16.gmra.mxu0 %v3671
        %v4076 = vpop.f32.mrf.mxu0
        %v4077 = vadd.f32 0.0, %v4076
        %v4078 = vpop.f32.mrf.mxu0
        %v4079 = vadd.f32 0.0, %v4078
        %4080 = vmatmul.bf16.gmra.mxu0 %v3673
        %v4081 = vpop.f32.mrf.mxu0
        %v4082 = vadd.f32 0.0, %v4081
        %v4083 = vpop.f32.mrf.mxu0
        %v4084 = vadd.f32 0.0, %v4083
        %4085 = vmatmul.bf16.gmra.mxu0 %v3675
        %v4086 = vpop.f32.mrf.mxu0
        %v4087 = vadd.f32 0.0, %v4086
        %v4088 = vpop.f32.mrf.mxu0
        %v4089 = vadd.f32 0.0, %v4088
        %4090 = vmatmul.bf16.gmra.mxu0 %v3677
        %v4091 = vpop.f32.mrf.mxu0
        %v4092 = vadd.f32 0.0, %v4091
        %v4093 = vpop.f32.mrf.mxu0
        %v4094 = vadd.f32 0.0, %v4093
        %4095 = vmatmul.bf16.gmra.mxu0 %v3679
        %v4096 = vpop.f32.mrf.mxu0
        %v4097 = vadd.f32 0.0, %v4096
        %v4098 = vpop.f32.mrf.mxu0
        %v4099 = vadd.f32 0.0, %v4098
        %4100 = vmatmul.bf16.gmra.mxu0 %v3681
        %v4101 = vpop.f32.mrf.mxu0
        %v4102 = vadd.f32 0.0, %v4101
        %v4103 = vpop.f32.mrf.mxu0
        %v4104 = vadd.f32 0.0, %v4103
        %4105 = vmatmul.bf16.gmra.mxu0 %v3683
        %v4106 = vpop.f32.mrf.mxu0
        %v4107 = vadd.f32 0.0, %v4106
        %v4108 = vpop.f32.mrf.mxu0
        %v4109 = vadd.f32 0.0, %v4108
        %4110 = vmatmul.bf16.gmra.mxu0 %v3685
        %v4111 = vpop.f32.mrf.mxu0
        %v4112 = vadd.f32 0.0, %v4111
        %v4113 = vpop.f32.mrf.mxu0
        %v4114 = vadd.f32 0.0, %v4113
        %4115 = vmatmul.bf16.gmra.mxu0 %v3687
        %v4116 = vpop.f32.mrf.mxu0
        %v4117 = vadd.f32 0.0, %v4116
        %v4118 = vpop.f32.mrf.mxu0
        %v4119 = vadd.f32 0.0, %v4118
        %4120 = vmatmul.bf16.gmra.mxu0 %v3689
        %v4121 = vpop.f32.mrf.mxu0
        %v4122 = vadd.f32 0.0, %v4121
        %v4123 = vpop.f32.mrf.mxu0
        %v4124 = vadd.f32 0.0, %v4123
        %4125 = vmatmul.bf16.gmra.mxu0 %v3691
        %v4126 = vpop.f32.mrf.mxu0
        %v4127 = vadd.f32 0.0, %v4126
        %v4128 = vpop.f32.mrf.mxu0
        %v4129 = vadd.f32 0.0, %v4128
        %4130 = vmatmul.bf16.gmra.mxu0 %v3693
        %v4131 = vpop.f32.mrf.mxu0
        %v4132 = vadd.f32 0.0, %v4131
        %v4133 = vpop.f32.mrf.mxu0
        %v4134 = vadd.f32 0.0, %v4133
        %4135 = vdwg.mxu0
        %4136 = vmatpush.bf16.msra.mxu0 %v3979
        %4137 = vmatpush.bf16.msra.mxu0 %v3975
        %4138 = vmatpush.bf16.msra.mxu0 %v3971
        %4139 = vmatpush.bf16.msra.mxu0 %v3967
        %4140 = vmatpush.bf16.msra.mxu0 %v3963
        %4141 = vmatpush.bf16.msra.mxu0 %v3959
        %4142 = vmatpush.bf16.msra.mxu0 %v3955
        %4143 = vmatpush.bf16.msra.mxu0 %v3951
        %4144 = vmatmul.bf16.gmra.mxu0 %v3664
        %v4145 = vpop.f32.mrf.mxu0
        %v4146 = vadd.f32 %v4057, %v4145
        %v4147 = vpop.f32.mrf.mxu0
        %v4148 = vadd.f32 %v4059, %v4147
        %4149 = vmatmul.bf16.gmra.mxu0 %v3666
        %v4150 = vpop.f32.mrf.mxu0
        %v4151 = vadd.f32 %v4062, %v4150
        %v4152 = vpop.f32.mrf.mxu0
        %v4153 = vadd.f32 %v4064, %v4152
        %4154 = vmatmul.bf16.gmra.mxu0 %v3668
        %v4155 = vpop.f32.mrf.mxu0
        %v4156 = vadd.f32 %v4067, %v4155
        %v4157 = vpop.f32.mrf.mxu0
        %v4158 = vadd.f32 %v4069, %v4157
        %4159 = vmatmul.bf16.gmra.mxu0 %v3670
        %v4160 = vpop.f32.mrf.mxu0
        %v4161 = vadd.f32 %v4072, %v4160
        %v4162 = vpop.f32.mrf.mxu0
        %v4163 = vadd.f32 %v4074, %v4162
        %4164 = vmatmul.bf16.gmra.mxu0 %v3672
        %v4165 = vpop.f32.mrf.mxu0
        %v4166 = vadd.f32 %v4077, %v4165
        %v4167 = vpop.f32.mrf.mxu0
        %v4168 = vadd.f32 %v4079, %v4167
        %4169 = vmatmul.bf16.gmra.mxu0 %v3674
        %v4170 = vpop.f32.mrf.mxu0
        %v4171 = vadd.f32 %v4082, %v4170
        %v4172 = vpop.f32.mrf.mxu0
        %v4173 = vadd.f32 %v4084, %v4172
        %4174 = vmatmul.bf16.gmra.mxu0 %v3676
        %v4175 = vpop.f32.mrf.mxu0
        %v4176 = vadd.f32 %v4087, %v4175
        %v4177 = vpop.f32.mrf.mxu0
        %v4178 = vadd.f32 %v4089, %v4177
        %4179 = vmatmul.bf16.gmra.mxu0 %v3678
        %v4180 = vpop.f32.mrf.mxu0
        %v4181 = vadd.f32 %v4092, %v4180
        %v4182 = vpop.f32.mrf.mxu0
        %v4183 = vadd.f32 %v4094, %v4182
        %4184 = vmatmul.bf16.gmra.mxu0 %v3680
        %v4185 = vpop.f32.mrf.mxu0
        %v4186 = vadd.f32 %v4097, %v4185
        %v4187 = vpop.f32.mrf.mxu0
        %v4188 = vadd.f32 %v4099, %v4187
        %4189 = vmatmul.bf16.gmra.mxu0 %v3682
        %v4190 = vpop.f32.mrf.mxu0
        %v4191 = vadd.f32 %v4102, %v4190
        %v4192 = vpop.f32.mrf.mxu0
        %v4193 = vadd.f32 %v4104, %v4192
        %4194 = vmatmul.bf16.gmra.mxu0 %v3684
        %v4195 = vpop.f32.mrf.mxu0
        %v4196 = vadd.f32 %v4107, %v4195
        %v4197 = vpop.f32.mrf.mxu0
        %v4198 = vadd.f32 %v4109, %v4197
        %4199 = vmatmul.bf16.gmra.mxu0 %v3686
        %v4200 = vpop.f32.mrf.mxu0
        %v4201 = vadd.f32 %v4112, %v4200
        %v4202 = vpop.f32.mrf.mxu0
        %v4203 = vadd.f32 %v4114, %v4202
        %4204 = vmatmul.bf16.gmra.mxu0 %v3688
        %v4205 = vpop.f32.mrf.mxu0
        %v4206 = vadd.f32 %v4117, %v4205
        %v4207 = vpop.f32.mrf.mxu0
        %v4208 = vadd.f32 %v4119, %v4207
        %4209 = vmatmul.bf16.gmra.mxu0 %v3690
        %v4210 = vpop.f32.mrf.mxu0
        %v4211 = vadd.f32 %v4122, %v4210
        %v4212 = vpop.f32.mrf.mxu0
        %v4213 = vadd.f32 %v4124, %v4212
        %4214 = vmatmul.bf16.gmra.mxu0 %v3692
        %v4215 = vpop.f32.mrf.mxu0
        %v4216 = vadd.f32 %v4127, %v4215
        %v4217 = vpop.f32.mrf.mxu0
        %v4218 = vadd.f32 %v4129, %v4217
        %4219 = vmatmul.bf16.gmra.mxu0 %v3694
        %v4220 = vpop.f32.mrf.mxu0
        %v4221 = vadd.f32 %v4132, %v4220
        %v4222 = vpop.f32.mrf.mxu0
        %v4223 = vadd.f32 %v4134, %v4222
        %4224 = vdwg.mxu0
        %4225 = vmatpush.bf16.msra.mxu0 %v3948
        %4226 = vmatpush.bf16.msra.mxu0 %v3944
        %4227 = vmatpush.bf16.msra.mxu0 %v3940
        %4228 = vmatpush.bf16.msra.mxu0 %v3936
        %4229 = vmatpush.bf16.msra.mxu0 %v3932
        %4230 = vmatpush.bf16.msra.mxu0 %v3928
        %4231 = vmatpush.bf16.msra.mxu0 %v3924
        %4232 = vmatpush.bf16.msra.mxu0 %v3920
        %4233 = vmatmul.bf16.gmra.mxu0 %v3663
        %v4234 = vpop.f32.mrf.mxu0
        %v4235 = vadd.f32 0.0, %v4234
        %v4236 = vpop.f32.mrf.mxu0
        %v4237 = vadd.f32 0.0, %v4236
        %4238 = vmatmul.bf16.gmra.mxu0 %v3665
        %v4239 = vpop.f32.mrf.mxu0
        %v4240 = vadd.f32 0.0, %v4239
        %v4241 = vpop.f32.mrf.mxu0
        %v4242 = vadd.f32 0.0, %v4241
        %4243 = vmatmul.bf16.gmra.mxu0 %v3667
        %v4244 = vpop.f32.mrf.mxu0
        %v4245 = vadd.f32 0.0, %v4244
        %v4246 = vpop.f32.mrf.mxu0
        %v4247 = vadd.f32 0.0, %v4246
        %4248 = vmatmul.bf16.gmra.mxu0 %v3669
        %v4249 = vpop.f32.mrf.mxu0
        %v4250 = vadd.f32 0.0, %v4249
        %v4251 = vpop.f32.mrf.mxu0
        %v4252 = vadd.f32 0.0, %v4251
        %4253 = vmatmul.bf16.gmra.mxu0 %v3671
        %v4254 = vpop.f32.mrf.mxu0
        %v4255 = vadd.f32 0.0, %v4254
        %v4256 = vpop.f32.mrf.mxu0
        %v4257 = vadd.f32 0.0, %v4256
        %4258 = vmatmul.bf16.gmra.mxu0 %v3673
        %v4259 = vpop.f32.mrf.mxu0
        %v4260 = vadd.f32 0.0, %v4259
        %v4261 = vpop.f32.mrf.mxu0
        %v4262 = vadd.f32 0.0, %v4261
        %4263 = vmatmul.bf16.gmra.mxu0 %v3675
        %v4264 = vpop.f32.mrf.mxu0
        %v4265 = vadd.f32 0.0, %v4264
        %v4266 = vpop.f32.mrf.mxu0
        %v4267 = vadd.f32 0.0, %v4266
        %4268 = vmatmul.bf16.gmra.mxu0 %v3677
        %v4269 = vpop.f32.mrf.mxu0
        %v4270 = vadd.f32 0.0, %v4269
        %v4271 = vpop.f32.mrf.mxu0
        %v4272 = vadd.f32 0.0, %v4271
        %4273 = vmatmul.bf16.gmra.mxu0 %v3679
        %v4274 = vpop.f32.mrf.mxu0
        %v4275 = vadd.f32 0.0, %v4274
        %v4276 = vpop.f32.mrf.mxu0
        %v4277 = vadd.f32 0.0, %v4276
        %4278 = vmatmul.bf16.gmra.mxu0 %v3681
        %v4279 = vpop.f32.mrf.mxu0
        %v4280 = vadd.f32 0.0, %v4279
        %v4281 = vpop.f32.mrf.mxu0
        %v4282 = vadd.f32 0.0, %v4281
        %4283 = vmatmul.bf16.gmra.mxu0 %v3683
        %v4284 = vpop.f32.mrf.mxu0
        %v4285 = vadd.f32 0.0, %v4284
        %v4286 = vpop.f32.mrf.mxu0
        %v4287 = vadd.f32 0.0, %v4286
        %4288 = vmatmul.bf16.gmra.mxu0 %v3685
        %v4289 = vpop.f32.mrf.mxu0
        %v4290 = vadd.f32 0.0, %v4289
        %v4291 = vpop.f32.mrf.mxu0
        %v4292 = vadd.f32 0.0, %v4291
        %4293 = vmatmul.bf16.gmra.mxu0 %v3687
        %v4294 = vpop.f32.mrf.mxu0
        %v4295 = vadd.f32 0.0, %v4294
        %v4296 = vpop.f32.mrf.mxu0
        %v4297 = vadd.f32 0.0, %v4296
        %4298 = vmatmul.bf16.gmra.mxu0 %v3689
        %v4299 = vpop.f32.mrf.mxu0
        %v4300 = vadd.f32 0.0, %v4299
        %v4301 = vpop.f32.mrf.mxu0
        %v4302 = vadd.f32 0.0, %v4301
        %4303 = vmatmul.bf16.gmra.mxu0 %v3691
        %v4304 = vpop.f32.mrf.mxu0
        %v4305 = vadd.f32 0.0, %v4304
        %v4306 = vpop.f32.mrf.mxu0
        %v4307 = vadd.f32 0.0, %v4306
        %4308 = vmatmul.bf16.gmra.mxu0 %v3693
        %v4309 = vpop.f32.mrf.mxu0
        %v4310 = vadd.f32 0.0, %v4309
        %v4311 = vpop.f32.mrf.mxu0
        %v4312 = vadd.f32 0.0, %v4311
        %4313 = vdwg.mxu0
        %4314 = vmatpush.bf16.msra.mxu0 %v3980
        %4315 = vmatpush.bf16.msra.mxu0 %v3976
        %4316 = vmatpush.bf16.msra.mxu0 %v3972
        %4317 = vmatpush.bf16.msra.mxu0 %v3968
        %4318 = vmatpush.bf16.msra.mxu0 %v3964
        %4319 = vmatpush.bf16.msra.mxu0 %v3960
        %4320 = vmatpush.bf16.msra.mxu0 %v3956
        %4321 = vmatpush.bf16.msra.mxu0 %v3952
        %4322 = vmatmul.bf16.gmra.mxu0 %v3664
        %v4323 = vpop.f32.mrf.mxu0
        %v4324 = vadd.f32 %v4235, %v4323
        %v4325 = vpop.f32.mrf.mxu0
        %v4326 = vadd.f32 %v4237, %v4325
        %4327 = vmatmul.bf16.gmra.mxu0 %v3666
        %v4328 = vpop.f32.mrf.mxu0
        %v4329 = vadd.f32 %v4240, %v4328
        %v4330 = vpop.f32.mrf.mxu0
        %v4331 = vadd.f32 %v4242, %v4330
        %4332 = vmatmul.bf16.gmra.mxu0 %v3668
        %v4333 = vpop.f32.mrf.mxu0
        %v4334 = vadd.f32 %v4245, %v4333
        %v4335 = vpop.f32.mrf.mxu0
        %v4336 = vadd.f32 %v4247, %v4335
        %4337 = vmatmul.bf16.gmra.mxu0 %v3670
        %v4338 = vpop.f32.mrf.mxu0
        %v4339 = vadd.f32 %v4250, %v4338
        %v4340 = vpop.f32.mrf.mxu0
        %v4341 = vadd.f32 %v4252, %v4340
        %4342 = vmatmul.bf16.gmra.mxu0 %v3672
        %v4343 = vpop.f32.mrf.mxu0
        %v4344 = vadd.f32 %v4255, %v4343
        %v4345 = vpop.f32.mrf.mxu0
        %v4346 = vadd.f32 %v4257, %v4345
        %4347 = vmatmul.bf16.gmra.mxu0 %v3674
        %v4348 = vpop.f32.mrf.mxu0
        %v4349 = vadd.f32 %v4260, %v4348
        %v4350 = vpop.f32.mrf.mxu0
        %v4351 = vadd.f32 %v4262, %v4350
        %4352 = vmatmul.bf16.gmra.mxu0 %v3676
        %v4353 = vpop.f32.mrf.mxu0
        %v4354 = vadd.f32 %v4265, %v4353
        %v4355 = vpop.f32.mrf.mxu0
        %v4356 = vadd.f32 %v4267, %v4355
        %4357 = vmatmul.bf16.gmra.mxu0 %v3678
        %v4358 = vpop.f32.mrf.mxu0
        %v4359 = vadd.f32 %v4270, %v4358
        %v4360 = vpop.f32.mrf.mxu0
        %v4361 = vadd.f32 %v4272, %v4360
        %4362 = vmatmul.bf16.gmra.mxu0 %v3680
        %v4363 = vpop.f32.mrf.mxu0
        %v4364 = vadd.f32 %v4275, %v4363
        %v4365 = vpop.f32.mrf.mxu0
        %v4366 = vadd.f32 %v4277, %v4365
        %4367 = vmatmul.bf16.gmra.mxu0 %v3682
        %v4368 = vpop.f32.mrf.mxu0
        %v4369 = vadd.f32 %v4280, %v4368
        %v4370 = vpop.f32.mrf.mxu0
        %v4371 = vadd.f32 %v4282, %v4370
        %4372 = vmatmul.bf16.gmra.mxu0 %v3684
        %v4373 = vpop.f32.mrf.mxu0
        %v4374 = vadd.f32 %v4285, %v4373
        %v4375 = vpop.f32.mrf.mxu0
        %v4376 = vadd.f32 %v4287, %v4375
        %4377 = vmatmul.bf16.gmra.mxu0 %v3686
        %v4378 = vpop.f32.mrf.mxu0
        %v4379 = vadd.f32 %v4290, %v4378
        %v4380 = vpop.f32.mrf.mxu0
        %v4381 = vadd.f32 %v4292, %v4380
        %4382 = vmatmul.bf16.gmra.mxu0 %v3688
        %v4383 = vpop.f32.mrf.mxu0
        %v4384 = vadd.f32 %v4295, %v4383
        %v4385 = vpop.f32.mrf.mxu0
        %v4386 = vadd.f32 %v4297, %v4385
        %4387 = vmatmul.bf16.gmra.mxu0 %v3690
        %v4388 = vpop.f32.mrf.mxu0
        %v4389 = vadd.f32 %v4300, %v4388
        %v4390 = vpop.f32.mrf.mxu0
        %v4391 = vadd.f32 %v4302, %v4390
        %4392 = vmatmul.bf16.gmra.mxu0 %v3692
        %v4393 = vpop.f32.mrf.mxu0
        %v4394 = vadd.f32 %v4305, %v4393
        %v4395 = vpop.f32.mrf.mxu0
        %v4396 = vadd.f32 %v4307, %v4395
        %4397 = vmatmul.bf16.gmra.mxu0 %v3694
        %v4398 = vpop.f32.mrf.mxu0
        %v4399 = vadd.f32 %v4310, %v4398
        %v4400 = vpop.f32.mrf.mxu0
        %v4401 = vadd.f32 %v4312, %v4400
        %4402 = vdwg.mxu0
        %4403 = vmatpush.bf16.msra.mxu0 %v3949
        %4404 = vmatpush.bf16.msra.mxu0 %v3945
        %4405 = vmatpush.bf16.msra.mxu0 %v3941
        %4406 = vmatpush.bf16.msra.mxu0 %v3937
        %4407 = vmatpush.bf16.msra.mxu0 %v3933
        %4408 = vmatpush.bf16.msra.mxu0 %v3929
        %4409 = vmatpush.bf16.msra.mxu0 %v3925
        %4410 = vmatpush.bf16.msra.mxu0 %v3921
        %4411 = vmatmul.bf16.gmra.mxu0 %v3663
        %v4412 = vpop.f32.mrf.mxu0
        %v4413 = vadd.f32 0.0, %v4412
        %v4414 = vpop.f32.mrf.mxu0
        %v4415 = vadd.f32 0.0, %v4414
        %4416 = vmatmul.bf16.gmra.mxu0 %v3665
        %v4417 = vpop.f32.mrf.mxu0
        %v4418 = vadd.f32 0.0, %v4417
        %v4419 = vpop.f32.mrf.mxu0
        %v4420 = vadd.f32 0.0, %v4419
        %4421 = vmatmul.bf16.gmra.mxu0 %v3667
        %v4422 = vpop.f32.mrf.mxu0
        %v4423 = vadd.f32 0.0, %v4422
        %v4424 = vpop.f32.mrf.mxu0
        %v4425 = vadd.f32 0.0, %v4424
        %4426 = vmatmul.bf16.gmra.mxu0 %v3669
        %v4427 = vpop.f32.mrf.mxu0
        %v4428 = vadd.f32 0.0, %v4427
        %v4429 = vpop.f32.mrf.mxu0
        %v4430 = vadd.f32 0.0, %v4429
        %4431 = vmatmul.bf16.gmra.mxu0 %v3671
        %v4432 = vpop.f32.mrf.mxu0
        %v4433 = vadd.f32 0.0, %v4432
        %v4434 = vpop.f32.mrf.mxu0
        %v4435 = vadd.f32 0.0, %v4434
        %4436 = vmatmul.bf16.gmra.mxu0 %v3673
        %v4437 = vpop.f32.mrf.mxu0
        %v4438 = vadd.f32 0.0, %v4437
        %v4439 = vpop.f32.mrf.mxu0
        %v4440 = vadd.f32 0.0, %v4439
        %4441 = vmatmul.bf16.gmra.mxu0 %v3675
        %v4442 = vpop.f32.mrf.mxu0
        %v4443 = vadd.f32 0.0, %v4442
        %v4444 = vpop.f32.mrf.mxu0
        %v4445 = vadd.f32 0.0, %v4444
        %4446 = vmatmul.bf16.gmra.mxu0 %v3677
        %v4447 = vpop.f32.mrf.mxu0
        %v4448 = vadd.f32 0.0, %v4447
        %v4449 = vpop.f32.mrf.mxu0
        %v4450 = vadd.f32 0.0, %v4449
        %4451 = vmatmul.bf16.gmra.mxu0 %v3679
        %v4452 = vpop.f32.mrf.mxu0
        %v4453 = vadd.f32 0.0, %v4452
        %v4454 = vpop.f32.mrf.mxu0
        %v4455 = vadd.f32 0.0, %v4454
        %4456 = vmatmul.bf16.gmra.mxu0 %v3681
        %v4457 = vpop.f32.mrf.mxu0
        %v4458 = vadd.f32 0.0, %v4457
        %v4459 = vpop.f32.mrf.mxu0
        %v4460 = vadd.f32 0.0, %v4459
        %4461 = vmatmul.bf16.gmra.mxu0 %v3683
        %v4462 = vpop.f32.mrf.mxu0
        %v4463 = vadd.f32 0.0, %v4462
        %v4464 = vpop.f32.mrf.mxu0
        %v4465 = vadd.f32 0.0, %v4464
        %4466 = vmatmul.bf16.gmra.mxu0 %v3685
        %v4467 = vpop.f32.mrf.mxu0
        %v4468 = vadd.f32 0.0, %v4467
        %v4469 = vpop.f32.mrf.mxu0
        %v4470 = vadd.f32 0.0, %v4469
        %4471 = vmatmul.bf16.gmra.mxu0 %v3687
        %v4472 = vpop.f32.mrf.mxu0
        %v4473 = vadd.f32 0.0, %v4472
        %v4474 = vpop.f32.mrf.mxu0
        %v4475 = vadd.f32 0.0, %v4474
        %4476 = vmatmul.bf16.gmra.mxu0 %v3689
        %v4477 = vpop.f32.mrf.mxu0
        %v4478 = vadd.f32 0.0, %v4477
        %v4479 = vpop.f32.mrf.mxu0
        %v4480 = vadd.f32 0.0, %v4479
        %4481 = vmatmul.bf16.gmra.mxu0 %v3691
        %v4482 = vpop.f32.mrf.mxu0
        %v4483 = vadd.f32 0.0, %v4482
        %v4484 = vpop.f32.mrf.mxu0
        %v4485 = vadd.f32 0.0, %v4484
        %4486 = vmatmul.bf16.gmra.mxu0 %v3693
        %v4487 = vpop.f32.mrf.mxu0
        %v4488 = vadd.f32 0.0, %v4487
        %v4489 = vpop.f32.mrf.mxu0
        %v4490 = vadd.f32 0.0, %v4489
        %4491 = vdwg.mxu0
        %4492 = vmatpush.bf16.msra.mxu0 %v3981
        %4493 = vmatpush.bf16.msra.mxu0 %v3977
        %4494 = vmatpush.bf16.msra.mxu0 %v3973
        %4495 = vmatpush.bf16.msra.mxu0 %v3969
        %4496 = vmatpush.bf16.msra.mxu0 %v3965
        %4497 = vmatpush.bf16.msra.mxu0 %v3961
        %4498 = vmatpush.bf16.msra.mxu0 %v3957
        %4499 = vmatpush.bf16.msra.mxu0 %v3953
        %4500 = vmatmul.bf16.gmra.mxu0 %v3664
        %v4501 = vpop.f32.mrf.mxu0
        %v4502 = vadd.f32 %v4413, %v4501
        %v4503 = vpop.f32.mrf.mxu0
        %v4504 = vadd.f32 %v4415, %v4503
        %4505 = vmatmul.bf16.gmra.mxu0 %v3666
        %v4506 = vpop.f32.mrf.mxu0
        %v4507 = vadd.f32 %v4418, %v4506
        %v4508 = vpop.f32.mrf.mxu0
        %v4509 = vadd.f32 %v4420, %v4508
        %4510 = vmatmul.bf16.gmra.mxu0 %v3668
        %v4511 = vpop.f32.mrf.mxu0
        %v4512 = vadd.f32 %v4423, %v4511
        %v4513 = vpop.f32.mrf.mxu0
        %v4514 = vadd.f32 %v4425, %v4513
        %4515 = vmatmul.bf16.gmra.mxu0 %v3670
        %v4516 = vpop.f32.mrf.mxu0
        %v4517 = vadd.f32 %v4428, %v4516
        %v4518 = vpop.f32.mrf.mxu0
        %v4519 = vadd.f32 %v4430, %v4518
        %4520 = vmatmul.bf16.gmra.mxu0 %v3672
        %v4521 = vpop.f32.mrf.mxu0
        %v4522 = vadd.f32 %v4433, %v4521
        %v4523 = vpop.f32.mrf.mxu0
        %v4524 = vadd.f32 %v4435, %v4523
        %4525 = vmatmul.bf16.gmra.mxu0 %v3674
        %v4526 = vpop.f32.mrf.mxu0
        %v4527 = vadd.f32 %v4438, %v4526
        %v4528 = vpop.f32.mrf.mxu0
        %v4529 = vadd.f32 %v4440, %v4528
        %4530 = vmatmul.bf16.gmra.mxu0 %v3676
        %v4531 = vpop.f32.mrf.mxu0
        %v4532 = vadd.f32 %v4443, %v4531
        %v4533 = vpop.f32.mrf.mxu0
        %v4534 = vadd.f32 %v4445, %v4533
        %4535 = vmatmul.bf16.gmra.mxu0 %v3678
        %v4536 = vpop.f32.mrf.mxu0
        %v4537 = vadd.f32 %v4448, %v4536
        %v4538 = vpop.f32.mrf.mxu0
        %v4539 = vadd.f32 %v4450, %v4538
        %4540 = vmatmul.bf16.gmra.mxu0 %v3680
        %v4541 = vpop.f32.mrf.mxu0
        %v4542 = vadd.f32 %v4453, %v4541
        %v4543 = vpop.f32.mrf.mxu0
        %v4544 = vadd.f32 %v4455, %v4543
        %4545 = vmatmul.bf16.gmra.mxu0 %v3682
        %v4546 = vpop.f32.mrf.mxu0
        %v4547 = vadd.f32 %v4458, %v4546
        %v4548 = vpop.f32.mrf.mxu0
        %v4549 = vadd.f32 %v4460, %v4548
        %4550 = vmatmul.bf16.gmra.mxu0 %v3684
        %v4551 = vpop.f32.mrf.mxu0
        %v4552 = vadd.f32 %v4463, %v4551
        %v4553 = vpop.f32.mrf.mxu0
        %v4554 = vadd.f32 %v4465, %v4553
        %4555 = vmatmul.bf16.gmra.mxu0 %v3686
        %v4556 = vpop.f32.mrf.mxu0
        %v4557 = vadd.f32 %v4468, %v4556
        %v4558 = vpop.f32.mrf.mxu0
        %v4559 = vadd.f32 %v4470, %v4558
        %4560 = vmatmul.bf16.gmra.mxu0 %v3688
        %v4561 = vpop.f32.mrf.mxu0
        %v4562 = vadd.f32 %v4473, %v4561
        %v4563 = vpop.f32.mrf.mxu0
        %v4564 = vadd.f32 %v4475, %v4563
        %4565 = vmatmul.bf16.gmra.mxu0 %v3690
        %v4566 = vpop.f32.mrf.mxu0
        %v4567 = vadd.f32 %v4478, %v4566
        %v4568 = vpop.f32.mrf.mxu0
        %v4569 = vadd.f32 %v4480, %v4568
        %4570 = vmatmul.bf16.gmra.mxu0 %v3692
        %v4571 = vpop.f32.mrf.mxu0
        %v4572 = vadd.f32 %v4483, %v4571
        %v4573 = vpop.f32.mrf.mxu0
        %v4574 = vadd.f32 %v4485, %v4573
        %4575 = vmatmul.bf16.gmra.mxu0 %v3694
        %v4576 = vpop.f32.mrf.mxu0
        %v4577 = vadd.f32 %v4488, %v4576
        %v4578 = vpop.f32.mrf.mxu0
        %v4579 = vadd.f32 %v4490, %v4578
        %4580 = vdwg.mxu0
        %4581 = vmatpush.bf16.msra.mxu0 %v3950
        %4582 = vmatpush.bf16.msra.mxu0 %v3946
        %4583 = vmatpush.bf16.msra.mxu0 %v3942
        %4584 = vmatpush.bf16.msra.mxu0 %v3938
        %4585 = vmatpush.bf16.msra.mxu0 %v3934
        %4586 = vmatpush.bf16.msra.mxu0 %v3930
        %4587 = vmatpush.bf16.msra.mxu0 %v3926
        %4588 = vmatpush.bf16.msra.mxu0 %v3922
        %4589 = vmatmul.bf16.gmra.mxu0 %v3663
        %v4590 = vpop.f32.mrf.mxu0
        %v4591 = vadd.f32 0.0, %v4590
        %v4592 = vpop.f32.mrf.mxu0
        %v4593 = vadd.f32 0.0, %v4592
        %4594 = vmatmul.bf16.gmra.mxu0 %v3665
        %v4595 = vpop.f32.mrf.mxu0
        %v4596 = vadd.f32 0.0, %v4595
        %v4597 = vpop.f32.mrf.mxu0
        %v4598 = vadd.f32 0.0, %v4597
        %4599 = vmatmul.bf16.gmra.mxu0 %v3667
        %v4600 = vpop.f32.mrf.mxu0
        %v4601 = vadd.f32 0.0, %v4600
        %v4602 = vpop.f32.mrf.mxu0
        %v4603 = vadd.f32 0.0, %v4602
        %4604 = vmatmul.bf16.gmra.mxu0 %v3669
        %v4605 = vpop.f32.mrf.mxu0
        %v4606 = vadd.f32 0.0, %v4605
        %v4607 = vpop.f32.mrf.mxu0
        %v4608 = vadd.f32 0.0, %v4607
        %4609 = vmatmul.bf16.gmra.mxu0 %v3671
        %v4610 = vpop.f32.mrf.mxu0
        %v4611 = vadd.f32 0.0, %v4610
        %v4612 = vpop.f32.mrf.mxu0
        %v4613 = vadd.f32 0.0, %v4612
        %4614 = vmatmul.bf16.gmra.mxu0 %v3673
        %v4615 = vpop.f32.mrf.mxu0
        %v4616 = vadd.f32 0.0, %v4615
        %v4617 = vpop.f32.mrf.mxu0
        %v4618 = vadd.f32 0.0, %v4617
        %4619 = vmatmul.bf16.gmra.mxu0 %v3675
        %v4620 = vpop.f32.mrf.mxu0
        %v4621 = vadd.f32 0.0, %v4620
        %v4622 = vpop.f32.mrf.mxu0
        %v4623 = vadd.f32 0.0, %v4622
        %4624 = vmatmul.bf16.gmra.mxu0 %v3677
        %v4625 = vpop.f32.mrf.mxu0
        %v4626 = vadd.f32 0.0, %v4625
        %v4627 = vpop.f32.mrf.mxu0
        %v4628 = vadd.f32 0.0, %v4627
        %4629 = vmatmul.bf16.gmra.mxu0 %v3679
        %v4630 = vpop.f32.mrf.mxu0
        %v4631 = vadd.f32 0.0, %v4630
        %v4632 = vpop.f32.mrf.mxu0
        %v4633 = vadd.f32 0.0, %v4632
        %4634 = vmatmul.bf16.gmra.mxu0 %v3681
        %v4635 = vpop.f32.mrf.mxu0
        %v4636 = vadd.f32 0.0, %v4635
        %v4637 = vpop.f32.mrf.mxu0
        %v4638 = vadd.f32 0.0, %v4637
        %4639 = vmatmul.bf16.gmra.mxu0 %v3683
        %v4640 = vpop.f32.mrf.mxu0
        %v4641 = vadd.f32 0.0, %v4640
        %v4642 = vpop.f32.mrf.mxu0
        %v4643 = vadd.f32 0.0, %v4642
        %4644 = vmatmul.bf16.gmra.mxu0 %v3685
        %v4645 = vpop.f32.mrf.mxu0
        %v4646 = vadd.f32 0.0, %v4645
        %v4647 = vpop.f32.mrf.mxu0
        %v4648 = vadd.f32 0.0, %v4647
        %4649 = vmatmul.bf16.gmra.mxu0 %v3687
        %v4650 = vpop.f32.mrf.mxu0
        %v4651 = vadd.f32 0.0, %v4650
        %v4652 = vpop.f32.mrf.mxu0
        %v4653 = vadd.f32 0.0, %v4652
        %4654 = vmatmul.bf16.gmra.mxu0 %v3689
        %v4655 = vpop.f32.mrf.mxu0
        %v4656 = vadd.f32 0.0, %v4655
        %v4657 = vpop.f32.mrf.mxu0
        %v4658 = vadd.f32 0.0, %v4657
        %4659 = vmatmul.bf16.gmra.mxu0 %v3691
        %v4660 = vpop.f32.mrf.mxu0
        %v4661 = vadd.f32 0.0, %v4660
        %v4662 = vpop.f32.mrf.mxu0
        %v4663 = vadd.f32 0.0, %v4662
        %4664 = vmatmul.bf16.gmra.mxu0 %v3693
        %v4665 = vpop.f32.mrf.mxu0
        %v4666 = vadd.f32 0.0, %v4665
        %v4667 = vpop.f32.mrf.mxu0
        %v4668 = vadd.f32 0.0, %v4667
        %4669 = vdwg.mxu0
        %4670 = vmatpush.bf16.msra.mxu0 %v3982
        %4671 = vmatpush.bf16.msra.mxu0 %v3978
        %4672 = vmatpush.bf16.msra.mxu0 %v3974
        %4673 = vmatpush.bf16.msra.mxu0 %v3970
        %4674 = vmatpush.bf16.msra.mxu0 %v3966
        %4675 = vmatpush.bf16.msra.mxu0 %v3962
        %4676 = vmatpush.bf16.msra.mxu0 %v3958
        %4677 = vmatpush.bf16.msra.mxu0 %v3954
        %4678 = vmatmul.bf16.gmra.mxu0 %v3664
        %v4679 = vpop.f32.mrf.mxu0
        %v4680 = vadd.f32 %v4591, %v4679
        %v4681 = vpop.f32.mrf.mxu0
        %v4682 = vadd.f32 %v4593, %v4681
        %4683 = vmatmul.bf16.gmra.mxu0 %v3666
        %v4684 = vpop.f32.mrf.mxu0
        %v4685 = vadd.f32 %v4596, %v4684
        %v4686 = vpop.f32.mrf.mxu0
        %v4687 = vadd.f32 %v4598, %v4686
        %4688 = vmatmul.bf16.gmra.mxu0 %v3668
        %v4689 = vpop.f32.mrf.mxu0
        %v4690 = vadd.f32 %v4601, %v4689
        %v4691 = vpop.f32.mrf.mxu0
        %v4692 = vadd.f32 %v4603, %v4691
        %4693 = vmatmul.bf16.gmra.mxu0 %v3670
        %v4694 = vpop.f32.mrf.mxu0
        %v4695 = vadd.f32 %v4606, %v4694
        %v4696 = vpop.f32.mrf.mxu0
        %v4697 = vadd.f32 %v4608, %v4696
        %4698 = vmatmul.bf16.gmra.mxu0 %v3672
        %v4699 = vpop.f32.mrf.mxu0
        %v4700 = vadd.f32 %v4611, %v4699
        %v4701 = vpop.f32.mrf.mxu0
        %v4702 = vadd.f32 %v4613, %v4701
        %4703 = vmatmul.bf16.gmra.mxu0 %v3674
        %v4704 = vpop.f32.mrf.mxu0
        %v4705 = vadd.f32 %v4616, %v4704
        %v4706 = vpop.f32.mrf.mxu0
        %v4707 = vadd.f32 %v4618, %v4706
        %4708 = vmatmul.bf16.gmra.mxu0 %v3676
        %v4709 = vpop.f32.mrf.mxu0
        %v4710 = vadd.f32 %v4621, %v4709
        %v4711 = vpop.f32.mrf.mxu0
        %v4712 = vadd.f32 %v4623, %v4711
        %4713 = vmatmul.bf16.gmra.mxu0 %v3678
        %v4714 = vpop.f32.mrf.mxu0
        %v4715 = vadd.f32 %v4626, %v4714
        %v4716 = vpop.f32.mrf.mxu0
        %v4717 = vadd.f32 %v4628, %v4716
        %4718 = vmatmul.bf16.gmra.mxu0 %v3680
        %v4719 = vpop.f32.mrf.mxu0
        %v4720 = vadd.f32 %v4631, %v4719
        %v4721 = vpop.f32.mrf.mxu0
        %v4722 = vadd.f32 %v4633, %v4721
        %4723 = vmatmul.bf16.gmra.mxu0 %v3682
        %v4724 = vpop.f32.mrf.mxu0
        %v4725 = vadd.f32 %v4636, %v4724
        %v4726 = vpop.f32.mrf.mxu0
        %v4727 = vadd.f32 %v4638, %v4726
        %4728 = vmatmul.bf16.gmra.mxu0 %v3684
        %v4729 = vpop.f32.mrf.mxu0
        %v4730 = vadd.f32 %v4641, %v4729
        %v4731 = vpop.f32.mrf.mxu0
        %v4732 = vadd.f32 %v4643, %v4731
        %4733 = vmatmul.bf16.gmra.mxu0 %v3686
        %v4734 = vpop.f32.mrf.mxu0
        %v4735 = vadd.f32 %v4646, %v4734
        %v4736 = vpop.f32.mrf.mxu0
        %v4737 = vadd.f32 %v4648, %v4736
        %4738 = vmatmul.bf16.gmra.mxu0 %v3688
        %v4739 = vpop.f32.mrf.mxu0
        %v4740 = vadd.f32 %v4651, %v4739
        %v4741 = vpop.f32.mrf.mxu0
        %v4742 = vadd.f32 %v4653, %v4741
        %4743 = vmatmul.bf16.gmra.mxu0 %v3690
        %v4744 = vpop.f32.mrf.mxu0
        %v4745 = vadd.f32 %v4656, %v4744
        %v4746 = vpop.f32.mrf.mxu0
        %v4747 = vadd.f32 %v4658, %v4746
        %4748 = vmatmul.bf16.gmra.mxu0 %v3692
        %v4749 = vpop.f32.mrf.mxu0
        %v4750 = vadd.f32 %v4661, %v4749
        %v4751 = vpop.f32.mrf.mxu0
        %v4752 = vadd.f32 %v4663, %v4751
        %4753 = vmatmul.bf16.gmra.mxu0 %v3694
        %v4754 = vpop.f32.mrf.mxu0
        %v4755 = vadd.f32 %v4666, %v4754
        %v4756 = vpop.f32.mrf.mxu0
        %v4757 = vadd.f32 %v4668, %v4756
        %4758 = vdwg.mxu0
        %v4759 = vmax.f32 %v4146, 0.0
        %v4760 = vmax.f32 %v4324, 0.0
        %v4761 = vmax.f32 %v4502, 0.0
        %v4762 = vmax.f32 %v4680, 0.0
        %v4763 = vmax.f32 %v4148, 0.0
        %v4764 = vmax.f32 %v4326, 0.0
        %v4765 = vmax.f32 %v4504, 0.0
        %v4766 = vmax.f32 %v4682, 0.0
        %v4767 = vmax.f32 %v4151, 0.0
        %v4768 = vmax.f32 %v4329, 0.0
        %v4769 = vmax.f32 %v4507, 0.0
        %v4770 = vmax.f32 %v4685, 0.0
        %v4771 = vmax.f32 %v4153, 0.0
        %v4772 = vmax.f32 %v4331, 0.0
        %v4773 = vmax.f32 %v4509, 0.0
        %v4774 = vmax.f32 %v4687, 0.0
        %v4775 = vmax.f32 %v4156, 0.0
        %v4776 = vmax.f32 %v4334, 0.0
        %v4777 = vmax.f32 %v4512, 0.0
        %v4778 = vmax.f32 %v4690, 0.0
        %v4779 = vmax.f32 %v4158, 0.0
        %v4780 = vmax.f32 %v4336, 0.0
        %v4781 = vmax.f32 %v4514, 0.0
        %v4782 = vmax.f32 %v4692, 0.0
        %v4783 = vmax.f32 %v4161, 0.0
        %v4784 = vmax.f32 %v4339, 0.0
        %v4785 = vmax.f32 %v4517, 0.0
        %v4786 = vmax.f32 %v4695, 0.0
        %v4787 = vmax.f32 %v4163, 0.0
        %v4788 = vmax.f32 %v4341, 0.0
        %v4789 = vmax.f32 %v4519, 0.0
        %v4790 = vmax.f32 %v4697, 0.0
        %v4791 = vmax.f32 %v4166, 0.0
        %v4792 = vmax.f32 %v4344, 0.0
        %v4793 = vmax.f32 %v4522, 0.0
        %v4794 = vmax.f32 %v4700, 0.0
        %v4795 = vmax.f32 %v4168, 0.0
        %v4796 = vmax.f32 %v4346, 0.0
        %v4797 = vmax.f32 %v4524, 0.0
        %v4798 = vmax.f32 %v4702, 0.0
        %v4799 = vmax.f32 %v4171, 0.0
        %v4800 = vmax.f32 %v4349, 0.0
        %v4801 = vmax.f32 %v4527, 0.0
        %v4802 = vmax.f32 %v4705, 0.0
        %v4803 = vmax.f32 %v4173, 0.0
        %v4804 = vmax.f32 %v4351, 0.0
        %v4805 = vmax.f32 %v4529, 0.0
        %v4806 = vmax.f32 %v4707, 0.0
        %v4807 = vmax.f32 %v4176, 0.0
        %v4808 = vmax.f32 %v4354, 0.0
        %v4809 = vmax.f32 %v4532, 0.0
        %v4810 = vmax.f32 %v4710, 0.0
        %v4811 = vmax.f32 %v4178, 0.0
        %v4812 = vmax.f32 %v4356, 0.0
        %v4813 = vmax.f32 %v4534, 0.0
        %v4814 = vmax.f32 %v4712, 0.0
        %v4815 = vmax.f32 %v4181, 0.0
        %v4816 = vmax.f32 %v4359, 0.0
        %v4817 = vmax.f32 %v4537, 0.0
        %v4818 = vmax.f32 %v4715, 0.0
        %v4819 = vmax.f32 %v4183, 0.0
        %v4820 = vmax.f32 %v4361, 0.0
        %v4821 = vmax.f32 %v4539, 0.0
        %v4822 = vmax.f32 %v4717, 0.0
        %v4823 = vmax.f32 %v4186, 0.0
        %v4824 = vmax.f32 %v4364, 0.0
        %v4825 = vmax.f32 %v4542, 0.0
        %v4826 = vmax.f32 %v4720, 0.0
        %v4827 = vmax.f32 %v4188, 0.0
        %v4828 = vmax.f32 %v4366, 0.0
        %v4829 = vmax.f32 %v4544, 0.0
        %v4830 = vmax.f32 %v4722, 0.0
        %v4831 = vmax.f32 %v4191, 0.0
        %v4832 = vmax.f32 %v4369, 0.0
        %v4833 = vmax.f32 %v4547, 0.0
        %v4834 = vmax.f32 %v4725, 0.0
        %v4835 = vmax.f32 %v4193, 0.0
        %v4836 = vmax.f32 %v4371, 0.0
        %v4837 = vmax.f32 %v4549, 0.0
        %v4838 = vmax.f32 %v4727, 0.0
        %v4839 = vmax.f32 %v4196, 0.0
        %v4840 = vmax.f32 %v4374, 0.0
        %v4841 = vmax.f32 %v4552, 0.0
        %v4842 = vmax.f32 %v4730, 0.0
        %v4843 = vmax.f32 %v4198, 0.0
        %v4844 = vmax.f32 %v4376, 0.0
        %v4845 = vmax.f32 %v4554, 0.0
        %v4846 = vmax.f32 %v4732, 0.0
        %v4847 = vmax.f32 %v4201, 0.0
        %v4848 = vmax.f32 %v4379, 0.0
        %v4849 = vmax.f32 %v4557, 0.0
        %v4850 = vmax.f32 %v4735, 0.0
        %v4851 = vmax.f32 %v4203, 0.0
        %v4852 = vmax.f32 %v4381, 0.0
        %v4853 = vmax.f32 %v4559, 0.0
        %v4854 = vmax.f32 %v4737, 0.0
        %v4855 = vmax.f32 %v4206, 0.0
        %v4856 = vmax.f32 %v4384, 0.0
        %v4857 = vmax.f32 %v4562, 0.0
        %v4858 = vmax.f32 %v4740, 0.0
        %v4859 = vmax.f32 %v4208, 0.0
        %v4860 = vmax.f32 %v4386, 0.0
        %v4861 = vmax.f32 %v4564, 0.0
        %v4862 = vmax.f32 %v4742, 0.0
        %v4863 = vmax.f32 %v4211, 0.0
        %v4864 = vmax.f32 %v4389, 0.0
        %v4865 = vmax.f32 %v4567, 0.0
        %v4866 = vmax.f32 %v4745, 0.0
        %v4867 = vmax.f32 %v4213, 0.0
        %v4868 = vmax.f32 %v4391, 0.0
        %v4869 = vmax.f32 %v4569, 0.0
        %v4870 = vmax.f32 %v4747, 0.0
        %v4871 = vmax.f32 %v4216, 0.0
        %v4872 = vmax.f32 %v4394, 0.0
        %v4873 = vmax.f32 %v4572, 0.0
        %v4874 = vmax.f32 %v4750, 0.0
        %v4875 = vmax.f32 %v4218, 0.0
        %v4876 = vmax.f32 %v4396, 0.0
        %v4877 = vmax.f32 %v4574, 0.0
        %v4878 = vmax.f32 %v4752, 0.0
        %v4879 = vmax.f32 %v4221, 0.0
        %v4880 = vmax.f32 %v4399, 0.0
        %v4881 = vmax.f32 %v4577, 0.0
        %v4882 = vmax.f32 %v4755, 0.0
        %v4883 = vmax.f32 %v4223, 0.0
        %v4884 = vmax.f32 %v4401, 0.0
        %v4885 = vmax.f32 %v4579, 0.0
        %v4886 = vmax.f32 %v4757, 0.0
        %v4887 = vmul.f32 %v4759, %v4759
        %v4888 = vmul.f32 %v4760, %v4760
        %v4889 = vmul.f32 %v4761, %v4761
        %v4890 = vmul.f32 %v4762, %v4762
        %v4891 = vmul.f32 %v4763, %v4763
        %v4892 = vmul.f32 %v4764, %v4764
        %v4893 = vmul.f32 %v4765, %v4765
        %v4894 = vmul.f32 %v4766, %v4766
        %v4895 = vmul.f32 %v4767, %v4767
        %v4896 = vmul.f32 %v4768, %v4768
        %v4897 = vmul.f32 %v4769, %v4769
        %v4898 = vmul.f32 %v4770, %v4770
        %v4899 = vmul.f32 %v4771, %v4771
        %v4900 = vmul.f32 %v4772, %v4772
        %v4901 = vmul.f32 %v4773, %v4773
        %v4902 = vmul.f32 %v4774, %v4774
        %v4903 = vmul.f32 %v4775, %v4775
        %v4904 = vmul.f32 %v4776, %v4776
        %v4905 = vmul.f32 %v4777, %v4777
        %v4906 = vmul.f32 %v4778, %v4778
        %v4907 = vmul.f32 %v4779, %v4779
        %v4908 = vmul.f32 %v4780, %v4780
        %v4909 = vmul.f32 %v4781, %v4781
        %v4910 = vmul.f32 %v4782, %v4782
        %v4911 = vmul.f32 %v4783, %v4783
        %v4912 = vmul.f32 %v4784, %v4784
        %v4913 = vmul.f32 %v4785, %v4785
        %v4914 = vmul.f32 %v4786, %v4786
        %v4915 = vmul.f32 %v4787, %v4787
        %v4916 = vmul.f32 %v4788, %v4788
        %v4917 = vmul.f32 %v4789, %v4789
        %v4918 = vmul.f32 %v4790, %v4790
        %v4919 = vmul.f32 %v4791, %v4791
        %v4920 = vmul.f32 %v4792, %v4792
        %v4921 = vmul.f32 %v4793, %v4793
        %v4922 = vmul.f32 %v4794, %v4794
        %v4923 = vmul.f32 %v4795, %v4795
        %v4924 = vmul.f32 %v4796, %v4796
        %v4925 = vmul.f32 %v4797, %v4797
        %v4926 = vmul.f32 %v4798, %v4798
        %v4927 = vmul.f32 %v4799, %v4799
        %v4928 = vmul.f32 %v4800, %v4800
        %v4929 = vmul.f32 %v4801, %v4801
        %v4930 = vmul.f32 %v4802, %v4802
        %v4931 = vmul.f32 %v4803, %v4803
        %v4932 = vmul.f32 %v4804, %v4804
        %v4933 = vmul.f32 %v4805, %v4805
        %v4934 = vmul.f32 %v4806, %v4806
        %v4935 = vmul.f32 %v4807, %v4807
        %v4936 = vmul.f32 %v4808, %v4808
        %v4937 = vmul.f32 %v4809, %v4809
        %v4938 = vmul.f32 %v4810, %v4810
        %v4939 = vmul.f32 %v4811, %v4811
        %v4940 = vmul.f32 %v4812, %v4812
        %v4941 = vmul.f32 %v4813, %v4813
        %v4942 = vmul.f32 %v4814, %v4814
        %v4943 = vmul.f32 %v4815, %v4815
        %v4944 = vmul.f32 %v4816, %v4816
        %v4945 = vmul.f32 %v4817, %v4817
        %v4946 = vmul.f32 %v4818, %v4818
        %v4947 = vmul.f32 %v4819, %v4819
        %v4948 = vmul.f32 %v4820, %v4820
        %v4949 = vmul.f32 %v4821, %v4821
        %v4950 = vmul.f32 %v4822, %v4822
        %v4951 = vmul.f32 %v4823, %v4823
        %v4952 = vmul.f32 %v4824, %v4824
        %v4953 = vmul.f32 %v4825, %v4825
        %v4954 = vmul.f32 %v4826, %v4826
        %v4955 = vmul.f32 %v4827, %v4827
        %v4956 = vmul.f32 %v4828, %v4828
        %v4957 = vmul.f32 %v4829, %v4829
        %v4958 = vmul.f32 %v4830, %v4830
        %v4959 = vmul.f32 %v4831, %v4831
        %v4960 = vmul.f32 %v4832, %v4832
        %v4961 = vmul.f32 %v4833, %v4833
        %v4962 = vmul.f32 %v4834, %v4834
        %v4963 = vmul.f32 %v4835, %v4835
        %v4964 = vmul.f32 %v4836, %v4836
        %v4965 = vmul.f32 %v4837, %v4837
        %v4966 = vmul.f32 %v4838, %v4838
        %v4967 = vmul.f32 %v4839, %v4839
        %v4968 = vmul.f32 %v4840, %v4840
        %v4969 = vmul.f32 %v4841, %v4841
        %v4970 = vmul.f32 %v4842, %v4842
        %v4971 = vmul.f32 %v4843, %v4843
        %v4972 = vmul.f32 %v4844, %v4844
        %v4973 = vmul.f32 %v4845, %v4845
        %v4974 = vmul.f32 %v4846, %v4846
        %v4975 = vmul.f32 %v4847, %v4847
        %v4976 = vmul.f32 %v4848, %v4848
        %v4977 = vmul.f32 %v4849, %v4849
        %v4978 = vmul.f32 %v4850, %v4850
        %v4979 = vmul.f32 %v4851, %v4851
        %v4980 = vmul.f32 %v4852, %v4852
        %v4981 = vmul.f32 %v4853, %v4853
        %v4982 = vmul.f32 %v4854, %v4854
        %v4983 = vmul.f32 %v4855, %v4855
        %v4984 = vmul.f32 %v4856, %v4856
        %v4985 = vmul.f32 %v4857, %v4857
        %v4986 = vmul.f32 %v4858, %v4858
        %v4987 = vmul.f32 %v4859, %v4859
        %v4988 = vmul.f32 %v4860, %v4860
        %v4989 = vmul.f32 %v4861, %v4861
        %v4990 = vmul.f32 %v4862, %v4862
        %v4991 = vmul.f32 %v4863, %v4863
        %v4992 = vmul.f32 %v4864, %v4864
        %v4993 = vmul.f32 %v4865, %v4865
        %v4994 = vmul.f32 %v4866, %v4866
        %v4995 = vmul.f32 %v4867, %v4867
        %v4996 = vmul.f32 %v4868, %v4868
        %v4997 = vmul.f32 %v4869, %v4869
        %v4998 = vmul.f32 %v4870, %v4870
        %v4999 = vmul.f32 %v4871, %v4871
        %v5000 = vmul.f32 %v4872, %v4872
        %v5001 = vmul.f32 %v4873, %v4873
        %v5002 = vmul.f32 %v4874, %v4874
        %v5003 = vmul.f32 %v4875, %v4875
        %v5004 = vmul.f32 %v4876, %v4876
        %v5005 = vmul.f32 %v4877, %v4877
        %v5006 = vmul.f32 %v4878, %v4878
        %v5007 = vmul.f32 %v4879, %v4879
        %v5008 = vmul.f32 %v4880, %v4880
        %v5009 = vmul.f32 %v4881, %v4881
        %v5010 = vmul.f32 %v4882, %v4882
        %v5011 = vmul.f32 %v4883, %v4883
        %v5012 = vmul.f32 %v4884, %v4884
        %v5013 = vmul.f32 %v4885, %v4885
        %v5014 = vmul.f32 %v4886, %v4886
        %v5015 = vld [vmem:[#allocation4] sm:$0xff]
        %v5016 = vld [vmem:[#allocation4 + $0x8] sm:$0xff]
        %v5017 = vld [vmem:[#allocation4 + $0x10] sm:$0xff]
        %v5018 = vld [vmem:[#allocation4 + $0x18] sm:$0xff]
        %v5019 = vld [vmem:[#allocation4 + $0x20] sm:$0xff]
        %v5020 = vld [vmem:[#allocation4 + $0x28] sm:$0xff]
        %v5021 = vld [vmem:[#allocation4 + $0x30] sm:$0xff]
        %v5022 = vld [vmem:[#allocation4 + $0x38] sm:$0xff]
        %v5023 = vld [vmem:[#allocation4 + $0x40] sm:$0xff]
        %v5024 = vld [vmem:[#allocation4 + $0x48] sm:$0xff]
        %v5025 = vld [vmem:[#allocation4 + $0x50] sm:$0xff]
        %v5026 = vld [vmem:[#allocation4 + $0x58] sm:$0xff]
        %v5027 = vld [vmem:[#allocation4 + $0x60] sm:$0xff]
        %v5028 = vld [vmem:[#allocation4 + $0x68] sm:$0xff]
        %v5029 = vld [vmem:[#allocation4 + $0x70] sm:$0xff]
        %v5030 = vld [vmem:[#allocation4 + $0x78] sm:$0xff]
        %v5031 = vld [vmem:[#allocation4 + $0x80] sm:$0xff]
        %v5032 = vld [vmem:[#allocation4 + $0x88] sm:$0xff]
        %v5033 = vld [vmem:[#allocation4 + $0x90] sm:$0xff]
        %v5034 = vld [vmem:[#allocation4 + $0x98] sm:$0xff]
        %v5035 = vld [vmem:[#allocation4 + $0xa0] sm:$0xff]
        %v5036 = vld [vmem:[#allocation4 + $0xa8] sm:$0xff]
        %v5037 = vld [vmem:[#allocation4 + $0xb0] sm:$0xff]
        %v5038 = vld [vmem:[#allocation4 + $0xb8] sm:$0xff]
        %v5039 = vld [vmem:[#allocation4 + $0xc0] sm:$0xff]
        %v5040 = vld [vmem:[#allocation4 + $0xc8] sm:$0xff]
        %v5041 = vld [vmem:[#allocation4 + $0xd0] sm:$0xff]
        %v5042 = vld [vmem:[#allocation4 + $0xd8] sm:$0xff]
        %v5043 = vld [vmem:[#allocation4 + $0xe0] sm:$0xff]
        %v5044 = vld [vmem:[#allocation4 + $0xe8] sm:$0xff]
        %v5045 = vld [vmem:[#allocation4 + $0xf0] sm:$0xff]
        %v5046 = vld [vmem:[#allocation4 + $0xf8] sm:$0xff]
        %v5047 = vld [vmem:[#allocation4 + $0x100] sm:$0xff]
        %v5048 = vld [vmem:[#allocation4 + $0x108] sm:$0xff]
        %v5049 = vld [vmem:[#allocation4 + $0x110] sm:$0xff]
        %v5050 = vld [vmem:[#allocation4 + $0x118] sm:$0xff]
        %v5051 = vld [vmem:[#allocation4 + $0x120] sm:$0xff]
        %v5052 = vld [vmem:[#allocation4 + $0x128] sm:$0xff]
        %v5053 = vld [vmem:[#allocation4 + $0x130] sm:$0xff]
        %v5054 = vld [vmem:[#allocation4 + $0x138] sm:$0xff]
        %v5055 = vld [vmem:[#allocation4 + $0x140] sm:$0xff]
        %v5056 = vld [vmem:[#allocation4 + $0x148] sm:$0xff]
        %v5057 = vld [vmem:[#allocation4 + $0x150] sm:$0xff]
        %v5058 = vld [vmem:[#allocation4 + $0x158] sm:$0xff]
        %v5059 = vld [vmem:[#allocation4 + $0x160] sm:$0xff]
        %v5060 = vld [vmem:[#allocation4 + $0x168] sm:$0xff]
        %v5061 = vld [vmem:[#allocation4 + $0x170] sm:$0xff]
        %v5062 = vld [vmem:[#allocation4 + $0x178] sm:$0xff]
        %v5063 = vld [vmem:[#allocation4 + $0x180] sm:$0xff]
        %v5064 = vld [vmem:[#allocation4 + $0x188] sm:$0xff]
        %v5065 = vld [vmem:[#allocation4 + $0x190] sm:$0xff]
        %v5066 = vld [vmem:[#allocation4 + $0x198] sm:$0xff]
        %v5067 = vld [vmem:[#allocation4 + $0x1a0] sm:$0xff]
        %v5068 = vld [vmem:[#allocation4 + $0x1a8] sm:$0xff]
        %v5069 = vld [vmem:[#allocation4 + $0x1b0] sm:$0xff]
        %v5070 = vld [vmem:[#allocation4 + $0x1b8] sm:$0xff]
        %v5071 = vld [vmem:[#allocation4 + $0x1c0] sm:$0xff]
        %v5072 = vld [vmem:[#allocation4 + $0x1c8] sm:$0xff]
        %v5073 = vld [vmem:[#allocation4 + $0x1d0] sm:$0xff]
        %v5074 = vld [vmem:[#allocation4 + $0x1d8] sm:$0xff]
        %v5075 = vld [vmem:[#allocation4 + $0x1e0] sm:$0xff]
        %v5076 = vld [vmem:[#allocation4 + $0x1e8] sm:$0xff]
        %v5077 = vld [vmem:[#allocation4 + $0x1f0] sm:$0xff]
        %v5078 = vld [vmem:[#allocation4 + $0x1f8] sm:$0xff]
        %v5079 = vpack.c.bf16 %v4891, %v4887
        %v5080 = vpack.c.bf16 %v4892, %v4888
        %v5081 = vpack.c.bf16 %v4893, %v4889
        %v5082 = vpack.c.bf16 %v4894, %v4890
        %v5083 = vpack.c.bf16 %v4899, %v4895
        %v5084 = vpack.c.bf16 %v4900, %v4896
        %v5085 = vpack.c.bf16 %v4901, %v4897
        %v5086 = vpack.c.bf16 %v4902, %v4898
        %v5087 = vpack.c.bf16 %v4907, %v4903
        %v5088 = vpack.c.bf16 %v4908, %v4904
        %v5089 = vpack.c.bf16 %v4909, %v4905
        %v5090 = vpack.c.bf16 %v4910, %v4906
        %v5091 = vpack.c.bf16 %v4915, %v4911
        %v5092 = vpack.c.bf16 %v4916, %v4912
        %v5093 = vpack.c.bf16 %v4917, %v4913
        %v5094 = vpack.c.bf16 %v4918, %v4914
        %v5095 = vpack.c.bf16 %v4923, %v4919
        %v5096 = vpack.c.bf16 %v4924, %v4920
        %v5097 = vpack.c.bf16 %v4925, %v4921
        %v5098 = vpack.c.bf16 %v4926, %v4922
        %v5099 = vpack.c.bf16 %v4931, %v4927
        %v5100 = vpack.c.bf16 %v4932, %v4928
        %v5101 = vpack.c.bf16 %v4933, %v4929
        %v5102 = vpack.c.bf16 %v4934, %v4930
        %v5103 = vpack.c.bf16 %v4939, %v4935
        %v5104 = vpack.c.bf16 %v4940, %v4936
        %v5105 = vpack.c.bf16 %v4941, %v4937
        %v5106 = vpack.c.bf16 %v4942, %v4938
        %v5107 = vpack.c.bf16 %v4947, %v4943
        %v5108 = vpack.c.bf16 %v4948, %v4944
        %v5109 = vpack.c.bf16 %v4949, %v4945
        %v5110 = vpack.c.bf16 %v4950, %v4946
        %v5111 = vpack.c.bf16 %v4955, %v4951
        %v5112 = vpack.c.bf16 %v4956, %v4952
        %v5113 = vpack.c.bf16 %v4957, %v4953
        %v5114 = vpack.c.bf16 %v4958, %v4954
        %v5115 = vpack.c.bf16 %v4963, %v4959
        %v5116 = vpack.c.bf16 %v4964, %v4960
        %v5117 = vpack.c.bf16 %v4965, %v4961
        %v5118 = vpack.c.bf16 %v4966, %v4962
        %v5119 = vpack.c.bf16 %v4971, %v4967
        %v5120 = vpack.c.bf16 %v4972, %v4968
        %v5121 = vpack.c.bf16 %v4973, %v4969
        %v5122 = vpack.c.bf16 %v4974, %v4970
        %v5123 = vpack.c.bf16 %v4979, %v4975
        %v5124 = vpack.c.bf16 %v4980, %v4976
        %v5125 = vpack.c.bf16 %v4981, %v4977
        %v5126 = vpack.c.bf16 %v4982, %v4978
        %v5127 = vpack.c.bf16 %v4987, %v4983
        %v5128 = vpack.c.bf16 %v4988, %v4984
        %v5129 = vpack.c.bf16 %v4989, %v4985
        %v5130 = vpack.c.bf16 %v4990, %v4986
        %v5131 = vpack.c.bf16 %v4995, %v4991
        %v5132 = vpack.c.bf16 %v4996, %v4992
        %v5133 = vpack.c.bf16 %v4997, %v4993
        %v5134 = vpack.c.bf16 %v4998, %v4994
        %v5135 = vpack.c.bf16 %v5003, %v4999
        %v5136 = vpack.c.bf16 %v5004, %v5000
        %v5137 = vpack.c.bf16 %v5005, %v5001
        %v5138 = vpack.c.bf16 %v5006, %v5002
        %v5139 = vpack.c.bf16 %v5011, %v5007
        %v5140 = vpack.c.bf16 %v5012, %v5008
        %v5141 = vpack.c.bf16 %v5013, %v5009
        %v5142 = vpack.c.bf16 %v5014, %v5010
        %v5143 = vld [vmem:[%s385] sm:$0xff]
        %v5144 = vld [vmem:[%s385 + $0x8] sm:$0xff]
        %v5145 = vld [vmem:[%s385 + $0x10] sm:$0xff]
        %v5146 = vld [vmem:[%s385 + $0x18] sm:$0xff]
        %v5147 = vld [vmem:[%s385 + $0x20] sm:$0xff]
        %v5148 = vld [vmem:[%s385 + $0x28] sm:$0xff]
        %v5149 = vld [vmem:[%s385 + $0x30] sm:$0xff]
        %v5150 = vld [vmem:[%s385 + $0x38] sm:$0xff]
        %v5151 = vld [vmem:[%s385 + $0x40] sm:$0xff]
        %v5152 = vld [vmem:[%s385 + $0x48] sm:$0xff]
        %v5153 = vld [vmem:[%s385 + $0x50] sm:$0xff]
        %v5154 = vld [vmem:[%s385 + $0x58] sm:$0xff]
        %v5155 = vld [vmem:[%s385 + $0x60] sm:$0xff]
        %v5156 = vld [vmem:[%s385 + $0x68] sm:$0xff]
        %v5157 = vld [vmem:[%s385 + $0x70] sm:$0xff]
        %v5158 = vld [vmem:[%s385 + $0x78] sm:$0xff]
        %v5159 = vld [vmem:[%s385 + $0x80] sm:$0xff]
        %v5160 = vld [vmem:[%s385 + $0x88] sm:$0xff]
        %v5161 = vld [vmem:[%s385 + $0x90] sm:$0xff]
        %v5162 = vld [vmem:[%s385 + $0x98] sm:$0xff]
        %v5163 = vld [vmem:[%s385 + $0xa0] sm:$0xff]
        %v5164 = vld [vmem:[%s385 + $0xa8] sm:$0xff]
        %v5165 = vld [vmem:[%s385 + $0xb0] sm:$0xff]
        %v5166 = vld [vmem:[%s385 + $0xb8] sm:$0xff]
        %v5167 = vld [vmem:[%s385 + $0xc0] sm:$0xff]
        %v5168 = vld [vmem:[%s385 + $0xc8] sm:$0xff]
        %v5169 = vld [vmem:[%s385 + $0xd0] sm:$0xff]
        %v5170 = vld [vmem:[%s385 + $0xd8] sm:$0xff]
        %v5171 = vld [vmem:[%s385 + $0xe0] sm:$0xff]
        %v5172 = vld [vmem:[%s385 + $0xe8] sm:$0xff]
        %v5173 = vld [vmem:[%s385 + $0xf0] sm:$0xff]
        %v5174 = vld [vmem:[%s385 + $0xf8] sm:$0xff]
        %v5175 = vld [vmem:[%s385 + $0x100] sm:$0xff]
        %v5176 = vld [vmem:[%s385 + $0x108] sm:$0xff]
        %v5177 = vld [vmem:[%s385 + $0x110] sm:$0xff]
        %v5178 = vld [vmem:[%s385 + $0x118] sm:$0xff]
        %v5179 = vld [vmem:[%s385 + $0x120] sm:$0xff]
        %v5180 = vld [vmem:[%s385 + $0x128] sm:$0xff]
        %v5181 = vld [vmem:[%s385 + $0x130] sm:$0xff]
        %v5182 = vld [vmem:[%s385 + $0x138] sm:$0xff]
        %v5183 = vld [vmem:[%s385 + $0x140] sm:$0xff]
        %v5184 = vld [vmem:[%s385 + $0x148] sm:$0xff]
        %v5185 = vld [vmem:[%s385 + $0x150] sm:$0xff]
        %v5186 = vld [vmem:[%s385 + $0x158] sm:$0xff]
        %v5187 = vld [vmem:[%s385 + $0x160] sm:$0xff]
        %v5188 = vld [vmem:[%s385 + $0x168] sm:$0xff]
        %v5189 = vld [vmem:[%s385 + $0x170] sm:$0xff]
        %v5190 = vld [vmem:[%s385 + $0x178] sm:$0xff]
        %v5191 = vld [vmem:[%s385 + $0x180] sm:$0xff]
        %v5192 = vld [vmem:[%s385 + $0x188] sm:$0xff]
        %v5193 = vld [vmem:[%s385 + $0x190] sm:$0xff]
        %v5194 = vld [vmem:[%s385 + $0x198] sm:$0xff]
        %v5195 = vld [vmem:[%s385 + $0x1a0] sm:$0xff]
        %v5196 = vld [vmem:[%s385 + $0x1a8] sm:$0xff]
        %v5197 = vld [vmem:[%s385 + $0x1b0] sm:$0xff]
        %v5198 = vld [vmem:[%s385 + $0x1b8] sm:$0xff]
        %v5199 = vld [vmem:[%s385 + $0x1c0] sm:$0xff]
        %v5200 = vld [vmem:[%s385 + $0x1c8] sm:$0xff]
        %v5201 = vld [vmem:[%s385 + $0x1d0] sm:$0xff]
        %v5202 = vld [vmem:[%s385 + $0x1d8] sm:$0xff]
        %v5203 = vld [vmem:[%s385 + $0x1e0] sm:$0xff]
        %v5204 = vld [vmem:[%s385 + $0x1e8] sm:$0xff]
        %v5205 = vld [vmem:[%s385 + $0x1f0] sm:$0xff]
        %v5206 = vld [vmem:[%s385 + $0x1f8] sm:$0xff]
        %v5271 = vunpack.c.l.b16 %v5143
        %v5272 = vunpack.c.h.b16 %v5143
        %v5273 = vunpack.c.l.b16 %v5144
        %v5274 = vunpack.c.h.b16 %v5144
        %v5275 = vunpack.c.l.b16 %v5145
        %v5276 = vunpack.c.h.b16 %v5145
        %v5277 = vunpack.c.l.b16 %v5146
        %v5278 = vunpack.c.h.b16 %v5146
        %v5279 = vunpack.c.l.b16 %v5147
        %v5280 = vunpack.c.h.b16 %v5147
        %v5281 = vunpack.c.l.b16 %v5148
        %v5282 = vunpack.c.h.b16 %v5148
        %v5283 = vunpack.c.l.b16 %v5149
        %v5284 = vunpack.c.h.b16 %v5149
        %v5285 = vunpack.c.l.b16 %v5150
        %v5286 = vunpack.c.h.b16 %v5150
        %v5287 = vunpack.c.l.b16 %v5151
        %v5288 = vunpack.c.h.b16 %v5151
        %v5289 = vunpack.c.l.b16 %v5152
        %v5290 = vunpack.c.h.b16 %v5152
        %v5291 = vunpack.c.l.b16 %v5153
        %v5292 = vunpack.c.h.b16 %v5153
        %v5293 = vunpack.c.l.b16 %v5154
        %v5294 = vunpack.c.h.b16 %v5154
        %v5295 = vunpack.c.l.b16 %v5155
        %v5296 = vunpack.c.h.b16 %v5155
        %v5297 = vunpack.c.l.b16 %v5156
        %v5298 = vunpack.c.h.b16 %v5156
        %v5299 = vunpack.c.l.b16 %v5157
        %v5300 = vunpack.c.h.b16 %v5157
        %v5301 = vunpack.c.l.b16 %v5158
        %v5302 = vunpack.c.h.b16 %v5158
        %v5303 = vunpack.c.l.b16 %v5159
        %v5304 = vunpack.c.h.b16 %v5159
        %v5305 = vunpack.c.l.b16 %v5160
        %v5306 = vunpack.c.h.b16 %v5160
        %v5307 = vunpack.c.l.b16 %v5161
        %v5308 = vunpack.c.h.b16 %v5161
        %v5309 = vunpack.c.l.b16 %v5162
        %v5310 = vunpack.c.h.b16 %v5162
        %v5311 = vunpack.c.l.b16 %v5163
        %v5312 = vunpack.c.h.b16 %v5163
        %v5313 = vunpack.c.l.b16 %v5164
        %v5314 = vunpack.c.h.b16 %v5164
        %v5315 = vunpack.c.l.b16 %v5165
        %v5316 = vunpack.c.h.b16 %v5165
        %v5317 = vunpack.c.l.b16 %v5166
        %v5318 = vunpack.c.h.b16 %v5166
        %v5319 = vunpack.c.l.b16 %v5167
        %v5320 = vunpack.c.h.b16 %v5167
        %v5321 = vunpack.c.l.b16 %v5168
        %v5322 = vunpack.c.h.b16 %v5168
        %v5323 = vunpack.c.l.b16 %v5169
        %v5324 = vunpack.c.h.b16 %v5169
        %v5325 = vunpack.c.l.b16 %v5170
        %v5326 = vunpack.c.h.b16 %v5170
        %v5327 = vunpack.c.l.b16 %v5171
        %v5328 = vunpack.c.h.b16 %v5171
        %v5329 = vunpack.c.l.b16 %v5172
        %v5330 = vunpack.c.h.b16 %v5172
        %v5331 = vunpack.c.l.b16 %v5173
        %v5332 = vunpack.c.h.b16 %v5173
        %v5333 = vunpack.c.l.b16 %v5174
        %v5334 = vunpack.c.h.b16 %v5174
        %v5335 = vunpack.c.l.b16 %v5175
        %v5336 = vunpack.c.h.b16 %v5175
        %v5337 = vunpack.c.l.b16 %v5176
        %v5338 = vunpack.c.h.b16 %v5176
        %v5339 = vunpack.c.l.b16 %v5177
        %v5340 = vunpack.c.h.b16 %v5177
        %v5341 = vunpack.c.l.b16 %v5178
        %v5342 = vunpack.c.h.b16 %v5178
        %v5343 = vunpack.c.l.b16 %v5179
        %v5344 = vunpack.c.h.b16 %v5179
        %v5345 = vunpack.c.l.b16 %v5180
        %v5346 = vunpack.c.h.b16 %v5180
        %v5347 = vunpack.c.l.b16 %v5181
        %v5348 = vunpack.c.h.b16 %v5181
        %v5349 = vunpack.c.l.b16 %v5182
        %v5350 = vunpack.c.h.b16 %v5182
        %v5351 = vunpack.c.l.b16 %v5183
        %v5352 = vunpack.c.h.b16 %v5183
        %v5353 = vunpack.c.l.b16 %v5184
        %v5354 = vunpack.c.h.b16 %v5184
        %v5355 = vunpack.c.l.b16 %v5185
        %v5356 = vunpack.c.h.b16 %v5185
        %v5357 = vunpack.c.l.b16 %v5186
        %v5358 = vunpack.c.h.b16 %v5186
        %v5359 = vunpack.c.l.b16 %v5187
        %v5360 = vunpack.c.h.b16 %v5187
        %v5361 = vunpack.c.l.b16 %v5188
        %v5362 = vunpack.c.h.b16 %v5188
        %v5363 = vunpack.c.l.b16 %v5189
        %v5364 = vunpack.c.h.b16 %v5189
        %v5365 = vunpack.c.l.b16 %v5190
        %v5366 = vunpack.c.h.b16 %v5190
        %v5367 = vunpack.c.l.b16 %v5191
        %v5368 = vunpack.c.h.b16 %v5191
        %v5369 = vunpack.c.l.b16 %v5192
        %v5370 = vunpack.c.h.b16 %v5192
        %v5371 = vunpack.c.l.b16 %v5193
        %v5372 = vunpack.c.h.b16 %v5193
        %v5373 = vunpack.c.l.b16 %v5194
        %v5374 = vunpack.c.h.b16 %v5194
        %v5375 = vunpack.c.l.b16 %v5195
        %v5376 = vunpack.c.h.b16 %v5195
        %v5377 = vunpack.c.l.b16 %v5196
        %v5378 = vunpack.c.h.b16 %v5196
        %v5379 = vunpack.c.l.b16 %v5197
        %v5380 = vunpack.c.h.b16 %v5197
        %v5381 = vunpack.c.l.b16 %v5198
        %v5382 = vunpack.c.h.b16 %v5198
        %v5383 = vunpack.c.l.b16 %v5199
        %v5384 = vunpack.c.h.b16 %v5199
        %v5385 = vunpack.c.l.b16 %v5200
        %v5386 = vunpack.c.h.b16 %v5200
        %v5387 = vunpack.c.l.b16 %v5201
        %v5388 = vunpack.c.h.b16 %v5201
        %v5389 = vunpack.c.l.b16 %v5202
        %v5390 = vunpack.c.h.b16 %v5202
        %v5391 = vunpack.c.l.b16 %v5203
        %v5392 = vunpack.c.h.b16 %v5203
        %v5393 = vunpack.c.l.b16 %v5204
        %v5394 = vunpack.c.h.b16 %v5204
        %v5395 = vunpack.c.l.b16 %v5205
        %v5396 = vunpack.c.h.b16 %v5205
        %v5397 = vunpack.c.l.b16 %v5206
        %v5398 = vunpack.c.h.b16 %v5206
        %v5399 = vpack.c.b16 %v5273, %v5271
        %v5400 = vpack.c.b16 %v5274, %v5272
        %v5401 = vpack.c.b16 %v5277, %v5275
        %v5402 = vpack.c.b16 %v5278, %v5276
        %v5403 = vpack.c.b16 %v5281, %v5279
        %v5404 = vpack.c.b16 %v5282, %v5280
        %v5405 = vpack.c.b16 %v5285, %v5283
        %v5406 = vpack.c.b16 %v5286, %v5284
        %v5407 = vpack.c.b16 %v5289, %v5287
        %v5408 = vpack.c.b16 %v5290, %v5288
        %v5409 = vpack.c.b16 %v5293, %v5291
        %v5410 = vpack.c.b16 %v5294, %v5292
        %v5411 = vpack.c.b16 %v5297, %v5295
        %v5412 = vpack.c.b16 %v5298, %v5296
        %v5413 = vpack.c.b16 %v5301, %v5299
        %v5414 = vpack.c.b16 %v5302, %v5300
        %v5415 = vpack.c.b16 %v5305, %v5303
        %v5416 = vpack.c.b16 %v5306, %v5304
        %v5417 = vpack.c.b16 %v5309, %v5307
        %v5418 = vpack.c.b16 %v5310, %v5308
        %v5419 = vpack.c.b16 %v5313, %v5311
        %v5420 = vpack.c.b16 %v5314, %v5312
        %v5421 = vpack.c.b16 %v5317, %v5315
        %v5422 = vpack.c.b16 %v5318, %v5316
        %v5423 = vpack.c.b16 %v5321, %v5319
        %v5424 = vpack.c.b16 %v5322, %v5320
        %v5425 = vpack.c.b16 %v5325, %v5323
        %v5426 = vpack.c.b16 %v5326, %v5324
        %v5427 = vpack.c.b16 %v5329, %v5327
        %v5428 = vpack.c.b16 %v5330, %v5328
        %v5429 = vpack.c.b16 %v5333, %v5331
        %v5430 = vpack.c.b16 %v5334, %v5332
        %v5431 = vpack.c.b16 %v5337, %v5335
        %v5432 = vpack.c.b16 %v5338, %v5336
        %v5433 = vpack.c.b16 %v5341, %v5339
        %v5434 = vpack.c.b16 %v5342, %v5340
        %v5435 = vpack.c.b16 %v5345, %v5343
        %v5436 = vpack.c.b16 %v5346, %v5344
        %v5437 = vpack.c.b16 %v5349, %v5347
        %v5438 = vpack.c.b16 %v5350, %v5348
        %v5439 = vpack.c.b16 %v5353, %v5351
        %v5440 = vpack.c.b16 %v5354, %v5352
        %v5441 = vpack.c.b16 %v5357, %v5355
        %v5442 = vpack.c.b16 %v5358, %v5356
        %v5443 = vpack.c.b16 %v5361, %v5359
        %v5444 = vpack.c.b16 %v5362, %v5360
        %v5445 = vpack.c.b16 %v5365, %v5363
        %v5446 = vpack.c.b16 %v5366, %v5364
        %v5447 = vpack.c.b16 %v5369, %v5367
        %v5448 = vpack.c.b16 %v5370, %v5368
        %v5449 = vpack.c.b16 %v5373, %v5371
        %v5450 = vpack.c.b16 %v5374, %v5372
        %v5451 = vpack.c.b16 %v5377, %v5375
        %v5452 = vpack.c.b16 %v5378, %v5376
        %v5453 = vpack.c.b16 %v5381, %v5379
        %v5454 = vpack.c.b16 %v5382, %v5380
        %v5455 = vpack.c.b16 %v5385, %v5383
        %v5456 = vpack.c.b16 %v5386, %v5384
        %v5457 = vpack.c.b16 %v5389, %v5387
        %v5458 = vpack.c.b16 %v5390, %v5388
        %v5459 = vpack.c.b16 %v5393, %v5391
        %v5460 = vpack.c.b16 %v5394, %v5392
        %v5461 = vpack.c.b16 %v5397, %v5395
        %v5462 = vpack.c.b16 %v5398, %v5396
        %5527 = vmatpush.bf16.msra.mxu0 %v5413
        %5528 = vmatpush.bf16.msra.mxu0 %v5411
        %5529 = vmatpush.bf16.msra.mxu0 %v5409
        %5530 = vmatpush.bf16.msra.mxu0 %v5407
        %5531 = vmatpush.bf16.msra.mxu0 %v5405
        %5532 = vmatpush.bf16.msra.mxu0 %v5403
        %5533 = vmatpush.bf16.msra.mxu0 %v5401
        %5534 = vmatpush.bf16.msra.mxu0 %v5399
        %5535 = vmatmul.bf16.gmra.mxu0 %v5079
        %v5536 = vpop.f32.mrf.mxu0
        %v5537 = vadd.f32 0.0, %v5536
        %v5538 = vpop.f32.mrf.mxu0
        %v5539 = vadd.f32 0.0, %v5538
        %5540 = vmatmul.bf16.gmra.mxu0 %v5083
        %v5541 = vpop.f32.mrf.mxu0
        %v5542 = vadd.f32 0.0, %v5541
        %v5543 = vpop.f32.mrf.mxu0
        %v5544 = vadd.f32 0.0, %v5543
        %5545 = vmatmul.bf16.gmra.mxu0 %v5087
        %v5546 = vpop.f32.mrf.mxu0
        %v5547 = vadd.f32 0.0, %v5546
        %v5548 = vpop.f32.mrf.mxu0
        %v5549 = vadd.f32 0.0, %v5548
        %5550 = vmatmul.bf16.gmra.mxu0 %v5091
        %v5551 = vpop.f32.mrf.mxu0
        %v5552 = vadd.f32 0.0, %v5551
        %v5553 = vpop.f32.mrf.mxu0
        %v5554 = vadd.f32 0.0, %v5553
        %5555 = vmatmul.bf16.gmra.mxu0 %v5095
        %v5556 = vpop.f32.mrf.mxu0
        %v5557 = vadd.f32 0.0, %v5556
        %v5558 = vpop.f32.mrf.mxu0
        %v5559 = vadd.f32 0.0, %v5558
        %5560 = vmatmul.bf16.gmra.mxu0 %v5099
        %v5561 = vpop.f32.mrf.mxu0
        %v5562 = vadd.f32 0.0, %v5561
        %v5563 = vpop.f32.mrf.mxu0
        %v5564 = vadd.f32 0.0, %v5563
        %5565 = vmatmul.bf16.gmra.mxu0 %v5103
        %v5566 = vpop.f32.mrf.mxu0
        %v5567 = vadd.f32 0.0, %v5566
        %v5568 = vpop.f32.mrf.mxu0
        %v5569 = vadd.f32 0.0, %v5568
        %5570 = vmatmul.bf16.gmra.mxu0 %v5107
        %v5571 = vpop.f32.mrf.mxu0
        %v5572 = vadd.f32 0.0, %v5571
        %v5573 = vpop.f32.mrf.mxu0
        %v5574 = vadd.f32 0.0, %v5573
        %5575 = vmatmul.bf16.gmra.mxu0 %v5111
        %v5576 = vpop.f32.mrf.mxu0
        %v5577 = vadd.f32 0.0, %v5576
        %v5578 = vpop.f32.mrf.mxu0
        %v5579 = vadd.f32 0.0, %v5578
        %5580 = vmatmul.bf16.gmra.mxu0 %v5115
        %v5581 = vpop.f32.mrf.mxu0
        %v5582 = vadd.f32 0.0, %v5581
        %v5583 = vpop.f32.mrf.mxu0
        %v5584 = vadd.f32 0.0, %v5583
        %5585 = vmatmul.bf16.gmra.mxu0 %v5119
        %v5586 = vpop.f32.mrf.mxu0
        %v5587 = vadd.f32 0.0, %v5586
        %v5588 = vpop.f32.mrf.mxu0
        %v5589 = vadd.f32 0.0, %v5588
        %5590 = vmatmul.bf16.gmra.mxu0 %v5123
        %v5591 = vpop.f32.mrf.mxu0
        %v5592 = vadd.f32 0.0, %v5591
        %v5593 = vpop.f32.mrf.mxu0
        %v5594 = vadd.f32 0.0, %v5593
        %5595 = vmatmul.bf16.gmra.mxu0 %v5127
        %v5596 = vpop.f32.mrf.mxu0
        %v5597 = vadd.f32 0.0, %v5596
        %v5598 = vpop.f32.mrf.mxu0
        %v5599 = vadd.f32 0.0, %v5598
        %5600 = vmatmul.bf16.gmra.mxu0 %v5131
        %v5601 = vpop.f32.mrf.mxu0
        %v5602 = vadd.f32 0.0, %v5601
        %v5603 = vpop.f32.mrf.mxu0
        %v5604 = vadd.f32 0.0, %v5603
        %5605 = vmatmul.bf16.gmra.mxu0 %v5135
        %v5606 = vpop.f32.mrf.mxu0
        %v5607 = vadd.f32 0.0, %v5606
        %v5608 = vpop.f32.mrf.mxu0
        %v5609 = vadd.f32 0.0, %v5608
        %5610 = vmatmul.bf16.gmra.mxu0 %v5139
        %v5611 = vpop.f32.mrf.mxu0
        %v5612 = vadd.f32 0.0, %v5611
        %v5613 = vpop.f32.mrf.mxu0
        %v5614 = vadd.f32 0.0, %v5613
        %5615 = vdwg.mxu0
        %5616 = vmatpush.bf16.msra.mxu0 %v5429
        %5617 = vmatpush.bf16.msra.mxu0 %v5427
        %5618 = vmatpush.bf16.msra.mxu0 %v5425
        %5619 = vmatpush.bf16.msra.mxu0 %v5423
        %5620 = vmatpush.bf16.msra.mxu0 %v5421
        %5621 = vmatpush.bf16.msra.mxu0 %v5419
        %5622 = vmatpush.bf16.msra.mxu0 %v5417
        %5623 = vmatpush.bf16.msra.mxu0 %v5415
        %5624 = vmatmul.bf16.gmra.mxu0 %v5080
        %v5625 = vpop.f32.mrf.mxu0
        %v5626 = vadd.f32 %v5537, %v5625
        %v5627 = vpop.f32.mrf.mxu0
        %v5628 = vadd.f32 %v5539, %v5627
        %5629 = vmatmul.bf16.gmra.mxu0 %v5084
        %v5630 = vpop.f32.mrf.mxu0
        %v5631 = vadd.f32 %v5542, %v5630
        %v5632 = vpop.f32.mrf.mxu0
        %v5633 = vadd.f32 %v5544, %v5632
        %5634 = vmatmul.bf16.gmra.mxu0 %v5088
        %v5635 = vpop.f32.mrf.mxu0
        %v5636 = vadd.f32 %v5547, %v5635
        %v5637 = vpop.f32.mrf.mxu0
        %v5638 = vadd.f32 %v5549, %v5637
        %5639 = vmatmul.bf16.gmra.mxu0 %v5092
        %v5640 = vpop.f32.mrf.mxu0
        %v5641 = vadd.f32 %v5552, %v5640
        %v5642 = vpop.f32.mrf.mxu0
        %v5643 = vadd.f32 %v5554, %v5642
        %5644 = vmatmul.bf16.gmra.mxu0 %v5096
        %v5645 = vpop.f32.mrf.mxu0
        %v5646 = vadd.f32 %v5557, %v5645
        %v5647 = vpop.f32.mrf.mxu0
        %v5648 = vadd.f32 %v5559, %v5647
        %5649 = vmatmul.bf16.gmra.mxu0 %v5100
        %v5650 = vpop.f32.mrf.mxu0
        %v5651 = vadd.f32 %v5562, %v5650
        %v5652 = vpop.f32.mrf.mxu0
        %v5653 = vadd.f32 %v5564, %v5652
        %5654 = vmatmul.bf16.gmra.mxu0 %v5104
        %v5655 = vpop.f32.mrf.mxu0
        %v5656 = vadd.f32 %v5567, %v5655
        %v5657 = vpop.f32.mrf.mxu0
        %v5658 = vadd.f32 %v5569, %v5657
        %5659 = vmatmul.bf16.gmra.mxu0 %v5108
        %v5660 = vpop.f32.mrf.mxu0
        %v5661 = vadd.f32 %v5572, %v5660
        %v5662 = vpop.f32.mrf.mxu0
        %v5663 = vadd.f32 %v5574, %v5662
        %5664 = vmatmul.bf16.gmra.mxu0 %v5112
        %v5665 = vpop.f32.mrf.mxu0
        %v5666 = vadd.f32 %v5577, %v5665
        %v5667 = vpop.f32.mrf.mxu0
        %v5668 = vadd.f32 %v5579, %v5667
        %5669 = vmatmul.bf16.gmra.mxu0 %v5116
        %v5670 = vpop.f32.mrf.mxu0
        %v5671 = vadd.f32 %v5582, %v5670
        %v5672 = vpop.f32.mrf.mxu0
        %v5673 = vadd.f32 %v5584, %v5672
        %5674 = vmatmul.bf16.gmra.mxu0 %v5120
        %v5675 = vpop.f32.mrf.mxu0
        %v5676 = vadd.f32 %v5587, %v5675
        %v5677 = vpop.f32.mrf.mxu0
        %v5678 = vadd.f32 %v5589, %v5677
        %5679 = vmatmul.bf16.gmra.mxu0 %v5124
        %v5680 = vpop.f32.mrf.mxu0
        %v5681 = vadd.f32 %v5592, %v5680
        %v5682 = vpop.f32.mrf.mxu0
        %v5683 = vadd.f32 %v5594, %v5682
        %5684 = vmatmul.bf16.gmra.mxu0 %v5128
        %v5685 = vpop.f32.mrf.mxu0
        %v5686 = vadd.f32 %v5597, %v5685
        %v5687 = vpop.f32.mrf.mxu0
        %v5688 = vadd.f32 %v5599, %v5687
        %5689 = vmatmul.bf16.gmra.mxu0 %v5132
        %v5690 = vpop.f32.mrf.mxu0
        %v5691 = vadd.f32 %v5602, %v5690
        %v5692 = vpop.f32.mrf.mxu0
        %v5693 = vadd.f32 %v5604, %v5692
        %5694 = vmatmul.bf16.gmra.mxu0 %v5136
        %v5695 = vpop.f32.mrf.mxu0
        %v5696 = vadd.f32 %v5607, %v5695
        %v5697 = vpop.f32.mrf.mxu0
        %v5698 = vadd.f32 %v5609, %v5697
        %5699 = vmatmul.bf16.gmra.mxu0 %v5140
        %v5700 = vpop.f32.mrf.mxu0
        %v5701 = vadd.f32 %v5612, %v5700
        %v5702 = vpop.f32.mrf.mxu0
        %v5703 = vadd.f32 %v5614, %v5702
        %5704 = vdwg.mxu0
        %5705 = vmatpush.bf16.msra.mxu0 %v5445
        %5706 = vmatpush.bf16.msra.mxu0 %v5443
        %5707 = vmatpush.bf16.msra.mxu0 %v5441
        %5708 = vmatpush.bf16.msra.mxu0 %v5439
        %5709 = vmatpush.bf16.msra.mxu0 %v5437
        %5710 = vmatpush.bf16.msra.mxu0 %v5435
        %5711 = vmatpush.bf16.msra.mxu0 %v5433
        %5712 = vmatpush.bf16.msra.mxu0 %v5431
        %5713 = vmatmul.bf16.gmra.mxu0 %v5081
        %v5714 = vpop.f32.mrf.mxu0
        %v5715 = vadd.f32 %v5626, %v5714
        %v5716 = vpop.f32.mrf.mxu0
        %v5717 = vadd.f32 %v5628, %v5716
        %5718 = vmatmul.bf16.gmra.mxu0 %v5085
        %v5719 = vpop.f32.mrf.mxu0
        %v5720 = vadd.f32 %v5631, %v5719
        %v5721 = vpop.f32.mrf.mxu0
        %v5722 = vadd.f32 %v5633, %v5721
        %5723 = vmatmul.bf16.gmra.mxu0 %v5089
        %v5724 = vpop.f32.mrf.mxu0
        %v5725 = vadd.f32 %v5636, %v5724
        %v5726 = vpop.f32.mrf.mxu0
        %v5727 = vadd.f32 %v5638, %v5726
        %5728 = vmatmul.bf16.gmra.mxu0 %v5093
        %v5729 = vpop.f32.mrf.mxu0
        %v5730 = vadd.f32 %v5641, %v5729
        %v5731 = vpop.f32.mrf.mxu0
        %v5732 = vadd.f32 %v5643, %v5731
        %5733 = vmatmul.bf16.gmra.mxu0 %v5097
        %v5734 = vpop.f32.mrf.mxu0
        %v5735 = vadd.f32 %v5646, %v5734
        %v5736 = vpop.f32.mrf.mxu0
        %v5737 = vadd.f32 %v5648, %v5736
        %5738 = vmatmul.bf16.gmra.mxu0 %v5101
        %v5739 = vpop.f32.mrf.mxu0
        %v5740 = vadd.f32 %v5651, %v5739
        %v5741 = vpop.f32.mrf.mxu0
        %v5742 = vadd.f32 %v5653, %v5741
        %5743 = vmatmul.bf16.gmra.mxu0 %v5105
        %v5744 = vpop.f32.mrf.mxu0
        %v5745 = vadd.f32 %v5656, %v5744
        %v5746 = vpop.f32.mrf.mxu0
        %v5747 = vadd.f32 %v5658, %v5746
        %5748 = vmatmul.bf16.gmra.mxu0 %v5109
        %v5749 = vpop.f32.mrf.mxu0
        %v5750 = vadd.f32 %v5661, %v5749
        %v5751 = vpop.f32.mrf.mxu0
        %v5752 = vadd.f32 %v5663, %v5751
        %5753 = vmatmul.bf16.gmra.mxu0 %v5113
        %v5754 = vpop.f32.mrf.mxu0
        %v5755 = vadd.f32 %v5666, %v5754
        %v5756 = vpop.f32.mrf.mxu0
        %v5757 = vadd.f32 %v5668, %v5756
        %5758 = vmatmul.bf16.gmra.mxu0 %v5117
        %v5759 = vpop.f32.mrf.mxu0
        %v5760 = vadd.f32 %v5671, %v5759
        %v5761 = vpop.f32.mrf.mxu0
        %v5762 = vadd.f32 %v5673, %v5761
        %5763 = vmatmul.bf16.gmra.mxu0 %v5121
        %v5764 = vpop.f32.mrf.mxu0
        %v5765 = vadd.f32 %v5676, %v5764
        %v5766 = vpop.f32.mrf.mxu0
        %v5767 = vadd.f32 %v5678, %v5766
        %5768 = vmatmul.bf16.gmra.mxu0 %v5125
        %v5769 = vpop.f32.mrf.mxu0
        %v5770 = vadd.f32 %v5681, %v5769
        %v5771 = vpop.f32.mrf.mxu0
        %v5772 = vadd.f32 %v5683, %v5771
        %5773 = vmatmul.bf16.gmra.mxu0 %v5129
        %v5774 = vpop.f32.mrf.mxu0
        %v5775 = vadd.f32 %v5686, %v5774
        %v5776 = vpop.f32.mrf.mxu0
        %v5777 = vadd.f32 %v5688, %v5776
        %5778 = vmatmul.bf16.gmra.mxu0 %v5133
        %v5779 = vpop.f32.mrf.mxu0
        %v5780 = vadd.f32 %v5691, %v5779
        %v5781 = vpop.f32.mrf.mxu0
        %v5782 = vadd.f32 %v5693, %v5781
        %5783 = vmatmul.bf16.gmra.mxu0 %v5137
        %v5784 = vpop.f32.mrf.mxu0
        %v5785 = vadd.f32 %v5696, %v5784
        %v5786 = vpop.f32.mrf.mxu0
        %v5787 = vadd.f32 %v5698, %v5786
        %5788 = vmatmul.bf16.gmra.mxu0 %v5141
        %v5789 = vpop.f32.mrf.mxu0
        %v5790 = vadd.f32 %v5701, %v5789
        %v5791 = vpop.f32.mrf.mxu0
        %v5792 = vadd.f32 %v5703, %v5791
        %5793 = vdwg.mxu0
        %5794 = vmatpush.bf16.msra.mxu0 %v5461
        %5795 = vmatpush.bf16.msra.mxu0 %v5459
        %5796 = vmatpush.bf16.msra.mxu0 %v5457
        %5797 = vmatpush.bf16.msra.mxu0 %v5455
        %5798 = vmatpush.bf16.msra.mxu0 %v5453
        %5799 = vmatpush.bf16.msra.mxu0 %v5451
        %5800 = vmatpush.bf16.msra.mxu0 %v5449
        %5801 = vmatpush.bf16.msra.mxu0 %v5447
        %5802 = vmatmul.bf16.gmra.mxu0 %v5082
        %v5803 = vpop.f32.mrf.mxu0
        %v5804 = vadd.f32 %v5715, %v5803
        %v5805 = vpop.f32.mrf.mxu0
        %v5806 = vadd.f32 %v5717, %v5805
        %5807 = vmatmul.bf16.gmra.mxu0 %v5086
        %v5808 = vpop.f32.mrf.mxu0
        %v5809 = vadd.f32 %v5720, %v5808
        %v5810 = vpop.f32.mrf.mxu0
        %v5811 = vadd.f32 %v5722, %v5810
        %5812 = vmatmul.bf16.gmra.mxu0 %v5090
        %v5813 = vpop.f32.mrf.mxu0
        %v5814 = vadd.f32 %v5725, %v5813
        %v5815 = vpop.f32.mrf.mxu0
        %v5816 = vadd.f32 %v5727, %v5815
        %5817 = vmatmul.bf16.gmra.mxu0 %v5094
        %v5818 = vpop.f32.mrf.mxu0
        %v5819 = vadd.f32 %v5730, %v5818
        %v5820 = vpop.f32.mrf.mxu0
        %v5821 = vadd.f32 %v5732, %v5820
        %5822 = vmatmul.bf16.gmra.mxu0 %v5098
        %v5823 = vpop.f32.mrf.mxu0
        %v5824 = vadd.f32 %v5735, %v5823
        %v5825 = vpop.f32.mrf.mxu0
        %v5826 = vadd.f32 %v5737, %v5825
        %5827 = vmatmul.bf16.gmra.mxu0 %v5102
        %v5828 = vpop.f32.mrf.mxu0
        %v5829 = vadd.f32 %v5740, %v5828
        %v5830 = vpop.f32.mrf.mxu0
        %v5831 = vadd.f32 %v5742, %v5830
        %5832 = vmatmul.bf16.gmra.mxu0 %v5106
        %v5833 = vpop.f32.mrf.mxu0
        %v5834 = vadd.f32 %v5745, %v5833
        %v5835 = vpop.f32.mrf.mxu0
        %v5836 = vadd.f32 %v5747, %v5835
        %5837 = vmatmul.bf16.gmra.mxu0 %v5110
        %v5838 = vpop.f32.mrf.mxu0
        %v5839 = vadd.f32 %v5750, %v5838
        %v5840 = vpop.f32.mrf.mxu0
        %v5841 = vadd.f32 %v5752, %v5840
        %5842 = vmatmul.bf16.gmra.mxu0 %v5114
        %v5843 = vpop.f32.mrf.mxu0
        %v5844 = vadd.f32 %v5755, %v5843
        %v5845 = vpop.f32.mrf.mxu0
        %v5846 = vadd.f32 %v5757, %v5845
        %5847 = vmatmul.bf16.gmra.mxu0 %v5118
        %v5848 = vpop.f32.mrf.mxu0
        %v5849 = vadd.f32 %v5760, %v5848
        %v5850 = vpop.f32.mrf.mxu0
        %v5851 = vadd.f32 %v5762, %v5850
        %5852 = vmatmul.bf16.gmra.mxu0 %v5122
        %v5853 = vpop.f32.mrf.mxu0
        %v5854 = vadd.f32 %v5765, %v5853
        %v5855 = vpop.f32.mrf.mxu0
        %v5856 = vadd.f32 %v5767, %v5855
        %5857 = vmatmul.bf16.gmra.mxu0 %v5126
        %v5858 = vpop.f32.mrf.mxu0
        %v5859 = vadd.f32 %v5770, %v5858
        %v5860 = vpop.f32.mrf.mxu0
        %v5861 = vadd.f32 %v5772, %v5860
        %5862 = vmatmul.bf16.gmra.mxu0 %v5130
        %v5863 = vpop.f32.mrf.mxu0
        %v5864 = vadd.f32 %v5775, %v5863
        %v5865 = vpop.f32.mrf.mxu0
        %v5866 = vadd.f32 %v5777, %v5865
        %5867 = vmatmul.bf16.gmra.mxu0 %v5134
        %v5868 = vpop.f32.mrf.mxu0
        %v5869 = vadd.f32 %v5780, %v5868
        %v5870 = vpop.f32.mrf.mxu0
        %v5871 = vadd.f32 %v5782, %v5870
        %5872 = vmatmul.bf16.gmra.mxu0 %v5138
        %v5873 = vpop.f32.mrf.mxu0
        %v5874 = vadd.f32 %v5785, %v5873
        %v5875 = vpop.f32.mrf.mxu0
        %v5876 = vadd.f32 %v5787, %v5875
        %5877 = vmatmul.bf16.gmra.mxu0 %v5142
        %v5878 = vpop.f32.mrf.mxu0
        %v5879 = vadd.f32 %v5790, %v5878
        %v5880 = vpop.f32.mrf.mxu0
        %v5881 = vadd.f32 %v5792, %v5880
        %5882 = vdwg.mxu0
        %5883 = vmatpush.bf16.msra.mxu0 %v5414
        %5884 = vmatpush.bf16.msra.mxu0 %v5412
        %5885 = vmatpush.bf16.msra.mxu0 %v5410
        %5886 = vmatpush.bf16.msra.mxu0 %v5408
        %5887 = vmatpush.bf16.msra.mxu0 %v5406
        %5888 = vmatpush.bf16.msra.mxu0 %v5404
        %5889 = vmatpush.bf16.msra.mxu0 %v5402
        %5890 = vmatpush.bf16.msra.mxu0 %v5400
        %5891 = vmatmul.bf16.gmra.mxu0 %v5079
        %v5892 = vpop.f32.mrf.mxu0
        %v5893 = vadd.f32 0.0, %v5892
        %v5894 = vpop.f32.mrf.mxu0
        %v5895 = vadd.f32 0.0, %v5894
        %5896 = vmatmul.bf16.gmra.mxu0 %v5083
        %v5897 = vpop.f32.mrf.mxu0
        %v5898 = vadd.f32 0.0, %v5897
        %v5899 = vpop.f32.mrf.mxu0
        %v5900 = vadd.f32 0.0, %v5899
        %5901 = vmatmul.bf16.gmra.mxu0 %v5087
        %v5902 = vpop.f32.mrf.mxu0
        %v5903 = vadd.f32 0.0, %v5902
        %v5904 = vpop.f32.mrf.mxu0
        %v5905 = vadd.f32 0.0, %v5904
        %5906 = vmatmul.bf16.gmra.mxu0 %v5091
        %v5907 = vpop.f32.mrf.mxu0
        %v5908 = vadd.f32 0.0, %v5907
        %v5909 = vpop.f32.mrf.mxu0
        %v5910 = vadd.f32 0.0, %v5909
        %5911 = vmatmul.bf16.gmra.mxu0 %v5095
        %v5912 = vpop.f32.mrf.mxu0
        %v5913 = vadd.f32 0.0, %v5912
        %v5914 = vpop.f32.mrf.mxu0
        %v5915 = vadd.f32 0.0, %v5914
        %5916 = vmatmul.bf16.gmra.mxu0 %v5099
        %v5917 = vpop.f32.mrf.mxu0
        %v5918 = vadd.f32 0.0, %v5917
        %v5919 = vpop.f32.mrf.mxu0
        %v5920 = vadd.f32 0.0, %v5919
        %5921 = vmatmul.bf16.gmra.mxu0 %v5103
        %v5922 = vpop.f32.mrf.mxu0
        %v5923 = vadd.f32 0.0, %v5922
        %v5924 = vpop.f32.mrf.mxu0
        %v5925 = vadd.f32 0.0, %v5924
        %5926 = vmatmul.bf16.gmra.mxu0 %v5107
        %v5927 = vpop.f32.mrf.mxu0
        %v5928 = vadd.f32 0.0, %v5927
        %v5929 = vpop.f32.mrf.mxu0
        %v5930 = vadd.f32 0.0, %v5929
        %5931 = vmatmul.bf16.gmra.mxu0 %v5111
        %v5932 = vpop.f32.mrf.mxu0
        %v5933 = vadd.f32 0.0, %v5932
        %v5934 = vpop.f32.mrf.mxu0
        %v5935 = vadd.f32 0.0, %v5934
        %5936 = vmatmul.bf16.gmra.mxu0 %v5115
        %v5937 = vpop.f32.mrf.mxu0
        %v5938 = vadd.f32 0.0, %v5937
        %v5939 = vpop.f32.mrf.mxu0
        %v5940 = vadd.f32 0.0, %v5939
        %5941 = vmatmul.bf16.gmra.mxu0 %v5119
        %v5942 = vpop.f32.mrf.mxu0
        %v5943 = vadd.f32 0.0, %v5942
        %v5944 = vpop.f32.mrf.mxu0
        %v5945 = vadd.f32 0.0, %v5944
        %5946 = vmatmul.bf16.gmra.mxu0 %v5123
        %v5947 = vpop.f32.mrf.mxu0
        %v5948 = vadd.f32 0.0, %v5947
        %v5949 = vpop.f32.mrf.mxu0
        %v5950 = vadd.f32 0.0, %v5949
        %5951 = vmatmul.bf16.gmra.mxu0 %v5127
        %v5952 = vpop.f32.mrf.mxu0
        %v5953 = vadd.f32 0.0, %v5952
        %v5954 = vpop.f32.mrf.mxu0
        %v5955 = vadd.f32 0.0, %v5954
        %5956 = vmatmul.bf16.gmra.mxu0 %v5131
        %v5957 = vpop.f32.mrf.mxu0
        %v5958 = vadd.f32 0.0, %v5957
        %v5959 = vpop.f32.mrf.mxu0
        %v5960 = vadd.f32 0.0, %v5959
        %5961 = vmatmul.bf16.gmra.mxu0 %v5135
        %v5962 = vpop.f32.mrf.mxu0
        %v5963 = vadd.f32 0.0, %v5962
        %v5964 = vpop.f32.mrf.mxu0
        %v5965 = vadd.f32 0.0, %v5964
        %5966 = vmatmul.bf16.gmra.mxu0 %v5139
        %v5967 = vpop.f32.mrf.mxu0
        %v5968 = vadd.f32 0.0, %v5967
        %v5969 = vpop.f32.mrf.mxu0
        %v5970 = vadd.f32 0.0, %v5969
        %5971 = vdwg.mxu0
        %5972 = vmatpush.bf16.msra.mxu0 %v5430
        %5973 = vmatpush.bf16.msra.mxu0 %v5428
        %5974 = vmatpush.bf16.msra.mxu0 %v5426
        %5975 = vmatpush.bf16.msra.mxu0 %v5424
        %5976 = vmatpush.bf16.msra.mxu0 %v5422
        %5977 = vmatpush.bf16.msra.mxu0 %v5420
        %5978 = vmatpush.bf16.msra.mxu0 %v5418
        %5979 = vmatpush.bf16.msra.mxu0 %v5416
        %5980 = vmatmul.bf16.gmra.mxu0 %v5080
        %v5981 = vpop.f32.mrf.mxu0
        %v5982 = vadd.f32 %v5893, %v5981
        %v5983 = vpop.f32.mrf.mxu0
        %v5984 = vadd.f32 %v5895, %v5983
        %5985 = vmatmul.bf16.gmra.mxu0 %v5084
        %v5986 = vpop.f32.mrf.mxu0
        %v5987 = vadd.f32 %v5898, %v5986
        %v5988 = vpop.f32.mrf.mxu0
        %v5989 = vadd.f32 %v5900, %v5988
        %5990 = vmatmul.bf16.gmra.mxu0 %v5088
        %v5991 = vpop.f32.mrf.mxu0
        %v5992 = vadd.f32 %v5903, %v5991
        %v5993 = vpop.f32.mrf.mxu0
        %v5994 = vadd.f32 %v5905, %v5993
        %5995 = vmatmul.bf16.gmra.mxu0 %v5092
        %v5996 = vpop.f32.mrf.mxu0
        %v5997 = vadd.f32 %v5908, %v5996
        %v5998 = vpop.f32.mrf.mxu0
        %v5999 = vadd.f32 %v5910, %v5998
        %6000 = vmatmul.bf16.gmra.mxu0 %v5096
        %v6001 = vpop.f32.mrf.mxu0
        %v6002 = vadd.f32 %v5913, %v6001
        %v6003 = vpop.f32.mrf.mxu0
        %v6004 = vadd.f32 %v5915, %v6003
        %6005 = vmatmul.bf16.gmra.mxu0 %v5100
        %v6006 = vpop.f32.mrf.mxu0
        %v6007 = vadd.f32 %v5918, %v6006
        %v6008 = vpop.f32.mrf.mxu0
        %v6009 = vadd.f32 %v5920, %v6008
        %6010 = vmatmul.bf16.gmra.mxu0 %v5104
        %v6011 = vpop.f32.mrf.mxu0
        %v6012 = vadd.f32 %v5923, %v6011
        %v6013 = vpop.f32.mrf.mxu0
        %v6014 = vadd.f32 %v5925, %v6013
        %6015 = vmatmul.bf16.gmra.mxu0 %v5108
        %v6016 = vpop.f32.mrf.mxu0
        %v6017 = vadd.f32 %v5928, %v6016
        %v6018 = vpop.f32.mrf.mxu0
        %v6019 = vadd.f32 %v5930, %v6018
        %6020 = vmatmul.bf16.gmra.mxu0 %v5112
        %v6021 = vpop.f32.mrf.mxu0
        %v6022 = vadd.f32 %v5933, %v6021
        %v6023 = vpop.f32.mrf.mxu0
        %v6024 = vadd.f32 %v5935, %v6023
        %6025 = vmatmul.bf16.gmra.mxu0 %v5116
        %v6026 = vpop.f32.mrf.mxu0
        %v6027 = vadd.f32 %v5938, %v6026
        %v6028 = vpop.f32.mrf.mxu0
        %v6029 = vadd.f32 %v5940, %v6028
        %6030 = vmatmul.bf16.gmra.mxu0 %v5120
        %v6031 = vpop.f32.mrf.mxu0
        %v6032 = vadd.f32 %v5943, %v6031
        %v6033 = vpop.f32.mrf.mxu0
        %v6034 = vadd.f32 %v5945, %v6033
        %6035 = vmatmul.bf16.gmra.mxu0 %v5124
        %v6036 = vpop.f32.mrf.mxu0
        %v6037 = vadd.f32 %v5948, %v6036
        %v6038 = vpop.f32.mrf.mxu0
        %v6039 = vadd.f32 %v5950, %v6038
        %6040 = vmatmul.bf16.gmra.mxu0 %v5128
        %v6041 = vpop.f32.mrf.mxu0
        %v6042 = vadd.f32 %v5953, %v6041
        %v6043 = vpop.f32.mrf.mxu0
        %v6044 = vadd.f32 %v5955, %v6043
        %6045 = vmatmul.bf16.gmra.mxu0 %v5132
        %v6046 = vpop.f32.mrf.mxu0
        %v6047 = vadd.f32 %v5958, %v6046
        %v6048 = vpop.f32.mrf.mxu0
        %v6049 = vadd.f32 %v5960, %v6048
        %6050 = vmatmul.bf16.gmra.mxu0 %v5136
        %v6051 = vpop.f32.mrf.mxu0
        %v6052 = vadd.f32 %v5963, %v6051
        %v6053 = vpop.f32.mrf.mxu0
        %v6054 = vadd.f32 %v5965, %v6053
        %6055 = vmatmul.bf16.gmra.mxu0 %v5140
        %v6056 = vpop.f32.mrf.mxu0
        %v6057 = vadd.f32 %v5968, %v6056
        %v6058 = vpop.f32.mrf.mxu0
        %v6059 = vadd.f32 %v5970, %v6058
        %6060 = vdwg.mxu0
        %6061 = vmatpush.bf16.msra.mxu0 %v5446
        %6062 = vmatpush.bf16.msra.mxu0 %v5444
        %6063 = vmatpush.bf16.msra.mxu0 %v5442
        %6064 = vmatpush.bf16.msra.mxu0 %v5440
        %6065 = vmatpush.bf16.msra.mxu0 %v5438
        %6066 = vmatpush.bf16.msra.mxu0 %v5436
        %6067 = vmatpush.bf16.msra.mxu0 %v5434
        %6068 = vmatpush.bf16.msra.mxu0 %v5432
        %6069 = vmatmul.bf16.gmra.mxu0 %v5081
        %v6070 = vpop.f32.mrf.mxu0
        %v6071 = vadd.f32 %v5982, %v6070
        %v6072 = vpop.f32.mrf.mxu0
        %v6073 = vadd.f32 %v5984, %v6072
        %6074 = vmatmul.bf16.gmra.mxu0 %v5085
        %v6075 = vpop.f32.mrf.mxu0
        %v6076 = vadd.f32 %v5987, %v6075
        %v6077 = vpop.f32.mrf.mxu0
        %v6078 = vadd.f32 %v5989, %v6077
        %6079 = vmatmul.bf16.gmra.mxu0 %v5089
        %v6080 = vpop.f32.mrf.mxu0
        %v6081 = vadd.f32 %v5992, %v6080
        %v6082 = vpop.f32.mrf.mxu0
        %v6083 = vadd.f32 %v5994, %v6082
        %6084 = vmatmul.bf16.gmra.mxu0 %v5093
        %v6085 = vpop.f32.mrf.mxu0
        %v6086 = vadd.f32 %v5997, %v6085
        %v6087 = vpop.f32.mrf.mxu0
        %v6088 = vadd.f32 %v5999, %v6087
        %6089 = vmatmul.bf16.gmra.mxu0 %v5097
        %v6090 = vpop.f32.mrf.mxu0
        %v6091 = vadd.f32 %v6002, %v6090
        %v6092 = vpop.f32.mrf.mxu0
        %v6093 = vadd.f32 %v6004, %v6092
        %6094 = vmatmul.bf16.gmra.mxu0 %v5101
        %v6095 = vpop.f32.mrf.mxu0
        %v6096 = vadd.f32 %v6007, %v6095
        %v6097 = vpop.f32.mrf.mxu0
        %v6098 = vadd.f32 %v6009, %v6097
        %6099 = vmatmul.bf16.gmra.mxu0 %v5105
        %v6100 = vpop.f32.mrf.mxu0
        %v6101 = vadd.f32 %v6012, %v6100
        %v6102 = vpop.f32.mrf.mxu0
        %v6103 = vadd.f32 %v6014, %v6102
        %6104 = vmatmul.bf16.gmra.mxu0 %v5109
        %v6105 = vpop.f32.mrf.mxu0
        %v6106 = vadd.f32 %v6017, %v6105
        %v6107 = vpop.f32.mrf.mxu0
        %v6108 = vadd.f32 %v6019, %v6107
        %6109 = vmatmul.bf16.gmra.mxu0 %v5113
        %v6110 = vpop.f32.mrf.mxu0
        %v6111 = vadd.f32 %v6022, %v6110
        %v6112 = vpop.f32.mrf.mxu0
        %v6113 = vadd.f32 %v6024, %v6112
        %6114 = vmatmul.bf16.gmra.mxu0 %v5117
        %v6115 = vpop.f32.mrf.mxu0
        %v6116 = vadd.f32 %v6027, %v6115
        %v6117 = vpop.f32.mrf.mxu0
        %v6118 = vadd.f32 %v6029, %v6117
        %6119 = vmatmul.bf16.gmra.mxu0 %v5121
        %v6120 = vpop.f32.mrf.mxu0
        %v6121 = vadd.f32 %v6032, %v6120
        %v6122 = vpop.f32.mrf.mxu0
        %v6123 = vadd.f32 %v6034, %v6122
        %6124 = vmatmul.bf16.gmra.mxu0 %v5125
        %v6125 = vpop.f32.mrf.mxu0
        %v6126 = vadd.f32 %v6037, %v6125
        %v6127 = vpop.f32.mrf.mxu0
        %v6128 = vadd.f32 %v6039, %v6127
        %6129 = vmatmul.bf16.gmra.mxu0 %v5129
        %v6130 = vpop.f32.mrf.mxu0
        %v6131 = vadd.f32 %v6042, %v6130
        %v6132 = vpop.f32.mrf.mxu0
        %v6133 = vadd.f32 %v6044, %v6132
        %6134 = vmatmul.bf16.gmra.mxu0 %v5133
        %v6135 = vpop.f32.mrf.mxu0
        %v6136 = vadd.f32 %v6047, %v6135
        %v6137 = vpop.f32.mrf.mxu0
        %v6138 = vadd.f32 %v6049, %v6137
        %6139 = vmatmul.bf16.gmra.mxu0 %v5137
        %v6140 = vpop.f32.mrf.mxu0
        %v6141 = vadd.f32 %v6052, %v6140
        %v6142 = vpop.f32.mrf.mxu0
        %v6143 = vadd.f32 %v6054, %v6142
        %6144 = vmatmul.bf16.gmra.mxu0 %v5141
        %v6145 = vpop.f32.mrf.mxu0
        %v6146 = vadd.f32 %v6057, %v6145
        %v6147 = vpop.f32.mrf.mxu0
        %v6148 = vadd.f32 %v6059, %v6147
        %6149 = vdwg.mxu0
        %6150 = vmatpush.bf16.msra.mxu0 %v5462
        %6151 = vmatpush.bf16.msra.mxu0 %v5460
        %6152 = vmatpush.bf16.msra.mxu0 %v5458
        %6153 = vmatpush.bf16.msra.mxu0 %v5456
        %6154 = vmatpush.bf16.msra.mxu0 %v5454
        %6155 = vmatpush.bf16.msra.mxu0 %v5452
        %6156 = vmatpush.bf16.msra.mxu0 %v5450
        %6157 = vmatpush.bf16.msra.mxu0 %v5448
        %6158 = vmatmul.bf16.gmra.mxu0 %v5082
        %v6159 = vpop.f32.mrf.mxu0
        %v6160 = vadd.f32 %v6071, %v6159
        %v6161 = vpop.f32.mrf.mxu0
        %v6162 = vadd.f32 %v6073, %v6161
        %6163 = vmatmul.bf16.gmra.mxu0 %v5086
        %v6164 = vpop.f32.mrf.mxu0
        %v6165 = vadd.f32 %v6076, %v6164
        %v6166 = vpop.f32.mrf.mxu0
        %v6167 = vadd.f32 %v6078, %v6166
        %6168 = vmatmul.bf16.gmra.mxu0 %v5090
        %v6169 = vpop.f32.mrf.mxu0
        %v6170 = vadd.f32 %v6081, %v6169
        %v6171 = vpop.f32.mrf.mxu0
        %v6172 = vadd.f32 %v6083, %v6171
        %6173 = vmatmul.bf16.gmra.mxu0 %v5094
        %v6174 = vpop.f32.mrf.mxu0
        %v6175 = vadd.f32 %v6086, %v6174
        %v6176 = vpop.f32.mrf.mxu0
        %v6177 = vadd.f32 %v6088, %v6176
        %6178 = vmatmul.bf16.gmra.mxu0 %v5098
        %v6179 = vpop.f32.mrf.mxu0
        %v6180 = vadd.f32 %v6091, %v6179
        %v6181 = vpop.f32.mrf.mxu0
        %v6182 = vadd.f32 %v6093, %v6181
        %6183 = vmatmul.bf16.gmra.mxu0 %v5102
        %v6184 = vpop.f32.mrf.mxu0
        %v6185 = vadd.f32 %v6096, %v6184
        %v6186 = vpop.f32.mrf.mxu0
        %v6187 = vadd.f32 %v6098, %v6186
        %6188 = vmatmul.bf16.gmra.mxu0 %v5106
        %v6189 = vpop.f32.mrf.mxu0
        %v6190 = vadd.f32 %v6101, %v6189
        %v6191 = vpop.f32.mrf.mxu0
        %v6192 = vadd.f32 %v6103, %v6191
        %6193 = vmatmul.bf16.gmra.mxu0 %v5110
        %v6194 = vpop.f32.mrf.mxu0
        %v6195 = vadd.f32 %v6106, %v6194
        %v6196 = vpop.f32.mrf.mxu0
        %v6197 = vadd.f32 %v6108, %v6196
        %6198 = vmatmul.bf16.gmra.mxu0 %v5114
        %v6199 = vpop.f32.mrf.mxu0
        %v6200 = vadd.f32 %v6111, %v6199
        %v6201 = vpop.f32.mrf.mxu0
        %v6202 = vadd.f32 %v6113, %v6201
        %6203 = vmatmul.bf16.gmra.mxu0 %v5118
        %v6204 = vpop.f32.mrf.mxu0
        %v6205 = vadd.f32 %v6116, %v6204
        %v6206 = vpop.f32.mrf.mxu0
        %v6207 = vadd.f32 %v6118, %v6206
        %6208 = vmatmul.bf16.gmra.mxu0 %v5122
        %v6209 = vpop.f32.mrf.mxu0
        %v6210 = vadd.f32 %v6121, %v6209
        %v6211 = vpop.f32.mrf.mxu0
        %v6212 = vadd.f32 %v6123, %v6211
        %6213 = vmatmul.bf16.gmra.mxu0 %v5126
        %v6214 = vpop.f32.mrf.mxu0
        %v6215 = vadd.f32 %v6126, %v6214
        %v6216 = vpop.f32.mrf.mxu0
        %v6217 = vadd.f32 %v6128, %v6216
        %6218 = vmatmul.bf16.gmra.mxu0 %v5130
        %v6219 = vpop.f32.mrf.mxu0
        %v6220 = vadd.f32 %v6131, %v6219
        %v6221 = vpop.f32.mrf.mxu0
        %v6222 = vadd.f32 %v6133, %v6221
        %6223 = vmatmul.bf16.gmra.mxu0 %v5134
        %v6224 = vpop.f32.mrf.mxu0
        %v6225 = vadd.f32 %v6136, %v6224
        %v6226 = vpop.f32.mrf.mxu0
        %v6227 = vadd.f32 %v6138, %v6226
        %6228 = vmatmul.bf16.gmra.mxu0 %v5138
        %v6229 = vpop.f32.mrf.mxu0
        %v6230 = vadd.f32 %v6141, %v6229
        %v6231 = vpop.f32.mrf.mxu0
        %v6232 = vadd.f32 %v6143, %v6231
        %6233 = vmatmul.bf16.gmra.mxu0 %v5142
        %v6234 = vpop.f32.mrf.mxu0
        %v6235 = vadd.f32 %v6146, %v6234
        %v6236 = vpop.f32.mrf.mxu0
        %v6237 = vadd.f32 %v6148, %v6236
        %6238 = vdwg.mxu0
        %v6239 = vadd.f32 %v5015, %v5804
        %v6240 = vadd.f32 %v5016, %v6160
        %v6241 = vadd.f32 %v5017, %v5806
        %v6242 = vadd.f32 %v5018, %v6162
        %v6243 = vadd.f32 %v5019, %v5809
        %v6244 = vadd.f32 %v5020, %v6165
        %v6245 = vadd.f32 %v5021, %v5811
        %v6246 = vadd.f32 %v5022, %v6167
        %v6247 = vadd.f32 %v5023, %v5814
        %v6248 = vadd.f32 %v5024, %v6170
        %v6249 = vadd.f32 %v5025, %v5816
        %v6250 = vadd.f32 %v5026, %v6172
        %v6251 = vadd.f32 %v5027, %v5819
        %v6252 = vadd.f32 %v5028, %v6175
        %v6253 = vadd.f32 %v5029, %v5821
        %v6254 = vadd.f32 %v5030, %v6177
        %v6255 = vadd.f32 %v5031, %v5824
        %v6256 = vadd.f32 %v5032, %v6180
        %v6257 = vadd.f32 %v5033, %v5826
        %v6258 = vadd.f32 %v5034, %v6182
        %v6259 = vadd.f32 %v5035, %v5829
        %v6260 = vadd.f32 %v5036, %v6185
        %v6261 = vadd.f32 %v5037, %v5831
        %v6262 = vadd.f32 %v5038, %v6187
        %v6263 = vadd.f32 %v5039, %v5834
        %v6264 = vadd.f32 %v5040, %v6190
        %v6265 = vadd.f32 %v5041, %v5836
        %v6266 = vadd.f32 %v5042, %v6192
        %v6267 = vadd.f32 %v5043, %v5839
        %v6268 = vadd.f32 %v5044, %v6195
        %v6269 = vadd.f32 %v5045, %v5841
        %v6270 = vadd.f32 %v5046, %v6197
        %v6271 = vadd.f32 %v5047, %v5844
        %v6272 = vadd.f32 %v5048, %v6200
        %v6273 = vadd.f32 %v5049, %v5846
        %v6274 = vadd.f32 %v5050, %v6202
        %v6275 = vadd.f32 %v5051, %v5849
        %v6276 = vadd.f32 %v5052, %v6205
        %v6277 = vadd.f32 %v5053, %v5851
        %v6278 = vadd.f32 %v5054, %v6207
        %v6279 = vadd.f32 %v5055, %v5854
        %v6280 = vadd.f32 %v5056, %v6210
        %v6281 = vadd.f32 %v5057, %v5856
        %v6282 = vadd.f32 %v5058, %v6212
        %v6283 = vadd.f32 %v5059, %v5859
        %v6284 = vadd.f32 %v5060, %v6215
        %v6285 = vadd.f32 %v5061, %v5861
        %v6286 = vadd.f32 %v5062, %v6217
        %v6287 = vadd.f32 %v5063, %v5864
        %v6288 = vadd.f32 %v5064, %v6220
        %v6289 = vadd.f32 %v5065, %v5866
        %v6290 = vadd.f32 %v5066, %v6222
        %v6291 = vadd.f32 %v5067, %v5869
        %v6292 = vadd.f32 %v5068, %v6225
        %v6293 = vadd.f32 %v5069, %v5871
        %v6294 = vadd.f32 %v5070, %v6227
        %v6295 = vadd.f32 %v5071, %v5874
        %v6296 = vadd.f32 %v5072, %v6230
        %v6297 = vadd.f32 %v5073, %v5876
        %v6298 = vadd.f32 %v5074, %v6232
        %v6299 = vadd.f32 %v5075, %v5879
        %v6300 = vadd.f32 %v5076, %v6235
        %v6301 = vadd.f32 %v5077, %v5881
        %v6302 = vadd.f32 %v5078, %v6237
        %6303 = vst [vmem:[#allocation4] sm:$0xff] %v6239
        %6304 = vst [vmem:[#allocation4 + $0x8] sm:$0xff] %v6240
        %6305 = vst [vmem:[#allocation4 + $0x10] sm:$0xff] %v6241
        %6306 = vst [vmem:[#allocation4 + $0x18] sm:$0xff] %v6242
        %6307 = vst [vmem:[#allocation4 + $0x20] sm:$0xff] %v6243
        %6308 = vst [vmem:[#allocation4 + $0x28] sm:$0xff] %v6244
        %6309 = vst [vmem:[#allocation4 + $0x30] sm:$0xff] %v6245
        %6310 = vst [vmem:[#allocation4 + $0x38] sm:$0xff] %v6246
        %6311 = vst [vmem:[#allocation4 + $0x40] sm:$0xff] %v6247
        %6312 = vst [vmem:[#allocation4 + $0x48] sm:$0xff] %v6248
        %6313 = vst [vmem:[#allocation4 + $0x50] sm:$0xff] %v6249
        %6314 = vst [vmem:[#allocation4 + $0x58] sm:$0xff] %v6250
        %6315 = vst [vmem:[#allocation4 + $0x60] sm:$0xff] %v6251
        %6316 = vst [vmem:[#allocation4 + $0x68] sm:$0xff] %v6252
        %6317 = vst [vmem:[#allocation4 + $0x70] sm:$0xff] %v6253
        %6318 = vst [vmem:[#allocation4 + $0x78] sm:$0xff] %v6254
        %6319 = vst [vmem:[#allocation4 + $0x80] sm:$0xff] %v6255
        %6320 = vst [vmem:[#allocation4 + $0x88] sm:$0xff] %v6256
        %6321 = vst [vmem:[#allocation4 + $0x90] sm:$0xff] %v6257
        %6322 = vst [vmem:[#allocation4 + $0x98] sm:$0xff] %v6258
        %6323 = vst [vmem:[#allocation4 + $0xa0] sm:$0xff] %v6259
        %6324 = vst [vmem:[#allocation4 + $0xa8] sm:$0xff] %v6260
        %6325 = vst [vmem:[#allocation4 + $0xb0] sm:$0xff] %v6261
        %6326 = vst [vmem:[#allocation4 + $0xb8] sm:$0xff] %v6262
        %6327 = vst [vmem:[#allocation4 + $0xc0] sm:$0xff] %v6263
        %6328 = vst [vmem:[#allocation4 + $0xc8] sm:$0xff] %v6264
        %6329 = vst [vmem:[#allocation4 + $0xd0] sm:$0xff] %v6265
        %6330 = vst [vmem:[#allocation4 + $0xd8] sm:$0xff] %v6266
        %6331 = vst [vmem:[#allocation4 + $0xe0] sm:$0xff] %v6267
        %6332 = vst [vmem:[#allocation4 + $0xe8] sm:$0xff] %v6268
        %6333 = vst [vmem:[#allocation4 + $0xf0] sm:$0xff] %v6269
        %6334 = vst [vmem:[#allocation4 + $0xf8] sm:$0xff] %v6270
        %6335 = vst [vmem:[#allocation4 + $0x100] sm:$0xff] %v6271
        %6336 = vst [vmem:[#allocation4 + $0x108] sm:$0xff] %v6272
        %6337 = vst [vmem:[#allocation4 + $0x110] sm:$0xff] %v6273
        %6338 = vst [vmem:[#allocation4 + $0x118] sm:$0xff] %v6274
        %6339 = vst [vmem:[#allocation4 + $0x120] sm:$0xff] %v6275
        %6340 = vst [vmem:[#allocation4 + $0x128] sm:$0xff] %v6276
        %6341 = vst [vmem:[#allocation4 + $0x130] sm:$0xff] %v6277
        %6342 = vst [vmem:[#allocation4 + $0x138] sm:$0xff] %v6278
        %6343 = vst [vmem:[#allocation4 + $0x140] sm:$0xff] %v6279
        %6344 = vst [vmem:[#allocation4 + $0x148] sm:$0xff] %v6280
        %6345 = vst [vmem:[#allocation4 + $0x150] sm:$0xff] %v6281
        %6346 = vst [vmem:[#allocation4 + $0x158] sm:$0xff] %v6282
        %6347 = vst [vmem:[#allocation4 + $0x160] sm:$0xff] %v6283
        %6348 = vst [vmem:[#allocation4 + $0x168] sm:$0xff] %v6284
        %6349 = vst [vmem:[#allocation4 + $0x170] sm:$0xff] %v6285
        %6350 = vst [vmem:[#allocation4 + $0x178] sm:$0xff] %v6286
        %6351 = vst [vmem:[#allocation4 + $0x180] sm:$0xff] %v6287
        %6352 = vst [vmem:[#allocation4 + $0x188] sm:$0xff] %v6288
        %6353 = vst [vmem:[#allocation4 + $0x190] sm:$0xff] %v6289
        %6354 = vst [vmem:[#allocation4 + $0x198] sm:$0xff] %v6290
        %6355 = vst [vmem:[#allocation4 + $0x1a0] sm:$0xff] %v6291
        %6356 = vst [vmem:[#allocation4 + $0x1a8] sm:$0xff] %v6292
        %6357 = vst [vmem:[#allocation4 + $0x1b0] sm:$0xff] %v6293
        %6358 = vst [vmem:[#allocation4 + $0x1b8] sm:$0xff] %v6294
        %6359 = vst [vmem:[#allocation4 + $0x1c0] sm:$0xff] %v6295
        %6360 = vst [vmem:[#allocation4 + $0x1c8] sm:$0xff] %v6296
        %6361 = vst [vmem:[#allocation4 + $0x1d0] sm:$0xff] %v6297
        %6362 = vst [vmem:[#allocation4 + $0x1d8] sm:$0xff] %v6298
        %6363 = vst [vmem:[#allocation4 + $0x1e0] sm:$0xff] %v6299
        %6364 = vst [vmem:[#allocation4 + $0x1e8] sm:$0xff] %v6300
        %6365 = vst [vmem:[#allocation4 + $0x1f0] sm:$0xff] %v6301
        %6366 = vst [vmem:[#allocation4 + $0x1f8] sm:$0xff] %v6302
        %p6367 = scmp.eq.s32.totalorder %s33, 1
        // Predicated region
        $region69: #{tpu_custom_call.1} parent=51 // pred_check
          %p6368 = pneg %p6367
        $region70: #{tpu_custom_call.1} parent=51 // pred_check_branch
          %6370 = sbr.rel (%p6368) target = $region72
        $region71: #{tpu_custom_call.1} parent=51 // pred_region
          %v6371 = vld [vmem:[#allocation3] sm:$0xff]
          %v6372 = vld [vmem:[#allocation3 + $0x8] sm:$0xff]
          %v6373 = vld [vmem:[#allocation3 + $0x10] sm:$0xff]
          %v6374 = vld [vmem:[#allocation3 + $0x18] sm:$0xff]
          %v6375 = vld [vmem:[#allocation3 + $0x20] sm:$0xff]
          %v6376 = vld [vmem:[#allocation3 + $0x28] sm:$0xff]
          %v6377 = vld [vmem:[#allocation3 + $0x30] sm:$0xff]
          %v6378 = vld [vmem:[#allocation3 + $0x38] sm:$0xff]
          %v6379 = vld [vmem:[#allocation3 + $0x40] sm:$0xff]
          %v6380 = vld [vmem:[#allocation3 + $0x48] sm:$0xff]
          %v6381 = vld [vmem:[#allocation3 + $0x50] sm:$0xff]
          %v6382 = vld [vmem:[#allocation3 + $0x58] sm:$0xff]
          %v6383 = vld [vmem:[#allocation3 + $0x60] sm:$0xff]
          %v6384 = vld [vmem:[#allocation3 + $0x68] sm:$0xff]
          %v6385 = vld [vmem:[#allocation3 + $0x70] sm:$0xff]
          %v6386 = vld [vmem:[#allocation3 + $0x78] sm:$0xff]
          %v6387 = vld [vmem:[#allocation3 + $0x80] sm:$0xff]
          %v6388 = vld [vmem:[#allocation3 + $0x88] sm:$0xff]
          %v6389 = vld [vmem:[#allocation3 + $0x90] sm:$0xff]
          %v6390 = vld [vmem:[#allocation3 + $0x98] sm:$0xff]
          %v6391 = vld [vmem:[#allocation3 + $0xa0] sm:$0xff]
          %v6392 = vld [vmem:[#allocation3 + $0xa8] sm:$0xff]
          %v6393 = vld [vmem:[#allocation3 + $0xb0] sm:$0xff]
          %v6394 = vld [vmem:[#allocation3 + $0xb8] sm:$0xff]
          %v6395 = vld [vmem:[#allocation3 + $0xc0] sm:$0xff]
          %v6396 = vld [vmem:[#allocation3 + $0xc8] sm:$0xff]
          %v6397 = vld [vmem:[#allocation3 + $0xd0] sm:$0xff]
          %v6398 = vld [vmem:[#allocation3 + $0xd8] sm:$0xff]
          %v6399 = vld [vmem:[#allocation3 + $0xe0] sm:$0xff]
          %v6400 = vld [vmem:[#allocation3 + $0xe8] sm:$0xff]
          %v6401 = vld [vmem:[#allocation3 + $0xf0] sm:$0xff]
          %v6402 = vld [vmem:[#allocation3 + $0xf8] sm:$0xff]
          %v6403 = vld [vmem:[#allocation3 + $0x100] sm:$0xff]
          %v6404 = vld [vmem:[#allocation3 + $0x108] sm:$0xff]
          %v6405 = vld [vmem:[#allocation3 + $0x110] sm:$0xff]
          %v6406 = vld [vmem:[#allocation3 + $0x118] sm:$0xff]
          %v6407 = vld [vmem:[#allocation3 + $0x120] sm:$0xff]
          %v6408 = vld [vmem:[#allocation3 + $0x128] sm:$0xff]
          %v6409 = vld [vmem:[#allocation3 + $0x130] sm:$0xff]
          %v6410 = vld [vmem:[#allocation3 + $0x138] sm:$0xff]
          %v6411 = vld [vmem:[#allocation3 + $0x140] sm:$0xff]
          %v6412 = vld [vmem:[#allocation3 + $0x148] sm:$0xff]
          %v6413 = vld [vmem:[#allocation3 + $0x150] sm:$0xff]
          %v6414 = vld [vmem:[#allocation3 + $0x158] sm:$0xff]
          %v6415 = vld [vmem:[#allocation3 + $0x160] sm:$0xff]
          %v6416 = vld [vmem:[#allocation3 + $0x168] sm:$0xff]
          %v6417 = vld [vmem:[#allocation3 + $0x170] sm:$0xff]
          %v6418 = vld [vmem:[#allocation3 + $0x178] sm:$0xff]
          %v6419 = vld [vmem:[#allocation3 + $0x180] sm:$0xff]
          %v6420 = vld [vmem:[#allocation3 + $0x188] sm:$0xff]
          %v6421 = vld [vmem:[#allocation3 + $0x190] sm:$0xff]
          %v6422 = vld [vmem:[#allocation3 + $0x198] sm:$0xff]
          %v6423 = vld [vmem:[#allocation3 + $0x1a0] sm:$0xff]
          %v6424 = vld [vmem:[#allocation3 + $0x1a8] sm:$0xff]
          %v6425 = vld [vmem:[#allocation3 + $0x1b0] sm:$0xff]
          %v6426 = vld [vmem:[#allocation3 + $0x1b8] sm:$0xff]
          %v6427 = vld [vmem:[#allocation3 + $0x1c0] sm:$0xff]
          %v6428 = vld [vmem:[#allocation3 + $0x1c8] sm:$0xff]
          %v6429 = vld [vmem:[#allocation3 + $0x1d0] sm:$0xff]
          %v6430 = vld [vmem:[#allocation3 + $0x1d8] sm:$0xff]
          %v6431 = vld [vmem:[#allocation3 + $0x1e0] sm:$0xff]
          %v6432 = vld [vmem:[#allocation3 + $0x1e8] sm:$0xff]
          %v6433 = vld [vmem:[#allocation3 + $0x1f0] sm:$0xff]
          %v6434 = vld [vmem:[#allocation3 + $0x1f8] sm:$0xff]
          %v6435 = vld [vmem:[#allocation4] sm:$0xff]
          %v6436 = vld [vmem:[#allocation4 + $0x8] sm:$0xff]
          %v6437 = vld [vmem:[#allocation4 + $0x10] sm:$0xff]
          %v6438 = vld [vmem:[#allocation4 + $0x18] sm:$0xff]
          %v6439 = vld [vmem:[#allocation4 + $0x20] sm:$0xff]
          %v6440 = vld [vmem:[#allocation4 + $0x28] sm:$0xff]
          %v6441 = vld [vmem:[#allocation4 + $0x30] sm:$0xff]
          %v6442 = vld [vmem:[#allocation4 + $0x38] sm:$0xff]
          %v6443 = vld [vmem:[#allocation4 + $0x40] sm:$0xff]
          %v6444 = vld [vmem:[#allocation4 + $0x48] sm:$0xff]
          %v6445 = vld [vmem:[#allocation4 + $0x50] sm:$0xff]
          %v6446 = vld [vmem:[#allocation4 + $0x58] sm:$0xff]
          %v6447 = vld [vmem:[#allocation4 + $0x60] sm:$0xff]
          %v6448 = vld [vmem:[#allocation4 + $0x68] sm:$0xff]
          %v6449 = vld [vmem:[#allocation4 + $0x70] sm:$0xff]
          %v6450 = vld [vmem:[#allocation4 + $0x78] sm:$0xff]
          %v6451 = vld [vmem:[#allocation4 + $0x80] sm:$0xff]
          %v6452 = vld [vmem:[#allocation4 + $0x88] sm:$0xff]
          %v6453 = vld [vmem:[#allocation4 + $0x90] sm:$0xff]
          %v6454 = vld [vmem:[#allocation4 + $0x98] sm:$0xff]
          %v6455 = vld [vmem:[#allocation4 + $0xa0] sm:$0xff]
          %v6456 = vld [vmem:[#allocation4 + $0xa8] sm:$0xff]
          %v6457 = vld [vmem:[#allocation4 + $0xb0] sm:$0xff]
          %v6458 = vld [vmem:[#allocation4 + $0xb8] sm:$0xff]
          %v6459 = vld [vmem:[#allocation4 + $0xc0] sm:$0xff]
          %v6460 = vld [vmem:[#allocation4 + $0xc8] sm:$0xff]
          %v6461 = vld [vmem:[#allocation4 + $0xd0] sm:$0xff]
          %v6462 = vld [vmem:[#allocation4 + $0xd8] sm:$0xff]
          %v6463 = vld [vmem:[#allocation4 + $0xe0] sm:$0xff]
          %v6464 = vld [vmem:[#allocation4 + $0xe8] sm:$0xff]
          %v6465 = vld [vmem:[#allocation4 + $0xf0] sm:$0xff]
          %v6466 = vld [vmem:[#allocation4 + $0xf8] sm:$0xff]
          %v6467 = vld [vmem:[#allocation4 + $0x100] sm:$0xff]
          %v6468 = vld [vmem:[#allocation4 + $0x108] sm:$0xff]
          %v6469 = vld [vmem:[#allocation4 + $0x110] sm:$0xff]
          %v6470 = vld [vmem:[#allocation4 + $0x118] sm:$0xff]
          %v6471 = vld [vmem:[#allocation4 + $0x120] sm:$0xff]
          %v6472 = vld [vmem:[#allocation4 + $0x128] sm:$0xff]
          %v6473 = vld [vmem:[#allocation4 + $0x130] sm:$0xff]
          %v6474 = vld [vmem:[#allocation4 + $0x138] sm:$0xff]
          %v6475 = vld [vmem:[#allocation4 + $0x140] sm:$0xff]
          %v6476 = vld [vmem:[#allocation4 + $0x148] sm:$0xff]
          %v6477 = vld [vmem:[#allocation4 + $0x150] sm:$0xff]
          %v6478 = vld [vmem:[#allocation4 + $0x158] sm:$0xff]
          %v6479 = vld [vmem:[#allocation4 + $0x160] sm:$0xff]
          %v6480 = vld [vmem:[#allocation4 + $0x168] sm:$0xff]
          %v6481 = vld [vmem:[#allocation4 + $0x170] sm:$0xff]
          %v6482 = vld [vmem:[#allocation4 + $0x178] sm:$0xff]
          %v6483 = vld [vmem:[#allocation4 + $0x180] sm:$0xff]
          %v6484 = vld [vmem:[#allocation4 + $0x188] sm:$0xff]
          %v6485 = vld [vmem:[#allocation4 + $0x190] sm:$0xff]
          %v6486 = vld [vmem:[#allocation4 + $0x198] sm:$0xff]
          %v6487 = vld [vmem:[#allocation4 + $0x1a0] sm:$0xff]
          %v6488 = vld [vmem:[#allocation4 + $0x1a8] sm:$0xff]
          %v6489 = vld [vmem:[#allocation4 + $0x1b0] sm:$0xff]
          %v6490 = vld [vmem:[#allocation4 + $0x1b8] sm:$0xff]
          %v6491 = vld [vmem:[#allocation4 + $0x1c0] sm:$0xff]
          %v6492 = vld [vmem:[#allocation4 + $0x1c8] sm:$0xff]
          %v6493 = vld [vmem:[#allocation4 + $0x1d0] sm:$0xff]
          %v6494 = vld [vmem:[#allocation4 + $0x1d8] sm:$0xff]
          %v6495 = vld [vmem:[#allocation4 + $0x1e0] sm:$0xff]
          %v6496 = vld [vmem:[#allocation4 + $0x1e8] sm:$0xff]
          %v6497 = vld [vmem:[#allocation4 + $0x1f0] sm:$0xff]
          %v6498 = vld [vmem:[#allocation4 + $0x1f8] sm:$0xff]
          %v6499 = vmul.f32 %v6371, %v6435
          %v6500 = vmul.f32 %v6372, %v6436
          %v6501 = vmul.f32 %v6373, %v6437
          %v6502 = vmul.f32 %v6374, %v6438
          %v6503 = vmul.f32 %v6375, %v6439
          %v6504 = vmul.f32 %v6376, %v6440
          %v6505 = vmul.f32 %v6377, %v6441
          %v6506 = vmul.f32 %v6378, %v6442
          %v6507 = vmul.f32 %v6379, %v6443
          %v6508 = vmul.f32 %v6380, %v6444
          %v6509 = vmul.f32 %v6381, %v6445
          %v6510 = vmul.f32 %v6382, %v6446
          %v6511 = vmul.f32 %v6383, %v6447
          %v6512 = vmul.f32 %v6384, %v6448
          %v6513 = vmul.f32 %v6385, %v6449
          %v6514 = vmul.f32 %v6386, %v6450
          %v6515 = vmul.f32 %v6387, %v6451
          %v6516 = vmul.f32 %v6388, %v6452
          %v6517 = vmul.f32 %v6389, %v6453
          %v6518 = vmul.f32 %v6390, %v6454
          %v6519 = vmul.f32 %v6391, %v6455
          %v6520 = vmul.f32 %v6392, %v6456
          %v6521 = vmul.f32 %v6393, %v6457
          %v6522 = vmul.f32 %v6394, %v6458
          %v6523 = vmul.f32 %v6395, %v6459
          %v6524 = vmul.f32 %v6396, %v6460
          %v6525 = vmul.f32 %v6397, %v6461
          %v6526 = vmul.f32 %v6398, %v6462
          %v6527 = vmul.f32 %v6399, %v6463
          %v6528 = vmul.f32 %v6400, %v6464
          %v6529 = vmul.f32 %v6401, %v6465
          %v6530 = vmul.f32 %v6402, %v6466
          %v6531 = vmul.f32 %v6403, %v6467
          %v6532 = vmul.f32 %v6404, %v6468
          %v6533 = vmul.f32 %v6405, %v6469
          %v6534 = vmul.f32 %v6406, %v6470
          %v6535 = vmul.f32 %v6407, %v6471
          %v6536 = vmul.f32 %v6408, %v6472
          %v6537 = vmul.f32 %v6409, %v6473
          %v6538 = vmul.f32 %v6410, %v6474
          %v6539 = vmul.f32 %v6411, %v6475
          %v6540 = vmul.f32 %v6412, %v6476
          %v6541 = vmul.f32 %v6413, %v6477
          %v6542 = vmul.f32 %v6414, %v6478
          %v6543 = vmul.f32 %v6415, %v6479
          %v6544 = vmul.f32 %v6416, %v6480
          %v6545 = vmul.f32 %v6417, %v6481
          %v6546 = vmul.f32 %v6418, %v6482
          %v6547 = vmul.f32 %v6419, %v6483
          %v6548 = vmul.f32 %v6420, %v6484
          %v6549 = vmul.f32 %v6421, %v6485
          %v6550 = vmul.f32 %v6422, %v6486
          %v6551 = vmul.f32 %v6423, %v6487
          %v6552 = vmul.f32 %v6424, %v6488
          %v6553 = vmul.f32 %v6425, %v6489
          %v6554 = vmul.f32 %v6426, %v6490
          %v6555 = vmul.f32 %v6427, %v6491
          %v6556 = vmul.f32 %v6428, %v6492
          %v6557 = vmul.f32 %v6429, %v6493
          %v6558 = vmul.f32 %v6430, %v6494
          %v6559 = vmul.f32 %v6431, %v6495
          %v6560 = vmul.f32 %v6432, %v6496
          %v6561 = vmul.f32 %v6433, %v6497
          %v6562 = vmul.f32 %v6434, %v6498
          %6563 = vst [vmem:[%s443] sm:$0xff] %v6499
          %6564 = vst [vmem:[%s443 + $0x8] sm:$0xff] %v6500
          %6565 = vst [vmem:[%s443 + $0x10] sm:$0xff] %v6501
          %6566 = vst [vmem:[%s443 + $0x18] sm:$0xff] %v6502
          %6567 = vst [vmem:[%s443 + $0x20] sm:$0xff] %v6503
          %6568 = vst [vmem:[%s443 + $0x28] sm:$0xff] %v6504
          %6569 = vst [vmem:[%s443 + $0x30] sm:$0xff] %v6505
          %6570 = vst [vmem:[%s443 + $0x38] sm:$0xff] %v6506
          %6571 = vst [vmem:[%s443 + $0x40] sm:$0xff] %v6507
          %6572 = vst [vmem:[%s443 + $0x48] sm:$0xff] %v6508
          %6573 = vst [vmem:[%s443 + $0x50] sm:$0xff] %v6509
          %6574 = vst [vmem:[%s443 + $0x58] sm:$0xff] %v6510
          %6575 = vst [vmem:[%s443 + $0x60] sm:$0xff] %v6511
          %6576 = vst [vmem:[%s443 + $0x68] sm:$0xff] %v6512
          %6577 = vst [vmem:[%s443 + $0x70] sm:$0xff] %v6513
          %6578 = vst [vmem:[%s443 + $0x78] sm:$0xff] %v6514
          %6579 = vst [vmem:[%s443 + $0x80] sm:$0xff] %v6515
          %6580 = vst [vmem:[%s443 + $0x88] sm:$0xff] %v6516
          %6581 = vst [vmem:[%s443 + $0x90] sm:$0xff] %v6517
          %6582 = vst [vmem:[%s443 + $0x98] sm:$0xff] %v6518
          %6583 = vst [vmem:[%s443 + $0xa0] sm:$0xff] %v6519
          %6584 = vst [vmem:[%s443 + $0xa8] sm:$0xff] %v6520
          %6585 = vst [vmem:[%s443 + $0xb0] sm:$0xff] %v6521
          %6586 = vst [vmem:[%s443 + $0xb8] sm:$0xff] %v6522
          %6587 = vst [vmem:[%s443 + $0xc0] sm:$0xff] %v6523
          %6588 = vst [vmem:[%s443 + $0xc8] sm:$0xff] %v6524
          %6589 = vst [vmem:[%s443 + $0xd0] sm:$0xff] %v6525
          %6590 = vst [vmem:[%s443 + $0xd8] sm:$0xff] %v6526
          %6591 = vst [vmem:[%s443 + $0xe0] sm:$0xff] %v6527
          %6592 = vst [vmem:[%s443 + $0xe8] sm:$0xff] %v6528
          %6593 = vst [vmem:[%s443 + $0xf0] sm:$0xff] %v6529
          %6594 = vst [vmem:[%s443 + $0xf8] sm:$0xff] %v6530
          %6595 = vst [vmem:[%s443 + $0x100] sm:$0xff] %v6531
          %6596 = vst [vmem:[%s443 + $0x108] sm:$0xff] %v6532
          %6597 = vst [vmem:[%s443 + $0x110] sm:$0xff] %v6533
          %6598 = vst [vmem:[%s443 + $0x118] sm:$0xff] %v6534
          %6599 = vst [vmem:[%s443 + $0x120] sm:$0xff] %v6535
          %6600 = vst [vmem:[%s443 + $0x128] sm:$0xff] %v6536
          %6601 = vst [vmem:[%s443 + $0x130] sm:$0xff] %v6537
          %6602 = vst [vmem:[%s443 + $0x138] sm:$0xff] %v6538
          %6603 = vst [vmem:[%s443 + $0x140] sm:$0xff] %v6539
          %6604 = vst [vmem:[%s443 + $0x148] sm:$0xff] %v6540
          %6605 = vst [vmem:[%s443 + $0x150] sm:$0xff] %v6541
          %6606 = vst [vmem:[%s443 + $0x158] sm:$0xff] %v6542
          %6607 = vst [vmem:[%s443 + $0x160] sm:$0xff] %v6543
          %6608 = vst [vmem:[%s443 + $0x168] sm:$0xff] %v6544
          %6609 = vst [vmem:[%s443 + $0x170] sm:$0xff] %v6545
          %6610 = vst [vmem:[%s443 + $0x178] sm:$0xff] %v6546
          %6611 = vst [vmem:[%s443 + $0x180] sm:$0xff] %v6547
          %6612 = vst [vmem:[%s443 + $0x188] sm:$0xff] %v6548
          %6613 = vst [vmem:[%s443 + $0x190] sm:$0xff] %v6549
          %6614 = vst [vmem:[%s443 + $0x198] sm:$0xff] %v6550
          %6615 = vst [vmem:[%s443 + $0x1a0] sm:$0xff] %v6551
          %6616 = vst [vmem:[%s443 + $0x1a8] sm:$0xff] %v6552
          %6617 = vst [vmem:[%s443 + $0x1b0] sm:$0xff] %v6553
          %6618 = vst [vmem:[%s443 + $0x1b8] sm:$0xff] %v6554
          %6619 = vst [vmem:[%s443 + $0x1c0] sm:$0xff] %v6555
          %6620 = vst [vmem:[%s443 + $0x1c8] sm:$0xff] %v6556
          %6621 = vst [vmem:[%s443 + $0x1d0] sm:$0xff] %v6557
          %6622 = vst [vmem:[%s443 + $0x1d8] sm:$0xff] %v6558
          %6623 = vst [vmem:[%s443 + $0x1e0] sm:$0xff] %v6559
          %6624 = vst [vmem:[%s443 + $0x1e8] sm:$0xff] %v6560
          %6625 = vst [vmem:[%s443 + $0x1f0] sm:$0xff] %v6561
          %6626 = vst [vmem:[%s443 + $0x1f8] sm:$0xff] %v6562
        $region72: #{tpu_custom_call.1} parent=51 // pred_fallthru
          _
        %s6627 = sand.u32 %s241, 1
        %s6628 = scalar_lea.sflag [#allocation7], %s6627
        %s6629 = sand.u32 %s241, 1
        %s6630 = smul.addr %s6629, 512
        %s6631 = scalar_lea.vmem [#allocation11], %s6630
        // Predicated region
        $region73: #{tpu_custom_call.1} parent=51 // pred_check
          %p6632 = pneg %p251
        $region74: #{tpu_custom_call.1} parent=51 // pred_check_branch
          %6634 = sbr.rel (%p6632) target = $region76
        $region75: #{tpu_custom_call.1} parent=51 // pred_region
          %s6635 = smul.u32 32, %s32
          %6637 = vsyncadd %s6628, 0
          %s6638 = smul.addr %s6635, 2
          %s6639 = smul.addr %s6638, 8
          %s6640 = scalar_lea.hbm %s8, %s6639
          %s6641 = sshll.u32 %s6631, 4
          %s6642 = int_to_ptr.vmem [resolvable:$true] %s6641
          %s6643 = sshll.u32 %s6640, 4
          %s6644 = int_to_ptr.hbm [resolvable:$true] %s6643
          %6649 = dma.vmem_to_hbm [thread:$0]  %s6642, 8192, %s6644, %s6628, 256, 256, 16
        $region76: #{tpu_custom_call.1} parent=51 // pred_fallthru
          _
      $region52: #{tpu_custom_call.1} parent=5 // pred_fallthru
        _
      %p6650 = scmp.le.s32.totalorder 2, %s23
      // Predicated region
      $region77: #{tpu_custom_call.1} parent=5 // pred_check
        %p6651 = pneg %p6650
      $region78: #{tpu_custom_call.1} parent=5 // pred_check_branch
        %6653 = sbr.rel (%p6651) target = $region80
      $region79: #{tpu_custom_call.1} parent=5 // pred_region
        %s6654 = ssub.s32 %s23, 2
        // Predicated region
        $region81: #{tpu_custom_call.1} parent=79 // pred_check
          %p6655 = pneg %p257
        $region82: #{tpu_custom_call.1} parent=79 // pred_check_branch
          %6657 = sbr.rel (%p6655) target = $region84
        $region83: #{tpu_custom_call.1} parent=79 // pred_region
          %s6658 = sand.u32 %s242, 1
          %s6659 = scalar_lea.sflag [#allocation7], %s6658
          %s6660 = sand.u32 %s242, 1
          %s6661 = smul.addr %s6660, 512
          %s6662 = scalar_lea.vmem [#allocation11], %s6661
          %6664 = dma.done %s6659, 8192
        $region84: #{tpu_custom_call.1} parent=79 // pred_fallthru
          _
      $region80: #{tpu_custom_call.1} parent=5 // pred_fallthru
        _
    $region6: #{tpu_custom_call.1} parent=1 // loop_footer
      %s27 = sadd.s32 1, %s23
    $region7: #{tpu_custom_call.1} parent=1 // loop_footer_branch
      %22 = sbr.rel target = $region3
    $region8: #{tpu_custom_call.1} parent=1 // loop_exit
      _
    %6665 = vsyncpa [#allocation6], 1
    %s6666 = scalar_lea.sflag [#allocation6], 1
    %6667 = vsyncpa %s6666, 1
    %6668 = vsyncpa [#allocation9], 1
    %s6669 = scalar_lea.sflag [#allocation9], 1
    %6670 = vsyncpa %s6669, 1
    %6671 = vsyncpa [#allocation7], 1
    %s6672 = scalar_lea.sflag [#allocation7], 1
    %6673 = vsyncpa %s6672, 1

</llo_original>
